<compile_context>
chip_gen: v6e
topology: v6e:2x2x1
jax: 0.10.0
libtpu: 0.0.40
codegen_flags: <defaults>
</compile_context>

<pallas_src>
import math

import numpy as np
import jax
import jax.numpy as jnp
from jax.experimental import pallas as pl
from jax.experimental.pallas import tpu as pltpu

NUM_HEAD = 2
WINDOW_SIZE = 4
LN_EPS = 1e-5
NEG = -1e30


# ----------------------------- in-kernel math helpers -----------------------------

def _erf(x):
    # Abramowitz & Stegun 7.1.26 rational approximation (|err| < 1.5e-7); built only
    # from exp/mul/add/select so it lowers cleanly inside a Pallas TPU kernel.
    a1, a2, a3, a4, a5 = (0.254829592, -0.284496736, 1.421413741,
                          -1.453152027, 1.061405429)
    p = 0.3275911
    s = jnp.where(x >= 0.0, 1.0, -1.0)
    z = jnp.abs(x)
    t = 1.0 / (1.0 + p * z)
    poly = ((((a5 * t + a4) * t + a3) * t + a2) * t + a1) * t
    return s * (1.0 - poly * jnp.exp(-z * z))


def _gelu(x):
    # exact (erf-based) GELU, matching torch.nn.GELU() default
    return 0.5 * x * (1.0 + _erf(x * 0.7071067811865476))


def _trunc(x):
    # round-toward-zero, mirroring the reference's `input.long()` cast in the residual
    return jnp.where(x < 0.0, jnp.ceil(x), jnp.floor(x))


def _layer_norm(x, gamma, beta):
    mu = jnp.mean(x, axis=-1, keepdims=True)
    var = jnp.mean((x - mu) ** 2, axis=-1, keepdims=True)
    return (x - mu) * jax.lax.rsqrt(var + LN_EPS) * gamma + beta


def _mhsa_masked(x, g, b, wqkv, bqkv, wo, bo, neg_mask):
    """LayerNorm + windowed multi-head self-attention + output projection.

    x: (L, D) window-order rows of ONE batch element.  neg_mask: (L, L) additive
    mask that is 0 inside a window and -1e30 across windows, so one full (L,L)
    score matmul per head reproduces the per-window softmax exactly (masked probs
    underflow to 0).  Per-head context folds into Wo's head-row-block (no concat)."""
    L, D = x.shape
    hd = D // NUM_HEAD
    scale = 1.0 / math.sqrt(hd)

    xn = _layer_norm(x, g, b)
    qkv = jnp.dot(xn, wqkv, preferred_element_type=jnp.float32) + bqkv        # (L, 3D)

    acc = jnp.zeros((L, D), jnp.float32)
    for h in range(NUM_HEAD):                                                 # static unroll (2)
        q = qkv[:, h * hd:(h + 1) * hd]
        k = qkv[:, D + h * hd:D + (h + 1) * hd]
        v = qkv[:, 2 * D + h * hd:2 * D + (h + 1) * hd]
        s = jax.lax.dot_general(q, k, (((1,), (1,)), ((), ())),
                                preferred_element_type=jnp.float32) * scale   # (L, L)
        s = s + neg_mask
        m = jnp.max(s, axis=-1, keepdims=True)
        e = jnp.exp(s - m)
        p = e / jnp.sum(e, axis=-1, keepdims=True)
        ctx = jnp.dot(p, v, preferred_element_type=jnp.float32)               # (L, hd)
        # concat_h(ctx_h) @ Wo  ==  sum_h ctx_h @ Wo[h*hd:(h+1)*hd, :]
        acc = acc + jnp.dot(ctx, wo[h * hd:(h + 1) * hd, :],
                            preferred_element_type=jnp.float32)
    return acc + bo


def _mlp(x, g, b, w1, b1, w2, b2):
    """GELU(GELU(LN(x) @ W1 + b1) @ W2 + b2) -- GELU after both layers, as in reference."""
    xn = _layer_norm(x, g, b)
    h = _gelu(jnp.dot(xn, w1, preferred_element_type=jnp.float32) + b1)
    return _gelu(jnp.dot(h, w2, preferred_element_type=jnp.float32) + b2)


# ----------------------------- fused Pallas kernel -----------------------------

def _swin_kernel(x_ref, c_ref,
                 g1_ref, b1_ref, m1_wqkv_ref, m1_bqkv_ref, m1_wo_ref, m1_bo_ref,
                 g2_ref, b2_ref, mlp1_w1_ref, mlp1_b1_ref, mlp1_w2_ref, mlp1_b2_ref,
                 g3_ref, b3_ref, m2_wqkv_ref, m2_bqkv_ref, m2_wo_ref, m2_bo_ref,
                 g4_ref, b4_ref, mlp2_w1_ref, mlp2_b1_ref, mlp2_w2_ref, mlp2_b2_ref,
                 o_ref):
    x = x_ref[0]                       # (L, D) image-order flattened input
    p_win = c_ref[0]                   # (L, L) one-hot: image-order -> window-order
    p_shift = c_ref[1]                 # window-order -> shifted-window-order
    p_unshift = c_ref[2]               # shifted-window-order -> window-order
    neg_mask = c_ref[3]                # (L, L) additive block-diagonal window mask

    # ---- W-MSA branch: LN1 + windowed MHSA + trunc(input) residual ----
    xw = jnp.dot(p_win, x, preferred_element_type=jnp.float32)
    msa1 = _mhsa_masked(xw, g1_ref[...], b1_ref[...], m1_wqkv_ref[...],
                        m1_bqkv_ref[...], m1_wo_ref[...], m1_bo_ref[...], neg_mask)
    w = _trunc(x) + msa1               # input.long() + MSA (flat-index add, as in reference)
    out1 = _mlp(w, g2_ref[...], b2_ref[...], mlp1_w1_ref[...], mlp1_b1_ref[...],
                mlp1_w2_ref[...], mlp1_b2_ref[...]) + w

    # ---- SW-MSA branch: cyclic shift folded into a row-permutation matmul ----
    xs = jnp.dot(p_shift, out1, preferred_element_type=jnp.float32)
    msa2 = _mhsa_masked(xs, g3_ref[...], b3_ref[...], m2_wqkv_ref[...],
                        m2_bqkv_ref[...], m2_wo_ref[...], m2_bo_ref[...], neg_mask)
    sw = jnp.dot(p_unshift, msa2, preferred_element_type=jnp.float32)
    z = out1 + sw
    out = _mlp(z, g4_ref[...], b4_ref[...], mlp2_w1_ref[...], mlp2_b1_ref[...],
               mlp2_w2_ref[...], mlp2_b2_ref[...]) + z
    o_ref[0] = out


# ----------------------------- permutation / mask construction (host-side) -----------------------------

def _window_perm(H, W, ws):
    # a[p] = image-flat index feeding window-order position p (matches F.unfold partition)
    a = np.arange(H * W).reshape(H // ws, ws, W // ws, ws)
    return a.transpose(0, 2, 1, 3).reshape(-1)


def _shift_perm(H, W, ws, shift):
    # out[p] = v[idx[p]]  where v is window-order and out is the window partition of
    # the (shift, shift)-rolled image built from v   (window2image -> roll -> partition)
    a = _window_perm(H, W, ws)
    inv_a = np.argsort(a)
    img = inv_a.reshape(H, W)
    rolled = np.roll(img, (shift, shift), axis=(0, 1))
    return rolled.reshape(-1)[a]


def _one_hot(idx):
    n = idx.shape[0]
    m = np.zeros((n, n), np.float32)
    m[np.arange(n), idx] = 1.0
    return m


def _window_neg_mask(nw, npw):
    wid = np.repeat(np.arange(nw), npw)
    same = (wid[:, None] == wid[None, :]).astype(np.float32)
    return (1.0 - same) * NEG


# ----------------------------- pallas_call wrapper -----------------------------

_WEIGHT_ORDER = ['ln1_g', 'ln1_b', 'm1_wqkv', 'm1_bqkv', 'm1_wo', 'm1_bo',
                 'ln2_g', 'ln2_b', 'mlp1_w1', 'mlp1_b1', 'mlp1_w2', 'mlp1_b2',
                 'ln3_g', 'ln3_b', 'm2_wqkv', 'm2_bqkv', 'm2_wo', 'm2_bo',
                 'ln4_g', 'ln4_b', 'mlp2_w1', 'mlp2_b1', 'mlp2_w2', 'mlp2_b2']


def swin_transformer_block(x, params, window_size=WINDOW_SIZE):
    bs, N, D = x.shape
    H = W = int(math.sqrt(N))
    ws = window_size
    nw = (H // ws) * (W // ws)
    npw = ws * ws
    L = N

    consts = np.stack([
        _one_hot(_window_perm(H, W, ws)),
        _one_hot(_shift_perm(H, W, ws, -(ws // 2))),   # reference forward shift = -ws//2
        _one_hot(_shift_perm(H, W, ws, ws // 2)),      # reverse shift = +ws//2
        _window_neg_mask(nw, npw),
    ]).astype(np.float32)
    consts = jnp.asarray(consts)

    weights = [params[k] for k in _WEIGHT_ORDER]

    def full_spec(a):
        return pl.BlockSpec(a.shape, lambda i, _n=a.ndim: (0,) * _n)

    in_specs = ([pl.BlockSpec((1, L, D), lambda i: (i, 0, 0)),
                 full_spec(consts)]
                + [full_spec(w) for w in weights])

    out = pl.pallas_call(
        _swin_kernel,
        out_shape=jax.ShapeDtypeStruct((bs, L, D), jnp.float32),
        grid_spec=pltpu.PrefetchScalarGridSpec(
            num_scalar_prefetch=0,
            grid=(bs,),
            in_specs=in_specs,
            out_specs=pl.BlockSpec((1, L, D), lambda i: (i, 0, 0)),
        ),
        compiler_params=pltpu.CompilerParams(dimension_semantics=("parallel",)),
    )(x, consts, *weights)

    return out.reshape(bs, nw, npw, D)


# ----------------------------- deterministic parameter init -----------------------------

def init_params(key, D):
    ks = jax.random.split(key, 12)

    def lin(k, fin, fout):
        kw, kb = jax.random.split(k)
        s = 1.0 / math.sqrt(fin)
        w = jax.random.uniform(kw, (fin, fout), jnp.float32, -s, s)   # stored as (in, out)
        b = jax.random.uniform(kb, (1, fout), jnp.float32, -s, s)
        return w, b

    def ln_p(k):
        kg, kb = jax.random.split(k)
        g = 1.0 + 0.1 * jax.random.normal(kg, (1, D), jnp.float32)
        b = 0.05 * jax.random.normal(kb, (1, D), jnp.float32)
        return g, b

    p = {}
    p['ln1_g'], p['ln1_b'] = ln_p(ks[0])
    p['ln2_g'], p['ln2_b'] = ln_p(ks[1])
    p['ln3_g'], p['ln3_b'] = ln_p(ks[2])
    p['ln4_g'], p['ln4_b'] = ln_p(ks[3])
    p['m1_wqkv'], p['m1_bqkv'] = lin(ks[4], D, 3 * D)
    p['m1_wo'], p['m1_bo'] = lin(ks[5], D, D)
    p['m2_wqkv'], p['m2_bqkv'] = lin(ks[6], D, 3 * D)
    p['m2_wo'], p['m2_bo'] = lin(ks[7], D, D)
    p['mlp1_w1'], p['mlp1_b1'] = lin(ks[8], D, 4 * D)
    p['mlp1_w2'], p['mlp1_b2'] = lin(ks[9], 4 * D, D)
    p['mlp2_w1'], p['mlp2_b1'] = lin(ks[10], D, 4 * D)
    p['mlp2_w2'], p['mlp2_b2'] = lin(ks[11], 4 * D, D)
    return p


if __name__ == "__main__":
    model_dim = 32           # divisible by num_head=2
    H = W = 8                # image 8x8 -> num_patch=64, num_window=4 (window_size=4)
    bs = 2

    key = jax.random.PRNGKey(0)
    kx, kp = jax.random.split(key)
    x = 2.0 * jax.random.normal(kx, (bs, H * W, model_dim), jnp.float32)
    params = init_params(kp, model_dim)

    fwd = jax.jit(swin_transformer_block)
    out = fwd(x, params)
    out = jax.block_until_ready(out)

    nw = (H // WINDOW_SIZE) * (W // WINDOW_SIZE)
    npw = WINDOW_SIZE * WINDOW_SIZE
    assert out.shape == (bs, nw, npw, model_dim), out.shape
    assert out.dtype == jnp.float32
    assert bool(jnp.all(jnp.isfinite(out)))
    print("KERNEL_OK")
</pallas_src>

<mosaic_0001>
module attributes {stable_mosaic.version = 11 : i64} {
  func.func @_swin_kernel(%arg0: i32, %arg1: memref<1x64x32xf32, #tpu.memory_space<vmem>>, %arg2: memref<4x64x64xf32, #tpu.memory_space<vmem>>, %arg3: memref<1x32xf32, #tpu.memory_space<vmem>>, %arg4: memref<1x32xf32, #tpu.memory_space<vmem>>, %arg5: memref<32x96xf32, #tpu.memory_space<vmem>>, %arg6: memref<1x96xf32, #tpu.memory_space<vmem>>, %arg7: memref<32x32xf32, #tpu.memory_space<vmem>>, %arg8: memref<1x32xf32, #tpu.memory_space<vmem>>, %arg9: memref<1x32xf32, #tpu.memory_space<vmem>>, %arg10: memref<1x32xf32, #tpu.memory_space<vmem>>, %arg11: memref<32x128xf32, #tpu.memory_space<vmem>>, %arg12: memref<1x128xf32, #tpu.memory_space<vmem>>, %arg13: memref<128x32xf32, #tpu.memory_space<vmem>>, %arg14: memref<1x32xf32, #tpu.memory_space<vmem>>, %arg15: memref<1x32xf32, #tpu.memory_space<vmem>>, %arg16: memref<1x32xf32, #tpu.memory_space<vmem>>, %arg17: memref<32x96xf32, #tpu.memory_space<vmem>>, %arg18: memref<1x96xf32, #tpu.memory_space<vmem>>, %arg19: memref<32x32xf32, #tpu.memory_space<vmem>>, %arg20: memref<1x32xf32, #tpu.memory_space<vmem>>, %arg21: memref<1x32xf32, #tpu.memory_space<vmem>>, %arg22: memref<1x32xf32, #tpu.memory_space<vmem>>, %arg23: memref<32x128xf32, #tpu.memory_space<vmem>>, %arg24: memref<1x128xf32, #tpu.memory_space<vmem>>, %arg25: memref<128x32xf32, #tpu.memory_space<vmem>>, %arg26: memref<1x32xf32, #tpu.memory_space<vmem>>, %arg27: memref<1x64x32xf32, #tpu.memory_space<vmem>>) attributes {dimension_semantics = [#tpu.dimension_semantics<parallel>], iteration_bounds = array<i64: 2>, scalar_prefetch = 0 : i64, scratch_operands = 0 : i64, tpu.core_type = #tpu.core_type<tc>, window_params = [{transform_indices = @transform_0, window_bounds = array<i64: 1, 64, 32>}, {pipeline_mode = #tpu.pipeline_mode<synchronous>, transform_indices = @transform_1, window_bounds = array<i64: 4, 64, 64>}, {pipeline_mode = #tpu.pipeline_mode<synchronous>, transform_indices = @transform_2, window_bounds = array<i64: 1, 32>}, {pipeline_mode = #tpu.pipeline_mode<synchronous>, transform_indices = @transform_3, window_bounds = array<i64: 1, 32>}, {pipeline_mode = #tpu.pipeline_mode<synchronous>, transform_indices = @transform_4, window_bounds = array<i64: 32, 96>}, {pipeline_mode = #tpu.pipeline_mode<synchronous>, transform_indices = @transform_5, window_bounds = array<i64: 1, 96>}, {pipeline_mode = #tpu.pipeline_mode<synchronous>, transform_indices = @transform_6, window_bounds = array<i64: 32, 32>}, {pipeline_mode = #tpu.pipeline_mode<synchronous>, transform_indices = @transform_7, window_bounds = array<i64: 1, 32>}, {pipeline_mode = #tpu.pipeline_mode<synchronous>, transform_indices = @transform_8, window_bounds = array<i64: 1, 32>}, {pipeline_mode = #tpu.pipeline_mode<synchronous>, transform_indices = @transform_9, window_bounds = array<i64: 1, 32>}, {pipeline_mode = #tpu.pipeline_mode<synchronous>, transform_indices = @transform_10, window_bounds = array<i64: 32, 128>}, {pipeline_mode = #tpu.pipeline_mode<synchronous>, transform_indices = @transform_11, window_bounds = array<i64: 1, 128>}, {pipeline_mode = #tpu.pipeline_mode<synchronous>, transform_indices = @transform_12, window_bounds = array<i64: 128, 32>}, {pipeline_mode = #tpu.pipeline_mode<synchronous>, transform_indices = @transform_13, window_bounds = array<i64: 1, 32>}, {pipeline_mode = #tpu.pipeline_mode<synchronous>, transform_indices = @transform_14, window_bounds = array<i64: 1, 32>}, {pipeline_mode = #tpu.pipeline_mode<synchronous>, transform_indices = @transform_15, window_bounds = array<i64: 1, 32>}, {pipeline_mode = #tpu.pipeline_mode<synchronous>, transform_indices = @transform_16, window_bounds = array<i64: 32, 96>}, {pipeline_mode = #tpu.pipeline_mode<synchronous>, transform_indices = @transform_17, window_bounds = array<i64: 1, 96>}, {pipeline_mode = #tpu.pipeline_mode<synchronous>, transform_indices = @transform_18, window_bounds = array<i64: 32, 32>}, {pipeline_mode = #tpu.pipeline_mode<synchronous>, transform_indices = @transform_19, window_bounds = array<i64: 1, 32>}, {pipeline_mode = #tpu.pipeline_mode<synchronous>, transform_indices = @transform_20, window_bounds = array<i64: 1, 32>}, {pipeline_mode = #tpu.pipeline_mode<synchronous>, transform_indices = @transform_21, window_bounds = array<i64: 1, 32>}, {pipeline_mode = #tpu.pipeline_mode<synchronous>, transform_indices = @transform_22, window_bounds = array<i64: 32, 128>}, {pipeline_mode = #tpu.pipeline_mode<synchronous>, transform_indices = @transform_23, window_bounds = array<i64: 1, 128>}, {pipeline_mode = #tpu.pipeline_mode<synchronous>, transform_indices = @transform_24, window_bounds = array<i64: 128, 32>}, {pipeline_mode = #tpu.pipeline_mode<synchronous>, transform_indices = @transform_25, window_bounds = array<i64: 1, 32>}, {transform_indices = @transform_26, window_bounds = array<i64: 1, 64, 32>}]} {
    %c0 = arith.constant 0 : index
    %c0_0 = arith.constant 0 : index
    %c0_1 = arith.constant 0 : index
    %0 = vector.load %arg1[%c0, %c0_0, %c0_1] : memref<1x64x32xf32, #tpu.memory_space<vmem>>, vector<1x64x32xf32>
    %1 = vector.shape_cast %0 : vector<1x64x32xf32> to vector<64x32xf32>
    %c0_2 = arith.constant 0 : index
    %c0_3 = arith.constant 0 : index
    %c0_4 = arith.constant 0 : index
    %2 = vector.load %arg2[%c0_2, %c0_3, %c0_4] : memref<4x64x64xf32, #tpu.memory_space<vmem>>, vector<1x64x64xf32>
    %3 = vector.shape_cast %2 : vector<1x64x64xf32> to vector<64x64xf32>
    %c1 = arith.constant 1 : index
    %c0_5 = arith.constant 0 : index
    %c0_6 = arith.constant 0 : index
    %4 = vector.load %arg2[%c1, %c0_5, %c0_6] : memref<4x64x64xf32, #tpu.memory_space<vmem>>, vector<1x64x64xf32>
    %5 = vector.shape_cast %4 : vector<1x64x64xf32> to vector<64x64xf32>
    %c2 = arith.constant 2 : index
    %c0_7 = arith.constant 0 : index
    %c0_8 = arith.constant 0 : index
    %6 = vector.load %arg2[%c2, %c0_7, %c0_8] : memref<4x64x64xf32, #tpu.memory_space<vmem>>, vector<1x64x64xf32>
    %7 = vector.shape_cast %6 : vector<1x64x64xf32> to vector<64x64xf32>
    %c3 = arith.constant 3 : index
    %c0_9 = arith.constant 0 : index
    %c0_10 = arith.constant 0 : index
    %8 = vector.load %arg2[%c3, %c0_9, %c0_10] : memref<4x64x64xf32, #tpu.memory_space<vmem>>, vector<1x64x64xf32>
    %9 = vector.shape_cast %8 : vector<1x64x64xf32> to vector<64x64xf32>
    %cst = arith.constant dense<0.000000e+00> : vector<64x32xf32>
    %10 = tpu.matmul %3, %1, %cst {dimension_numbers = #tpu.dot_dimension_numbers<[1], [0], [0], [1], [0, 0, 1, 1], [], []>} : vector<64x64xf32>, vector<64x32xf32>, vector<64x32xf32> -> vector<64x32xf32>
    %c0_11 = arith.constant 0 : index
    %c0_12 = arith.constant 0 : index
    %11 = vector.load %arg3[%c0_11, %c0_12] : memref<1x32xf32, #tpu.memory_space<vmem>>, vector<1x32xf32>
    %c0_13 = arith.constant 0 : index
    %c0_14 = arith.constant 0 : index
    %12 = vector.load %arg4[%c0_13, %c0_14] : memref<1x32xf32, #tpu.memory_space<vmem>>, vector<1x32xf32>
    %c0_15 = arith.constant 0 : index
    %c0_16 = arith.constant 0 : index
    %13 = vector.load %arg5[%c0_15, %c0_16] : memref<32x96xf32, #tpu.memory_space<vmem>>, vector<32x96xf32>
    %c0_17 = arith.constant 0 : index
    %c0_18 = arith.constant 0 : index
    %14 = vector.load %arg6[%c0_17, %c0_18] : memref<1x96xf32, #tpu.memory_space<vmem>>, vector<1x96xf32>
    %c0_19 = arith.constant 0 : index
    %c0_20 = arith.constant 0 : index
    %15 = vector.load %arg7[%c0_19, %c0_20] : memref<32x32xf32, #tpu.memory_space<vmem>>, vector<32x32xf32>
    %c0_21 = arith.constant 0 : index
    %c0_22 = arith.constant 0 : index
    %16 = vector.load %arg8[%c0_21, %c0_22] : memref<1x32xf32, #tpu.memory_space<vmem>>, vector<1x32xf32>
    %cst_23 = arith.constant dense<0.000000e+00> : vector<64xf32>
    %17 = vector.multi_reduction <add>, %10, %cst_23 [1] : vector<64x32xf32> to vector<64xf32>
    %18 = vector.shape_cast %17 : vector<64xf32> to vector<64x1xf32>
    %cst_24 = arith.constant 3.200000e+01 : f32
    %19 = vector.broadcast %cst_24 : f32 to vector<64x1xf32>
    %20 = arith.divf %18, %19 : vector<64x1xf32>
    %21 = vector.broadcast %20 : vector<64x1xf32> to vector<64x32xf32>
    %22 = arith.subf %10, %21 : vector<64x32xf32>
    %23 = arith.mulf %22, %22 : vector<64x32xf32>
    %cst_25 = arith.constant dense<0.000000e+00> : vector<64xf32>
    %24 = vector.multi_reduction <add>, %23, %cst_25 [1] : vector<64x32xf32> to vector<64xf32>
    %25 = vector.shape_cast %24 : vector<64xf32> to vector<64x1xf32>
    %cst_26 = arith.constant 3.200000e+01 : f32
    %26 = vector.broadcast %cst_26 : f32 to vector<64x1xf32>
    %27 = arith.divf %25, %26 : vector<64x1xf32>
    %28 = vector.broadcast %20 : vector<64x1xf32> to vector<64x32xf32>
    %29 = arith.subf %10, %28 : vector<64x32xf32>
    %cst_27 = arith.constant 9.99999974E-6 : f32
    %30 = vector.broadcast %cst_27 : f32 to vector<64x1xf32>
    %31 = arith.addf %27, %30 : vector<64x1xf32>
    %32 = math.rsqrt %31 : vector<64x1xf32>
    %33 = vector.broadcast %32 : vector<64x1xf32> to vector<64x32xf32>
    %34 = arith.mulf %29, %33 : vector<64x32xf32>
    %35 = vector.broadcast %11 : vector<1x32xf32> to vector<64x32xf32>
    %36 = arith.mulf %34, %35 : vector<64x32xf32>
    %37 = vector.broadcast %12 : vector<1x32xf32> to vector<64x32xf32>
    %38 = arith.addf %36, %37 : vector<64x32xf32>
    %cst_28 = arith.constant dense<0.000000e+00> : vector<64x96xf32>
    %39 = tpu.matmul %38, %13, %cst_28 {dimension_numbers = #tpu.dot_dimension_numbers<[1], [0], [0], [1], [0, 0, 1, 1], [], []>} : vector<64x32xf32>, vector<32x96xf32>, vector<64x96xf32> -> vector<64x96xf32>
    %40 = vector.broadcast %14 : vector<1x96xf32> to vector<64x96xf32>
    %41 = arith.addf %39, %40 : vector<64x96xf32>
    %cst_29 = arith.constant 0.000000e+00 : f32
    %42 = vector.broadcast %cst_29 : f32 to vector<64x32xf32>
    %43 = vector.extract_strided_slice %41 {offsets = [0, 0], sizes = [64, 16], strides = [1, 1]} : vector<64x96xf32> to vector<64x16xf32>
    %44 = vector.extract_strided_slice %41 {offsets = [0, 32], sizes = [64, 16], strides = [1, 1]} : vector<64x96xf32> to vector<64x16xf32>
    %45 = vector.extract_strided_slice %41 {offsets = [0, 64], sizes = [64, 16], strides = [1, 1]} : vector<64x96xf32> to vector<64x16xf32>
    %cst_30 = arith.constant dense<0.000000e+00> : vector<64x64xf32>
    %46 = tpu.matmul %43, %44, %cst_30 {dimension_numbers = #tpu.dot_dimension_numbers<[1], [1], [0], [0], [0, 0, 1, 0], [], []>} : vector<64x16xf32>, vector<64x16xf32>, vector<64x64xf32> -> vector<64x64xf32>
    %cst_31 = arith.constant 2.500000e-01 : f32
    %47 = vector.broadcast %cst_31 : f32 to vector<64x64xf32>
    %48 = arith.mulf %46, %47 : vector<64x64xf32>
    %49 = arith.addf %48, %9 : vector<64x64xf32>
    %cst_32 = arith.constant dense<0xFF800000> : vector<64xf32>
    %50 = vector.multi_reduction <maximumf>, %49, %cst_32 [1] : vector<64x64xf32> to vector<64xf32>
    %51 = vector.shape_cast %50 : vector<64xf32> to vector<64x1xf32>
    %52 = vector.broadcast %51 : vector<64x1xf32> to vector<64x64xf32>
    %53 = arith.subf %49, %52 : vector<64x64xf32>
    %54 = math.exp %53 : vector<64x64xf32>
    %cst_33 = arith.constant dense<0.000000e+00> : vector<64xf32>
    %55 = vector.multi_reduction <add>, %54, %cst_33 [1] : vector<64x64xf32> to vector<64xf32>
    %56 = vector.shape_cast %55 : vector<64xf32> to vector<64x1xf32>
    %57 = vector.broadcast %56 : vector<64x1xf32> to vector<64x64xf32>
    %58 = arith.divf %54, %57 : vector<64x64xf32>
    %cst_34 = arith.constant dense<0.000000e+00> : vector<64x16xf32>
    %59 = tpu.matmul %58, %45, %cst_34 {dimension_numbers = #tpu.dot_dimension_numbers<[1], [0], [0], [1], [0, 0, 1, 1], [], []>} : vector<64x64xf32>, vector<64x16xf32>, vector<64x16xf32> -> vector<64x16xf32>
    %60 = vector.extract_strided_slice %15 {offsets = [0, 0], sizes = [16, 32], strides = [1, 1]} : vector<32x32xf32> to vector<16x32xf32>
    %cst_35 = arith.constant dense<0.000000e+00> : vector<64x32xf32>
    %61 = tpu.matmul %59, %60, %cst_35 {dimension_numbers = #tpu.dot_dimension_numbers<[1], [0], [0], [1], [0, 0, 1, 1], [], []>} : vector<64x16xf32>, vector<16x32xf32>, vector<64x32xf32> -> vector<64x32xf32>
    %62 = arith.addf %42, %61 : vector<64x32xf32>
    %63 = vector.extract_strided_slice %41 {offsets = [0, 16], sizes = [64, 16], strides = [1, 1]} : vector<64x96xf32> to vector<64x16xf32>
    %64 = vector.extract_strided_slice %41 {offsets = [0, 48], sizes = [64, 16], strides = [1, 1]} : vector<64x96xf32> to vector<64x16xf32>
    %65 = vector.extract_strided_slice %41 {offsets = [0, 80], sizes = [64, 16], strides = [1, 1]} : vector<64x96xf32> to vector<64x16xf32>
    %cst_36 = arith.constant dense<0.000000e+00> : vector<64x64xf32>
    %66 = tpu.matmul %63, %64, %cst_36 {dimension_numbers = #tpu.dot_dimension_numbers<[1], [1], [0], [0], [0, 0, 1, 0], [], []>} : vector<64x16xf32>, vector<64x16xf32>, vector<64x64xf32> -> vector<64x64xf32>
    %cst_37 = arith.constant 2.500000e-01 : f32
    %67 = vector.broadcast %cst_37 : f32 to vector<64x64xf32>
    %68 = arith.mulf %66, %67 : vector<64x64xf32>
    %69 = arith.addf %68, %9 : vector<64x64xf32>
    %cst_38 = arith.constant dense<0xFF800000> : vector<64xf32>
    %70 = vector.multi_reduction <maximumf>, %69, %cst_38 [1] : vector<64x64xf32> to vector<64xf32>
    %71 = vector.shape_cast %70 : vector<64xf32> to vector<64x1xf32>
    %72 = vector.broadcast %71 : vector<64x1xf32> to vector<64x64xf32>
    %73 = arith.subf %69, %72 : vector<64x64xf32>
    %74 = math.exp %73 : vector<64x64xf32>
    %cst_39 = arith.constant dense<0.000000e+00> : vector<64xf32>
    %75 = vector.multi_reduction <add>, %74, %cst_39 [1] : vector<64x64xf32> to vector<64xf32>
    %76 = vector.shape_cast %75 : vector<64xf32> to vector<64x1xf32>
    %77 = vector.broadcast %76 : vector<64x1xf32> to vector<64x64xf32>
    %78 = arith.divf %74, %77 : vector<64x64xf32>
    %cst_40 = arith.constant dense<0.000000e+00> : vector<64x16xf32>
    %79 = tpu.matmul %78, %65, %cst_40 {dimension_numbers = #tpu.dot_dimension_numbers<[1], [0], [0], [1], [0, 0, 1, 1], [], []>} : vector<64x64xf32>, vector<64x16xf32>, vector<64x16xf32> -> vector<64x16xf32>
    %80 = vector.extract_strided_slice %15 {offsets = [16, 0], sizes = [16, 32], strides = [1, 1]} : vector<32x32xf32> to vector<16x32xf32>
    %cst_41 = arith.constant dense<0.000000e+00> : vector<64x32xf32>
    %81 = tpu.matmul %79, %80, %cst_41 {dimension_numbers = #tpu.dot_dimension_numbers<[1], [0], [0], [1], [0, 0, 1, 1], [], []>} : vector<64x16xf32>, vector<16x32xf32>, vector<64x32xf32> -> vector<64x32xf32>
    %82 = arith.addf %62, %81 : vector<64x32xf32>
    %83 = vector.broadcast %16 : vector<1x32xf32> to vector<64x32xf32>
    %84 = arith.addf %82, %83 : vector<64x32xf32>
    %cst_42 = arith.constant 0.000000e+00 : f32
    %85 = vector.broadcast %cst_42 : f32 to vector<64x32xf32>
    %86 = arith.cmpf olt, %1, %85 : vector<64x32xf32>
    %87 = math.ceil %1 : vector<64x32xf32>
    %88 = math.floor %1 : vector<64x32xf32>
    %89 = arith.select %86, %87, %88 : vector<64x32xi1>, vector<64x32xf32>
    %90 = arith.addf %89, %84 : vector<64x32xf32>
    %c0_43 = arith.constant 0 : index
    %c0_44 = arith.constant 0 : index
    %91 = vector.load %arg9[%c0_43, %c0_44] : memref<1x32xf32, #tpu.memory_space<vmem>>, vector<1x32xf32>
    %c0_45 = arith.constant 0 : index
    %c0_46 = arith.constant 0 : index
    %92 = vector.load %arg10[%c0_45, %c0_46] : memref<1x32xf32, #tpu.memory_space<vmem>>, vector<1x32xf32>
    %c0_47 = arith.constant 0 : index
    %c0_48 = arith.constant 0 : index
    %93 = vector.load %arg11[%c0_47, %c0_48] : memref<32x128xf32, #tpu.memory_space<vmem>>, vector<32x128xf32>
    %c0_49 = arith.constant 0 : index
    %c0_50 = arith.constant 0 : index
    %94 = vector.load %arg12[%c0_49, %c0_50] : memref<1x128xf32, #tpu.memory_space<vmem>>, vector<1x128xf32>
    %c0_51 = arith.constant 0 : index
    %c0_52 = arith.constant 0 : index
    %95 = vector.load %arg13[%c0_51, %c0_52] : memref<128x32xf32, #tpu.memory_space<vmem>>, vector<128x32xf32>
    %c0_53 = arith.constant 0 : index
    %c0_54 = arith.constant 0 : index
    %96 = vector.load %arg14[%c0_53, %c0_54] : memref<1x32xf32, #tpu.memory_space<vmem>>, vector<1x32xf32>
    %cst_55 = arith.constant dense<0.000000e+00> : vector<64xf32>
    %97 = vector.multi_reduction <add>, %90, %cst_55 [1] : vector<64x32xf32> to vector<64xf32>
    %98 = vector.shape_cast %97 : vector<64xf32> to vector<64x1xf32>
    %cst_56 = arith.constant 3.200000e+01 : f32
    %99 = vector.broadcast %cst_56 : f32 to vector<64x1xf32>
    %100 = arith.divf %98, %99 : vector<64x1xf32>
    %101 = vector.broadcast %100 : vector<64x1xf32> to vector<64x32xf32>
    %102 = arith.subf %90, %101 : vector<64x32xf32>
    %103 = arith.mulf %102, %102 : vector<64x32xf32>
    %cst_57 = arith.constant dense<0.000000e+00> : vector<64xf32>
    %104 = vector.multi_reduction <add>, %103, %cst_57 [1] : vector<64x32xf32> to vector<64xf32>
    %105 = vector.shape_cast %104 : vector<64xf32> to vector<64x1xf32>
    %cst_58 = arith.constant 3.200000e+01 : f32
    %106 = vector.broadcast %cst_58 : f32 to vector<64x1xf32>
    %107 = arith.divf %105, %106 : vector<64x1xf32>
    %108 = vector.broadcast %100 : vector<64x1xf32> to vector<64x32xf32>
    %109 = arith.subf %90, %108 : vector<64x32xf32>
    %cst_59 = arith.constant 9.99999974E-6 : f32
    %110 = vector.broadcast %cst_59 : f32 to vector<64x1xf32>
    %111 = arith.addf %107, %110 : vector<64x1xf32>
    %112 = math.rsqrt %111 : vector<64x1xf32>
    %113 = vector.broadcast %112 : vector<64x1xf32> to vector<64x32xf32>
    %114 = arith.mulf %109, %113 : vector<64x32xf32>
    %115 = vector.broadcast %91 : vector<1x32xf32> to vector<64x32xf32>
    %116 = arith.mulf %114, %115 : vector<64x32xf32>
    %117 = vector.broadcast %92 : vector<1x32xf32> to vector<64x32xf32>
    %118 = arith.addf %116, %117 : vector<64x32xf32>
    %cst_60 = arith.constant dense<0.000000e+00> : vector<64x128xf32>
    %119 = tpu.matmul %118, %93, %cst_60 {dimension_numbers = #tpu.dot_dimension_numbers<[1], [0], [0], [1], [0, 0, 1, 1], [], []>} : vector<64x32xf32>, vector<32x128xf32>, vector<64x128xf32> -> vector<64x128xf32>
    %120 = vector.broadcast %94 : vector<1x128xf32> to vector<64x128xf32>
    %121 = arith.addf %119, %120 : vector<64x128xf32>
    %cst_61 = arith.constant 5.000000e-01 : f32
    %122 = vector.broadcast %cst_61 : f32 to vector<64x128xf32>
    %123 = arith.mulf %122, %121 : vector<64x128xf32>
    %cst_62 = arith.constant 0.707106769 : f32
    %124 = vector.broadcast %cst_62 : f32 to vector<64x128xf32>
    %125 = arith.mulf %121, %124 : vector<64x128xf32>
    %cst_63 = arith.constant 0.000000e+00 : f32
    %126 = vector.broadcast %cst_63 : f32 to vector<64x128xf32>
    %127 = arith.cmpf oge, %125, %126 : vector<64x128xf32>
    %cst_64 = arith.constant 1.000000e+00 : f32
    %cst_65 = arith.constant -1.000000e+00 : f32
    %128 = vector.broadcast %cst_64 : f32 to vector<64x128xf32>
    %129 = vector.broadcast %cst_65 : f32 to vector<64x128xf32>
    %130 = arith.select %127, %128, %129 : vector<64x128xi1>, vector<64x128xf32>
    %131 = math.absf %125 : vector<64x128xf32>
    %cst_66 = arith.constant 0.327591091 : f32
    %132 = vector.broadcast %cst_66 : f32 to vector<64x128xf32>
    %133 = arith.mulf %132, %131 : vector<64x128xf32>
    %cst_67 = arith.constant 1.000000e+00 : f32
    %134 = vector.broadcast %cst_67 : f32 to vector<64x128xf32>
    %135 = arith.addf %134, %133 : vector<64x128xf32>
    %cst_68 = arith.constant 1.000000e+00 : f32
    %136 = vector.broadcast %cst_68 : f32 to vector<64x128xf32>
    %137 = arith.divf %136, %135 : vector<64x128xf32>
    %cst_69 = arith.constant 1.06140542 : f32
    %138 = vector.broadcast %cst_69 : f32 to vector<64x128xf32>
    %139 = arith.mulf %138, %137 : vector<64x128xf32>
    %cst_70 = arith.constant -1.45315206 : f32
    %140 = vector.broadcast %cst_70 : f32 to vector<64x128xf32>
    %141 = arith.addf %139, %140 : vector<64x128xf32>
    %142 = arith.mulf %141, %137 : vector<64x128xf32>
    %cst_71 = arith.constant 1.42141378 : f32
    %143 = vector.broadcast %cst_71 : f32 to vector<64x128xf32>
    %144 = arith.addf %142, %143 : vector<64x128xf32>
    %145 = arith.mulf %144, %137 : vector<64x128xf32>
    %cst_72 = arith.constant -0.284496725 : f32
    %146 = vector.broadcast %cst_72 : f32 to vector<64x128xf32>
    %147 = arith.addf %145, %146 : vector<64x128xf32>
    %148 = arith.mulf %147, %137 : vector<64x128xf32>
    %cst_73 = arith.constant 0.254829586 : f32
    %149 = vector.broadcast %cst_73 : f32 to vector<64x128xf32>
    %150 = arith.addf %148, %149 : vector<64x128xf32>
    %151 = arith.mulf %150, %137 : vector<64x128xf32>
    %cst_74 = arith.constant 0.000000e+00 : f32
    %152 = vector.broadcast %cst_74 : f32 to vector<64x128xf32>
    %153 = arith.subf %152, %131 : vector<64x128xf32>
    %154 = arith.mulf %153, %131 : vector<64x128xf32>
    %155 = math.exp %154 : vector<64x128xf32>
    %156 = arith.mulf %151, %155 : vector<64x128xf32>
    %cst_75 = arith.constant 1.000000e+00 : f32
    %157 = vector.broadcast %cst_75 : f32 to vector<64x128xf32>
    %158 = arith.subf %157, %156 : vector<64x128xf32>
    %159 = arith.mulf %130, %158 : vector<64x128xf32>
    %cst_76 = arith.constant 1.000000e+00 : f32
    %160 = vector.broadcast %cst_76 : f32 to vector<64x128xf32>
    %161 = arith.addf %160, %159 : vector<64x128xf32>
    %162 = arith.mulf %123, %161 : vector<64x128xf32>
    %cst_77 = arith.constant dense<0.000000e+00> : vector<64x32xf32>
    %163 = tpu.matmul %162, %95, %cst_77 {dimension_numbers = #tpu.dot_dimension_numbers<[1], [0], [0], [1], [0, 0, 1, 1], [], []>} : vector<64x128xf32>, vector<128x32xf32>, vector<64x32xf32> -> vector<64x32xf32>
    %164 = vector.broadcast %96 : vector<1x32xf32> to vector<64x32xf32>
    %165 = arith.addf %163, %164 : vector<64x32xf32>
    %cst_78 = arith.constant 5.000000e-01 : f32
    %166 = vector.broadcast %cst_78 : f32 to vector<64x32xf32>
    %167 = arith.mulf %166, %165 : vector<64x32xf32>
    %cst_79 = arith.constant 0.707106769 : f32
    %168 = vector.broadcast %cst_79 : f32 to vector<64x32xf32>
    %169 = arith.mulf %165, %168 : vector<64x32xf32>
    %cst_80 = arith.constant 0.000000e+00 : f32
    %170 = vector.broadcast %cst_80 : f32 to vector<64x32xf32>
    %171 = arith.cmpf oge, %169, %170 : vector<64x32xf32>
    %cst_81 = arith.constant 1.000000e+00 : f32
    %cst_82 = arith.constant -1.000000e+00 : f32
    %172 = vector.broadcast %cst_81 : f32 to vector<64x32xf32>
    %173 = vector.broadcast %cst_82 : f32 to vector<64x32xf32>
    %174 = arith.select %171, %172, %173 : vector<64x32xi1>, vector<64x32xf32>
    %175 = math.absf %169 : vector<64x32xf32>
    %cst_83 = arith.constant 0.327591091 : f32
    %176 = vector.broadcast %cst_83 : f32 to vector<64x32xf32>
    %177 = arith.mulf %176, %175 : vector<64x32xf32>
    %cst_84 = arith.constant 1.000000e+00 : f32
    %178 = vector.broadcast %cst_84 : f32 to vector<64x32xf32>
    %179 = arith.addf %178, %177 : vector<64x32xf32>
    %cst_85 = arith.constant 1.000000e+00 : f32
    %180 = vector.broadcast %cst_85 : f32 to vector<64x32xf32>
    %181 = arith.divf %180, %179 : vector<64x32xf32>
    %cst_86 = arith.constant 1.06140542 : f32
    %182 = vector.broadcast %cst_86 : f32 to vector<64x32xf32>
    %183 = arith.mulf %182, %181 : vector<64x32xf32>
    %cst_87 = arith.constant -1.45315206 : f32
    %184 = vector.broadcast %cst_87 : f32 to vector<64x32xf32>
    %185 = arith.addf %183, %184 : vector<64x32xf32>
    %186 = arith.mulf %185, %181 : vector<64x32xf32>
    %cst_88 = arith.constant 1.42141378 : f32
    %187 = vector.broadcast %cst_88 : f32 to vector<64x32xf32>
    %188 = arith.addf %186, %187 : vector<64x32xf32>
    %189 = arith.mulf %188, %181 : vector<64x32xf32>
    %cst_89 = arith.constant -0.284496725 : f32
    %190 = vector.broadcast %cst_89 : f32 to vector<64x32xf32>
    %191 = arith.addf %189, %190 : vector<64x32xf32>
    %192 = arith.mulf %191, %181 : vector<64x32xf32>
    %cst_90 = arith.constant 0.254829586 : f32
    %193 = vector.broadcast %cst_90 : f32 to vector<64x32xf32>
    %194 = arith.addf %192, %193 : vector<64x32xf32>
    %195 = arith.mulf %194, %181 : vector<64x32xf32>
    %cst_91 = arith.constant 0.000000e+00 : f32
    %196 = vector.broadcast %cst_91 : f32 to vector<64x32xf32>
    %197 = arith.subf %196, %175 : vector<64x32xf32>
    %198 = arith.mulf %197, %175 : vector<64x32xf32>
    %199 = math.exp %198 : vector<64x32xf32>
    %200 = arith.mulf %195, %199 : vector<64x32xf32>
    %cst_92 = arith.constant 1.000000e+00 : f32
    %201 = vector.broadcast %cst_92 : f32 to vector<64x32xf32>
    %202 = arith.subf %201, %200 : vector<64x32xf32>
    %203 = arith.mulf %174, %202 : vector<64x32xf32>
    %cst_93 = arith.constant 1.000000e+00 : f32
    %204 = vector.broadcast %cst_93 : f32 to vector<64x32xf32>
    %205 = arith.addf %204, %203 : vector<64x32xf32>
    %206 = arith.mulf %167, %205 : vector<64x32xf32>
    %207 = arith.addf %206, %90 : vector<64x32xf32>
    %cst_94 = arith.constant dense<0.000000e+00> : vector<64x32xf32>
    %208 = tpu.matmul %5, %207, %cst_94 {dimension_numbers = #tpu.dot_dimension_numbers<[1], [0], [0], [1], [0, 0, 1, 1], [], []>} : vector<64x64xf32>, vector<64x32xf32>, vector<64x32xf32> -> vector<64x32xf32>
    %c0_95 = arith.constant 0 : index
    %c0_96 = arith.constant 0 : index
    %209 = vector.load %arg15[%c0_95, %c0_96] : memref<1x32xf32, #tpu.memory_space<vmem>>, vector<1x32xf32>
    %c0_97 = arith.constant 0 : index
    %c0_98 = arith.constant 0 : index
    %210 = vector.load %arg16[%c0_97, %c0_98] : memref<1x32xf32, #tpu.memory_space<vmem>>, vector<1x32xf32>
    %c0_99 = arith.constant 0 : index
    %c0_100 = arith.constant 0 : index
    %211 = vector.load %arg17[%c0_99, %c0_100] : memref<32x96xf32, #tpu.memory_space<vmem>>, vector<32x96xf32>
    %c0_101 = arith.constant 0 : index
    %c0_102 = arith.constant 0 : index
    %212 = vector.load %arg18[%c0_101, %c0_102] : memref<1x96xf32, #tpu.memory_space<vmem>>, vector<1x96xf32>
    %c0_103 = arith.constant 0 : index
    %c0_104 = arith.constant 0 : index
    %213 = vector.load %arg19[%c0_103, %c0_104] : memref<32x32xf32, #tpu.memory_space<vmem>>, vector<32x32xf32>
    %c0_105 = arith.constant 0 : index
    %c0_106 = arith.constant 0 : index
    %214 = vector.load %arg20[%c0_105, %c0_106] : memref<1x32xf32, #tpu.memory_space<vmem>>, vector<1x32xf32>
    %cst_107 = arith.constant dense<0.000000e+00> : vector<64xf32>
    %215 = vector.multi_reduction <add>, %208, %cst_107 [1] : vector<64x32xf32> to vector<64xf32>
    %216 = vector.shape_cast %215 : vector<64xf32> to vector<64x1xf32>
    %cst_108 = arith.constant 3.200000e+01 : f32
    %217 = vector.broadcast %cst_108 : f32 to vector<64x1xf32>
    %218 = arith.divf %216, %217 : vector<64x1xf32>
    %219 = vector.broadcast %218 : vector<64x1xf32> to vector<64x32xf32>
    %220 = arith.subf %208, %219 : vector<64x32xf32>
    %221 = arith.mulf %220, %220 : vector<64x32xf32>
    %cst_109 = arith.constant dense<0.000000e+00> : vector<64xf32>
    %222 = vector.multi_reduction <add>, %221, %cst_109 [1] : vector<64x32xf32> to vector<64xf32>
    %223 = vector.shape_cast %222 : vector<64xf32> to vector<64x1xf32>
    %cst_110 = arith.constant 3.200000e+01 : f32
    %224 = vector.broadcast %cst_110 : f32 to vector<64x1xf32>
    %225 = arith.divf %223, %224 : vector<64x1xf32>
    %226 = vector.broadcast %218 : vector<64x1xf32> to vector<64x32xf32>
    %227 = arith.subf %208, %226 : vector<64x32xf32>
    %cst_111 = arith.constant 9.99999974E-6 : f32
    %228 = vector.broadcast %cst_111 : f32 to vector<64x1xf32>
    %229 = arith.addf %225, %228 : vector<64x1xf32>
    %230 = math.rsqrt %229 : vector<64x1xf32>
    %231 = vector.broadcast %230 : vector<64x1xf32> to vector<64x32xf32>
    %232 = arith.mulf %227, %231 : vector<64x32xf32>
    %233 = vector.broadcast %209 : vector<1x32xf32> to vector<64x32xf32>
    %234 = arith.mulf %232, %233 : vector<64x32xf32>
    %235 = vector.broadcast %210 : vector<1x32xf32> to vector<64x32xf32>
    %236 = arith.addf %234, %235 : vector<64x32xf32>
    %cst_112 = arith.constant dense<0.000000e+00> : vector<64x96xf32>
    %237 = tpu.matmul %236, %211, %cst_112 {dimension_numbers = #tpu.dot_dimension_numbers<[1], [0], [0], [1], [0, 0, 1, 1], [], []>} : vector<64x32xf32>, vector<32x96xf32>, vector<64x96xf32> -> vector<64x96xf32>
    %238 = vector.broadcast %212 : vector<1x96xf32> to vector<64x96xf32>
    %239 = arith.addf %237, %238 : vector<64x96xf32>
    %cst_113 = arith.constant 0.000000e+00 : f32
    %240 = vector.broadcast %cst_113 : f32 to vector<64x32xf32>
    %241 = vector.extract_strided_slice %239 {offsets = [0, 0], sizes = [64, 16], strides = [1, 1]} : vector<64x96xf32> to vector<64x16xf32>
    %242 = vector.extract_strided_slice %239 {offsets = [0, 32], sizes = [64, 16], strides = [1, 1]} : vector<64x96xf32> to vector<64x16xf32>
    %243 = vector.extract_strided_slice %239 {offsets = [0, 64], sizes = [64, 16], strides = [1, 1]} : vector<64x96xf32> to vector<64x16xf32>
    %cst_114 = arith.constant dense<0.000000e+00> : vector<64x64xf32>
    %244 = tpu.matmul %241, %242, %cst_114 {dimension_numbers = #tpu.dot_dimension_numbers<[1], [1], [0], [0], [0, 0, 1, 0], [], []>} : vector<64x16xf32>, vector<64x16xf32>, vector<64x64xf32> -> vector<64x64xf32>
    %cst_115 = arith.constant 2.500000e-01 : f32
    %245 = vector.broadcast %cst_115 : f32 to vector<64x64xf32>
    %246 = arith.mulf %244, %245 : vector<64x64xf32>
    %247 = arith.addf %246, %9 : vector<64x64xf32>
    %cst_116 = arith.constant dense<0xFF800000> : vector<64xf32>
    %248 = vector.multi_reduction <maximumf>, %247, %cst_116 [1] : vector<64x64xf32> to vector<64xf32>
    %249 = vector.shape_cast %248 : vector<64xf32> to vector<64x1xf32>
    %250 = vector.broadcast %249 : vector<64x1xf32> to vector<64x64xf32>
    %251 = arith.subf %247, %250 : vector<64x64xf32>
    %252 = math.exp %251 : vector<64x64xf32>
    %cst_117 = arith.constant dense<0.000000e+00> : vector<64xf32>
    %253 = vector.multi_reduction <add>, %252, %cst_117 [1] : vector<64x64xf32> to vector<64xf32>
    %254 = vector.shape_cast %253 : vector<64xf32> to vector<64x1xf32>
    %255 = vector.broadcast %254 : vector<64x1xf32> to vector<64x64xf32>
    %256 = arith.divf %252, %255 : vector<64x64xf32>
    %cst_118 = arith.constant dense<0.000000e+00> : vector<64x16xf32>
    %257 = tpu.matmul %256, %243, %cst_118 {dimension_numbers = #tpu.dot_dimension_numbers<[1], [0], [0], [1], [0, 0, 1, 1], [], []>} : vector<64x64xf32>, vector<64x16xf32>, vector<64x16xf32> -> vector<64x16xf32>
    %258 = vector.extract_strided_slice %213 {offsets = [0, 0], sizes = [16, 32], strides = [1, 1]} : vector<32x32xf32> to vector<16x32xf32>
    %cst_119 = arith.constant dense<0.000000e+00> : vector<64x32xf32>
    %259 = tpu.matmul %257, %258, %cst_119 {dimension_numbers = #tpu.dot_dimension_numbers<[1], [0], [0], [1], [0, 0, 1, 1], [], []>} : vector<64x16xf32>, vector<16x32xf32>, vector<64x32xf32> -> vector<64x32xf32>
    %260 = arith.addf %240, %259 : vector<64x32xf32>
    %261 = vector.extract_strided_slice %239 {offsets = [0, 16], sizes = [64, 16], strides = [1, 1]} : vector<64x96xf32> to vector<64x16xf32>
    %262 = vector.extract_strided_slice %239 {offsets = [0, 48], sizes = [64, 16], strides = [1, 1]} : vector<64x96xf32> to vector<64x16xf32>
    %263 = vector.extract_strided_slice %239 {offsets = [0, 80], sizes = [64, 16], strides = [1, 1]} : vector<64x96xf32> to vector<64x16xf32>
    %cst_120 = arith.constant dense<0.000000e+00> : vector<64x64xf32>
    %264 = tpu.matmul %261, %262, %cst_120 {dimension_numbers = #tpu.dot_dimension_numbers<[1], [1], [0], [0], [0, 0, 1, 0], [], []>} : vector<64x16xf32>, vector<64x16xf32>, vector<64x64xf32> -> vector<64x64xf32>
    %cst_121 = arith.constant 2.500000e-01 : f32
    %265 = vector.broadcast %cst_121 : f32 to vector<64x64xf32>
    %266 = arith.mulf %264, %265 : vector<64x64xf32>
    %267 = arith.addf %266, %9 : vector<64x64xf32>
    %cst_122 = arith.constant dense<0xFF800000> : vector<64xf32>
    %268 = vector.multi_reduction <maximumf>, %267, %cst_122 [1] : vector<64x64xf32> to vector<64xf32>
    %269 = vector.shape_cast %268 : vector<64xf32> to vector<64x1xf32>
    %270 = vector.broadcast %269 : vector<64x1xf32> to vector<64x64xf32>
    %271 = arith.subf %267, %270 : vector<64x64xf32>
    %272 = math.exp %271 : vector<64x64xf32>
    %cst_123 = arith.constant dense<0.000000e+00> : vector<64xf32>
    %273 = vector.multi_reduction <add>, %272, %cst_123 [1] : vector<64x64xf32> to vector<64xf32>
    %274 = vector.shape_cast %273 : vector<64xf32> to vector<64x1xf32>
    %275 = vector.broadcast %274 : vector<64x1xf32> to vector<64x64xf32>
    %276 = arith.divf %272, %275 : vector<64x64xf32>
    %cst_124 = arith.constant dense<0.000000e+00> : vector<64x16xf32>
    %277 = tpu.matmul %276, %263, %cst_124 {dimension_numbers = #tpu.dot_dimension_numbers<[1], [0], [0], [1], [0, 0, 1, 1], [], []>} : vector<64x64xf32>, vector<64x16xf32>, vector<64x16xf32> -> vector<64x16xf32>
    %278 = vector.extract_strided_slice %213 {offsets = [16, 0], sizes = [16, 32], strides = [1, 1]} : vector<32x32xf32> to vector<16x32xf32>
    %cst_125 = arith.constant dense<0.000000e+00> : vector<64x32xf32>
    %279 = tpu.matmul %277, %278, %cst_125 {dimension_numbers = #tpu.dot_dimension_numbers<[1], [0], [0], [1], [0, 0, 1, 1], [], []>} : vector<64x16xf32>, vector<16x32xf32>, vector<64x32xf32> -> vector<64x32xf32>
    %280 = arith.addf %260, %279 : vector<64x32xf32>
    %281 = vector.broadcast %214 : vector<1x32xf32> to vector<64x32xf32>
    %282 = arith.addf %280, %281 : vector<64x32xf32>
    %cst_126 = arith.constant dense<0.000000e+00> : vector<64x32xf32>
    %283 = tpu.matmul %7, %282, %cst_126 {dimension_numbers = #tpu.dot_dimension_numbers<[1], [0], [0], [1], [0, 0, 1, 1], [], []>} : vector<64x64xf32>, vector<64x32xf32>, vector<64x32xf32> -> vector<64x32xf32>
    %284 = arith.addf %207, %283 : vector<64x32xf32>
    %c0_127 = arith.constant 0 : index
    %c0_128 = arith.constant 0 : index
    %285 = vector.load %arg21[%c0_127, %c0_128] : memref<1x32xf32, #tpu.memory_space<vmem>>, vector<1x32xf32>
    %c0_129 = arith.constant 0 : index
    %c0_130 = arith.constant 0 : index
    %286 = vector.load %arg22[%c0_129, %c0_130] : memref<1x32xf32, #tpu.memory_space<vmem>>, vector<1x32xf32>
    %c0_131 = arith.constant 0 : index
    %c0_132 = arith.constant 0 : index
    %287 = vector.load %arg23[%c0_131, %c0_132] : memref<32x128xf32, #tpu.memory_space<vmem>>, vector<32x128xf32>
    %c0_133 = arith.constant 0 : index
    %c0_134 = arith.constant 0 : index
    %288 = vector.load %arg24[%c0_133, %c0_134] : memref<1x128xf32, #tpu.memory_space<vmem>>, vector<1x128xf32>
    %c0_135 = arith.constant 0 : index
    %c0_136 = arith.constant 0 : index
    %289 = vector.load %arg25[%c0_135, %c0_136] : memref<128x32xf32, #tpu.memory_space<vmem>>, vector<128x32xf32>
    %c0_137 = arith.constant 0 : index
    %c0_138 = arith.constant 0 : index
    %290 = vector.load %arg26[%c0_137, %c0_138] : memref<1x32xf32, #tpu.memory_space<vmem>>, vector<1x32xf32>
    %cst_139 = arith.constant dense<0.000000e+00> : vector<64xf32>
    %291 = vector.multi_reduction <add>, %284, %cst_139 [1] : vector<64x32xf32> to vector<64xf32>
    %292 = vector.shape_cast %291 : vector<64xf32> to vector<64x1xf32>
    %cst_140 = arith.constant 3.200000e+01 : f32
    %293 = vector.broadcast %cst_140 : f32 to vector<64x1xf32>
    %294 = arith.divf %292, %293 : vector<64x1xf32>
    %295 = vector.broadcast %294 : vector<64x1xf32> to vector<64x32xf32>
    %296 = arith.subf %284, %295 : vector<64x32xf32>
    %297 = arith.mulf %296, %296 : vector<64x32xf32>
    %cst_141 = arith.constant dense<0.000000e+00> : vector<64xf32>
    %298 = vector.multi_reduction <add>, %297, %cst_141 [1] : vector<64x32xf32> to vector<64xf32>
    %299 = vector.shape_cast %298 : vector<64xf32> to vector<64x1xf32>
    %cst_142 = arith.constant 3.200000e+01 : f32
    %300 = vector.broadcast %cst_142 : f32 to vector<64x1xf32>
    %301 = arith.divf %299, %300 : vector<64x1xf32>
    %302 = vector.broadcast %294 : vector<64x1xf32> to vector<64x32xf32>
    %303 = arith.subf %284, %302 : vector<64x32xf32>
    %cst_143 = arith.constant 9.99999974E-6 : f32
    %304 = vector.broadcast %cst_143 : f32 to vector<64x1xf32>
    %305 = arith.addf %301, %304 : vector<64x1xf32>
    %306 = math.rsqrt %305 : vector<64x1xf32>
    %307 = vector.broadcast %306 : vector<64x1xf32> to vector<64x32xf32>
    %308 = arith.mulf %303, %307 : vector<64x32xf32>
    %309 = vector.broadcast %285 : vector<1x32xf32> to vector<64x32xf32>
    %310 = arith.mulf %308, %309 : vector<64x32xf32>
    %311 = vector.broadcast %286 : vector<1x32xf32> to vector<64x32xf32>
    %312 = arith.addf %310, %311 : vector<64x32xf32>
    %cst_144 = arith.constant dense<0.000000e+00> : vector<64x128xf32>
    %313 = tpu.matmul %312, %287, %cst_144 {dimension_numbers = #tpu.dot_dimension_numbers<[1], [0], [0], [1], [0, 0, 1, 1], [], []>} : vector<64x32xf32>, vector<32x128xf32>, vector<64x128xf32> -> vector<64x128xf32>
    %314 = vector.broadcast %288 : vector<1x128xf32> to vector<64x128xf32>
    %315 = arith.addf %313, %314 : vector<64x128xf32>
    %cst_145 = arith.constant 5.000000e-01 : f32
    %316 = vector.broadcast %cst_145 : f32 to vector<64x128xf32>
    %317 = arith.mulf %316, %315 : vector<64x128xf32>
    %cst_146 = arith.constant 0.707106769 : f32
    %318 = vector.broadcast %cst_146 : f32 to vector<64x128xf32>
    %319 = arith.mulf %315, %318 : vector<64x128xf32>
    %cst_147 = arith.constant 0.000000e+00 : f32
    %320 = vector.broadcast %cst_147 : f32 to vector<64x128xf32>
    %321 = arith.cmpf oge, %319, %320 : vector<64x128xf32>
    %cst_148 = arith.constant 1.000000e+00 : f32
    %cst_149 = arith.constant -1.000000e+00 : f32
    %322 = vector.broadcast %cst_148 : f32 to vector<64x128xf32>
    %323 = vector.broadcast %cst_149 : f32 to vector<64x128xf32>
    %324 = arith.select %321, %322, %323 : vector<64x128xi1>, vector<64x128xf32>
    %325 = math.absf %319 : vector<64x128xf32>
    %cst_150 = arith.constant 0.327591091 : f32
    %326 = vector.broadcast %cst_150 : f32 to vector<64x128xf32>
    %327 = arith.mulf %326, %325 : vector<64x128xf32>
    %cst_151 = arith.constant 1.000000e+00 : f32
    %328 = vector.broadcast %cst_151 : f32 to vector<64x128xf32>
    %329 = arith.addf %328, %327 : vector<64x128xf32>
    %cst_152 = arith.constant 1.000000e+00 : f32
    %330 = vector.broadcast %cst_152 : f32 to vector<64x128xf32>
    %331 = arith.divf %330, %329 : vector<64x128xf32>
    %cst_153 = arith.constant 1.06140542 : f32
    %332 = vector.broadcast %cst_153 : f32 to vector<64x128xf32>
    %333 = arith.mulf %332, %331 : vector<64x128xf32>
    %cst_154 = arith.constant -1.45315206 : f32
    %334 = vector.broadcast %cst_154 : f32 to vector<64x128xf32>
    %335 = arith.addf %333, %334 : vector<64x128xf32>
    %336 = arith.mulf %335, %331 : vector<64x128xf32>
    %cst_155 = arith.constant 1.42141378 : f32
    %337 = vector.broadcast %cst_155 : f32 to vector<64x128xf32>
    %338 = arith.addf %336, %337 : vector<64x128xf32>
    %339 = arith.mulf %338, %331 : vector<64x128xf32>
    %cst_156 = arith.constant -0.284496725 : f32
    %340 = vector.broadcast %cst_156 : f32 to vector<64x128xf32>
    %341 = arith.addf %339, %340 : vector<64x128xf32>
    %342 = arith.mulf %341, %331 : vector<64x128xf32>
    %cst_157 = arith.constant 0.254829586 : f32
    %343 = vector.broadcast %cst_157 : f32 to vector<64x128xf32>
    %344 = arith.addf %342, %343 : vector<64x128xf32>
    %345 = arith.mulf %344, %331 : vector<64x128xf32>
    %cst_158 = arith.constant 0.000000e+00 : f32
    %346 = vector.broadcast %cst_158 : f32 to vector<64x128xf32>
    %347 = arith.subf %346, %325 : vector<64x128xf32>
    %348 = arith.mulf %347, %325 : vector<64x128xf32>
    %349 = math.exp %348 : vector<64x128xf32>
    %350 = arith.mulf %345, %349 : vector<64x128xf32>
    %cst_159 = arith.constant 1.000000e+00 : f32
    %351 = vector.broadcast %cst_159 : f32 to vector<64x128xf32>
    %352 = arith.subf %351, %350 : vector<64x128xf32>
    %353 = arith.mulf %324, %352 : vector<64x128xf32>
    %cst_160 = arith.constant 1.000000e+00 : f32
    %354 = vector.broadcast %cst_160 : f32 to vector<64x128xf32>
    %355 = arith.addf %354, %353 : vector<64x128xf32>
    %356 = arith.mulf %317, %355 : vector<64x128xf32>
    %cst_161 = arith.constant dense<0.000000e+00> : vector<64x32xf32>
    %357 = tpu.matmul %356, %289, %cst_161 {dimension_numbers = #tpu.dot_dimension_numbers<[1], [0], [0], [1], [0, 0, 1, 1], [], []>} : vector<64x128xf32>, vector<128x32xf32>, vector<64x32xf32> -> vector<64x32xf32>
    %358 = vector.broadcast %290 : vector<1x32xf32> to vector<64x32xf32>
    %359 = arith.addf %357, %358 : vector<64x32xf32>
    %cst_162 = arith.constant 5.000000e-01 : f32
    %360 = vector.broadcast %cst_162 : f32 to vector<64x32xf32>
    %361 = arith.mulf %360, %359 : vector<64x32xf32>
    %cst_163 = arith.constant 0.707106769 : f32
    %362 = vector.broadcast %cst_163 : f32 to vector<64x32xf32>
    %363 = arith.mulf %359, %362 : vector<64x32xf32>
    %cst_164 = arith.constant 0.000000e+00 : f32
    %364 = vector.broadcast %cst_164 : f32 to vector<64x32xf32>
    %365 = arith.cmpf oge, %363, %364 : vector<64x32xf32>
    %cst_165 = arith.constant 1.000000e+00 : f32
    %cst_166 = arith.constant -1.000000e+00 : f32
    %366 = vector.broadcast %cst_165 : f32 to vector<64x32xf32>
    %367 = vector.broadcast %cst_166 : f32 to vector<64x32xf32>
    %368 = arith.select %365, %366, %367 : vector<64x32xi1>, vector<64x32xf32>
    %369 = math.absf %363 : vector<64x32xf32>
    %cst_167 = arith.constant 0.327591091 : f32
    %370 = vector.broadcast %cst_167 : f32 to vector<64x32xf32>
    %371 = arith.mulf %370, %369 : vector<64x32xf32>
    %cst_168 = arith.constant 1.000000e+00 : f32
    %372 = vector.broadcast %cst_168 : f32 to vector<64x32xf32>
    %373 = arith.addf %372, %371 : vector<64x32xf32>
    %cst_169 = arith.constant 1.000000e+00 : f32
    %374 = vector.broadcast %cst_169 : f32 to vector<64x32xf32>
    %375 = arith.divf %374, %373 : vector<64x32xf32>
    %cst_170 = arith.constant 1.06140542 : f32
    %376 = vector.broadcast %cst_170 : f32 to vector<64x32xf32>
    %377 = arith.mulf %376, %375 : vector<64x32xf32>
    %cst_171 = arith.constant -1.45315206 : f32
    %378 = vector.broadcast %cst_171 : f32 to vector<64x32xf32>
    %379 = arith.addf %377, %378 : vector<64x32xf32>
    %380 = arith.mulf %379, %375 : vector<64x32xf32>
    %cst_172 = arith.constant 1.42141378 : f32
    %381 = vector.broadcast %cst_172 : f32 to vector<64x32xf32>
    %382 = arith.addf %380, %381 : vector<64x32xf32>
    %383 = arith.mulf %382, %375 : vector<64x32xf32>
    %cst_173 = arith.constant -0.284496725 : f32
    %384 = vector.broadcast %cst_173 : f32 to vector<64x32xf32>
    %385 = arith.addf %383, %384 : vector<64x32xf32>
    %386 = arith.mulf %385, %375 : vector<64x32xf32>
    %cst_174 = arith.constant 0.254829586 : f32
    %387 = vector.broadcast %cst_174 : f32 to vector<64x32xf32>
    %388 = arith.addf %386, %387 : vector<64x32xf32>
    %389 = arith.mulf %388, %375 : vector<64x32xf32>
    %cst_175 = arith.constant 0.000000e+00 : f32
    %390 = vector.broadcast %cst_175 : f32 to vector<64x32xf32>
    %391 = arith.subf %390, %369 : vector<64x32xf32>
    %392 = arith.mulf %391, %369 : vector<64x32xf32>
    %393 = math.exp %392 : vector<64x32xf32>
    %394 = arith.mulf %389, %393 : vector<64x32xf32>
    %cst_176 = arith.constant 1.000000e+00 : f32
    %395 = vector.broadcast %cst_176 : f32 to vector<64x32xf32>
    %396 = arith.subf %395, %394 : vector<64x32xf32>
    %397 = arith.mulf %368, %396 : vector<64x32xf32>
    %cst_177 = arith.constant 1.000000e+00 : f32
    %398 = vector.broadcast %cst_177 : f32 to vector<64x32xf32>
    %399 = arith.addf %398, %397 : vector<64x32xf32>
    %400 = arith.mulf %361, %399 : vector<64x32xf32>
    %401 = arith.addf %400, %284 : vector<64x32xf32>
    %c0_178 = arith.constant 0 : index
    %c0_179 = arith.constant 0 : index
    %c0_180 = arith.constant 0 : index
    %402 = vector.load %arg27[%c0_178, %c0_179, %c0_180] : memref<1x64x32xf32, #tpu.memory_space<vmem>>, vector<1x64x32xf32>
    %403 = vector.shape_cast %402 : vector<1x64x32xf32> to vector<64x32xf32>
    %404 = vector.shape_cast %401 : vector<64x32xf32> to vector<1x64x32xf32>
    tpu.vector_store %arg27[%c0_178, %c0_179, %c0_180], %404 {strides = array<i32>} : memref<1x64x32xf32, #tpu.memory_space<vmem>>, vector<1x64x32xf32>,
    return
  }
  func.func @transform_0(%arg0: i32) -> (i32, i32, i32) {
    %c0_i32 = arith.constant 0 : i32
    %c0_i32_0 = arith.constant 0 : i32
    %c0_i32_1 = arith.constant 0 : i32
    return %arg0, %c0_i32, %c0_i32_0 : i32, i32, i32
  }
  func.func @transform_1(%arg0: i32) -> (i32, i32, i32) {
    %c0_i32 = arith.constant 0 : i32
    %c0_i32_0 = arith.constant 0 : i32
    %c0_i32_1 = arith.constant 0 : i32
    %c0_i32_2 = arith.constant 0 : i32
    return %c0_i32, %c0_i32_0, %c0_i32_1 : i32, i32, i32
  }
  func.func @transform_2(%arg0: i32) -> (i32, i32) {
    %c0_i32 = arith.constant 0 : i32
    %c0_i32_0 = arith.constant 0 : i32
    %c0_i32_1 = arith.constant 0 : i32
    return %c0_i32, %c0_i32_0 : i32, i32
  }
  func.func @transform_3(%arg0: i32) -> (i32, i32) {
    %c0_i32 = arith.constant 0 : i32
    %c0_i32_0 = arith.constant 0 : i32
    %c0_i32_1 = arith.constant 0 : i32
    return %c0_i32, %c0_i32_0 : i32, i32
  }
  func.func @transform_4(%arg0: i32) -> (i32, i32) {
    %c0_i32 = arith.constant 0 : i32
    %c0_i32_0 = arith.constant 0 : i32
    %c0_i32_1 = arith.constant 0 : i32
    return %c0_i32, %c0_i32_0 : i32, i32
  }
  func.func @transform_5(%arg0: i32) -> (i32, i32) {
    %c0_i32 = arith.constant 0 : i32
    %c0_i32_0 = arith.constant 0 : i32
    %c0_i32_1 = arith.constant 0 : i32
    return %c0_i32, %c0_i32_0 : i32, i32
  }
  func.func @transform_6(%arg0: i32) -> (i32, i32) {
    %c0_i32 = arith.constant 0 : i32
    %c0_i32_0 = arith.constant 0 : i32
    %c0_i32_1 = arith.constant 0 : i32
    return %c0_i32, %c0_i32_0 : i32, i32
  }
  func.func @transform_7(%arg0: i32) -> (i32, i32) {
    %c0_i32 = arith.constant 0 : i32
    %c0_i32_0 = arith.constant 0 : i32
    %c0_i32_1 = arith.constant 0 : i32
    return %c0_i32, %c0_i32_0 : i32, i32
  }
  func.func @transform_8(%arg0: i32) -> (i32, i32) {
    %c0_i32 = arith.constant 0 : i32
    %c0_i32_0 = arith.constant 0 : i32
    %c0_i32_1 = arith.constant 0 : i32
    return %c0_i32, %c0_i32_0 : i32, i32
  }
  func.func @transform_9(%arg0: i32) -> (i32, i32) {
    %c0_i32 = arith.constant 0 : i32
    %c0_i32_0 = arith.constant 0 : i32
    %c0_i32_1 = arith.constant 0 : i32
    return %c0_i32, %c0_i32_0 : i32, i32
  }
  func.func @transform_10(%arg0: i32) -> (i32, i32) {
    %c0_i32 = arith.constant 0 : i32
    %c0_i32_0 = arith.constant 0 : i32
    %c0_i32_1 = arith.constant 0 : i32
    return %c0_i32, %c0_i32_0 : i32, i32
  }
  func.func @transform_11(%arg0: i32) -> (i32, i32) {
    %c0_i32 = arith.constant 0 : i32
    %c0_i32_0 = arith.constant 0 : i32
    %c0_i32_1 = arith.constant 0 : i32
    return %c0_i32, %c0_i32_0 : i32, i32
  }
  func.func @transform_12(%arg0: i32) -> (i32, i32) {
    %c0_i32 = arith.constant 0 : i32
    %c0_i32_0 = arith.constant 0 : i32
    %c0_i32_1 = arith.constant 0 : i32
    return %c0_i32, %c0_i32_0 : i32, i32
  }
  func.func @transform_13(%arg0: i32) -> (i32, i32) {
    %c0_i32 = arith.constant 0 : i32
    %c0_i32_0 = arith.constant 0 : i32
    %c0_i32_1 = arith.constant 0 : i32
    return %c0_i32, %c0_i32_0 : i32, i32
  }
  func.func @transform_14(%arg0: i32) -> (i32, i32) {
    %c0_i32 = arith.constant 0 : i32
    %c0_i32_0 = arith.constant 0 : i32
    %c0_i32_1 = arith.constant 0 : i32
    return %c0_i32, %c0_i32_0 : i32, i32
  }
  func.func @transform_15(%arg0: i32) -> (i32, i32) {
    %c0_i32 = arith.constant 0 : i32
    %c0_i32_0 = arith.constant 0 : i32
    %c0_i32_1 = arith.constant 0 : i32
    return %c0_i32, %c0_i32_0 : i32, i32
  }
  func.func @transform_16(%arg0: i32) -> (i32, i32) {
    %c0_i32 = arith.constant 0 : i32
    %c0_i32_0 = arith.constant 0 : i32
    %c0_i32_1 = arith.constant 0 : i32
    return %c0_i32, %c0_i32_0 : i32, i32
  }
  func.func @transform_17(%arg0: i32) -> (i32, i32) {
    %c0_i32 = arith.constant 0 : i32
    %c0_i32_0 = arith.constant 0 : i32
    %c0_i32_1 = arith.constant 0 : i32
    return %c0_i32, %c0_i32_0 : i32, i32
  }
  func.func @transform_18(%arg0: i32) -> (i32, i32) {
    %c0_i32 = arith.constant 0 : i32
    %c0_i32_0 = arith.constant 0 : i32
    %c0_i32_1 = arith.constant 0 : i32
    return %c0_i32, %c0_i32_0 : i32, i32
  }
  func.func @transform_19(%arg0: i32) -> (i32, i32) {
    %c0_i32 = arith.constant 0 : i32
    %c0_i32_0 = arith.constant 0 : i32
    %c0_i32_1 = arith.constant 0 : i32
    return %c0_i32, %c0_i32_0 : i32, i32
  }
  func.func @transform_20(%arg0: i32) -> (i32, i32) {
    %c0_i32 = arith.constant 0 : i32
    %c0_i32_0 = arith.constant 0 : i32
    %c0_i32_1 = arith.constant 0 : i32
    return %c0_i32, %c0_i32_0 : i32, i32
  }
  func.func @transform_21(%arg0: i32) -> (i32, i32) {
    %c0_i32 = arith.constant 0 : i32
    %c0_i32_0 = arith.constant 0 : i32
    %c0_i32_1 = arith.constant 0 : i32
    return %c0_i32, %c0_i32_0 : i32, i32
  }
  func.func @transform_22(%arg0: i32) -> (i32, i32) {
    %c0_i32 = arith.constant 0 : i32
    %c0_i32_0 = arith.constant 0 : i32
    %c0_i32_1 = arith.constant 0 : i32
    return %c0_i32, %c0_i32_0 : i32, i32
  }
  func.func @transform_23(%arg0: i32) -> (i32, i32) {
    %c0_i32 = arith.constant 0 : i32
    %c0_i32_0 = arith.constant 0 : i32
    %c0_i32_1 = arith.constant 0 : i32
    return %c0_i32, %c0_i32_0 : i32, i32
  }
  func.func @transform_24(%arg0: i32) -> (i32, i32) {
    %c0_i32 = arith.constant 0 : i32
    %c0_i32_0 = arith.constant 0 : i32
    %c0_i32_1 = arith.constant 0 : i32
    return %c0_i32, %c0_i32_0 : i32, i32
  }
  func.func @transform_25(%arg0: i32) -> (i32, i32) {
    %c0_i32 = arith.constant 0 : i32
    %c0_i32_0 = arith.constant 0 : i32
    %c0_i32_1 = arith.constant 0 : i32
    return %c0_i32, %c0_i32_0 : i32, i32
  }
  func.func @transform_26(%arg0: i32) -> (i32, i32, i32) {
    %c0_i32 = arith.constant 0 : i32
    %c0_i32_0 = arith.constant 0 : i32
    %c0_i32_1 = arith.constant 0 : i32
    return %arg0, %c0_i32, %c0_i32_0 : i32, i32, i32
  }
}

</mosaic_0001>

<llo_original>
// kernel: swin_transformer_block.1
$region0: #{swin_transformer_block.1}
  #allocation0 [shape = 'u32[]', space=smem, size = 0x4, offset = 0x4, fixed_abs, tag = 'smem constant byte address 0x4 - core index']
  #allocation1 [shape = 'u32[144,128]{1,0:T(1,128)}', space=vmem, size = 0x12000, scoped, tag = 'internal scratch']
  %s0 = inlined_call_operand.vmem [shape: f32[2,64,32], index: 0, kind: input, shape index: {}]
  %s1 = inlined_call_operand.vmem [shape: f32[4,64,64], index: 1, kind: input, shape index: {}]
  %s2 = inlined_call_operand.vmem [shape: f32[1,32], index: 2, kind: input, shape index: {}]
  %s3 = inlined_call_operand.vmem [shape: f32[1,32], index: 3, kind: input, shape index: {}]
  %s4 = inlined_call_operand.vmem [shape: f32[32,96], index: 4, kind: input, shape index: {}]
  %s5 = inlined_call_operand.vmem [shape: f32[1,96], index: 5, kind: input, shape index: {}]
  %s6 = inlined_call_operand.vmem [shape: f32[32,32], index: 6, kind: input, shape index: {}]
  %s7 = inlined_call_operand.vmem [shape: f32[1,32], index: 7, kind: input, shape index: {}]
  %s8 = inlined_call_operand.vmem [shape: f32[1,32], index: 8, kind: input, shape index: {}]
  %s9 = inlined_call_operand.hbm [shape: f32[1,32], index: 9, kind: input, shape index: {}]
  %s10 = inlined_call_operand.vmem [shape: f32[32,128], index: 10, kind: input, shape index: {}]
  %s11 = inlined_call_operand.vmem [shape: f32[1,128], index: 11, kind: input, shape index: {}]
  %s12 = inlined_call_operand.vmem [shape: f32[128,32], index: 12, kind: input, shape index: {}]
  %s13 = inlined_call_operand.vmem [shape: f32[1,32], index: 13, kind: input, shape index: {}]
  %s14 = inlined_call_operand.vmem [shape: f32[1,32], index: 14, kind: input, shape index: {}]
  %s15 = inlined_call_operand.hbm [shape: f32[1,32], index: 15, kind: input, shape index: {}]
  %s16 = inlined_call_operand.vmem [shape: f32[32,96], index: 16, kind: input, shape index: {}]
  %s17 = inlined_call_operand.vmem [shape: f32[1,96], index: 17, kind: input, shape index: {}]
  %s18 = inlined_call_operand.vmem [shape: f32[32,32], index: 18, kind: input, shape index: {}]
  %s19 = inlined_call_operand.vmem [shape: f32[1,32], index: 19, kind: input, shape index: {}]
  %s20 = inlined_call_operand.vmem [shape: f32[1,32], index: 20, kind: input, shape index: {}]
  %s21 = inlined_call_operand.hbm [shape: f32[1,32], index: 21, kind: input, shape index: {}]
  %s22 = inlined_call_operand.vmem [shape: f32[32,128], index: 22, kind: input, shape index: {}]
  %s23 = inlined_call_operand.vmem [shape: f32[1,128], index: 23, kind: input, shape index: {}]
  %s24 = inlined_call_operand.vmem [shape: f32[128,32], index: 24, kind: input, shape index: {}]
  %s25 = inlined_call_operand.vmem [shape: f32[1,32], index: 25, kind: input, shape index: {}]
  %s26 = inlined_call_operand.hbm [shape: f32[2,64,32], index: 26, kind: output, shape index: {}]
  %s27 = sld [smem:[#allocation0]]
  $region149: #{swin_transformer_block.1} parent=0
    _
  %s29 = ssub.s32 1, %s27
  %s30 = scalar_select 0, %s29, %s27
  $region1: #{swin_transformer_block.1} parent=0
    #allocation2 [shape = 'u8[512]{0}', space=vmem, size = 0x400, scoped, tag = 'input window, operand 9, single buffered']
    #allocation3 [shape = 's32[2]{0}', space=sflag, size = 0x8, scoped, tag = 'scoped memory for swin_transformer_block.1']
    #allocation4 [shape = 's32[2]{0}', space=sflag, size = 0x8, scoped, tag = 'scoped memory for swin_transformer_block.1']
    #allocation5 [shape = 'u8[512]{0}', space=vmem, size = 0x400, scoped, tag = 'input window, operand 15, single buffered']
    #allocation6 [shape = 's32[1]{0}', space=sflag, size = 0x4, scoped, tag = 'scoped memory for swin_transformer_block.1']
    #allocation7 [shape = 'u8[512]{0}', space=vmem, size = 0x400, scoped, tag = 'input window, operand 21, single buffered']
    #allocation8 [shape = 'u8[65536]{0}', space=vmem, size = 0x10000, scoped, tag = 'output window, operand 0']
    %31 = vsyncpa [#allocation3], 0
    %32 = vsyncpa [#allocation6], 0
    %33 = vsyncpa [#allocation4], 0
    %s34 = scalar_lea.sflag [#allocation4], 1
    %35 = vsyncpa %s34, 0
    loop: start=0, step=1, limit=4
    $region2: #{swin_transformer_block.1} parent=1 // loop_pre_header
      _
    $region3: #{swin_transformer_block.1} parent=1 // loop_header
      %s37 = sphi 0, %s41
      %p38 = scmp.ge.s32.totalorder %s37, 4
      %s47 = sphi 0, %s49
      %s50 = sphi 0, %s47
      %s51 = sphi 0, %s50
      %s67 = sphi 0, %s51
      %s71 = sphi 0, %s71
      %s73 = sphi 0, %s71
      %s74 = sphi 0, %s73
      %s88 = sphi 0, %s74
      %s92 = sphi 0, %s92
      %s94 = sphi 0, %s92
      %s95 = sphi 0, %s94
      %s109 = sphi 0, %s95
      %s113 = sphi 0, %s113
      %s115 = sphi 0, %s113
      %s116 = sphi 0, %s115
      %s130 = sphi 0, %s116
      %s134 = sphi 0, %s134
      %s136 = sphi 0, %s134
      %s137 = sphi 0, %s136
      %s151 = sphi 0, %s137
      %s155 = sphi 0, %s155
      %s157 = sphi 0, %s155
      %s158 = sphi 0, %s157
      %s172 = sphi 0, %s158
      %s176 = sphi 0, %s176
      %s178 = sphi 0, %s176
      %s179 = sphi 0, %s178
      %s193 = sphi 0, %s179
      %s197 = sphi 0, %s197
      %s199 = sphi 0, %s197
      %s200 = sphi 0, %s199
      %s214 = sphi 0, %s200
      %s218 = sphi 0, %s218
      %s220 = sphi 0, %s218
      %s221 = sphi 0, %s220
      %s235 = sphi 0, %s221
      %s239 = sphi 0, %s239
      %s241 = sphi 0, %s239
      %s242 = sphi 0, %s241
      %s256 = sphi 0, %s242
      %s260 = sphi 0, %s260
      %s262 = sphi 0, %s260
      %s263 = sphi 0, %s262
      %s277 = sphi 0, %s263
      %s281 = sphi 0, %s281
      %s283 = sphi 0, %s281
      %s284 = sphi 0, %s283
      %s298 = sphi 0, %s284
      %s302 = sphi 0, %s302
      %s304 = sphi 0, %s302
      %s305 = sphi 0, %s304
      %s319 = sphi 0, %s305
      %s323 = sphi 0, %s323
      %s325 = sphi 0, %s323
      %s326 = sphi 0, %s325
      %s340 = sphi 0, %s326
      %s344 = sphi 0, %s344
      %s346 = sphi 0, %s344
      %s347 = sphi 0, %s346
      %s361 = sphi 0, %s347
      %s365 = sphi 0, %s365
      %s367 = sphi 0, %s365
      %s368 = sphi 0, %s367
      %s382 = sphi 0, %s368
      %s386 = sphi 0, %s386
      %s388 = sphi 0, %s386
      %s389 = sphi 0, %s388
      %s403 = sphi 0, %s389
      %s407 = sphi 0, %s407
      %s409 = sphi 0, %s407
      %s410 = sphi 0, %s409
      %s424 = sphi 0, %s410
      %s428 = sphi 0, %s428
      %s430 = sphi 0, %s428
      %s431 = sphi 0, %s430
      %s445 = sphi 0, %s431
      %s449 = sphi 0, %s449
      %s451 = sphi 0, %s449
      %s452 = sphi 0, %s451
      %s466 = sphi 0, %s452
      %s470 = sphi 0, %s470
      %s472 = sphi 0, %s470
      %s473 = sphi 0, %s472
      %s487 = sphi 0, %s473
      %s491 = sphi 0, %s491
      %s493 = sphi 0, %s491
      %s494 = sphi 0, %s493
      %s508 = sphi 0, %s494
      %s512 = sphi 0, %s512
      %s514 = sphi 0, %s512
      %s515 = sphi 0, %s514
      %s529 = sphi 0, %s515
      %s533 = sphi 0, %s533
      %s535 = sphi 0, %s533
      %s536 = sphi 0, %s535
      %s550 = sphi 0, %s536
      %s554 = sphi 0, %s554
      %s556 = sphi 0, %s554
      %s557 = sphi 0, %s556
      %s571 = sphi 0, %s557
      %s575 = sphi 0, %s575
      %s577 = sphi 0, %s575
      %s578 = sphi 0, %s577
      %s592 = sphi 0, %s578
      %s598 = sphi 0, %s600
      %s601 = sphi 0, %s598
      %s602 = sphi 0, %s601
      %s618 = sphi 0, %s602
    $region4: #{swin_transformer_block.1} parent=1 // loop_header_branch
      %40 = sbr.rel (%p38) target = $region8
    $region5: #{swin_transformer_block.1} parent=1 // loop_body
      %s42 = ssub.s32 %s37, 1
      %s43 = ssub.s32 %s37, 2
      %s44 = sadd.s32 %s37, 1
      %s45 = ssub.s32 %s37, %s44
      %p46 = scmp.eq.s32.totalorder %s45, 0
      %s48 = sadd.s32 %s47, 1
      %s49 = scalar_select %p46, %s47, %s48
      %p52 = pneg %p46
      %p53 = scmp.eq.s32.totalorder %s37, 1
      %p54 = por %p52, %p53
      %p55 = scmp.ne.s32.totalorder %s47, %s50
      %p56 = scmp.eq.s32.totalorder %s37, 0
      %p57 = por %p55, %p56
      %p58 = scmp.ne.s32.totalorder %s47, %s50
      %p59 = scmp.eq.s32.totalorder %s42, 1
      %p60 = por %p58, %p59
      %p61 = scmp.ne.s32.totalorder %s50, %s51
      %p62 = scmp.eq.s32.totalorder %s42, 0
      %p63 = por %p61, %p62
      %p64 = scmp.ne.s32.totalorder %s50, %s51
      %p65 = scmp.eq.s32.totalorder %s43, 1
      %p66 = por %p64, %p65
      %p68 = scmp.ne.s32.totalorder %s51, %s67
      %p69 = scmp.eq.s32.totalorder %s43, 0
      %p70 = por %p68, %p69
      %s72 = sadd.s32 %s71, 1
      %p75 = scmp.eq.s32.totalorder %s37, 1
      %p76 = scmp.ne.s32.totalorder %s71, %s73
      %p77 = scmp.eq.s32.totalorder %s37, 0
      %p78 = por %p76, %p77
      %p79 = scmp.ne.s32.totalorder %s71, %s73
      %p80 = scmp.eq.s32.totalorder %s42, 1
      %p81 = por %p79, %p80
      %p82 = scmp.ne.s32.totalorder %s73, %s74
      %p83 = scmp.eq.s32.totalorder %s42, 0
      %p84 = por %p82, %p83
      %p85 = scmp.ne.s32.totalorder %s73, %s74
      %p86 = scmp.eq.s32.totalorder %s43, 1
      %p87 = por %p85, %p86
      %p89 = scmp.ne.s32.totalorder %s74, %s88
      %p90 = scmp.eq.s32.totalorder %s43, 0
      %p91 = por %p89, %p90
      %s93 = sadd.s32 %s92, 1
      %p96 = scmp.eq.s32.totalorder %s37, 1
      %p97 = scmp.ne.s32.totalorder %s92, %s94
      %p98 = scmp.eq.s32.totalorder %s37, 0
      %p99 = por %p97, %p98
      %p100 = scmp.ne.s32.totalorder %s92, %s94
      %p101 = scmp.eq.s32.totalorder %s42, 1
      %p102 = por %p100, %p101
      %p103 = scmp.ne.s32.totalorder %s94, %s95
      %p104 = scmp.eq.s32.totalorder %s42, 0
      %p105 = por %p103, %p104
      %p106 = scmp.ne.s32.totalorder %s94, %s95
      %p107 = scmp.eq.s32.totalorder %s43, 1
      %p108 = por %p106, %p107
      %p110 = scmp.ne.s32.totalorder %s95, %s109
      %p111 = scmp.eq.s32.totalorder %s43, 0
      %p112 = por %p110, %p111
      %s114 = sadd.s32 %s113, 1
      %p117 = scmp.eq.s32.totalorder %s37, 1
      %p118 = scmp.ne.s32.totalorder %s113, %s115
      %p119 = scmp.eq.s32.totalorder %s37, 0
      %p120 = por %p118, %p119
      %p121 = scmp.ne.s32.totalorder %s113, %s115
      %p122 = scmp.eq.s32.totalorder %s42, 1
      %p123 = por %p121, %p122
      %p124 = scmp.ne.s32.totalorder %s115, %s116
      %p125 = scmp.eq.s32.totalorder %s42, 0
      %p126 = por %p124, %p125
      %p127 = scmp.ne.s32.totalorder %s115, %s116
      %p128 = scmp.eq.s32.totalorder %s43, 1
      %p129 = por %p127, %p128
      %p131 = scmp.ne.s32.totalorder %s116, %s130
      %p132 = scmp.eq.s32.totalorder %s43, 0
      %p133 = por %p131, %p132
      %s135 = sadd.s32 %s134, 1
      %p138 = scmp.eq.s32.totalorder %s37, 1
      %p139 = scmp.ne.s32.totalorder %s134, %s136
      %p140 = scmp.eq.s32.totalorder %s37, 0
      %p141 = por %p139, %p140
      %p142 = scmp.ne.s32.totalorder %s134, %s136
      %p143 = scmp.eq.s32.totalorder %s42, 1
      %p144 = por %p142, %p143
      %p145 = scmp.ne.s32.totalorder %s136, %s137
      %p146 = scmp.eq.s32.totalorder %s42, 0
      %p147 = por %p145, %p146
      %p148 = scmp.ne.s32.totalorder %s136, %s137
      %p149 = scmp.eq.s32.totalorder %s43, 1
      %p150 = por %p148, %p149
      %p152 = scmp.ne.s32.totalorder %s137, %s151
      %p153 = scmp.eq.s32.totalorder %s43, 0
      %p154 = por %p152, %p153
      %s156 = sadd.s32 %s155, 1
      %p159 = scmp.eq.s32.totalorder %s37, 1
      %p160 = scmp.ne.s32.totalorder %s155, %s157
      %p161 = scmp.eq.s32.totalorder %s37, 0
      %p162 = por %p160, %p161
      %p163 = scmp.ne.s32.totalorder %s155, %s157
      %p164 = scmp.eq.s32.totalorder %s42, 1
      %p165 = por %p163, %p164
      %p166 = scmp.ne.s32.totalorder %s157, %s158
      %p167 = scmp.eq.s32.totalorder %s42, 0
      %p168 = por %p166, %p167
      %p169 = scmp.ne.s32.totalorder %s157, %s158
      %p170 = scmp.eq.s32.totalorder %s43, 1
      %p171 = por %p169, %p170
      %p173 = scmp.ne.s32.totalorder %s158, %s172
      %p174 = scmp.eq.s32.totalorder %s43, 0
      %p175 = por %p173, %p174
      %s177 = sadd.s32 %s176, 1
      %p180 = scmp.eq.s32.totalorder %s37, 1
      %p181 = scmp.ne.s32.totalorder %s176, %s178
      %p182 = scmp.eq.s32.totalorder %s37, 0
      %p183 = por %p181, %p182
      %p184 = scmp.ne.s32.totalorder %s176, %s178
      %p185 = scmp.eq.s32.totalorder %s42, 1
      %p186 = por %p184, %p185
      %p187 = scmp.ne.s32.totalorder %s178, %s179
      %p188 = scmp.eq.s32.totalorder %s42, 0
      %p189 = por %p187, %p188
      %p190 = scmp.ne.s32.totalorder %s178, %s179
      %p191 = scmp.eq.s32.totalorder %s43, 1
      %p192 = por %p190, %p191
      %p194 = scmp.ne.s32.totalorder %s179, %s193
      %p195 = scmp.eq.s32.totalorder %s43, 0
      %p196 = por %p194, %p195
      %s198 = sadd.s32 %s197, 1
      %p201 = scmp.eq.s32.totalorder %s37, 1
      %p202 = scmp.ne.s32.totalorder %s197, %s199
      %p203 = scmp.eq.s32.totalorder %s37, 0
      %p204 = por %p202, %p203
      %p205 = scmp.ne.s32.totalorder %s197, %s199
      %p206 = scmp.eq.s32.totalorder %s42, 1
      %p207 = por %p205, %p206
      %p208 = scmp.ne.s32.totalorder %s199, %s200
      %p209 = scmp.eq.s32.totalorder %s42, 0
      %p210 = por %p208, %p209
      %p211 = scmp.ne.s32.totalorder %s199, %s200
      %p212 = scmp.eq.s32.totalorder %s43, 1
      %p213 = por %p211, %p212
      %p215 = scmp.ne.s32.totalorder %s200, %s214
      %p216 = scmp.eq.s32.totalorder %s43, 0
      %p217 = por %p215, %p216
      %s219 = sadd.s32 %s218, 1
      %p222 = scmp.eq.s32.totalorder %s37, 1
      %p223 = scmp.ne.s32.totalorder %s218, %s220
      %p224 = scmp.eq.s32.totalorder %s37, 0
      %p225 = por %p223, %p224
      %p226 = scmp.ne.s32.totalorder %s218, %s220
      %p227 = scmp.eq.s32.totalorder %s42, 1
      %p228 = por %p226, %p227
      %p229 = scmp.ne.s32.totalorder %s220, %s221
      %p230 = scmp.eq.s32.totalorder %s42, 0
      %p231 = por %p229, %p230
      %p232 = scmp.ne.s32.totalorder %s220, %s221
      %p233 = scmp.eq.s32.totalorder %s43, 1
      %p234 = por %p232, %p233
      %p236 = scmp.ne.s32.totalorder %s221, %s235
      %p237 = scmp.eq.s32.totalorder %s43, 0
      %p238 = por %p236, %p237
      %s240 = sadd.s32 %s239, 1
      %p243 = scmp.eq.s32.totalorder %s37, 1
      %p244 = scmp.ne.s32.totalorder %s239, %s241
      %p245 = scmp.eq.s32.totalorder %s37, 0
      %p246 = por %p244, %p245
      %p247 = scmp.ne.s32.totalorder %s239, %s241
      %p248 = scmp.eq.s32.totalorder %s42, 1
      %p249 = por %p247, %p248
      %p250 = scmp.ne.s32.totalorder %s241, %s242
      %p251 = scmp.eq.s32.totalorder %s42, 0
      %p252 = por %p250, %p251
      %p253 = scmp.ne.s32.totalorder %s241, %s242
      %p254 = scmp.eq.s32.totalorder %s43, 1
      %p255 = por %p253, %p254
      %p257 = scmp.ne.s32.totalorder %s242, %s256
      %p258 = scmp.eq.s32.totalorder %s43, 0
      %p259 = por %p257, %p258
      %s261 = sadd.s32 %s260, 1
      %p264 = scmp.eq.s32.totalorder %s37, 1
      %p265 = scmp.ne.s32.totalorder %s260, %s262
      %p266 = scmp.eq.s32.totalorder %s37, 0
      %p267 = por %p265, %p266
      %p268 = scmp.ne.s32.totalorder %s260, %s262
      %p269 = scmp.eq.s32.totalorder %s42, 1
      %p270 = por %p268, %p269
      %p271 = scmp.ne.s32.totalorder %s262, %s263
      %p272 = scmp.eq.s32.totalorder %s42, 0
      %p273 = por %p271, %p272
      %p274 = scmp.ne.s32.totalorder %s262, %s263
      %p275 = scmp.eq.s32.totalorder %s43, 1
      %p276 = por %p274, %p275
      %p278 = scmp.ne.s32.totalorder %s263, %s277
      %p279 = scmp.eq.s32.totalorder %s43, 0
      %p280 = por %p278, %p279
      %s282 = sadd.s32 %s281, 1
      %p285 = scmp.eq.s32.totalorder %s37, 1
      %p286 = scmp.ne.s32.totalorder %s281, %s283
      %p287 = scmp.eq.s32.totalorder %s37, 0
      %p288 = por %p286, %p287
      %p289 = scmp.ne.s32.totalorder %s281, %s283
      %p290 = scmp.eq.s32.totalorder %s42, 1
      %p291 = por %p289, %p290
      %p292 = scmp.ne.s32.totalorder %s283, %s284
      %p293 = scmp.eq.s32.totalorder %s42, 0
      %p294 = por %p292, %p293
      %p295 = scmp.ne.s32.totalorder %s283, %s284
      %p296 = scmp.eq.s32.totalorder %s43, 1
      %p297 = por %p295, %p296
      %p299 = scmp.ne.s32.totalorder %s284, %s298
      %p300 = scmp.eq.s32.totalorder %s43, 0
      %p301 = por %p299, %p300
      %s303 = sadd.s32 %s302, 1
      %p306 = scmp.eq.s32.totalorder %s37, 1
      %p307 = scmp.ne.s32.totalorder %s302, %s304
      %p308 = scmp.eq.s32.totalorder %s37, 0
      %p309 = por %p307, %p308
      %p310 = scmp.ne.s32.totalorder %s302, %s304
      %p311 = scmp.eq.s32.totalorder %s42, 1
      %p312 = por %p310, %p311
      %p313 = scmp.ne.s32.totalorder %s304, %s305
      %p314 = scmp.eq.s32.totalorder %s42, 0
      %p315 = por %p313, %p314
      %p316 = scmp.ne.s32.totalorder %s304, %s305
      %p317 = scmp.eq.s32.totalorder %s43, 1
      %p318 = por %p316, %p317
      %p320 = scmp.ne.s32.totalorder %s305, %s319
      %p321 = scmp.eq.s32.totalorder %s43, 0
      %p322 = por %p320, %p321
      %s324 = sadd.s32 %s323, 1
      %p327 = scmp.eq.s32.totalorder %s37, 1
      %p328 = scmp.ne.s32.totalorder %s323, %s325
      %p329 = scmp.eq.s32.totalorder %s37, 0
      %p330 = por %p328, %p329
      %p331 = scmp.ne.s32.totalorder %s323, %s325
      %p332 = scmp.eq.s32.totalorder %s42, 1
      %p333 = por %p331, %p332
      %p334 = scmp.ne.s32.totalorder %s325, %s326
      %p335 = scmp.eq.s32.totalorder %s42, 0
      %p336 = por %p334, %p335
      %p337 = scmp.ne.s32.totalorder %s325, %s326
      %p338 = scmp.eq.s32.totalorder %s43, 1
      %p339 = por %p337, %p338
      %p341 = scmp.ne.s32.totalorder %s326, %s340
      %p342 = scmp.eq.s32.totalorder %s43, 0
      %p343 = por %p341, %p342
      %s345 = sadd.s32 %s344, 1
      %p348 = scmp.eq.s32.totalorder %s37, 1
      %p349 = scmp.ne.s32.totalorder %s344, %s346
      %p350 = scmp.eq.s32.totalorder %s37, 0
      %p351 = por %p349, %p350
      %p352 = scmp.ne.s32.totalorder %s344, %s346
      %p353 = scmp.eq.s32.totalorder %s42, 1
      %p354 = por %p352, %p353
      %p355 = scmp.ne.s32.totalorder %s346, %s347
      %p356 = scmp.eq.s32.totalorder %s42, 0
      %p357 = por %p355, %p356
      %p358 = scmp.ne.s32.totalorder %s346, %s347
      %p359 = scmp.eq.s32.totalorder %s43, 1
      %p360 = por %p358, %p359
      %p362 = scmp.ne.s32.totalorder %s347, %s361
      %p363 = scmp.eq.s32.totalorder %s43, 0
      %p364 = por %p362, %p363
      %s366 = sadd.s32 %s365, 1
      %p369 = scmp.eq.s32.totalorder %s37, 1
      %p370 = scmp.ne.s32.totalorder %s365, %s367
      %p371 = scmp.eq.s32.totalorder %s37, 0
      %p372 = por %p370, %p371
      %p373 = scmp.ne.s32.totalorder %s365, %s367
      %p374 = scmp.eq.s32.totalorder %s42, 1
      %p375 = por %p373, %p374
      %p376 = scmp.ne.s32.totalorder %s367, %s368
      %p377 = scmp.eq.s32.totalorder %s42, 0
      %p378 = por %p376, %p377
      %p379 = scmp.ne.s32.totalorder %s367, %s368
      %p380 = scmp.eq.s32.totalorder %s43, 1
      %p381 = por %p379, %p380
      %p383 = scmp.ne.s32.totalorder %s368, %s382
      %p384 = scmp.eq.s32.totalorder %s43, 0
      %p385 = por %p383, %p384
      %s387 = sadd.s32 %s386, 1
      %p390 = scmp.eq.s32.totalorder %s37, 1
      %p391 = scmp.ne.s32.totalorder %s386, %s388
      %p392 = scmp.eq.s32.totalorder %s37, 0
      %p393 = por %p391, %p392
      %p394 = scmp.ne.s32.totalorder %s386, %s388
      %p395 = scmp.eq.s32.totalorder %s42, 1
      %p396 = por %p394, %p395
      %p397 = scmp.ne.s32.totalorder %s388, %s389
      %p398 = scmp.eq.s32.totalorder %s42, 0
      %p399 = por %p397, %p398
      %p400 = scmp.ne.s32.totalorder %s388, %s389
      %p401 = scmp.eq.s32.totalorder %s43, 1
      %p402 = por %p400, %p401
      %p404 = scmp.ne.s32.totalorder %s389, %s403
      %p405 = scmp.eq.s32.totalorder %s43, 0
      %p406 = por %p404, %p405
      %s408 = sadd.s32 %s407, 1
      %p411 = scmp.eq.s32.totalorder %s37, 1
      %p412 = scmp.ne.s32.totalorder %s407, %s409
      %p413 = scmp.eq.s32.totalorder %s37, 0
      %p414 = por %p412, %p413
      %p415 = scmp.ne.s32.totalorder %s407, %s409
      %p416 = scmp.eq.s32.totalorder %s42, 1
      %p417 = por %p415, %p416
      %p418 = scmp.ne.s32.totalorder %s409, %s410
      %p419 = scmp.eq.s32.totalorder %s42, 0
      %p420 = por %p418, %p419
      %p421 = scmp.ne.s32.totalorder %s409, %s410
      %p422 = scmp.eq.s32.totalorder %s43, 1
      %p423 = por %p421, %p422
      %p425 = scmp.ne.s32.totalorder %s410, %s424
      %p426 = scmp.eq.s32.totalorder %s43, 0
      %p427 = por %p425, %p426
      %s429 = sadd.s32 %s428, 1
      %p432 = scmp.eq.s32.totalorder %s37, 1
      %p433 = scmp.ne.s32.totalorder %s428, %s430
      %p434 = scmp.eq.s32.totalorder %s37, 0
      %p435 = por %p433, %p434
      %p436 = scmp.ne.s32.totalorder %s428, %s430
      %p437 = scmp.eq.s32.totalorder %s42, 1
      %p438 = por %p436, %p437
      %p439 = scmp.ne.s32.totalorder %s430, %s431
      %p440 = scmp.eq.s32.totalorder %s42, 0
      %p441 = por %p439, %p440
      %p442 = scmp.ne.s32.totalorder %s430, %s431
      %p443 = scmp.eq.s32.totalorder %s43, 1
      %p444 = por %p442, %p443
      %p446 = scmp.ne.s32.totalorder %s431, %s445
      %p447 = scmp.eq.s32.totalorder %s43, 0
      %p448 = por %p446, %p447
      %s450 = sadd.s32 %s449, 1
      %p453 = scmp.eq.s32.totalorder %s37, 1
      %p454 = scmp.ne.s32.totalorder %s449, %s451
      %p455 = scmp.eq.s32.totalorder %s37, 0
      %p456 = por %p454, %p455
      %p457 = scmp.ne.s32.totalorder %s449, %s451
      %p458 = scmp.eq.s32.totalorder %s42, 1
      %p459 = por %p457, %p458
      %p460 = scmp.ne.s32.totalorder %s451, %s452
      %p461 = scmp.eq.s32.totalorder %s42, 0
      %p462 = por %p460, %p461
      %p463 = scmp.ne.s32.totalorder %s451, %s452
      %p464 = scmp.eq.s32.totalorder %s43, 1
      %p465 = por %p463, %p464
      %p467 = scmp.ne.s32.totalorder %s452, %s466
      %p468 = scmp.eq.s32.totalorder %s43, 0
      %p469 = por %p467, %p468
      %s471 = sadd.s32 %s470, 1
      %p474 = scmp.eq.s32.totalorder %s37, 1
      %p475 = scmp.ne.s32.totalorder %s470, %s472
      %p476 = scmp.eq.s32.totalorder %s37, 0
      %p477 = por %p475, %p476
      %p478 = scmp.ne.s32.totalorder %s470, %s472
      %p479 = scmp.eq.s32.totalorder %s42, 1
      %p480 = por %p478, %p479
      %p481 = scmp.ne.s32.totalorder %s472, %s473
      %p482 = scmp.eq.s32.totalorder %s42, 0
      %p483 = por %p481, %p482
      %p484 = scmp.ne.s32.totalorder %s472, %s473
      %p485 = scmp.eq.s32.totalorder %s43, 1
      %p486 = por %p484, %p485
      %p488 = scmp.ne.s32.totalorder %s473, %s487
      %p489 = scmp.eq.s32.totalorder %s43, 0
      %p490 = por %p488, %p489
      %s492 = sadd.s32 %s491, 1
      %p495 = scmp.eq.s32.totalorder %s37, 1
      %p496 = scmp.ne.s32.totalorder %s491, %s493
      %p497 = scmp.eq.s32.totalorder %s37, 0
      %p498 = por %p496, %p497
      %p499 = scmp.ne.s32.totalorder %s491, %s493
      %p500 = scmp.eq.s32.totalorder %s42, 1
      %p501 = por %p499, %p500
      %p502 = scmp.ne.s32.totalorder %s493, %s494
      %p503 = scmp.eq.s32.totalorder %s42, 0
      %p504 = por %p502, %p503
      %p505 = scmp.ne.s32.totalorder %s493, %s494
      %p506 = scmp.eq.s32.totalorder %s43, 1
      %p507 = por %p505, %p506
      %p509 = scmp.ne.s32.totalorder %s494, %s508
      %p510 = scmp.eq.s32.totalorder %s43, 0
      %p511 = por %p509, %p510
      %s513 = sadd.s32 %s512, 1
      %p516 = scmp.eq.s32.totalorder %s37, 1
      %p517 = scmp.ne.s32.totalorder %s512, %s514
      %p518 = scmp.eq.s32.totalorder %s37, 0
      %p519 = por %p517, %p518
      %p520 = scmp.ne.s32.totalorder %s512, %s514
      %p521 = scmp.eq.s32.totalorder %s42, 1
      %p522 = por %p520, %p521
      %p523 = scmp.ne.s32.totalorder %s514, %s515
      %p524 = scmp.eq.s32.totalorder %s42, 0
      %p525 = por %p523, %p524
      %p526 = scmp.ne.s32.totalorder %s514, %s515
      %p527 = scmp.eq.s32.totalorder %s43, 1
      %p528 = por %p526, %p527
      %p530 = scmp.ne.s32.totalorder %s515, %s529
      %p531 = scmp.eq.s32.totalorder %s43, 0
      %p532 = por %p530, %p531
      %s534 = sadd.s32 %s533, 1
      %p537 = scmp.eq.s32.totalorder %s37, 1
      %p538 = scmp.ne.s32.totalorder %s533, %s535
      %p539 = scmp.eq.s32.totalorder %s37, 0
      %p540 = por %p538, %p539
      %p541 = scmp.ne.s32.totalorder %s533, %s535
      %p542 = scmp.eq.s32.totalorder %s42, 1
      %p543 = por %p541, %p542
      %p544 = scmp.ne.s32.totalorder %s535, %s536
      %p545 = scmp.eq.s32.totalorder %s42, 0
      %p546 = por %p544, %p545
      %p547 = scmp.ne.s32.totalorder %s535, %s536
      %p548 = scmp.eq.s32.totalorder %s43, 1
      %p549 = por %p547, %p548
      %p551 = scmp.ne.s32.totalorder %s536, %s550
      %p552 = scmp.eq.s32.totalorder %s43, 0
      %p553 = por %p551, %p552
      %s555 = sadd.s32 %s554, 1
      %p558 = scmp.eq.s32.totalorder %s37, 1
      %p559 = scmp.ne.s32.totalorder %s554, %s556
      %p560 = scmp.eq.s32.totalorder %s37, 0
      %p561 = por %p559, %p560
      %p562 = scmp.ne.s32.totalorder %s554, %s556
      %p563 = scmp.eq.s32.totalorder %s42, 1
      %p564 = por %p562, %p563
      %p565 = scmp.ne.s32.totalorder %s556, %s557
      %p566 = scmp.eq.s32.totalorder %s42, 0
      %p567 = por %p565, %p566
      %p568 = scmp.ne.s32.totalorder %s556, %s557
      %p569 = scmp.eq.s32.totalorder %s43, 1
      %p570 = por %p568, %p569
      %p572 = scmp.ne.s32.totalorder %s557, %s571
      %p573 = scmp.eq.s32.totalorder %s43, 0
      %p574 = por %p572, %p573
      %s576 = sadd.s32 %s575, 1
      %p579 = scmp.eq.s32.totalorder %s37, 1
      %p580 = scmp.ne.s32.totalorder %s575, %s577
      %p581 = scmp.eq.s32.totalorder %s37, 0
      %p582 = por %p580, %p581
      %p583 = scmp.ne.s32.totalorder %s575, %s577
      %p584 = scmp.eq.s32.totalorder %s42, 1
      %p585 = por %p583, %p584
      %p586 = scmp.ne.s32.totalorder %s577, %s578
      %p587 = scmp.eq.s32.totalorder %s42, 0
      %p588 = por %p586, %p587
      %p589 = scmp.ne.s32.totalorder %s577, %s578
      %p590 = scmp.eq.s32.totalorder %s43, 1
      %p591 = por %p589, %p590
      %p593 = scmp.ne.s32.totalorder %s578, %s592
      %p594 = scmp.eq.s32.totalorder %s43, 0
      %p595 = por %p593, %p594
      %s596 = ssub.s32 %s37, %s44
      %p597 = scmp.eq.s32.totalorder %s596, 0
      %s599 = sadd.s32 %s598, 1
      %s600 = scalar_select %p597, %s598, %s599
      %p603 = pneg %p597
      %p604 = scmp.eq.s32.totalorder %s37, 1
      %p605 = por %p603, %p604
      %p606 = scmp.ne.s32.totalorder %s598, %s601
      %p607 = scmp.eq.s32.totalorder %s37, 0
      %p608 = por %p606, %p607
      %p609 = scmp.ne.s32.totalorder %s598, %s601
      %p610 = scmp.eq.s32.totalorder %s42, 1
      %p611 = por %p609, %p610
      %p612 = scmp.ne.s32.totalorder %s601, %s602
      %p613 = scmp.eq.s32.totalorder %s42, 0
      %p614 = por %p612, %p613
      %p615 = scmp.ne.s32.totalorder %s601, %s602
      %p616 = scmp.eq.s32.totalorder %s43, 1
      %p617 = por %p615, %p616
      %p619 = scmp.ne.s32.totalorder %s602, %s618
      %p620 = scmp.eq.s32.totalorder %s43, 0
      %p621 = por %p619, %p620
      %p622 = scmp.le.s32.totalorder 1, %s37
      %p623 = scmp.lt.s32.totalorder %s37, 3
      %p624 = pnand %p622, %p623
      %p625 = pneg %p624
      // Predicated region
      $region9: #{swin_transformer_block.1} parent=5 // pred_check
        _
      $region10: #{swin_transformer_block.1} parent=5 // pred_check_branch
        %627 = sbr.rel (%p624) target = $region12
      $region11: #{swin_transformer_block.1} parent=5 // pred_region
        %s628 = ssub.s32 %s37, 1
        // Predicated region
        $region13: #{swin_transformer_block.1} parent=11 // pred_check
          %p629 = pneg %p84
        $region14: #{swin_transformer_block.1} parent=11 // pred_check_branch
          %631 = sbr.rel (%p629) target = $region16
        $region15: #{swin_transformer_block.1} parent=11 // pred_region
          _
        $region16: #{swin_transformer_block.1} parent=11 // pred_fallthru
          _
        // Predicated region
        $region17: #{swin_transformer_block.1} parent=11 // pred_check
          %p632 = pneg %p105
        $region18: #{swin_transformer_block.1} parent=11 // pred_check_branch
          %634 = sbr.rel (%p632) target = $region20
        $region19: #{swin_transformer_block.1} parent=11 // pred_region
          _
        $region20: #{swin_transformer_block.1} parent=11 // pred_fallthru
          _
        // Predicated region
        $region21: #{swin_transformer_block.1} parent=11 // pred_check
          %p635 = pneg %p126
        $region22: #{swin_transformer_block.1} parent=11 // pred_check_branch
          %637 = sbr.rel (%p635) target = $region24
        $region23: #{swin_transformer_block.1} parent=11 // pred_region
          _
        $region24: #{swin_transformer_block.1} parent=11 // pred_fallthru
          _
        // Predicated region
        $region25: #{swin_transformer_block.1} parent=11 // pred_check
          %p638 = pneg %p147
        $region26: #{swin_transformer_block.1} parent=11 // pred_check_branch
          %640 = sbr.rel (%p638) target = $region28
        $region27: #{swin_transformer_block.1} parent=11 // pred_region
          _
        $region28: #{swin_transformer_block.1} parent=11 // pred_fallthru
          _
        // Predicated region
        $region29: #{swin_transformer_block.1} parent=11 // pred_check
          %p641 = pneg %p168
        $region30: #{swin_transformer_block.1} parent=11 // pred_check_branch
          %643 = sbr.rel (%p641) target = $region32
        $region31: #{swin_transformer_block.1} parent=11 // pred_region
          _
        $region32: #{swin_transformer_block.1} parent=11 // pred_fallthru
          _
        // Predicated region
        $region33: #{swin_transformer_block.1} parent=11 // pred_check
          %p644 = pneg %p189
        $region34: #{swin_transformer_block.1} parent=11 // pred_check_branch
          %646 = sbr.rel (%p644) target = $region36
        $region35: #{swin_transformer_block.1} parent=11 // pred_region
          _
        $region36: #{swin_transformer_block.1} parent=11 // pred_fallthru
          _
        // Predicated region
        $region37: #{swin_transformer_block.1} parent=11 // pred_check
          %p647 = pneg %p210
        $region38: #{swin_transformer_block.1} parent=11 // pred_check_branch
          %649 = sbr.rel (%p647) target = $region40
        $region39: #{swin_transformer_block.1} parent=11 // pred_region
          _
        $region40: #{swin_transformer_block.1} parent=11 // pred_fallthru
          _
        // Predicated region
        $region41: #{swin_transformer_block.1} parent=11 // pred_check
          %p650 = pneg %p231
        $region42: #{swin_transformer_block.1} parent=11 // pred_check_branch
          %652 = sbr.rel (%p650) target = $region44
        $region43: #{swin_transformer_block.1} parent=11 // pred_region
          _
        $region44: #{swin_transformer_block.1} parent=11 // pred_fallthru
          _
        // Predicated region
        $region45: #{swin_transformer_block.1} parent=11 // pred_check
          %p653 = pneg %p252
        $region46: #{swin_transformer_block.1} parent=11 // pred_check_branch
          %655 = sbr.rel (%p653) target = $region48
        $region47: #{swin_transformer_block.1} parent=11 // pred_region
          %s657 = ssub.s32 16, 16
          %658 = vsyncadd [#allocation3], %s657
          %s660 = sshll.u32 [#allocation2], 4
          %s661 = int_to_ptr.vmem [resolvable:$true] %s660
          %663 = dma.hbm_to_vmem [thread:$0]  %s9, 16, %s661, [#allocation3]
        $region48: #{swin_transformer_block.1} parent=11 // pred_fallthru
          _
        // Predicated region
        $region49: #{swin_transformer_block.1} parent=11 // pred_check
          %p664 = pneg %p273
        $region50: #{swin_transformer_block.1} parent=11 // pred_check_branch
          %666 = sbr.rel (%p664) target = $region52
        $region51: #{swin_transformer_block.1} parent=11 // pred_region
          _
        $region52: #{swin_transformer_block.1} parent=11 // pred_fallthru
          _
        // Predicated region
        $region53: #{swin_transformer_block.1} parent=11 // pred_check
          %p667 = pneg %p294
        $region54: #{swin_transformer_block.1} parent=11 // pred_check_branch
          %669 = sbr.rel (%p667) target = $region56
        $region55: #{swin_transformer_block.1} parent=11 // pred_region
          _
        $region56: #{swin_transformer_block.1} parent=11 // pred_fallthru
          _
        // Predicated region
        $region57: #{swin_transformer_block.1} parent=11 // pred_check
          %p670 = pneg %p315
        $region58: #{swin_transformer_block.1} parent=11 // pred_check_branch
          %672 = sbr.rel (%p670) target = $region60
        $region59: #{swin_transformer_block.1} parent=11 // pred_region
          _
        $region60: #{swin_transformer_block.1} parent=11 // pred_fallthru
          _
        // Predicated region
        $region61: #{swin_transformer_block.1} parent=11 // pred_check
          %p673 = pneg %p336
        $region62: #{swin_transformer_block.1} parent=11 // pred_check_branch
          %675 = sbr.rel (%p673) target = $region64
        $region63: #{swin_transformer_block.1} parent=11 // pred_region
          _
        $region64: #{swin_transformer_block.1} parent=11 // pred_fallthru
          _
        // Predicated region
        $region65: #{swin_transformer_block.1} parent=11 // pred_check
          %p676 = pneg %p357
        $region66: #{swin_transformer_block.1} parent=11 // pred_check_branch
          %678 = sbr.rel (%p676) target = $region68
        $region67: #{swin_transformer_block.1} parent=11 // pred_region
          _
        $region68: #{swin_transformer_block.1} parent=11 // pred_fallthru
          _
        // Predicated region
        $region69: #{swin_transformer_block.1} parent=11 // pred_check
          %p679 = pneg %p378
        $region70: #{swin_transformer_block.1} parent=11 // pred_check_branch
          %681 = sbr.rel (%p679) target = $region72
        $region71: #{swin_transformer_block.1} parent=11 // pred_region
          %s683 = ssub.s32 16, 16
          %684 = vsyncadd [#allocation6], %s683
          %s686 = sshll.u32 [#allocation5], 4
          %s687 = int_to_ptr.vmem [resolvable:$true] %s686
          %689 = dma.hbm_to_vmem [thread:$0]  %s15, 16, %s687, [#allocation6]
        $region72: #{swin_transformer_block.1} parent=11 // pred_fallthru
          _
        // Predicated region
        $region73: #{swin_transformer_block.1} parent=11 // pred_check
          %p690 = pneg %p399
        $region74: #{swin_transformer_block.1} parent=11 // pred_check_branch
          %692 = sbr.rel (%p690) target = $region76
        $region75: #{swin_transformer_block.1} parent=11 // pred_region
          _
        $region76: #{swin_transformer_block.1} parent=11 // pred_fallthru
          _
        // Predicated region
        $region77: #{swin_transformer_block.1} parent=11 // pred_check
          %p693 = pneg %p420
        $region78: #{swin_transformer_block.1} parent=11 // pred_check_branch
          %695 = sbr.rel (%p693) target = $region80
        $region79: #{swin_transformer_block.1} parent=11 // pred_region
          _
        $region80: #{swin_transformer_block.1} parent=11 // pred_fallthru
          _
        // Predicated region
        $region81: #{swin_transformer_block.1} parent=11 // pred_check
          %p696 = pneg %p441
        $region82: #{swin_transformer_block.1} parent=11 // pred_check_branch
          %698 = sbr.rel (%p696) target = $region84
        $region83: #{swin_transformer_block.1} parent=11 // pred_region
          _
        $region84: #{swin_transformer_block.1} parent=11 // pred_fallthru
          _
        // Predicated region
        $region85: #{swin_transformer_block.1} parent=11 // pred_check
          %p699 = pneg %p462
        $region86: #{swin_transformer_block.1} parent=11 // pred_check_branch
          %701 = sbr.rel (%p699) target = $region88
        $region87: #{swin_transformer_block.1} parent=11 // pred_region
          _
        $region88: #{swin_transformer_block.1} parent=11 // pred_fallthru
          _
        // Predicated region
        $region89: #{swin_transformer_block.1} parent=11 // pred_check
          %p702 = pneg %p483
        $region90: #{swin_transformer_block.1} parent=11 // pred_check_branch
          %704 = sbr.rel (%p702) target = $region92
        $region91: #{swin_transformer_block.1} parent=11 // pred_region
          _
        $region92: #{swin_transformer_block.1} parent=11 // pred_fallthru
          _
        // Predicated region
        $region93: #{swin_transformer_block.1} parent=11 // pred_check
          %p705 = pneg %p504
        $region94: #{swin_transformer_block.1} parent=11 // pred_check_branch
          %707 = sbr.rel (%p705) target = $region96
        $region95: #{swin_transformer_block.1} parent=11 // pred_region
          %s709 = ssub.s32 16, 16
          %710 = vsyncadd [#allocation6], %s709
          %s712 = sshll.u32 [#allocation7], 4
          %s713 = int_to_ptr.vmem [resolvable:$true] %s712
          %715 = dma.hbm_to_vmem [thread:$0]  %s21, 16, %s713, [#allocation6]
        $region96: #{swin_transformer_block.1} parent=11 // pred_fallthru
          _
        // Predicated region
        $region97: #{swin_transformer_block.1} parent=11 // pred_check
          %p716 = pneg %p525
        $region98: #{swin_transformer_block.1} parent=11 // pred_check_branch
          %718 = sbr.rel (%p716) target = $region100
        $region99: #{swin_transformer_block.1} parent=11 // pred_region
          _
        $region100: #{swin_transformer_block.1} parent=11 // pred_fallthru
          _
        // Predicated region
        $region101: #{swin_transformer_block.1} parent=11 // pred_check
          %p719 = pneg %p546
        $region102: #{swin_transformer_block.1} parent=11 // pred_check_branch
          %721 = sbr.rel (%p719) target = $region104
        $region103: #{swin_transformer_block.1} parent=11 // pred_region
          _
        $region104: #{swin_transformer_block.1} parent=11 // pred_fallthru
          _
        // Predicated region
        $region105: #{swin_transformer_block.1} parent=11 // pred_check
          %p722 = pneg %p567
        $region106: #{swin_transformer_block.1} parent=11 // pred_check_branch
          %724 = sbr.rel (%p722) target = $region108
        $region107: #{swin_transformer_block.1} parent=11 // pred_region
          _
        $region108: #{swin_transformer_block.1} parent=11 // pred_fallthru
          _
        // Predicated region
        $region109: #{swin_transformer_block.1} parent=11 // pred_check
          %p725 = pneg %p588
        $region110: #{swin_transformer_block.1} parent=11 // pred_check_branch
          %727 = sbr.rel (%p725) target = $region112
        $region111: #{swin_transformer_block.1} parent=11 // pred_region
          _
        $region112: #{swin_transformer_block.1} parent=11 // pred_fallthru
          _
      $region12: #{swin_transformer_block.1} parent=5 // pred_fallthru
        _
      %p728 = scmp.lt.s32.totalorder %s37, 2
      // Predicated region
      $region113: #{swin_transformer_block.1} parent=5 // pred_check
        %p729 = pneg %p728
      $region114: #{swin_transformer_block.1} parent=5 // pred_check_branch
        %731 = sbr.rel (%p729) target = $region116
      $region115: #{swin_transformer_block.1} parent=5 // pred_region
        // Predicated region
        $region117: #{swin_transformer_block.1} parent=115 // pred_check
          %p732 = pneg %p57
        $region118: #{swin_transformer_block.1} parent=115 // pred_check_branch
          %734 = sbr.rel (%p732) target = $region120
        $region119: #{swin_transformer_block.1} parent=115 // pred_region
          %p735 = scmp.lt.s32.totalorder %s37, 1
          %s736 = scalar_select %p735, %s37, 1
          %s737 = smul.addr %s736, 8
          %s738 = smul.addr %s737, 8
          %s739 = scalar_lea.vmem %s0, %s738
        $region120: #{swin_transformer_block.1} parent=115 // pred_fallthru
          _
      $region116: #{swin_transformer_block.1} parent=5 // pred_fallthru
        _
      %p740 = scmp.le.s32.totalorder 1, %s37
      %p741 = scmp.lt.s32.totalorder %s37, 3
      %p742 = pnand %p740, %p741
      %p743 = pneg %p742
      // Predicated region
      $region121: #{swin_transformer_block.1} parent=5 // pred_check
        _
      $region122: #{swin_transformer_block.1} parent=5 // pred_check_branch
        %745 = sbr.rel (%p742) target = $region124
      $region123: #{swin_transformer_block.1} parent=5 // pred_region
        %s746 = ssub.s32 %s37, 1
        // Predicated region
        $region125: #{swin_transformer_block.1} parent=123 // pred_check
          %p747 = pneg %p252
        $region126: #{swin_transformer_block.1} parent=123 // pred_check_branch
          %749 = sbr.rel (%p747) target = $region128
        $region127: #{swin_transformer_block.1} parent=123 // pred_region
          %750 = dma.done [#allocation3], 16
        $region128: #{swin_transformer_block.1} parent=123 // pred_fallthru
          _
        // Predicated region
        $region129: #{swin_transformer_block.1} parent=123 // pred_check
          %p751 = pneg %p378
        $region130: #{swin_transformer_block.1} parent=123 // pred_check_branch
          %753 = sbr.rel (%p751) target = $region132
        $region131: #{swin_transformer_block.1} parent=123 // pred_region
          %754 = dma.done [#allocation6], 16
        $region132: #{swin_transformer_block.1} parent=123 // pred_fallthru
          _
        // Predicated region
        $region133: #{swin_transformer_block.1} parent=123 // pred_check
          %p755 = pneg %p504
        $region134: #{swin_transformer_block.1} parent=123 // pred_check_branch
          %757 = sbr.rel (%p755) target = $region136
        $region135: #{swin_transformer_block.1} parent=123 // pred_region
          %758 = dma.done [#allocation6], 16
        $region136: #{swin_transformer_block.1} parent=123 // pred_fallthru
          _
        %p759 = scmp.lt.s32.totalorder %s42, 1
        %s760 = scalar_select %p759, %s42, 1
        %s761 = smul.addr %s760, 8
        %s762 = smul.addr %s761, 8
        %s763 = scalar_lea.vmem %s0, %s762
        %p764 = pneg %p63
        %p765 = pneg %p60
        %p766 = pneg %p84
        %p767 = pneg %p81
        %p768 = pneg %p105
        %p769 = pneg %p102
        %p770 = pneg %p126
        %p771 = pneg %p123
        %p772 = pneg %p147
        %p773 = pneg %p144
        %p774 = pneg %p168
        %p775 = pneg %p165
        %p776 = pneg %p189
        %p777 = pneg %p186
        %p778 = pneg %p210
        %p779 = pneg %p207
        %p780 = pneg %p231
        %p781 = pneg %p228
        %p782 = pneg %p252
        %p783 = pneg %p249
        %p784 = pneg %p273
        %p785 = pneg %p270
        %p786 = pneg %p294
        %p787 = pneg %p291
        %p788 = pneg %p315
        %p789 = pneg %p312
        %p790 = pneg %p336
        %p791 = pneg %p333
        %p792 = pneg %p357
        %p793 = pneg %p354
        %p794 = pneg %p378
        %p795 = pneg %p375
        %p796 = pneg %p399
        %p797 = pneg %p396
        %p798 = pneg %p420
        %p799 = pneg %p417
        %p800 = pneg %p441
        %p801 = pneg %p438
        %p802 = pneg %p462
        %p803 = pneg %p459
        %p804 = pneg %p483
        %p805 = pneg %p480
        %p806 = pneg %p504
        %p807 = pneg %p501
        %p808 = pneg %p525
        %p809 = pneg %p522
        %p810 = pneg %p546
        %p811 = pneg %p543
        %p812 = pneg %p567
        %p813 = pneg %p564
        %p814 = pneg %p588
        %p815 = pneg %p585
        %p816 = pneg %p614
        %p817 = pneg %p611
        %s818 = sand.u32 %s601, 1
        %s819 = scalar_lea.sflag [#allocation4], %s818
        %s820 = sand.u32 %s601, 1
        %s821 = smul.addr %s820, 64
        %s822 = scalar_lea.vmem [#allocation8], %s821
        %p823 = scmp.lt.s32.totalorder %s42, 1
        %s824 = scalar_select %p823, %s42, 1
        %s825 = smul.addr %s824, 8
        %s826 = smul.addr %s825, 8
        %s827 = scalar_lea.vmem %s0, %s826
        %v828 = vld [vmem:[%s827] sm:$0xff]
        %v829 = vld [vmem:[%s827 + $0x8] sm:$0xff]
        %v830 = vld [vmem:[%s827 + $0x10] sm:$0xff]
        %v831 = vld [vmem:[%s827 + $0x18] sm:$0xff]
        %v832 = vld [vmem:[%s827 + $0x20] sm:$0xff]
        %v833 = vld [vmem:[%s827 + $0x28] sm:$0xff]
        %v834 = vld [vmem:[%s827 + $0x30] sm:$0xff]
        %v835 = vld [vmem:[%s827 + $0x38] sm:$0xff]
        %v836 = vld [vmem:[%s1] sm:$0xff]
        %v837 = vld [vmem:[%s1 + $0x8] sm:$0xff]
        %v838 = vld [vmem:[%s1 + $0x10] sm:$0xff]
        %v839 = vld [vmem:[%s1 + $0x18] sm:$0xff]
        %v840 = vld [vmem:[%s1 + $0x20] sm:$0xff]
        %v841 = vld [vmem:[%s1 + $0x28] sm:$0xff]
        %v842 = vld [vmem:[%s1 + $0x30] sm:$0xff]
        %v843 = vld [vmem:[%s1 + $0x38] sm:$0xff]
        %s844 = scalar_lea.vmem %s1, 64
        %v845 = vld [vmem:[%s844] sm:$0xff]
        %v846 = vld [vmem:[%s844 + $0x8] sm:$0xff]
        %v847 = vld [vmem:[%s844 + $0x10] sm:$0xff]
        %v848 = vld [vmem:[%s844 + $0x18] sm:$0xff]
        %v849 = vld [vmem:[%s844 + $0x20] sm:$0xff]
        %v850 = vld [vmem:[%s844 + $0x28] sm:$0xff]
        %v851 = vld [vmem:[%s844 + $0x30] sm:$0xff]
        %v852 = vld [vmem:[%s844 + $0x38] sm:$0xff]
        %s853 = scalar_lea.vmem %s1, 128
        %v854 = vld [vmem:[%s853] sm:$0xff]
        %v855 = vld [vmem:[%s853 + $0x8] sm:$0xff]
        %v856 = vld [vmem:[%s853 + $0x10] sm:$0xff]
        %v857 = vld [vmem:[%s853 + $0x18] sm:$0xff]
        %v858 = vld [vmem:[%s853 + $0x20] sm:$0xff]
        %v859 = vld [vmem:[%s853 + $0x28] sm:$0xff]
        %v860 = vld [vmem:[%s853 + $0x30] sm:$0xff]
        %v861 = vld [vmem:[%s853 + $0x38] sm:$0xff]
        %s862 = scalar_lea.vmem %s1, 192
        %v863 = vld [vmem:[%s862] sm:$0xff]
        %v864 = vld [vmem:[%s862 + $0x8] sm:$0xff]
        %v865 = vld [vmem:[%s862 + $0x10] sm:$0xff]
        %v866 = vld [vmem:[%s862 + $0x18] sm:$0xff]
        %v867 = vld [vmem:[%s862 + $0x20] sm:$0xff]
        %v868 = vld [vmem:[%s862 + $0x28] sm:$0xff]
        %v869 = vld [vmem:[%s862 + $0x30] sm:$0xff]
        %v870 = vld [vmem:[%s862 + $0x38] sm:$0xff]
        %vm871 = vcmask 523264
        %v873 = vsel %vm871, %v836, 0
        %v876 = vsel %vm871, %v837, 0
        %v879 = vsel %vm871, %v838, 0
        %v882 = vsel %vm871, %v839, 0
        %v885 = vsel %vm871, %v840, 0
        %v888 = vsel %vm871, %v841, 0
        %v891 = vsel %vm871, %v842, 0
        %v894 = vsel %vm871, %v843, 0
        %896 = vmatprep.subr.mxu0 0.0
        %897 = vmatpush1.msra.mxu0 0.0
        %898 = vmatprep.subr.mxu0 0.0
        %899 = vmatpush1.msra.mxu0 0.0
        %900 = vmatprep.subr.mxu0 0.0
        %901 = vmatpush1.msra.mxu0 0.0
        %902 = vmatprep.subr.mxu0 0.0
        %903 = vmatpush1.msra.mxu0 0.0
        %904 = vmatprep.subr.mxu0 0.0
        %905 = vmatpush1.msra.mxu0 0.0
        %906 = vmatprep.subr.mxu0 0.0
        %907 = vmatpush1.msra.mxu0 0.0
        %908 = vmatprep.subr.mxu0 0.0
        %909 = vmatpush1.msra.mxu0 0.0
        %910 = vmatprep.subr.mxu0 0.0
        %911 = vmatpush1.msra.mxu0 0.0
        %912 = vmatprep.subr.mxu0 0.0
        %913 = vmatpush1.msra.mxu0 %v835
        %914 = vmatprep.subr.mxu0 0.0
        %915 = vmatpush1.msra.mxu0 %v834
        %916 = vmatprep.subr.mxu0 0.0
        %917 = vmatpush1.msra.mxu0 %v833
        %918 = vmatprep.subr.mxu0 0.0
        %919 = vmatpush1.msra.mxu0 %v832
        %920 = vmatprep.subr.mxu0 0.0
        %921 = vmatpush1.msra.mxu0 %v831
        %922 = vmatprep.subr.mxu0 0.0
        %923 = vmatpush1.msra.mxu0 %v830
        %924 = vmatprep.subr.mxu0 0.0
        %925 = vmatpush1.msra.mxu0 %v829
        %926 = vmatprep.subr.mxu0 0.0
        %927 = vmatpush1.msra.mxu0 %v828
        %928 = vmatprep.subr.mxu0 0.0
        %929 = vmatpush2.msra.mxu0 0.0
        %930 = vmatprep.subr.mxu0 0.0
        %931 = vmatpush2.msra.mxu0 0.0
        %932 = vmatprep.subr.mxu0 0.0
        %933 = vmatpush2.msra.mxu0 0.0
        %934 = vmatprep.subr.mxu0 0.0
        %935 = vmatpush2.msra.mxu0 0.0
        %936 = vmatprep.subr.mxu0 0.0
        %937 = vmatpush2.msra.mxu0 0.0
        %938 = vmatprep.subr.mxu0 0.0
        %939 = vmatpush2.msra.mxu0 0.0
        %940 = vmatprep.subr.mxu0 0.0
        %941 = vmatpush2.msra.mxu0 0.0
        %942 = vmatprep.subr.mxu0 0.0
        %943 = vmatpush2.msra.mxu0 0.0
        %944 = vmatprep.subr.mxu0 0.0
        %945 = vmatpush2.msra.mxu0 0.0
        %946 = vmatprep.subr.mxu0 0.0
        %947 = vmatpush2.msra.mxu0 0.0
        %948 = vmatprep.subr.mxu0 0.0
        %949 = vmatpush2.msra.mxu0 0.0
        %950 = vmatprep.subr.mxu0 0.0
        %951 = vmatpush2.msra.mxu0 0.0
        %952 = vmatprep.subr.mxu0 0.0
        %953 = vmatpush2.msra.mxu0 0.0
        %954 = vmatprep.subr.mxu0 0.0
        %955 = vmatpush2.msra.mxu0 0.0
        %956 = vmatprep.subr.mxu0 0.0
        %957 = vmatpush2.msra.mxu0 0.0
        %958 = vmatprep.subr.mxu0 0.0
        %959 = vmatpush2.msra.mxu0 0.0
        %960 = vmatprep.mubr.f32.mxu0 0.0
        %961 = vmatmul.mubr.f32.gmra.mxu0 %v873
        %v962 = vpop.f32.mrf.mxu0
        %v963 = vadd.f32 0.0, %v962
        %v964 = vpop.f32.mrf.mxu0
        %965 = vmatprep.mubr.f32.mxu0 0.0
        %966 = vmatmul.mubr.f32.gmra.mxu0 %v876
        %v967 = vpop.f32.mrf.mxu0
        %v968 = vadd.f32 0.0, %v967
        %v969 = vpop.f32.mrf.mxu0
        %970 = vmatprep.mubr.f32.mxu0 0.0
        %971 = vmatmul.mubr.f32.gmra.mxu0 %v879
        %v972 = vpop.f32.mrf.mxu0
        %v973 = vadd.f32 0.0, %v972
        %v974 = vpop.f32.mrf.mxu0
        %975 = vmatprep.mubr.f32.mxu0 0.0
        %976 = vmatmul.mubr.f32.gmra.mxu0 %v882
        %v977 = vpop.f32.mrf.mxu0
        %v978 = vadd.f32 0.0, %v977
        %v979 = vpop.f32.mrf.mxu0
        %980 = vmatprep.mubr.f32.mxu0 0.0
        %981 = vmatmul.mubr.f32.gmra.mxu0 %v885
        %v982 = vpop.f32.mrf.mxu0
        %v983 = vadd.f32 0.0, %v982
        %v984 = vpop.f32.mrf.mxu0
        %985 = vmatprep.mubr.f32.mxu0 0.0
        %986 = vmatmul.mubr.f32.gmra.mxu0 %v888
        %v987 = vpop.f32.mrf.mxu0
        %v988 = vadd.f32 0.0, %v987
        %v989 = vpop.f32.mrf.mxu0
        %990 = vmatprep.mubr.f32.mxu0 0.0
        %991 = vmatmul.mubr.f32.gmra.mxu0 %v891
        %v992 = vpop.f32.mrf.mxu0
        %v993 = vadd.f32 0.0, %v992
        %v994 = vpop.f32.mrf.mxu0
        %995 = vmatprep.mubr.f32.mxu0 0.0
        %996 = vmatmul.mubr.f32.gmra.mxu0 %v894
        %v997 = vpop.f32.mrf.mxu0
        %v998 = vadd.f32 0.0, %v997
        %v999 = vpop.f32.mrf.mxu0
        %1000 = vdwg.mxu0
        %v1001 = vld [vmem:[%s2] sm:$0x1]
        %v1002 = vld [vmem:[%s3] sm:$0x1]
        %v1003 = vld [vmem:[%s4] sm:$0xff]
        %v1004 = vld [vmem:[%s4 + $0x8] sm:$0xff]
        %v1005 = vld [vmem:[%s4 + $0x10] sm:$0xff]
        %v1006 = vld [vmem:[%s4 + $0x18] sm:$0xff]
        %v1007 = vld [vmem:[%s5] sm:$0x1]
        %v1008 = vld [vmem:[%s6] sm:$0xff]
        %v1009 = vld [vmem:[%s6 + $0x8] sm:$0xff]
        %v1010 = vld [vmem:[%s6 + $0x10] sm:$0xff]
        %v1011 = vld [vmem:[%s6 + $0x18] sm:$0xff]
        %v1012 = vld [vmem:[%s7] sm:$0x1]
        %vm1013 = vcmask 261120
        %v1014 = vsel %vm1013, %v963, 0.0
        %1015 = vadd.xlane.f32.xlu0 %v1014
        %v1016 = vpop.xlane.xlu0 %1015
        %v1017 = vsel %vm1013, %v968, 0.0
        %1018 = vadd.xlane.f32.xlu0 %v1017
        %v1019 = vpop.xlane.xlu0 %1018
        %v1020 = vsel %vm1013, %v973, 0.0
        %1021 = vadd.xlane.f32.xlu0 %v1020
        %v1022 = vpop.xlane.xlu0 %1021
        %v1023 = vsel %vm1013, %v978, 0.0
        %1024 = vadd.xlane.f32.xlu0 %v1023
        %v1025 = vpop.xlane.xlu0 %1024
        %v1026 = vsel %vm1013, %v983, 0.0
        %1027 = vadd.xlane.f32.xlu0 %v1026
        %v1028 = vpop.xlane.xlu0 %1027
        %v1029 = vsel %vm1013, %v988, 0.0
        %1030 = vadd.xlane.f32.xlu0 %v1029
        %v1031 = vpop.xlane.xlu0 %1030
        %v1032 = vsel %vm1013, %v993, 0.0
        %1033 = vadd.xlane.f32.xlu0 %v1032
        %v1034 = vpop.xlane.xlu0 %1033
        %v1035 = vsel %vm1013, %v998, 0.0
        %1036 = vadd.xlane.f32.xlu0 %v1035
        %v1037 = vpop.xlane.xlu0 %1036
        %v1038 = vrcp.pop 32.0
        %v1039 = vmul.f32 %v1016, %v1038
        %v1040 = vmul.f32 %v1019, %v1038
        %v1041 = vmul.f32 %v1022, %v1038
        %v1042 = vmul.f32 %v1025, %v1038
        %v1043 = vmul.f32 %v1028, %v1038
        %v1044 = vmul.f32 %v1031, %v1038
        %v1045 = vmul.f32 %v1034, %v1038
        %v1046 = vmul.f32 %v1037, %v1038
        %v1047 = vsub.f32 %v963, %v1039
        %v1048 = vsub.f32 %v968, %v1040
        %v1049 = vsub.f32 %v973, %v1041
        %v1050 = vsub.f32 %v978, %v1042
        %v1051 = vsub.f32 %v983, %v1043
        %v1052 = vsub.f32 %v988, %v1044
        %v1053 = vsub.f32 %v993, %v1045
        %v1054 = vsub.f32 %v998, %v1046
        %v1055 = vmul.f32 %v1047, %v1047
        %v1056 = vmul.f32 %v1048, %v1048
        %v1057 = vmul.f32 %v1049, %v1049
        %v1058 = vmul.f32 %v1050, %v1050
        %v1059 = vmul.f32 %v1051, %v1051
        %v1060 = vmul.f32 %v1052, %v1052
        %v1061 = vmul.f32 %v1053, %v1053
        %v1062 = vmul.f32 %v1054, %v1054
        %v1063 = vsel %vm1013, %v1055, 0.0
        %1064 = vadd.xlane.f32.xlu0 %v1063
        %v1065 = vpop.xlane.xlu0 %1064
        %v1066 = vsel %vm1013, %v1056, 0.0
        %1067 = vadd.xlane.f32.xlu0 %v1066
        %v1068 = vpop.xlane.xlu0 %1067
        %v1069 = vsel %vm1013, %v1057, 0.0
        %1070 = vadd.xlane.f32.xlu0 %v1069
        %v1071 = vpop.xlane.xlu0 %1070
        %v1072 = vsel %vm1013, %v1058, 0.0
        %1073 = vadd.xlane.f32.xlu0 %v1072
        %v1074 = vpop.xlane.xlu0 %1073
        %v1075 = vsel %vm1013, %v1059, 0.0
        %1076 = vadd.xlane.f32.xlu0 %v1075
        %v1077 = vpop.xlane.xlu0 %1076
        %v1078 = vsel %vm1013, %v1060, 0.0
        %1079 = vadd.xlane.f32.xlu0 %v1078
        %v1080 = vpop.xlane.xlu0 %1079
        %v1081 = vsel %vm1013, %v1061, 0.0
        %1082 = vadd.xlane.f32.xlu0 %v1081
        %v1083 = vpop.xlane.xlu0 %1082
        %v1084 = vsel %vm1013, %v1062, 0.0
        %1085 = vadd.xlane.f32.xlu0 %v1084
        %v1086 = vpop.xlane.xlu0 %1085
        %v1087 = vmul.f32 %v1065, %v1038
        %v1088 = vmul.f32 %v1068, %v1038
        %v1089 = vmul.f32 %v1071, %v1038
        %v1090 = vmul.f32 %v1074, %v1038
        %v1091 = vmul.f32 %v1077, %v1038
        %v1092 = vmul.f32 %v1080, %v1038
        %v1093 = vmul.f32 %v1083, %v1038
        %v1094 = vmul.f32 %v1086, %v1038
        %v1095 = vadd.f32 %v1087, 1e-05
        %v1096 = vadd.f32 %v1088, 1e-05
        %v1097 = vadd.f32 %v1089, 1e-05
        %v1098 = vadd.f32 %v1090, 1e-05
        %v1099 = vadd.f32 %v1091, 1e-05
        %v1100 = vadd.f32 %v1092, 1e-05
        %v1101 = vadd.f32 %v1093, 1e-05
        %v1102 = vadd.f32 %v1094, 1e-05
        %v1103 = vrsqrt.pop %v1095
        %v1104 = vrsqrt.pop %v1096
        %v1105 = vrsqrt.pop %v1097
        %v1106 = vrsqrt.pop %v1098
        %v1107 = vrsqrt.pop %v1099
        %v1108 = vrsqrt.pop %v1100
        %v1109 = vrsqrt.pop %v1101
        %v1110 = vrsqrt.pop %v1102
        %v1111 = vmul.f32 %v1047, %v1103
        %v1112 = vmul.f32 %v1048, %v1104
        %v1113 = vmul.f32 %v1049, %v1105
        %v1114 = vmul.f32 %v1050, %v1106
        %v1115 = vmul.f32 %v1051, %v1107
        %v1116 = vmul.f32 %v1052, %v1108
        %v1117 = vmul.f32 %v1053, %v1109
        %v1118 = vmul.f32 %v1054, %v1110
        %v1120 = vlaneseq
        %v1121 = vshrl.u32 %v1120, 7
        %v1122 = vsub.s32 0, %v1121
        %v1123 = vrot.slane %v1001, %v1122
        %v1125 = vmul.f32 %v1111, %v1123
        %v1126 = vmul.f32 %v1112, %v1123
        %v1127 = vmul.f32 %v1113, %v1123
        %v1128 = vmul.f32 %v1114, %v1123
        %v1129 = vmul.f32 %v1115, %v1123
        %v1130 = vmul.f32 %v1116, %v1123
        %v1131 = vmul.f32 %v1117, %v1123
        %v1132 = vmul.f32 %v1118, %v1123
        %v1134 = vlaneseq
        %v1135 = vshrl.u32 %v1134, 7
        %v1136 = vsub.s32 0, %v1135
        %v1137 = vrot.slane %v1002, %v1136
        %v1139 = vadd.f32 %v1125, %v1137
        %v1140 = vadd.f32 %v1126, %v1137
        %v1141 = vadd.f32 %v1127, %v1137
        %v1142 = vadd.f32 %v1128, %v1137
        %v1143 = vadd.f32 %v1129, %v1137
        %v1144 = vadd.f32 %v1130, %v1137
        %v1145 = vadd.f32 %v1131, %v1137
        %v1146 = vadd.f32 %v1132, %v1137
        %v1148 = vlaneseq
        %v1149 = vshrl.u32 %v1148, 7
        %v1150 = vsub.s32 0, %v1149
        %v1151 = vrot.slane %v1007, %v1150
        %v1154 = vsel %vm1013, %v1139, 0
        %v1157 = vsel %vm1013, %v1140, 0
        %v1160 = vsel %vm1013, %v1141, 0
        %v1163 = vsel %vm1013, %v1142, 0
        %v1166 = vsel %vm1013, %v1143, 0
        %v1169 = vsel %vm1013, %v1144, 0
        %v1172 = vsel %vm1013, %v1145, 0
        %v1175 = vsel %vm1013, %v1146, 0
        %1177 = vmatprep.subr.mxu0 0.0
        %1178 = vmatpush1.msra.mxu0 0.0
        %1179 = vmatprep.subr.mxu0 0.0
        %1180 = vmatpush1.msra.mxu0 0.0
        %1181 = vmatprep.subr.mxu0 0.0
        %1182 = vmatpush1.msra.mxu0 0.0
        %1183 = vmatprep.subr.mxu0 0.0
        %1184 = vmatpush1.msra.mxu0 0.0
        %1185 = vmatprep.subr.mxu0 0.0
        %1186 = vmatpush1.msra.mxu0 0.0
        %1187 = vmatprep.subr.mxu0 0.0
        %1188 = vmatpush1.msra.mxu0 0.0
        %1189 = vmatprep.subr.mxu0 0.0
        %1190 = vmatpush1.msra.mxu0 0.0
        %1191 = vmatprep.subr.mxu0 0.0
        %1192 = vmatpush1.msra.mxu0 0.0
        %1193 = vmatprep.subr.mxu0 0.0
        %1194 = vmatpush1.msra.mxu0 0.0
        %1195 = vmatprep.subr.mxu0 0.0
        %1196 = vmatpush1.msra.mxu0 0.0
        %1197 = vmatprep.subr.mxu0 0.0
        %1198 = vmatpush1.msra.mxu0 0.0
        %1199 = vmatprep.subr.mxu0 0.0
        %1200 = vmatpush1.msra.mxu0 0.0
        %1201 = vmatprep.subr.mxu0 0.0
        %1202 = vmatpush1.msra.mxu0 %v1006
        %1203 = vmatprep.subr.mxu0 0.0
        %1204 = vmatpush1.msra.mxu0 %v1005
        %1205 = vmatprep.subr.mxu0 0.0
        %1206 = vmatpush1.msra.mxu0 %v1004
        %1207 = vmatprep.subr.mxu0 0.0
        %1208 = vmatpush1.msra.mxu0 %v1003
        %1209 = vmatprep.subr.mxu0 0.0
        %1210 = vmatpush2.msra.mxu0 0.0
        %1211 = vmatprep.subr.mxu0 0.0
        %1212 = vmatpush2.msra.mxu0 0.0
        %1213 = vmatprep.subr.mxu0 0.0
        %1214 = vmatpush2.msra.mxu0 0.0
        %1215 = vmatprep.subr.mxu0 0.0
        %1216 = vmatpush2.msra.mxu0 0.0
        %1217 = vmatprep.subr.mxu0 0.0
        %1218 = vmatpush2.msra.mxu0 0.0
        %1219 = vmatprep.subr.mxu0 0.0
        %1220 = vmatpush2.msra.mxu0 0.0
        %1221 = vmatprep.subr.mxu0 0.0
        %1222 = vmatpush2.msra.mxu0 0.0
        %1223 = vmatprep.subr.mxu0 0.0
        %1224 = vmatpush2.msra.mxu0 0.0
        %1225 = vmatprep.subr.mxu0 0.0
        %1226 = vmatpush2.msra.mxu0 0.0
        %1227 = vmatprep.subr.mxu0 0.0
        %1228 = vmatpush2.msra.mxu0 0.0
        %1229 = vmatprep.subr.mxu0 0.0
        %1230 = vmatpush2.msra.mxu0 0.0
        %1231 = vmatprep.subr.mxu0 0.0
        %1232 = vmatpush2.msra.mxu0 0.0
        %1233 = vmatprep.subr.mxu0 0.0
        %1234 = vmatpush2.msra.mxu0 0.0
        %1235 = vmatprep.subr.mxu0 0.0
        %1236 = vmatpush2.msra.mxu0 0.0
        %1237 = vmatprep.subr.mxu0 0.0
        %1238 = vmatpush2.msra.mxu0 0.0
        %1239 = vmatprep.subr.mxu0 0.0
        %1240 = vmatpush2.msra.mxu0 0.0
        %1241 = vmatprep.mubr.f32.mxu0 0.0
        %1242 = vmatmul.mubr.f32.gmra.mxu0 %v1154
        %v1243 = vpop.f32.mrf.mxu0
        %v1244 = vadd.f32 %v1151, %v1243
        %v1245 = vpop.f32.mrf.mxu0
        %1246 = vmatprep.mubr.f32.mxu0 0.0
        %1247 = vmatmul.mubr.f32.gmra.mxu0 %v1157
        %v1248 = vpop.f32.mrf.mxu0
        %v1249 = vadd.f32 %v1151, %v1248
        %v1250 = vpop.f32.mrf.mxu0
        %1251 = vmatprep.mubr.f32.mxu0 0.0
        %1252 = vmatmul.mubr.f32.gmra.mxu0 %v1160
        %v1253 = vpop.f32.mrf.mxu0
        %v1254 = vadd.f32 %v1151, %v1253
        %v1255 = vpop.f32.mrf.mxu0
        %1256 = vmatprep.mubr.f32.mxu0 0.0
        %1257 = vmatmul.mubr.f32.gmra.mxu0 %v1163
        %v1258 = vpop.f32.mrf.mxu0
        %v1259 = vadd.f32 %v1151, %v1258
        %v1260 = vpop.f32.mrf.mxu0
        %1261 = vmatprep.mubr.f32.mxu0 0.0
        %1262 = vmatmul.mubr.f32.gmra.mxu0 %v1166
        %v1263 = vpop.f32.mrf.mxu0
        %v1264 = vadd.f32 %v1151, %v1263
        %v1265 = vpop.f32.mrf.mxu0
        %1266 = vmatprep.mubr.f32.mxu0 0.0
        %1267 = vmatmul.mubr.f32.gmra.mxu0 %v1169
        %v1268 = vpop.f32.mrf.mxu0
        %v1269 = vadd.f32 %v1151, %v1268
        %v1270 = vpop.f32.mrf.mxu0
        %1271 = vmatprep.mubr.f32.mxu0 0.0
        %1272 = vmatmul.mubr.f32.gmra.mxu0 %v1172
        %v1273 = vpop.f32.mrf.mxu0
        %v1274 = vadd.f32 %v1151, %v1273
        %v1275 = vpop.f32.mrf.mxu0
        %1276 = vmatprep.mubr.f32.mxu0 0.0
        %1277 = vmatmul.mubr.f32.gmra.mxu0 %v1175
        %v1278 = vpop.f32.mrf.mxu0
        %v1279 = vadd.f32 %v1151, %v1278
        %v1280 = vpop.f32.mrf.mxu0
        %1281 = vdwg.mxu0
        %1290 = vrot.lane.b32.xlu0 %v1244, 96
        %v1291 = vpop.permute.xlu0 %1290
        %1292 = vrot.lane.b32.xlu0 %v1249, 96
        %v1293 = vpop.permute.xlu0 %1292
        %1294 = vrot.lane.b32.xlu0 %v1254, 96
        %v1295 = vpop.permute.xlu0 %1294
        %1296 = vrot.lane.b32.xlu0 %v1259, 96
        %v1297 = vpop.permute.xlu0 %1296
        %1298 = vrot.lane.b32.xlu0 %v1264, 96
        %v1299 = vpop.permute.xlu0 %1298
        %1300 = vrot.lane.b32.xlu0 %v1269, 96
        %v1301 = vpop.permute.xlu0 %1300
        %1302 = vrot.lane.b32.xlu0 %v1274, 96
        %v1303 = vpop.permute.xlu0 %1302
        %1304 = vrot.lane.b32.xlu0 %v1279, 96
        %v1305 = vpop.permute.xlu0 %1304
        %vm1306 = vcmask 130048
        %v1307 = vsel %vm1306, %v1244, 0
        %v1309 = vsel %vm1306, %v1249, 0
        %v1311 = vsel %vm1306, %v1254, 0
        %v1313 = vsel %vm1306, %v1259, 0
        %v1315 = vsel %vm1306, %v1264, 0
        %v1317 = vsel %vm1306, %v1269, 0
        %v1319 = vsel %vm1306, %v1274, 0
        %v1321 = vsel %vm1306, %v1279, 0
        %v1323 = vsel %vm1306, %v1291, 0
        %v1325 = vsel %vm1306, %v1293, 0
        %v1327 = vsel %vm1306, %v1295, 0
        %v1329 = vsel %vm1306, %v1297, 0
        %v1331 = vsel %vm1306, %v1299, 0
        %v1333 = vsel %vm1306, %v1301, 0
        %v1335 = vsel %vm1306, %v1303, 0
        %v1337 = vsel %vm1306, %v1305, 0
        %1339 = vmatprep.subr.mxu0 0.0
        %1340 = vmatpush1.xpose.msra.mxu0 0.0
        %1341 = vmatprep.subr.mxu0 0.0
        %1342 = vmatpush1.xpose.msra.mxu0 0.0
        %1343 = vmatprep.subr.mxu0 0.0
        %1344 = vmatpush1.xpose.msra.mxu0 0.0
        %1345 = vmatprep.subr.mxu0 0.0
        %1346 = vmatpush1.xpose.msra.mxu0 0.0
        %1347 = vmatprep.subr.mxu0 0.0
        %1348 = vmatpush1.xpose.msra.mxu0 0.0
        %1349 = vmatprep.subr.mxu0 0.0
        %1350 = vmatpush1.xpose.msra.mxu0 0.0
        %1351 = vmatprep.subr.mxu0 0.0
        %1352 = vmatpush1.xpose.msra.mxu0 0.0
        %1353 = vmatprep.subr.mxu0 0.0
        %1354 = vmatpush1.xpose.msra.mxu0 0.0
        %1355 = vmatprep.subr.mxu0 0.0
        %1356 = vmatpush1.xpose.msra.mxu0 %v1337
        %1357 = vmatprep.subr.mxu0 0.0
        %1358 = vmatpush1.xpose.msra.mxu0 %v1335
        %1359 = vmatprep.subr.mxu0 0.0
        %1360 = vmatpush1.xpose.msra.mxu0 %v1333
        %1361 = vmatprep.subr.mxu0 0.0
        %1362 = vmatpush1.xpose.msra.mxu0 %v1331
        %1363 = vmatprep.subr.mxu0 0.0
        %1364 = vmatpush1.xpose.msra.mxu0 %v1329
        %1365 = vmatprep.subr.mxu0 0.0
        %1366 = vmatpush1.xpose.msra.mxu0 %v1327
        %1367 = vmatprep.subr.mxu0 0.0
        %1368 = vmatpush1.xpose.msra.mxu0 %v1325
        %1369 = vmatprep.subr.mxu0 0.0
        %1370 = vmatpush1.xpose.msra.mxu0 %v1323
        %1371 = vmatprep.subr.mxu0 0.0
        %1372 = vmatpush2.xpose.msra.mxu0 0.0
        %1373 = vmatprep.subr.mxu0 0.0
        %1374 = vmatpush2.xpose.msra.mxu0 0.0
        %1375 = vmatprep.subr.mxu0 0.0
        %1376 = vmatpush2.xpose.msra.mxu0 0.0
        %1377 = vmatprep.subr.mxu0 0.0
        %1378 = vmatpush2.xpose.msra.mxu0 0.0
        %1379 = vmatprep.subr.mxu0 0.0
        %1380 = vmatpush2.xpose.msra.mxu0 0.0
        %1381 = vmatprep.subr.mxu0 0.0
        %1382 = vmatpush2.xpose.msra.mxu0 0.0
        %1383 = vmatprep.subr.mxu0 0.0
        %1384 = vmatpush2.xpose.msra.mxu0 0.0
        %1385 = vmatprep.subr.mxu0 0.0
        %1386 = vmatpush2.xpose.msra.mxu0 0.0
        %1387 = vmatprep.subr.mxu0 0.0
        %1388 = vmatpush2.xpose.msra.mxu0 0.0
        %1389 = vmatprep.subr.mxu0 0.0
        %1390 = vmatpush2.xpose.msra.mxu0 0.0
        %1391 = vmatprep.subr.mxu0 0.0
        %1392 = vmatpush2.xpose.msra.mxu0 0.0
        %1393 = vmatprep.subr.mxu0 0.0
        %1394 = vmatpush2.xpose.msra.mxu0 0.0
        %1395 = vmatprep.subr.mxu0 0.0
        %1396 = vmatpush2.xpose.msra.mxu0 0.0
        %1397 = vmatprep.subr.mxu0 0.0
        %1398 = vmatpush2.xpose.msra.mxu0 0.0
        %1399 = vmatprep.subr.mxu0 0.0
        %1400 = vmatpush2.xpose.msra.mxu0 0.0
        %1401 = vmatprep.subr.mxu0 0.0
        %1402 = vmatpush2.xpose.msra.mxu0 0.0
        %1403 = vmatprep.mubr.f32.mxu0 0.0
        %1404 = vmatmul.mubr.f32.gmra.mxu0 %v1307
        %v1405 = vpop.f32.mrf.mxu0
        %v1406 = vadd.f32 0.0, %v1405
        %v1407 = vpop.f32.mrf.mxu0
        %1408 = vmatprep.mubr.f32.mxu0 0.0
        %1409 = vmatmul.mubr.f32.gmra.mxu0 %v1309
        %v1410 = vpop.f32.mrf.mxu0
        %v1411 = vadd.f32 0.0, %v1410
        %v1412 = vpop.f32.mrf.mxu0
        %1413 = vmatprep.mubr.f32.mxu0 0.0
        %1414 = vmatmul.mubr.f32.gmra.mxu0 %v1311
        %v1415 = vpop.f32.mrf.mxu0
        %v1416 = vadd.f32 0.0, %v1415
        %v1417 = vpop.f32.mrf.mxu0
        %1418 = vmatprep.mubr.f32.mxu0 0.0
        %1419 = vmatmul.mubr.f32.gmra.mxu0 %v1313
        %v1420 = vpop.f32.mrf.mxu0
        %v1421 = vadd.f32 0.0, %v1420
        %v1422 = vpop.f32.mrf.mxu0
        %1423 = vmatprep.mubr.f32.mxu0 0.0
        %1424 = vmatmul.mubr.f32.gmra.mxu0 %v1315
        %v1425 = vpop.f32.mrf.mxu0
        %v1426 = vadd.f32 0.0, %v1425
        %v1427 = vpop.f32.mrf.mxu0
        %1428 = vmatprep.mubr.f32.mxu0 0.0
        %1429 = vmatmul.mubr.f32.gmra.mxu0 %v1317
        %v1430 = vpop.f32.mrf.mxu0
        %v1431 = vadd.f32 0.0, %v1430
        %v1432 = vpop.f32.mrf.mxu0
        %1433 = vmatprep.mubr.f32.mxu0 0.0
        %1434 = vmatmul.mubr.f32.gmra.mxu0 %v1319
        %v1435 = vpop.f32.mrf.mxu0
        %v1436 = vadd.f32 0.0, %v1435
        %v1437 = vpop.f32.mrf.mxu0
        %1438 = vmatprep.mubr.f32.mxu0 0.0
        %1439 = vmatmul.mubr.f32.gmra.mxu0 %v1321
        %v1440 = vpop.f32.mrf.mxu0
        %v1441 = vadd.f32 0.0, %v1440
        %v1442 = vpop.f32.mrf.mxu0
        %1443 = vdwg.mxu0
        %v1444 = vmul.f32 %v1406, 0.25
        %v1445 = vmul.f32 %v1411, 0.25
        %v1446 = vmul.f32 %v1416, 0.25
        %v1447 = vmul.f32 %v1421, 0.25
        %v1448 = vmul.f32 %v1426, 0.25
        %v1449 = vmul.f32 %v1431, 0.25
        %v1450 = vmul.f32 %v1436, 0.25
        %v1451 = vmul.f32 %v1441, 0.25
        %v1452 = vadd.f32 %v1444, %v863
        %v1453 = vadd.f32 %v1445, %v864
        %v1454 = vadd.f32 %v1446, %v865
        %v1455 = vadd.f32 %v1447, %v866
        %v1456 = vadd.f32 %v1448, %v867
        %v1457 = vadd.f32 %v1449, %v868
        %v1458 = vadd.f32 %v1450, %v869
        %v1459 = vadd.f32 %v1451, %v870
        %v1460 = vsel %vm871, %v1452, -inf
        %1461 = vmax.xlane.f32.xlu0 %v1460
        %v1462 = vpop.xlane.xlu0 %1461
        %v1463 = vsel %vm871, %v1453, -inf
        %1464 = vmax.xlane.f32.xlu0 %v1463
        %v1465 = vpop.xlane.xlu0 %1464
        %v1466 = vsel %vm871, %v1454, -inf
        %1467 = vmax.xlane.f32.xlu0 %v1466
        %v1468 = vpop.xlane.xlu0 %1467
        %v1469 = vsel %vm871, %v1455, -inf
        %1470 = vmax.xlane.f32.xlu0 %v1469
        %v1471 = vpop.xlane.xlu0 %1470
        %v1472 = vsel %vm871, %v1456, -inf
        %1473 = vmax.xlane.f32.xlu0 %v1472
        %v1474 = vpop.xlane.xlu0 %1473
        %v1475 = vsel %vm871, %v1457, -inf
        %1476 = vmax.xlane.f32.xlu0 %v1475
        %v1477 = vpop.xlane.xlu0 %1476
        %v1478 = vsel %vm871, %v1458, -inf
        %1479 = vmax.xlane.f32.xlu0 %v1478
        %v1480 = vpop.xlane.xlu0 %1479
        %v1481 = vsel %vm871, %v1459, -inf
        %1482 = vmax.xlane.f32.xlu0 %v1481
        %v1483 = vpop.xlane.xlu0 %1482
        %v1484 = vsub.f32 %v1452, %v1462
        %v1485 = vsub.f32 %v1453, %v1465
        %v1486 = vsub.f32 %v1454, %v1468
        %v1487 = vsub.f32 %v1455, %v1471
        %v1488 = vsub.f32 %v1456, %v1474
        %v1489 = vsub.f32 %v1457, %v1477
        %v1490 = vsub.f32 %v1458, %v1480
        %v1491 = vsub.f32 %v1459, %v1483
        %v1492 = vmul.f32 %v1484, 1.442695
        %v1493 = vpow.pop %v1492
        %v1494 = vmul.f32 %v1485, 1.442695
        %v1495 = vpow.pop %v1494
        %v1496 = vmul.f32 %v1486, 1.442695
        %v1497 = vpow.pop %v1496
        %v1498 = vmul.f32 %v1487, 1.442695
        %v1499 = vpow.pop %v1498
        %v1500 = vmul.f32 %v1488, 1.442695
        %v1501 = vpow.pop %v1500
        %v1502 = vmul.f32 %v1489, 1.442695
        %v1503 = vpow.pop %v1502
        %v1504 = vmul.f32 %v1490, 1.442695
        %v1505 = vpow.pop %v1504
        %v1506 = vmul.f32 %v1491, 1.442695
        %v1507 = vpow.pop %v1506
        %v1508 = vsel %vm871, %v1493, 0.0
        %1509 = vadd.xlane.f32.xlu0 %v1508
        %v1510 = vpop.xlane.xlu0 %1509
        %v1511 = vsel %vm871, %v1495, 0.0
        %1512 = vadd.xlane.f32.xlu0 %v1511
        %v1513 = vpop.xlane.xlu0 %1512
        %v1514 = vsel %vm871, %v1497, 0.0
        %1515 = vadd.xlane.f32.xlu0 %v1514
        %v1516 = vpop.xlane.xlu0 %1515
        %v1517 = vsel %vm871, %v1499, 0.0
        %1518 = vadd.xlane.f32.xlu0 %v1517
        %v1519 = vpop.xlane.xlu0 %1518
        %v1520 = vsel %vm871, %v1501, 0.0
        %1521 = vadd.xlane.f32.xlu0 %v1520
        %v1522 = vpop.xlane.xlu0 %1521
        %v1523 = vsel %vm871, %v1503, 0.0
        %1524 = vadd.xlane.f32.xlu0 %v1523
        %v1525 = vpop.xlane.xlu0 %1524
        %v1526 = vsel %vm871, %v1505, 0.0
        %1527 = vadd.xlane.f32.xlu0 %v1526
        %v1528 = vpop.xlane.xlu0 %1527
        %v1529 = vsel %vm871, %v1507, 0.0
        %1530 = vadd.xlane.f32.xlu0 %v1529
        %v1531 = vpop.xlane.xlu0 %1530
        %v1532 = vrcp.pop %v1510
        %v1533 = vmul.f32 %v1493, %v1532
        %v1534 = vrcp.pop %v1513
        %v1535 = vmul.f32 %v1495, %v1534
        %v1536 = vrcp.pop %v1516
        %v1537 = vmul.f32 %v1497, %v1536
        %v1538 = vrcp.pop %v1519
        %v1539 = vmul.f32 %v1499, %v1538
        %v1540 = vrcp.pop %v1522
        %v1541 = vmul.f32 %v1501, %v1540
        %v1542 = vrcp.pop %v1525
        %v1543 = vmul.f32 %v1503, %v1542
        %v1544 = vrcp.pop %v1528
        %v1545 = vmul.f32 %v1505, %v1544
        %v1546 = vrcp.pop %v1531
        %v1547 = vmul.f32 %v1507, %v1546
        %1548 = vrot.lane.b32.xlu0 %v1244, 64
        %v1549 = vpop.permute.xlu0 %1548
        %1550 = vrot.lane.b32.xlu0 %v1249, 64
        %v1551 = vpop.permute.xlu0 %1550
        %1552 = vrot.lane.b32.xlu0 %v1254, 64
        %v1553 = vpop.permute.xlu0 %1552
        %1554 = vrot.lane.b32.xlu0 %v1259, 64
        %v1555 = vpop.permute.xlu0 %1554
        %1556 = vrot.lane.b32.xlu0 %v1264, 64
        %v1557 = vpop.permute.xlu0 %1556
        %1558 = vrot.lane.b32.xlu0 %v1269, 64
        %v1559 = vpop.permute.xlu0 %1558
        %1560 = vrot.lane.b32.xlu0 %v1274, 64
        %v1561 = vpop.permute.xlu0 %1560
        %1562 = vrot.lane.b32.xlu0 %v1279, 64
        %v1563 = vpop.permute.xlu0 %1562
        %v1573 = vsel %vm871, %v1533, 0
        %v1576 = vsel %vm871, %v1535, 0
        %v1579 = vsel %vm871, %v1537, 0
        %v1582 = vsel %vm871, %v1539, 0
        %v1585 = vsel %vm871, %v1541, 0
        %v1588 = vsel %vm871, %v1543, 0
        %v1591 = vsel %vm871, %v1545, 0
        %v1594 = vsel %vm871, %v1547, 0
        %1596 = vmatprep.subr.mxu0 0.0
        %1597 = vmatpush1.msra.mxu0 0.0
        %1598 = vmatprep.subr.mxu0 0.0
        %1599 = vmatpush1.msra.mxu0 0.0
        %1600 = vmatprep.subr.mxu0 0.0
        %1601 = vmatpush1.msra.mxu0 0.0
        %1602 = vmatprep.subr.mxu0 0.0
        %1603 = vmatpush1.msra.mxu0 0.0
        %1604 = vmatprep.subr.mxu0 0.0
        %1605 = vmatpush1.msra.mxu0 0.0
        %1606 = vmatprep.subr.mxu0 0.0
        %1607 = vmatpush1.msra.mxu0 0.0
        %1608 = vmatprep.subr.mxu0 0.0
        %1609 = vmatpush1.msra.mxu0 0.0
        %1610 = vmatprep.subr.mxu0 0.0
        %1611 = vmatpush1.msra.mxu0 0.0
        %1612 = vmatprep.subr.mxu0 0.0
        %1613 = vmatpush1.msra.mxu0 %v1563
        %1614 = vmatprep.subr.mxu0 0.0
        %1615 = vmatpush1.msra.mxu0 %v1561
        %1616 = vmatprep.subr.mxu0 0.0
        %1617 = vmatpush1.msra.mxu0 %v1559
        %1618 = vmatprep.subr.mxu0 0.0
        %1619 = vmatpush1.msra.mxu0 %v1557
        %1620 = vmatprep.subr.mxu0 0.0
        %1621 = vmatpush1.msra.mxu0 %v1555
        %1622 = vmatprep.subr.mxu0 0.0
        %1623 = vmatpush1.msra.mxu0 %v1553
        %1624 = vmatprep.subr.mxu0 0.0
        %1625 = vmatpush1.msra.mxu0 %v1551
        %1626 = vmatprep.subr.mxu0 0.0
        %1627 = vmatpush1.msra.mxu0 %v1549
        %1628 = vmatprep.subr.mxu0 0.0
        %1629 = vmatpush2.msra.mxu0 0.0
        %1630 = vmatprep.subr.mxu0 0.0
        %1631 = vmatpush2.msra.mxu0 0.0
        %1632 = vmatprep.subr.mxu0 0.0
        %1633 = vmatpush2.msra.mxu0 0.0
        %1634 = vmatprep.subr.mxu0 0.0
        %1635 = vmatpush2.msra.mxu0 0.0
        %1636 = vmatprep.subr.mxu0 0.0
        %1637 = vmatpush2.msra.mxu0 0.0
        %1638 = vmatprep.subr.mxu0 0.0
        %1639 = vmatpush2.msra.mxu0 0.0
        %1640 = vmatprep.subr.mxu0 0.0
        %1641 = vmatpush2.msra.mxu0 0.0
        %1642 = vmatprep.subr.mxu0 0.0
        %1643 = vmatpush2.msra.mxu0 0.0
        %1644 = vmatprep.subr.mxu0 0.0
        %1645 = vmatpush2.msra.mxu0 0.0
        %1646 = vmatprep.subr.mxu0 0.0
        %1647 = vmatpush2.msra.mxu0 0.0
        %1648 = vmatprep.subr.mxu0 0.0
        %1649 = vmatpush2.msra.mxu0 0.0
        %1650 = vmatprep.subr.mxu0 0.0
        %1651 = vmatpush2.msra.mxu0 0.0
        %1652 = vmatprep.subr.mxu0 0.0
        %1653 = vmatpush2.msra.mxu0 0.0
        %1654 = vmatprep.subr.mxu0 0.0
        %1655 = vmatpush2.msra.mxu0 0.0
        %1656 = vmatprep.subr.mxu0 0.0
        %1657 = vmatpush2.msra.mxu0 0.0
        %1658 = vmatprep.subr.mxu0 0.0
        %1659 = vmatpush2.msra.mxu0 0.0
        %1660 = vmatprep.mubr.f32.mxu0 0.0
        %1661 = vmatmul.mubr.f32.gmra.mxu0 %v1573
        %v1662 = vpop.f32.mrf.mxu0
        %v1663 = vadd.f32 0.0, %v1662
        %v1664 = vpop.f32.mrf.mxu0
        %1665 = vmatprep.mubr.f32.mxu0 0.0
        %1666 = vmatmul.mubr.f32.gmra.mxu0 %v1576
        %v1667 = vpop.f32.mrf.mxu0
        %v1668 = vadd.f32 0.0, %v1667
        %v1669 = vpop.f32.mrf.mxu0
        %1670 = vmatprep.mubr.f32.mxu0 0.0
        %1671 = vmatmul.mubr.f32.gmra.mxu0 %v1579
        %v1672 = vpop.f32.mrf.mxu0
        %v1673 = vadd.f32 0.0, %v1672
        %v1674 = vpop.f32.mrf.mxu0
        %1675 = vmatprep.mubr.f32.mxu0 0.0
        %1676 = vmatmul.mubr.f32.gmra.mxu0 %v1582
        %v1677 = vpop.f32.mrf.mxu0
        %v1678 = vadd.f32 0.0, %v1677
        %v1679 = vpop.f32.mrf.mxu0
        %1680 = vmatprep.mubr.f32.mxu0 0.0
        %1681 = vmatmul.mubr.f32.gmra.mxu0 %v1585
        %v1682 = vpop.f32.mrf.mxu0
        %v1683 = vadd.f32 0.0, %v1682
        %v1684 = vpop.f32.mrf.mxu0
        %1685 = vmatprep.mubr.f32.mxu0 0.0
        %1686 = vmatmul.mubr.f32.gmra.mxu0 %v1588
        %v1687 = vpop.f32.mrf.mxu0
        %v1688 = vadd.f32 0.0, %v1687
        %v1689 = vpop.f32.mrf.mxu0
        %1690 = vmatprep.mubr.f32.mxu0 0.0
        %1691 = vmatmul.mubr.f32.gmra.mxu0 %v1591
        %v1692 = vpop.f32.mrf.mxu0
        %v1693 = vadd.f32 0.0, %v1692
        %v1694 = vpop.f32.mrf.mxu0
        %1695 = vmatprep.mubr.f32.mxu0 0.0
        %1696 = vmatmul.mubr.f32.gmra.mxu0 %v1594
        %v1697 = vpop.f32.mrf.mxu0
        %v1698 = vadd.f32 0.0, %v1697
        %v1699 = vpop.f32.mrf.mxu0
        %1700 = vdwg.mxu0
        %1701 = vrot.lane.b32.xlu0 %v1244, 112
        %v1702 = vpop.permute.xlu0 %1701
        %1703 = vrot.lane.b32.xlu0 %v1249, 112
        %v1704 = vpop.permute.xlu0 %1703
        %1705 = vrot.lane.b32.xlu0 %v1254, 112
        %v1706 = vpop.permute.xlu0 %1705
        %1707 = vrot.lane.b32.xlu0 %v1259, 112
        %v1708 = vpop.permute.xlu0 %1707
        %1709 = vrot.lane.b32.xlu0 %v1264, 112
        %v1710 = vpop.permute.xlu0 %1709
        %1711 = vrot.lane.b32.xlu0 %v1269, 112
        %v1712 = vpop.permute.xlu0 %1711
        %1713 = vrot.lane.b32.xlu0 %v1274, 112
        %v1714 = vpop.permute.xlu0 %1713
        %1715 = vrot.lane.b32.xlu0 %v1279, 112
        %v1716 = vpop.permute.xlu0 %1715
        %1717 = vrot.lane.b32.xlu0 %v1244, 80
        %v1718 = vpop.permute.xlu0 %1717
        %1719 = vrot.lane.b32.xlu0 %v1249, 80
        %v1720 = vpop.permute.xlu0 %1719
        %1721 = vrot.lane.b32.xlu0 %v1254, 80
        %v1722 = vpop.permute.xlu0 %1721
        %1723 = vrot.lane.b32.xlu0 %v1259, 80
        %v1724 = vpop.permute.xlu0 %1723
        %1725 = vrot.lane.b32.xlu0 %v1264, 80
        %v1726 = vpop.permute.xlu0 %1725
        %1727 = vrot.lane.b32.xlu0 %v1269, 80
        %v1728 = vpop.permute.xlu0 %1727
        %1729 = vrot.lane.b32.xlu0 %v1274, 80
        %v1730 = vpop.permute.xlu0 %1729
        %1731 = vrot.lane.b32.xlu0 %v1279, 80
        %v1732 = vpop.permute.xlu0 %1731
        %v1733 = vsel %vm1306, %v1702, 0
        %v1735 = vsel %vm1306, %v1704, 0
        %v1737 = vsel %vm1306, %v1706, 0
        %v1739 = vsel %vm1306, %v1708, 0
        %v1741 = vsel %vm1306, %v1710, 0
        %v1743 = vsel %vm1306, %v1712, 0
        %v1745 = vsel %vm1306, %v1714, 0
        %v1747 = vsel %vm1306, %v1716, 0
        %v1749 = vsel %vm1306, %v1718, 0
        %v1751 = vsel %vm1306, %v1720, 0
        %v1753 = vsel %vm1306, %v1722, 0
        %v1755 = vsel %vm1306, %v1724, 0
        %v1757 = vsel %vm1306, %v1726, 0
        %v1759 = vsel %vm1306, %v1728, 0
        %v1761 = vsel %vm1306, %v1730, 0
        %v1763 = vsel %vm1306, %v1732, 0
        %1765 = vmatprep.subr.mxu0 0.0
        %1766 = vmatpush1.xpose.msra.mxu0 0.0
        %1767 = vmatprep.subr.mxu0 0.0
        %1768 = vmatpush1.xpose.msra.mxu0 0.0
        %1769 = vmatprep.subr.mxu0 0.0
        %1770 = vmatpush1.xpose.msra.mxu0 0.0
        %1771 = vmatprep.subr.mxu0 0.0
        %1772 = vmatpush1.xpose.msra.mxu0 0.0
        %1773 = vmatprep.subr.mxu0 0.0
        %1774 = vmatpush1.xpose.msra.mxu0 0.0
        %1775 = vmatprep.subr.mxu0 0.0
        %1776 = vmatpush1.xpose.msra.mxu0 0.0
        %1777 = vmatprep.subr.mxu0 0.0
        %1778 = vmatpush1.xpose.msra.mxu0 0.0
        %1779 = vmatprep.subr.mxu0 0.0
        %1780 = vmatpush1.xpose.msra.mxu0 0.0
        %1781 = vmatprep.subr.mxu0 0.0
        %1782 = vmatpush1.xpose.msra.mxu0 %v1763
        %1783 = vmatprep.subr.mxu0 0.0
        %1784 = vmatpush1.xpose.msra.mxu0 %v1761
        %1785 = vmatprep.subr.mxu0 0.0
        %1786 = vmatpush1.xpose.msra.mxu0 %v1759
        %1787 = vmatprep.subr.mxu0 0.0
        %1788 = vmatpush1.xpose.msra.mxu0 %v1757
        %1789 = vmatprep.subr.mxu0 0.0
        %1790 = vmatpush1.xpose.msra.mxu0 %v1755
        %1791 = vmatprep.subr.mxu0 0.0
        %1792 = vmatpush1.xpose.msra.mxu0 %v1753
        %1793 = vmatprep.subr.mxu0 0.0
        %1794 = vmatpush1.xpose.msra.mxu0 %v1751
        %1795 = vmatprep.subr.mxu0 0.0
        %1796 = vmatpush1.xpose.msra.mxu0 %v1749
        %1797 = vmatprep.subr.mxu0 0.0
        %1798 = vmatpush2.xpose.msra.mxu0 0.0
        %1799 = vmatprep.subr.mxu0 0.0
        %1800 = vmatpush2.xpose.msra.mxu0 0.0
        %1801 = vmatprep.subr.mxu0 0.0
        %1802 = vmatpush2.xpose.msra.mxu0 0.0
        %1803 = vmatprep.subr.mxu0 0.0
        %1804 = vmatpush2.xpose.msra.mxu0 0.0
        %1805 = vmatprep.subr.mxu0 0.0
        %1806 = vmatpush2.xpose.msra.mxu0 0.0
        %1807 = vmatprep.subr.mxu0 0.0
        %1808 = vmatpush2.xpose.msra.mxu0 0.0
        %1809 = vmatprep.subr.mxu0 0.0
        %1810 = vmatpush2.xpose.msra.mxu0 0.0
        %1811 = vmatprep.subr.mxu0 0.0
        %1812 = vmatpush2.xpose.msra.mxu0 0.0
        %1813 = vmatprep.subr.mxu0 0.0
        %1814 = vmatpush2.xpose.msra.mxu0 0.0
        %1815 = vmatprep.subr.mxu0 0.0
        %1816 = vmatpush2.xpose.msra.mxu0 0.0
        %1817 = vmatprep.subr.mxu0 0.0
        %1818 = vmatpush2.xpose.msra.mxu0 0.0
        %1819 = vmatprep.subr.mxu0 0.0
        %1820 = vmatpush2.xpose.msra.mxu0 0.0
        %1821 = vmatprep.subr.mxu0 0.0
        %1822 = vmatpush2.xpose.msra.mxu0 0.0
        %1823 = vmatprep.subr.mxu0 0.0
        %1824 = vmatpush2.xpose.msra.mxu0 0.0
        %1825 = vmatprep.subr.mxu0 0.0
        %1826 = vmatpush2.xpose.msra.mxu0 0.0
        %1827 = vmatprep.subr.mxu0 0.0
        %1828 = vmatpush2.xpose.msra.mxu0 0.0
        %1829 = vmatprep.mubr.f32.mxu0 0.0
        %1830 = vmatmul.mubr.f32.gmra.mxu0 %v1733
        %v1831 = vpop.f32.mrf.mxu0
        %v1832 = vadd.f32 0.0, %v1831
        %v1833 = vpop.f32.mrf.mxu0
        %1834 = vmatprep.mubr.f32.mxu0 0.0
        %1835 = vmatmul.mubr.f32.gmra.mxu0 %v1735
        %v1836 = vpop.f32.mrf.mxu0
        %v1837 = vadd.f32 0.0, %v1836
        %v1838 = vpop.f32.mrf.mxu0
        %1839 = vmatprep.mubr.f32.mxu0 0.0
        %1840 = vmatmul.mubr.f32.gmra.mxu0 %v1737
        %v1841 = vpop.f32.mrf.mxu0
        %v1842 = vadd.f32 0.0, %v1841
        %v1843 = vpop.f32.mrf.mxu0
        %1844 = vmatprep.mubr.f32.mxu0 0.0
        %1845 = vmatmul.mubr.f32.gmra.mxu0 %v1739
        %v1846 = vpop.f32.mrf.mxu0
        %v1847 = vadd.f32 0.0, %v1846
        %v1848 = vpop.f32.mrf.mxu0
        %1849 = vmatprep.mubr.f32.mxu0 0.0
        %1850 = vmatmul.mubr.f32.gmra.mxu0 %v1741
        %v1851 = vpop.f32.mrf.mxu0
        %v1852 = vadd.f32 0.0, %v1851
        %v1853 = vpop.f32.mrf.mxu0
        %1854 = vmatprep.mubr.f32.mxu0 0.0
        %1855 = vmatmul.mubr.f32.gmra.mxu0 %v1743
        %v1856 = vpop.f32.mrf.mxu0
        %v1857 = vadd.f32 0.0, %v1856
        %v1858 = vpop.f32.mrf.mxu0
        %1859 = vmatprep.mubr.f32.mxu0 0.0
        %1860 = vmatmul.mubr.f32.gmra.mxu0 %v1745
        %v1861 = vpop.f32.mrf.mxu0
        %v1862 = vadd.f32 0.0, %v1861
        %v1863 = vpop.f32.mrf.mxu0
        %1864 = vmatprep.mubr.f32.mxu0 0.0
        %1865 = vmatmul.mubr.f32.gmra.mxu0 %v1747
        %v1866 = vpop.f32.mrf.mxu0
        %v1867 = vadd.f32 0.0, %v1866
        %v1868 = vpop.f32.mrf.mxu0
        %1869 = vdwg.mxu0
        %v1870 = vmul.f32 %v1832, 0.25
        %v1871 = vmul.f32 %v1837, 0.25
        %v1872 = vmul.f32 %v1842, 0.25
        %v1873 = vmul.f32 %v1847, 0.25
        %v1874 = vmul.f32 %v1852, 0.25
        %v1875 = vmul.f32 %v1857, 0.25
        %v1876 = vmul.f32 %v1862, 0.25
        %v1877 = vmul.f32 %v1867, 0.25
        %v1878 = vadd.f32 %v1870, %v863
        %v1879 = vadd.f32 %v1871, %v864
        %v1880 = vadd.f32 %v1872, %v865
        %v1881 = vadd.f32 %v1873, %v866
        %v1882 = vadd.f32 %v1874, %v867
        %v1883 = vadd.f32 %v1875, %v868
        %v1884 = vadd.f32 %v1876, %v869
        %v1885 = vadd.f32 %v1877, %v870
        %v1886 = vsel %vm871, %v1878, -inf
        %1887 = vmax.xlane.f32.xlu0 %v1886
        %v1888 = vpop.xlane.xlu0 %1887
        %v1889 = vsel %vm871, %v1879, -inf
        %1890 = vmax.xlane.f32.xlu0 %v1889
        %v1891 = vpop.xlane.xlu0 %1890
        %v1892 = vsel %vm871, %v1880, -inf
        %1893 = vmax.xlane.f32.xlu0 %v1892
        %v1894 = vpop.xlane.xlu0 %1893
        %v1895 = vsel %vm871, %v1881, -inf
        %1896 = vmax.xlane.f32.xlu0 %v1895
        %v1897 = vpop.xlane.xlu0 %1896
        %v1898 = vsel %vm871, %v1882, -inf
        %1899 = vmax.xlane.f32.xlu0 %v1898
        %v1900 = vpop.xlane.xlu0 %1899
        %v1901 = vsel %vm871, %v1883, -inf
        %1902 = vmax.xlane.f32.xlu0 %v1901
        %v1903 = vpop.xlane.xlu0 %1902
        %v1904 = vsel %vm871, %v1884, -inf
        %1905 = vmax.xlane.f32.xlu0 %v1904
        %v1906 = vpop.xlane.xlu0 %1905
        %v1907 = vsel %vm871, %v1885, -inf
        %1908 = vmax.xlane.f32.xlu0 %v1907
        %v1909 = vpop.xlane.xlu0 %1908
        %v1910 = vsub.f32 %v1878, %v1888
        %v1911 = vsub.f32 %v1879, %v1891
        %v1912 = vsub.f32 %v1880, %v1894
        %v1913 = vsub.f32 %v1881, %v1897
        %v1914 = vsub.f32 %v1882, %v1900
        %v1915 = vsub.f32 %v1883, %v1903
        %v1916 = vsub.f32 %v1884, %v1906
        %v1917 = vsub.f32 %v1885, %v1909
        %v1918 = vmul.f32 %v1910, 1.442695
        %v1919 = vpow.pop %v1918
        %v1920 = vmul.f32 %v1911, 1.442695
        %v1921 = vpow.pop %v1920
        %v1922 = vmul.f32 %v1912, 1.442695
        %v1923 = vpow.pop %v1922
        %v1924 = vmul.f32 %v1913, 1.442695
        %v1925 = vpow.pop %v1924
        %v1926 = vmul.f32 %v1914, 1.442695
        %v1927 = vpow.pop %v1926
        %v1928 = vmul.f32 %v1915, 1.442695
        %v1929 = vpow.pop %v1928
        %v1930 = vmul.f32 %v1916, 1.442695
        %v1931 = vpow.pop %v1930
        %v1932 = vmul.f32 %v1917, 1.442695
        %v1933 = vpow.pop %v1932
        %v1934 = vsel %vm871, %v1919, 0.0
        %1935 = vadd.xlane.f32.xlu0 %v1934
        %v1936 = vpop.xlane.xlu0 %1935
        %v1937 = vsel %vm871, %v1921, 0.0
        %1938 = vadd.xlane.f32.xlu0 %v1937
        %v1939 = vpop.xlane.xlu0 %1938
        %v1940 = vsel %vm871, %v1923, 0.0
        %1941 = vadd.xlane.f32.xlu0 %v1940
        %v1942 = vpop.xlane.xlu0 %1941
        %v1943 = vsel %vm871, %v1925, 0.0
        %1944 = vadd.xlane.f32.xlu0 %v1943
        %v1945 = vpop.xlane.xlu0 %1944
        %v1946 = vsel %vm871, %v1927, 0.0
        %1947 = vadd.xlane.f32.xlu0 %v1946
        %v1948 = vpop.xlane.xlu0 %1947
        %v1949 = vsel %vm871, %v1929, 0.0
        %1950 = vadd.xlane.f32.xlu0 %v1949
        %v1951 = vpop.xlane.xlu0 %1950
        %v1952 = vsel %vm871, %v1931, 0.0
        %1953 = vadd.xlane.f32.xlu0 %v1952
        %v1954 = vpop.xlane.xlu0 %1953
        %v1955 = vsel %vm871, %v1933, 0.0
        %1956 = vadd.xlane.f32.xlu0 %v1955
        %v1957 = vpop.xlane.xlu0 %1956
        %v1958 = vrcp.pop %v1936
        %v1959 = vmul.f32 %v1919, %v1958
        %v1960 = vrcp.pop %v1939
        %v1961 = vmul.f32 %v1921, %v1960
        %v1962 = vrcp.pop %v1942
        %v1963 = vmul.f32 %v1923, %v1962
        %v1964 = vrcp.pop %v1945
        %v1965 = vmul.f32 %v1925, %v1964
        %v1966 = vrcp.pop %v1948
        %v1967 = vmul.f32 %v1927, %v1966
        %v1968 = vrcp.pop %v1951
        %v1969 = vmul.f32 %v1929, %v1968
        %v1970 = vrcp.pop %v1954
        %v1971 = vmul.f32 %v1931, %v1970
        %v1972 = vrcp.pop %v1957
        %v1973 = vmul.f32 %v1933, %v1972
        %1974 = vrot.lane.b32.xlu0 %v1244, 48
        %v1975 = vpop.permute.xlu0 %1974
        %1976 = vrot.lane.b32.xlu0 %v1249, 48
        %v1977 = vpop.permute.xlu0 %1976
        %1978 = vrot.lane.b32.xlu0 %v1254, 48
        %v1979 = vpop.permute.xlu0 %1978
        %1980 = vrot.lane.b32.xlu0 %v1259, 48
        %v1981 = vpop.permute.xlu0 %1980
        %1982 = vrot.lane.b32.xlu0 %v1264, 48
        %v1983 = vpop.permute.xlu0 %1982
        %1984 = vrot.lane.b32.xlu0 %v1269, 48
        %v1985 = vpop.permute.xlu0 %1984
        %1986 = vrot.lane.b32.xlu0 %v1274, 48
        %v1987 = vpop.permute.xlu0 %1986
        %1988 = vrot.lane.b32.xlu0 %v1279, 48
        %v1989 = vpop.permute.xlu0 %1988
        %v1999 = vsel %vm871, %v1959, 0
        %v2002 = vsel %vm871, %v1961, 0
        %v2005 = vsel %vm871, %v1963, 0
        %v2008 = vsel %vm871, %v1965, 0
        %v2011 = vsel %vm871, %v1967, 0
        %v2014 = vsel %vm871, %v1969, 0
        %v2017 = vsel %vm871, %v1971, 0
        %v2020 = vsel %vm871, %v1973, 0
        %2022 = vmatprep.subr.mxu0 0.0
        %2023 = vmatpush1.msra.mxu0 0.0
        %2024 = vmatprep.subr.mxu0 0.0
        %2025 = vmatpush1.msra.mxu0 0.0
        %2026 = vmatprep.subr.mxu0 0.0
        %2027 = vmatpush1.msra.mxu0 0.0
        %2028 = vmatprep.subr.mxu0 0.0
        %2029 = vmatpush1.msra.mxu0 0.0
        %2030 = vmatprep.subr.mxu0 0.0
        %2031 = vmatpush1.msra.mxu0 0.0
        %2032 = vmatprep.subr.mxu0 0.0
        %2033 = vmatpush1.msra.mxu0 0.0
        %2034 = vmatprep.subr.mxu0 0.0
        %2035 = vmatpush1.msra.mxu0 0.0
        %2036 = vmatprep.subr.mxu0 0.0
        %2037 = vmatpush1.msra.mxu0 0.0
        %2038 = vmatprep.subr.mxu0 0.0
        %2039 = vmatpush1.msra.mxu0 %v1989
        %2040 = vmatprep.subr.mxu0 0.0
        %2041 = vmatpush1.msra.mxu0 %v1987
        %2042 = vmatprep.subr.mxu0 0.0
        %2043 = vmatpush1.msra.mxu0 %v1985
        %2044 = vmatprep.subr.mxu0 0.0
        %2045 = vmatpush1.msra.mxu0 %v1983
        %2046 = vmatprep.subr.mxu0 0.0
        %2047 = vmatpush1.msra.mxu0 %v1981
        %2048 = vmatprep.subr.mxu0 0.0
        %2049 = vmatpush1.msra.mxu0 %v1979
        %2050 = vmatprep.subr.mxu0 0.0
        %2051 = vmatpush1.msra.mxu0 %v1977
        %2052 = vmatprep.subr.mxu0 0.0
        %2053 = vmatpush1.msra.mxu0 %v1975
        %2054 = vmatprep.subr.mxu0 0.0
        %2055 = vmatpush2.msra.mxu0 0.0
        %2056 = vmatprep.subr.mxu0 0.0
        %2057 = vmatpush2.msra.mxu0 0.0
        %2058 = vmatprep.subr.mxu0 0.0
        %2059 = vmatpush2.msra.mxu0 0.0
        %2060 = vmatprep.subr.mxu0 0.0
        %2061 = vmatpush2.msra.mxu0 0.0
        %2062 = vmatprep.subr.mxu0 0.0
        %2063 = vmatpush2.msra.mxu0 0.0
        %2064 = vmatprep.subr.mxu0 0.0
        %2065 = vmatpush2.msra.mxu0 0.0
        %2066 = vmatprep.subr.mxu0 0.0
        %2067 = vmatpush2.msra.mxu0 0.0
        %2068 = vmatprep.subr.mxu0 0.0
        %2069 = vmatpush2.msra.mxu0 0.0
        %2070 = vmatprep.subr.mxu0 0.0
        %2071 = vmatpush2.msra.mxu0 0.0
        %2072 = vmatprep.subr.mxu0 0.0
        %2073 = vmatpush2.msra.mxu0 0.0
        %2074 = vmatprep.subr.mxu0 0.0
        %2075 = vmatpush2.msra.mxu0 0.0
        %2076 = vmatprep.subr.mxu0 0.0
        %2077 = vmatpush2.msra.mxu0 0.0
        %2078 = vmatprep.subr.mxu0 0.0
        %2079 = vmatpush2.msra.mxu0 0.0
        %2080 = vmatprep.subr.mxu0 0.0
        %2081 = vmatpush2.msra.mxu0 0.0
        %2082 = vmatprep.subr.mxu0 0.0
        %2083 = vmatpush2.msra.mxu0 0.0
        %2084 = vmatprep.subr.mxu0 0.0
        %2085 = vmatpush2.msra.mxu0 0.0
        %2086 = vmatprep.mubr.f32.mxu0 0.0
        %2087 = vmatmul.mubr.f32.gmra.mxu0 %v1999
        %v2088 = vpop.f32.mrf.mxu0
        %v2089 = vadd.f32 0.0, %v2088
        %v2090 = vpop.f32.mrf.mxu0
        %2091 = vmatprep.mubr.f32.mxu0 0.0
        %2092 = vmatmul.mubr.f32.gmra.mxu0 %v2002
        %v2093 = vpop.f32.mrf.mxu0
        %v2094 = vadd.f32 0.0, %v2093
        %v2095 = vpop.f32.mrf.mxu0
        %2096 = vmatprep.mubr.f32.mxu0 0.0
        %2097 = vmatmul.mubr.f32.gmra.mxu0 %v2005
        %v2098 = vpop.f32.mrf.mxu0
        %v2099 = vadd.f32 0.0, %v2098
        %v2100 = vpop.f32.mrf.mxu0
        %2101 = vmatprep.mubr.f32.mxu0 0.0
        %2102 = vmatmul.mubr.f32.gmra.mxu0 %v2008
        %v2103 = vpop.f32.mrf.mxu0
        %v2104 = vadd.f32 0.0, %v2103
        %v2105 = vpop.f32.mrf.mxu0
        %2106 = vmatprep.mubr.f32.mxu0 0.0
        %2107 = vmatmul.mubr.f32.gmra.mxu0 %v2011
        %v2108 = vpop.f32.mrf.mxu0
        %v2109 = vadd.f32 0.0, %v2108
        %v2110 = vpop.f32.mrf.mxu0
        %2111 = vmatprep.mubr.f32.mxu0 0.0
        %2112 = vmatmul.mubr.f32.gmra.mxu0 %v2014
        %v2113 = vpop.f32.mrf.mxu0
        %v2114 = vadd.f32 0.0, %v2113
        %v2115 = vpop.f32.mrf.mxu0
        %2116 = vmatprep.mubr.f32.mxu0 0.0
        %2117 = vmatmul.mubr.f32.gmra.mxu0 %v2017
        %v2118 = vpop.f32.mrf.mxu0
        %v2119 = vadd.f32 0.0, %v2118
        %v2120 = vpop.f32.mrf.mxu0
        %2121 = vmatprep.mubr.f32.mxu0 0.0
        %2122 = vmatmul.mubr.f32.gmra.mxu0 %v2020
        %v2123 = vpop.f32.mrf.mxu0
        %v2124 = vadd.f32 0.0, %v2123
        %v2125 = vpop.f32.mrf.mxu0
        %2126 = vdwg.mxu0
        %v2128 = vsel %vm1306, %v2089, 0
        %v2131 = vsel %vm1306, %v2094, 0
        %v2134 = vsel %vm1306, %v2099, 0
        %v2137 = vsel %vm1306, %v2104, 0
        %v2140 = vsel %vm1306, %v2109, 0
        %v2143 = vsel %vm1306, %v2114, 0
        %v2146 = vsel %vm1306, %v2119, 0
        %v2149 = vsel %vm1306, %v2124, 0
        %2151 = vmatprep.subr.mxu0 0.0
        %2152 = vmatpush1.msra.mxu0 0.0
        %2153 = vmatprep.subr.mxu0 0.0
        %2154 = vmatpush1.msra.mxu0 0.0
        %2155 = vmatprep.subr.mxu0 0.0
        %2156 = vmatpush1.msra.mxu0 0.0
        %2157 = vmatprep.subr.mxu0 0.0
        %2158 = vmatpush1.msra.mxu0 0.0
        %2159 = vmatprep.subr.mxu0 0.0
        %2160 = vmatpush1.msra.mxu0 0.0
        %2161 = vmatprep.subr.mxu0 0.0
        %2162 = vmatpush1.msra.mxu0 0.0
        %2163 = vmatprep.subr.mxu0 0.0
        %2164 = vmatpush1.msra.mxu0 0.0
        %2165 = vmatprep.subr.mxu0 0.0
        %2166 = vmatpush1.msra.mxu0 0.0
        %2167 = vmatprep.subr.mxu0 0.0
        %2168 = vmatpush1.msra.mxu0 0.0
        %2169 = vmatprep.subr.mxu0 0.0
        %2170 = vmatpush1.msra.mxu0 0.0
        %2171 = vmatprep.subr.mxu0 0.0
        %2172 = vmatpush1.msra.mxu0 0.0
        %2173 = vmatprep.subr.mxu0 0.0
        %2174 = vmatpush1.msra.mxu0 0.0
        %2175 = vmatprep.subr.mxu0 0.0
        %2176 = vmatpush1.msra.mxu0 0.0
        %2177 = vmatprep.subr.mxu0 0.0
        %2178 = vmatpush1.msra.mxu0 0.0
        %2179 = vmatprep.subr.mxu0 0.0
        %2180 = vmatpush1.msra.mxu0 %v1011
        %2181 = vmatprep.subr.mxu0 0.0
        %2182 = vmatpush1.msra.mxu0 %v1010
        %2183 = vmatprep.subr.mxu0 0.0
        %2184 = vmatpush2.msra.mxu0 0.0
        %2185 = vmatprep.subr.mxu0 0.0
        %2186 = vmatpush2.msra.mxu0 0.0
        %2187 = vmatprep.subr.mxu0 0.0
        %2188 = vmatpush2.msra.mxu0 0.0
        %2189 = vmatprep.subr.mxu0 0.0
        %2190 = vmatpush2.msra.mxu0 0.0
        %2191 = vmatprep.subr.mxu0 0.0
        %2192 = vmatpush2.msra.mxu0 0.0
        %2193 = vmatprep.subr.mxu0 0.0
        %2194 = vmatpush2.msra.mxu0 0.0
        %2195 = vmatprep.subr.mxu0 0.0
        %2196 = vmatpush2.msra.mxu0 0.0
        %2197 = vmatprep.subr.mxu0 0.0
        %2198 = vmatpush2.msra.mxu0 0.0
        %2199 = vmatprep.subr.mxu0 0.0
        %2200 = vmatpush2.msra.mxu0 0.0
        %2201 = vmatprep.subr.mxu0 0.0
        %2202 = vmatpush2.msra.mxu0 0.0
        %2203 = vmatprep.subr.mxu0 0.0
        %2204 = vmatpush2.msra.mxu0 0.0
        %2205 = vmatprep.subr.mxu0 0.0
        %2206 = vmatpush2.msra.mxu0 0.0
        %2207 = vmatprep.subr.mxu0 0.0
        %2208 = vmatpush2.msra.mxu0 0.0
        %2209 = vmatprep.subr.mxu0 0.0
        %2210 = vmatpush2.msra.mxu0 0.0
        %2211 = vmatprep.subr.mxu0 0.0
        %2212 = vmatpush2.msra.mxu0 0.0
        %2213 = vmatprep.subr.mxu0 0.0
        %2214 = vmatpush2.msra.mxu0 0.0
        %2215 = vmatprep.mubr.f32.mxu0 0.0
        %2216 = vmatmul.mubr.f32.gmra.mxu0 %v2128
        %v2217 = vpop.f32.mrf.mxu0
        %v2218 = vadd.f32 0.0, %v2217
        %v2219 = vpop.f32.mrf.mxu0
        %2220 = vmatprep.mubr.f32.mxu0 0.0
        %2221 = vmatmul.mubr.f32.gmra.mxu0 %v2131
        %v2222 = vpop.f32.mrf.mxu0
        %v2223 = vadd.f32 0.0, %v2222
        %v2224 = vpop.f32.mrf.mxu0
        %2225 = vmatprep.mubr.f32.mxu0 0.0
        %2226 = vmatmul.mubr.f32.gmra.mxu0 %v2134
        %v2227 = vpop.f32.mrf.mxu0
        %v2228 = vadd.f32 0.0, %v2227
        %v2229 = vpop.f32.mrf.mxu0
        %2230 = vmatprep.mubr.f32.mxu0 0.0
        %2231 = vmatmul.mubr.f32.gmra.mxu0 %v2137
        %v2232 = vpop.f32.mrf.mxu0
        %v2233 = vadd.f32 0.0, %v2232
        %v2234 = vpop.f32.mrf.mxu0
        %2235 = vmatprep.mubr.f32.mxu0 0.0
        %2236 = vmatmul.mubr.f32.gmra.mxu0 %v2140
        %v2237 = vpop.f32.mrf.mxu0
        %v2238 = vadd.f32 0.0, %v2237
        %v2239 = vpop.f32.mrf.mxu0
        %2240 = vmatprep.mubr.f32.mxu0 0.0
        %2241 = vmatmul.mubr.f32.gmra.mxu0 %v2143
        %v2242 = vpop.f32.mrf.mxu0
        %v2243 = vadd.f32 0.0, %v2242
        %v2244 = vpop.f32.mrf.mxu0
        %2245 = vmatprep.mubr.f32.mxu0 0.0
        %2246 = vmatmul.mubr.f32.gmra.mxu0 %v2146
        %v2247 = vpop.f32.mrf.mxu0
        %v2248 = vadd.f32 0.0, %v2247
        %v2249 = vpop.f32.mrf.mxu0
        %2250 = vmatprep.mubr.f32.mxu0 0.0
        %2251 = vmatmul.mubr.f32.gmra.mxu0 %v2149
        %v2252 = vpop.f32.mrf.mxu0
        %v2253 = vadd.f32 0.0, %v2252
        %v2254 = vpop.f32.mrf.mxu0
        %2255 = vdwg.mxu0
        %v2257 = vsel %vm1306, %v1663, 0
        %v2260 = vsel %vm1306, %v1668, 0
        %v2263 = vsel %vm1306, %v1673, 0
        %v2266 = vsel %vm1306, %v1678, 0
        %v2269 = vsel %vm1306, %v1683, 0
        %v2272 = vsel %vm1306, %v1688, 0
        %v2275 = vsel %vm1306, %v1693, 0
        %v2278 = vsel %vm1306, %v1698, 0
        %2280 = vmatprep.subr.mxu0 0.0
        %2281 = vmatpush1.msra.mxu0 0.0
        %2282 = vmatprep.subr.mxu0 0.0
        %2283 = vmatpush1.msra.mxu0 0.0
        %2284 = vmatprep.subr.mxu0 0.0
        %2285 = vmatpush1.msra.mxu0 0.0
        %2286 = vmatprep.subr.mxu0 0.0
        %2287 = vmatpush1.msra.mxu0 0.0
        %2288 = vmatprep.subr.mxu0 0.0
        %2289 = vmatpush1.msra.mxu0 0.0
        %2290 = vmatprep.subr.mxu0 0.0
        %2291 = vmatpush1.msra.mxu0 0.0
        %2292 = vmatprep.subr.mxu0 0.0
        %2293 = vmatpush1.msra.mxu0 0.0
        %2294 = vmatprep.subr.mxu0 0.0
        %2295 = vmatpush1.msra.mxu0 0.0
        %2296 = vmatprep.subr.mxu0 0.0
        %2297 = vmatpush1.msra.mxu0 0.0
        %2298 = vmatprep.subr.mxu0 0.0
        %2299 = vmatpush1.msra.mxu0 0.0
        %2300 = vmatprep.subr.mxu0 0.0
        %2301 = vmatpush1.msra.mxu0 0.0
        %2302 = vmatprep.subr.mxu0 0.0
        %2303 = vmatpush1.msra.mxu0 0.0
        %2304 = vmatprep.subr.mxu0 0.0
        %2305 = vmatpush1.msra.mxu0 0.0
        %2306 = vmatprep.subr.mxu0 0.0
        %2307 = vmatpush1.msra.mxu0 0.0
        %2308 = vmatprep.subr.mxu0 0.0
        %2309 = vmatpush1.msra.mxu0 %v1009
        %2310 = vmatprep.subr.mxu0 0.0
        %2311 = vmatpush1.msra.mxu0 %v1008
        %2312 = vmatprep.subr.mxu0 0.0
        %2313 = vmatpush2.msra.mxu0 0.0
        %2314 = vmatprep.subr.mxu0 0.0
        %2315 = vmatpush2.msra.mxu0 0.0
        %2316 = vmatprep.subr.mxu0 0.0
        %2317 = vmatpush2.msra.mxu0 0.0
        %2318 = vmatprep.subr.mxu0 0.0
        %2319 = vmatpush2.msra.mxu0 0.0
        %2320 = vmatprep.subr.mxu0 0.0
        %2321 = vmatpush2.msra.mxu0 0.0
        %2322 = vmatprep.subr.mxu0 0.0
        %2323 = vmatpush2.msra.mxu0 0.0
        %2324 = vmatprep.subr.mxu0 0.0
        %2325 = vmatpush2.msra.mxu0 0.0
        %2326 = vmatprep.subr.mxu0 0.0
        %2327 = vmatpush2.msra.mxu0 0.0
        %2328 = vmatprep.subr.mxu0 0.0
        %2329 = vmatpush2.msra.mxu0 0.0
        %2330 = vmatprep.subr.mxu0 0.0
        %2331 = vmatpush2.msra.mxu0 0.0
        %2332 = vmatprep.subr.mxu0 0.0
        %2333 = vmatpush2.msra.mxu0 0.0
        %2334 = vmatprep.subr.mxu0 0.0
        %2335 = vmatpush2.msra.mxu0 0.0
        %2336 = vmatprep.subr.mxu0 0.0
        %2337 = vmatpush2.msra.mxu0 0.0
        %2338 = vmatprep.subr.mxu0 0.0
        %2339 = vmatpush2.msra.mxu0 0.0
        %2340 = vmatprep.subr.mxu0 0.0
        %2341 = vmatpush2.msra.mxu0 0.0
        %2342 = vmatprep.subr.mxu0 0.0
        %2343 = vmatpush2.msra.mxu0 0.0
        %2344 = vmatprep.mubr.f32.mxu0 0.0
        %2345 = vmatmul.mubr.f32.gmra.mxu0 %v2257
        %v2346 = vpop.f32.mrf.mxu0
        %v2347 = vadd.f32 %v2218, %v2346
        %v2348 = vpop.f32.mrf.mxu0
        %2349 = vmatprep.mubr.f32.mxu0 0.0
        %2350 = vmatmul.mubr.f32.gmra.mxu0 %v2260
        %v2351 = vpop.f32.mrf.mxu0
        %v2352 = vadd.f32 %v2223, %v2351
        %v2353 = vpop.f32.mrf.mxu0
        %2354 = vmatprep.mubr.f32.mxu0 0.0
        %2355 = vmatmul.mubr.f32.gmra.mxu0 %v2263
        %v2356 = vpop.f32.mrf.mxu0
        %v2357 = vadd.f32 %v2228, %v2356
        %v2358 = vpop.f32.mrf.mxu0
        %2359 = vmatprep.mubr.f32.mxu0 0.0
        %2360 = vmatmul.mubr.f32.gmra.mxu0 %v2266
        %v2361 = vpop.f32.mrf.mxu0
        %v2362 = vadd.f32 %v2233, %v2361
        %v2363 = vpop.f32.mrf.mxu0
        %2364 = vmatprep.mubr.f32.mxu0 0.0
        %2365 = vmatmul.mubr.f32.gmra.mxu0 %v2269
        %v2366 = vpop.f32.mrf.mxu0
        %v2367 = vadd.f32 %v2238, %v2366
        %v2368 = vpop.f32.mrf.mxu0
        %2369 = vmatprep.mubr.f32.mxu0 0.0
        %2370 = vmatmul.mubr.f32.gmra.mxu0 %v2272
        %v2371 = vpop.f32.mrf.mxu0
        %v2372 = vadd.f32 %v2243, %v2371
        %v2373 = vpop.f32.mrf.mxu0
        %2374 = vmatprep.mubr.f32.mxu0 0.0
        %2375 = vmatmul.mubr.f32.gmra.mxu0 %v2275
        %v2376 = vpop.f32.mrf.mxu0
        %v2377 = vadd.f32 %v2248, %v2376
        %v2378 = vpop.f32.mrf.mxu0
        %2379 = vmatprep.mubr.f32.mxu0 0.0
        %2380 = vmatmul.mubr.f32.gmra.mxu0 %v2278
        %v2381 = vpop.f32.mrf.mxu0
        %v2382 = vadd.f32 %v2253, %v2381
        %v2383 = vpop.f32.mrf.mxu0
        %2384 = vdwg.mxu0
        %v2386 = vlaneseq
        %v2387 = vshrl.u32 %v2386, 7
        %v2388 = vsub.s32 0, %v2387
        %v2389 = vrot.slane %v1012, %v2388
        %v2391 = vadd.f32 %v2347, %v2389
        %v2392 = vadd.f32 %v2352, %v2389
        %v2393 = vadd.f32 %v2357, %v2389
        %v2394 = vadd.f32 %v2362, %v2389
        %v2395 = vadd.f32 %v2367, %v2389
        %v2396 = vadd.f32 %v2372, %v2389
        %v2397 = vadd.f32 %v2377, %v2389
        %v2398 = vadd.f32 %v2382, %v2389
        %vm2399 = vcmp.lt.f32.partialorder %v828, 0.0
        %vm2400 = vcmp.lt.f32.partialorder %v829, 0.0
        %vm2401 = vcmp.lt.f32.partialorder %v830, 0.0
        %vm2402 = vcmp.lt.f32.partialorder %v831, 0.0
        %vm2403 = vcmp.lt.f32.partialorder %v832, 0.0
        %vm2404 = vcmp.lt.f32.partialorder %v833, 0.0
        %vm2405 = vcmp.lt.f32.partialorder %v834, 0.0
        %vm2406 = vcmp.lt.f32.partialorder %v835, 0.0
        %v2407 = vceil.f32 %v828
        %v2408 = vceil.f32 %v829
        %v2409 = vceil.f32 %v830
        %v2410 = vceil.f32 %v831
        %v2411 = vceil.f32 %v832
        %v2412 = vceil.f32 %v833
        %v2413 = vceil.f32 %v834
        %v2414 = vceil.f32 %v835
        %v2415 = vfloor.f32 %v828
        %v2416 = vfloor.f32 %v829
        %v2417 = vfloor.f32 %v830
        %v2418 = vfloor.f32 %v831
        %v2419 = vfloor.f32 %v832
        %v2420 = vfloor.f32 %v833
        %v2421 = vfloor.f32 %v834
        %v2422 = vfloor.f32 %v835
        %v2423 = vsel %vm2399, %v2407, %v2415
        %v2424 = vsel %vm2400, %v2408, %v2416
        %v2425 = vsel %vm2401, %v2409, %v2417
        %v2426 = vsel %vm2402, %v2410, %v2418
        %v2427 = vsel %vm2403, %v2411, %v2419
        %v2428 = vsel %vm2404, %v2412, %v2420
        %v2429 = vsel %vm2405, %v2413, %v2421
        %v2430 = vsel %vm2406, %v2414, %v2422
        %v2431 = vadd.f32 %v2423, %v2391
        %v2432 = vadd.f32 %v2424, %v2392
        %v2433 = vadd.f32 %v2425, %v2393
        %v2434 = vadd.f32 %v2426, %v2394
        %v2435 = vadd.f32 %v2427, %v2395
        %v2436 = vadd.f32 %v2428, %v2396
        %v2437 = vadd.f32 %v2429, %v2397
        %v2438 = vadd.f32 %v2430, %v2398
        %v2439 = vld [vmem:[%s8] sm:$0x1]
        %v2440 = vld [vmem:[#allocation2] sm:$0x1]
        %v2441 = vld [vmem:[%s10] sm:$0xff]
        %v2442 = vld [vmem:[%s10 + $0x8] sm:$0xff]
        %v2443 = vld [vmem:[%s10 + $0x10] sm:$0xff]
        %v2444 = vld [vmem:[%s10 + $0x18] sm:$0xff]
        %v2445 = vld [vmem:[%s11] sm:$0x1]
        %v2446 = vld [vmem:[%s12] sm:$0xff]
        %v2447 = vld [vmem:[%s12 + $0x8] sm:$0xff]
        %v2448 = vld [vmem:[%s12 + $0x10] sm:$0xff]
        %v2449 = vld [vmem:[%s12 + $0x18] sm:$0xff]
        %v2450 = vld [vmem:[%s12 + $0x20] sm:$0xff]
        %v2451 = vld [vmem:[%s12 + $0x28] sm:$0xff]
        %v2452 = vld [vmem:[%s12 + $0x30] sm:$0xff]
        %v2453 = vld [vmem:[%s12 + $0x38] sm:$0xff]
        %v2454 = vld [vmem:[%s12 + $0x40] sm:$0xff]
        %v2455 = vld [vmem:[%s12 + $0x48] sm:$0xff]
        %v2456 = vld [vmem:[%s12 + $0x50] sm:$0xff]
        %v2457 = vld [vmem:[%s12 + $0x58] sm:$0xff]
        %v2458 = vld [vmem:[%s12 + $0x60] sm:$0xff]
        %v2459 = vld [vmem:[%s12 + $0x68] sm:$0xff]
        %v2460 = vld [vmem:[%s12 + $0x70] sm:$0xff]
        %v2461 = vld [vmem:[%s12 + $0x78] sm:$0xff]
        %v2462 = vld [vmem:[%s13] sm:$0x1]
        %v2463 = vsel %vm1013, %v2431, 0.0
        %2464 = vadd.xlane.f32.xlu0 %v2463
        %v2465 = vpop.xlane.xlu0 %2464
        %v2466 = vsel %vm1013, %v2432, 0.0
        %2467 = vadd.xlane.f32.xlu0 %v2466
        %v2468 = vpop.xlane.xlu0 %2467
        %v2469 = vsel %vm1013, %v2433, 0.0
        %2470 = vadd.xlane.f32.xlu0 %v2469
        %v2471 = vpop.xlane.xlu0 %2470
        %v2472 = vsel %vm1013, %v2434, 0.0
        %2473 = vadd.xlane.f32.xlu0 %v2472
        %v2474 = vpop.xlane.xlu0 %2473
        %v2475 = vsel %vm1013, %v2435, 0.0
        %2476 = vadd.xlane.f32.xlu0 %v2475
        %v2477 = vpop.xlane.xlu0 %2476
        %v2478 = vsel %vm1013, %v2436, 0.0
        %2479 = vadd.xlane.f32.xlu0 %v2478
        %v2480 = vpop.xlane.xlu0 %2479
        %v2481 = vsel %vm1013, %v2437, 0.0
        %2482 = vadd.xlane.f32.xlu0 %v2481
        %v2483 = vpop.xlane.xlu0 %2482
        %v2484 = vsel %vm1013, %v2438, 0.0
        %2485 = vadd.xlane.f32.xlu0 %v2484
        %v2486 = vpop.xlane.xlu0 %2485
        %v2487 = vmul.f32 %v2465, %v1038
        %v2488 = vmul.f32 %v2468, %v1038
        %v2489 = vmul.f32 %v2471, %v1038
        %v2490 = vmul.f32 %v2474, %v1038
        %v2491 = vmul.f32 %v2477, %v1038
        %v2492 = vmul.f32 %v2480, %v1038
        %v2493 = vmul.f32 %v2483, %v1038
        %v2494 = vmul.f32 %v2486, %v1038
        %v2495 = vsub.f32 %v2431, %v2487
        %v2496 = vsub.f32 %v2432, %v2488
        %v2497 = vsub.f32 %v2433, %v2489
        %v2498 = vsub.f32 %v2434, %v2490
        %v2499 = vsub.f32 %v2435, %v2491
        %v2500 = vsub.f32 %v2436, %v2492
        %v2501 = vsub.f32 %v2437, %v2493
        %v2502 = vsub.f32 %v2438, %v2494
        %v2503 = vmul.f32 %v2495, %v2495
        %v2504 = vmul.f32 %v2496, %v2496
        %v2505 = vmul.f32 %v2497, %v2497
        %v2506 = vmul.f32 %v2498, %v2498
        %v2507 = vmul.f32 %v2499, %v2499
        %v2508 = vmul.f32 %v2500, %v2500
        %v2509 = vmul.f32 %v2501, %v2501
        %v2510 = vmul.f32 %v2502, %v2502
        %v2511 = vsel %vm1013, %v2503, 0.0
        %2512 = vadd.xlane.f32.xlu0 %v2511
        %v2513 = vpop.xlane.xlu0 %2512
        %v2514 = vsel %vm1013, %v2504, 0.0
        %2515 = vadd.xlane.f32.xlu0 %v2514
        %v2516 = vpop.xlane.xlu0 %2515
        %v2517 = vsel %vm1013, %v2505, 0.0
        %2518 = vadd.xlane.f32.xlu0 %v2517
        %v2519 = vpop.xlane.xlu0 %2518
        %v2520 = vsel %vm1013, %v2506, 0.0
        %2521 = vadd.xlane.f32.xlu0 %v2520
        %v2522 = vpop.xlane.xlu0 %2521
        %v2523 = vsel %vm1013, %v2507, 0.0
        %2524 = vadd.xlane.f32.xlu0 %v2523
        %v2525 = vpop.xlane.xlu0 %2524
        %v2526 = vsel %vm1013, %v2508, 0.0
        %2527 = vadd.xlane.f32.xlu0 %v2526
        %v2528 = vpop.xlane.xlu0 %2527
        %v2529 = vsel %vm1013, %v2509, 0.0
        %2530 = vadd.xlane.f32.xlu0 %v2529
        %v2531 = vpop.xlane.xlu0 %2530
        %v2532 = vsel %vm1013, %v2510, 0.0
        %2533 = vadd.xlane.f32.xlu0 %v2532
        %v2534 = vpop.xlane.xlu0 %2533
        %v2535 = vmul.f32 %v2513, %v1038
        %v2536 = vmul.f32 %v2516, %v1038
        %v2537 = vmul.f32 %v2519, %v1038
        %v2538 = vmul.f32 %v2522, %v1038
        %v2539 = vmul.f32 %v2525, %v1038
        %v2540 = vmul.f32 %v2528, %v1038
        %v2541 = vmul.f32 %v2531, %v1038
        %v2542 = vmul.f32 %v2534, %v1038
        %v2543 = vadd.f32 %v2535, 1e-05
        %v2544 = vadd.f32 %v2536, 1e-05
        %v2545 = vadd.f32 %v2537, 1e-05
        %v2546 = vadd.f32 %v2538, 1e-05
        %v2547 = vadd.f32 %v2539, 1e-05
        %v2548 = vadd.f32 %v2540, 1e-05
        %v2549 = vadd.f32 %v2541, 1e-05
        %v2550 = vadd.f32 %v2542, 1e-05
        %v2551 = vrsqrt.pop %v2543
        %v2552 = vrsqrt.pop %v2544
        %v2553 = vrsqrt.pop %v2545
        %v2554 = vrsqrt.pop %v2546
        %v2555 = vrsqrt.pop %v2547
        %v2556 = vrsqrt.pop %v2548
        %v2557 = vrsqrt.pop %v2549
        %v2558 = vrsqrt.pop %v2550
        %v2559 = vmul.f32 %v2495, %v2551
        %v2560 = vmul.f32 %v2496, %v2552
        %v2561 = vmul.f32 %v2497, %v2553
        %v2562 = vmul.f32 %v2498, %v2554
        %v2563 = vmul.f32 %v2499, %v2555
        %v2564 = vmul.f32 %v2500, %v2556
        %v2565 = vmul.f32 %v2501, %v2557
        %v2566 = vmul.f32 %v2502, %v2558
        %v2568 = vlaneseq
        %v2569 = vshrl.u32 %v2568, 7
        %v2570 = vsub.s32 0, %v2569
        %v2571 = vrot.slane %v2439, %v2570
        %v2573 = vmul.f32 %v2559, %v2571
        %v2574 = vmul.f32 %v2560, %v2571
        %v2575 = vmul.f32 %v2561, %v2571
        %v2576 = vmul.f32 %v2562, %v2571
        %v2577 = vmul.f32 %v2563, %v2571
        %v2578 = vmul.f32 %v2564, %v2571
        %v2579 = vmul.f32 %v2565, %v2571
        %v2580 = vmul.f32 %v2566, %v2571
        %v2582 = vlaneseq
        %v2583 = vshrl.u32 %v2582, 7
        %v2584 = vsub.s32 0, %v2583
        %v2585 = vrot.slane %v2440, %v2584
        %v2587 = vadd.f32 %v2573, %v2585
        %v2588 = vadd.f32 %v2574, %v2585
        %v2589 = vadd.f32 %v2575, %v2585
        %v2590 = vadd.f32 %v2576, %v2585
        %v2591 = vadd.f32 %v2577, %v2585
        %v2592 = vadd.f32 %v2578, %v2585
        %v2593 = vadd.f32 %v2579, %v2585
        %v2594 = vadd.f32 %v2580, %v2585
        %v2596 = vlaneseq
        %v2597 = vshrl.u32 %v2596, 7
        %v2598 = vsub.s32 0, %v2597
        %v2599 = vrot.slane %v2445, %v2598
        %v2602 = vsel %vm1013, %v2587, 0
        %v2605 = vsel %vm1013, %v2588, 0
        %v2608 = vsel %vm1013, %v2589, 0
        %v2611 = vsel %vm1013, %v2590, 0
        %v2614 = vsel %vm1013, %v2591, 0
        %v2617 = vsel %vm1013, %v2592, 0
        %v2620 = vsel %vm1013, %v2593, 0
        %v2623 = vsel %vm1013, %v2594, 0
        %2625 = vmatprep.subr.mxu0 0.0
        %2626 = vmatpush1.msra.mxu0 0.0
        %2627 = vmatprep.subr.mxu0 0.0
        %2628 = vmatpush1.msra.mxu0 0.0
        %2629 = vmatprep.subr.mxu0 0.0
        %2630 = vmatpush1.msra.mxu0 0.0
        %2631 = vmatprep.subr.mxu0 0.0
        %2632 = vmatpush1.msra.mxu0 0.0
        %2633 = vmatprep.subr.mxu0 0.0
        %2634 = vmatpush1.msra.mxu0 0.0
        %2635 = vmatprep.subr.mxu0 0.0
        %2636 = vmatpush1.msra.mxu0 0.0
        %2637 = vmatprep.subr.mxu0 0.0
        %2638 = vmatpush1.msra.mxu0 0.0
        %2639 = vmatprep.subr.mxu0 0.0
        %2640 = vmatpush1.msra.mxu0 0.0
        %2641 = vmatprep.subr.mxu0 0.0
        %2642 = vmatpush1.msra.mxu0 0.0
        %2643 = vmatprep.subr.mxu0 0.0
        %2644 = vmatpush1.msra.mxu0 0.0
        %2645 = vmatprep.subr.mxu0 0.0
        %2646 = vmatpush1.msra.mxu0 0.0
        %2647 = vmatprep.subr.mxu0 0.0
        %2648 = vmatpush1.msra.mxu0 0.0
        %2649 = vmatprep.subr.mxu0 0.0
        %2650 = vmatpush1.msra.mxu0 %v2444
        %2651 = vmatprep.subr.mxu0 0.0
        %2652 = vmatpush1.msra.mxu0 %v2443
        %2653 = vmatprep.subr.mxu0 0.0
        %2654 = vmatpush1.msra.mxu0 %v2442
        %2655 = vmatprep.subr.mxu0 0.0
        %2656 = vmatpush1.msra.mxu0 %v2441
        %2657 = vmatprep.subr.mxu0 0.0
        %2658 = vmatpush2.msra.mxu0 0.0
        %2659 = vmatprep.subr.mxu0 0.0
        %2660 = vmatpush2.msra.mxu0 0.0
        %2661 = vmatprep.subr.mxu0 0.0
        %2662 = vmatpush2.msra.mxu0 0.0
        %2663 = vmatprep.subr.mxu0 0.0
        %2664 = vmatpush2.msra.mxu0 0.0
        %2665 = vmatprep.subr.mxu0 0.0
        %2666 = vmatpush2.msra.mxu0 0.0
        %2667 = vmatprep.subr.mxu0 0.0
        %2668 = vmatpush2.msra.mxu0 0.0
        %2669 = vmatprep.subr.mxu0 0.0
        %2670 = vmatpush2.msra.mxu0 0.0
        %2671 = vmatprep.subr.mxu0 0.0
        %2672 = vmatpush2.msra.mxu0 0.0
        %2673 = vmatprep.subr.mxu0 0.0
        %2674 = vmatpush2.msra.mxu0 0.0
        %2675 = vmatprep.subr.mxu0 0.0
        %2676 = vmatpush2.msra.mxu0 0.0
        %2677 = vmatprep.subr.mxu0 0.0
        %2678 = vmatpush2.msra.mxu0 0.0
        %2679 = vmatprep.subr.mxu0 0.0
        %2680 = vmatpush2.msra.mxu0 0.0
        %2681 = vmatprep.subr.mxu0 0.0
        %2682 = vmatpush2.msra.mxu0 0.0
        %2683 = vmatprep.subr.mxu0 0.0
        %2684 = vmatpush2.msra.mxu0 0.0
        %2685 = vmatprep.subr.mxu0 0.0
        %2686 = vmatpush2.msra.mxu0 0.0
        %2687 = vmatprep.subr.mxu0 0.0
        %2688 = vmatpush2.msra.mxu0 0.0
        %2689 = vmatprep.mubr.f32.mxu0 0.0
        %2690 = vmatmul.mubr.f32.gmra.mxu0 %v2602
        %v2691 = vpop.f32.mrf.mxu0
        %v2692 = vadd.f32 %v2599, %v2691
        %v2693 = vpop.f32.mrf.mxu0
        %2694 = vmatprep.mubr.f32.mxu0 0.0
        %2695 = vmatmul.mubr.f32.gmra.mxu0 %v2605
        %v2696 = vpop.f32.mrf.mxu0
        %v2697 = vadd.f32 %v2599, %v2696
        %v2698 = vpop.f32.mrf.mxu0
        %2699 = vmatprep.mubr.f32.mxu0 0.0
        %2700 = vmatmul.mubr.f32.gmra.mxu0 %v2608
        %v2701 = vpop.f32.mrf.mxu0
        %v2702 = vadd.f32 %v2599, %v2701
        %v2703 = vpop.f32.mrf.mxu0
        %2704 = vmatprep.mubr.f32.mxu0 0.0
        %2705 = vmatmul.mubr.f32.gmra.mxu0 %v2611
        %v2706 = vpop.f32.mrf.mxu0
        %v2707 = vadd.f32 %v2599, %v2706
        %v2708 = vpop.f32.mrf.mxu0
        %2709 = vmatprep.mubr.f32.mxu0 0.0
        %2710 = vmatmul.mubr.f32.gmra.mxu0 %v2614
        %v2711 = vpop.f32.mrf.mxu0
        %v2712 = vadd.f32 %v2599, %v2711
        %v2713 = vpop.f32.mrf.mxu0
        %2714 = vmatprep.mubr.f32.mxu0 0.0
        %2715 = vmatmul.mubr.f32.gmra.mxu0 %v2617
        %v2716 = vpop.f32.mrf.mxu0
        %v2717 = vadd.f32 %v2599, %v2716
        %v2718 = vpop.f32.mrf.mxu0
        %2719 = vmatprep.mubr.f32.mxu0 0.0
        %2720 = vmatmul.mubr.f32.gmra.mxu0 %v2620
        %v2721 = vpop.f32.mrf.mxu0
        %v2722 = vadd.f32 %v2599, %v2721
        %v2723 = vpop.f32.mrf.mxu0
        %2724 = vmatprep.mubr.f32.mxu0 0.0
        %2725 = vmatmul.mubr.f32.gmra.mxu0 %v2623
        %v2726 = vpop.f32.mrf.mxu0
        %v2727 = vadd.f32 %v2599, %v2726
        %v2728 = vpop.f32.mrf.mxu0
        %2729 = vdwg.mxu0
        %v2730 = vmul.f32 %v2692, 0.5
        %v2731 = vmul.f32 %v2697, 0.5
        %v2732 = vmul.f32 %v2702, 0.5
        %v2733 = vmul.f32 %v2707, 0.5
        %v2734 = vmul.f32 %v2712, 0.5
        %v2735 = vmul.f32 %v2717, 0.5
        %v2736 = vmul.f32 %v2722, 0.5
        %v2737 = vmul.f32 %v2727, 0.5
        %v2738 = vmul.f32 %v2692, 0.70710677
        %v2739 = vmul.f32 %v2697, 0.70710677
        %v2740 = vmul.f32 %v2702, 0.70710677
        %v2741 = vmul.f32 %v2707, 0.70710677
        %v2742 = vmul.f32 %v2712, 0.70710677
        %v2743 = vmul.f32 %v2717, 0.70710677
        %v2744 = vmul.f32 %v2722, 0.70710677
        %v2745 = vmul.f32 %v2727, 0.70710677
        %vm2746 = vcmp.ge.f32.partialorder %v2738, 0.0
        %vm2747 = vcmp.ge.f32.partialorder %v2739, 0.0
        %vm2748 = vcmp.ge.f32.partialorder %v2740, 0.0
        %vm2749 = vcmp.ge.f32.partialorder %v2741, 0.0
        %vm2750 = vcmp.ge.f32.partialorder %v2742, 0.0
        %vm2751 = vcmp.ge.f32.partialorder %v2743, 0.0
        %vm2752 = vcmp.ge.f32.partialorder %v2744, 0.0
        %vm2753 = vcmp.ge.f32.partialorder %v2745, 0.0
        %v2754 = vsel %vm2746, 1.0, -1.0
        %v2755 = vsel %vm2747, 1.0, -1.0
        %v2756 = vsel %vm2748, 1.0, -1.0
        %v2757 = vsel %vm2749, 1.0, -1.0
        %v2758 = vsel %vm2750, 1.0, -1.0
        %v2759 = vsel %vm2751, 1.0, -1.0
        %v2760 = vsel %vm2752, 1.0, -1.0
        %v2761 = vsel %vm2753, 1.0, -1.0
        %v2762 = vand.u32 2147483647, %v2738
        %v2763 = vand.u32 2147483647, %v2739
        %v2764 = vand.u32 2147483647, %v2740
        %v2765 = vand.u32 2147483647, %v2741
        %v2766 = vand.u32 2147483647, %v2742
        %v2767 = vand.u32 2147483647, %v2743
        %v2768 = vand.u32 2147483647, %v2744
        %v2769 = vand.u32 2147483647, %v2745
        %v2770 = vmul.f32 %v2762, 0.3275911
        %v2771 = vmul.f32 %v2763, 0.3275911
        %v2772 = vmul.f32 %v2764, 0.3275911
        %v2773 = vmul.f32 %v2765, 0.3275911
        %v2774 = vmul.f32 %v2766, 0.3275911
        %v2775 = vmul.f32 %v2767, 0.3275911
        %v2776 = vmul.f32 %v2768, 0.3275911
        %v2777 = vmul.f32 %v2769, 0.3275911
        %v2778 = vadd.f32 %v2770, 1.0
        %v2779 = vadd.f32 %v2771, 1.0
        %v2780 = vadd.f32 %v2772, 1.0
        %v2781 = vadd.f32 %v2773, 1.0
        %v2782 = vadd.f32 %v2774, 1.0
        %v2783 = vadd.f32 %v2775, 1.0
        %v2784 = vadd.f32 %v2776, 1.0
        %v2785 = vadd.f32 %v2777, 1.0
        %v2786 = vrcp.pop %v2778
        %v2787 = vmul.f32 1.0, %v2786
        %v2788 = vrcp.pop %v2779
        %v2789 = vmul.f32 1.0, %v2788
        %v2790 = vrcp.pop %v2780
        %v2791 = vmul.f32 1.0, %v2790
        %v2792 = vrcp.pop %v2781
        %v2793 = vmul.f32 1.0, %v2792
        %v2794 = vrcp.pop %v2782
        %v2795 = vmul.f32 1.0, %v2794
        %v2796 = vrcp.pop %v2783
        %v2797 = vmul.f32 1.0, %v2796
        %v2798 = vrcp.pop %v2784
        %v2799 = vmul.f32 1.0, %v2798
        %v2800 = vrcp.pop %v2785
        %v2801 = vmul.f32 1.0, %v2800
        %v2802 = vmul.f32 %v2787, 1.0614054
        %v2803 = vmul.f32 %v2789, 1.0614054
        %v2804 = vmul.f32 %v2791, 1.0614054
        %v2805 = vmul.f32 %v2793, 1.0614054
        %v2806 = vmul.f32 %v2795, 1.0614054
        %v2807 = vmul.f32 %v2797, 1.0614054
        %v2808 = vmul.f32 %v2799, 1.0614054
        %v2809 = vmul.f32 %v2801, 1.0614054
        %v2810 = vadd.f32 %v2802, -1.4531521
        %v2811 = vadd.f32 %v2803, -1.4531521
        %v2812 = vadd.f32 %v2804, -1.4531521
        %v2813 = vadd.f32 %v2805, -1.4531521
        %v2814 = vadd.f32 %v2806, -1.4531521
        %v2815 = vadd.f32 %v2807, -1.4531521
        %v2816 = vadd.f32 %v2808, -1.4531521
        %v2817 = vadd.f32 %v2809, -1.4531521
        %v2818 = vmul.f32 %v2810, %v2787
        %v2819 = vmul.f32 %v2811, %v2789
        %v2820 = vmul.f32 %v2812, %v2791
        %v2821 = vmul.f32 %v2813, %v2793
        %v2822 = vmul.f32 %v2814, %v2795
        %v2823 = vmul.f32 %v2815, %v2797
        %v2824 = vmul.f32 %v2816, %v2799
        %v2825 = vmul.f32 %v2817, %v2801
        %v2826 = vadd.f32 %v2818, 1.4214138
        %v2827 = vadd.f32 %v2819, 1.4214138
        %v2828 = vadd.f32 %v2820, 1.4214138
        %v2829 = vadd.f32 %v2821, 1.4214138
        %v2830 = vadd.f32 %v2822, 1.4214138
        %v2831 = vadd.f32 %v2823, 1.4214138
        %v2832 = vadd.f32 %v2824, 1.4214138
        %v2833 = vadd.f32 %v2825, 1.4214138
        %v2834 = vmul.f32 %v2826, %v2787
        %v2835 = vmul.f32 %v2827, %v2789
        %v2836 = vmul.f32 %v2828, %v2791
        %v2837 = vmul.f32 %v2829, %v2793
        %v2838 = vmul.f32 %v2830, %v2795
        %v2839 = vmul.f32 %v2831, %v2797
        %v2840 = vmul.f32 %v2832, %v2799
        %v2841 = vmul.f32 %v2833, %v2801
        %v2842 = vadd.f32 %v2834, -0.28449672
        %v2843 = vadd.f32 %v2835, -0.28449672
        %v2844 = vadd.f32 %v2836, -0.28449672
        %v2845 = vadd.f32 %v2837, -0.28449672
        %v2846 = vadd.f32 %v2838, -0.28449672
        %v2847 = vadd.f32 %v2839, -0.28449672
        %v2848 = vadd.f32 %v2840, -0.28449672
        %v2849 = vadd.f32 %v2841, -0.28449672
        %v2850 = vmul.f32 %v2842, %v2787
        %v2851 = vmul.f32 %v2843, %v2789
        %v2852 = vmul.f32 %v2844, %v2791
        %v2853 = vmul.f32 %v2845, %v2793
        %v2854 = vmul.f32 %v2846, %v2795
        %v2855 = vmul.f32 %v2847, %v2797
        %v2856 = vmul.f32 %v2848, %v2799
        %v2857 = vmul.f32 %v2849, %v2801
        %v2858 = vadd.f32 %v2850, 0.2548296
        %v2859 = vadd.f32 %v2851, 0.2548296
        %v2860 = vadd.f32 %v2852, 0.2548296
        %v2861 = vadd.f32 %v2853, 0.2548296
        %v2862 = vadd.f32 %v2854, 0.2548296
        %v2863 = vadd.f32 %v2855, 0.2548296
        %v2864 = vadd.f32 %v2856, 0.2548296
        %v2865 = vadd.f32 %v2857, 0.2548296
        %v2866 = vmul.f32 %v2858, %v2787
        %v2867 = vmul.f32 %v2859, %v2789
        %v2868 = vmul.f32 %v2860, %v2791
        %v2869 = vmul.f32 %v2861, %v2793
        %v2870 = vmul.f32 %v2862, %v2795
        %v2871 = vmul.f32 %v2863, %v2797
        %v2872 = vmul.f32 %v2864, %v2799
        %v2873 = vmul.f32 %v2865, %v2801
        %v2874 = vsub.f32 0.0, %v2762
        %v2875 = vsub.f32 0.0, %v2763
        %v2876 = vsub.f32 0.0, %v2764
        %v2877 = vsub.f32 0.0, %v2765
        %v2878 = vsub.f32 0.0, %v2766
        %v2879 = vsub.f32 0.0, %v2767
        %v2880 = vsub.f32 0.0, %v2768
        %v2881 = vsub.f32 0.0, %v2769
        %v2882 = vmul.f32 %v2874, %v2762
        %v2883 = vmul.f32 %v2875, %v2763
        %v2884 = vmul.f32 %v2876, %v2764
        %v2885 = vmul.f32 %v2877, %v2765
        %v2886 = vmul.f32 %v2878, %v2766
        %v2887 = vmul.f32 %v2879, %v2767
        %v2888 = vmul.f32 %v2880, %v2768
        %v2889 = vmul.f32 %v2881, %v2769
        %v2890 = vmul.f32 %v2882, 1.442695
        %v2891 = vpow.pop %v2890
        %v2892 = vmul.f32 %v2883, 1.442695
        %v2893 = vpow.pop %v2892
        %v2894 = vmul.f32 %v2884, 1.442695
        %v2895 = vpow.pop %v2894
        %v2896 = vmul.f32 %v2885, 1.442695
        %v2897 = vpow.pop %v2896
        %v2898 = vmul.f32 %v2886, 1.442695
        %v2899 = vpow.pop %v2898
        %v2900 = vmul.f32 %v2887, 1.442695
        %v2901 = vpow.pop %v2900
        %v2902 = vmul.f32 %v2888, 1.442695
        %v2903 = vpow.pop %v2902
        %v2904 = vmul.f32 %v2889, 1.442695
        %v2905 = vpow.pop %v2904
        %v2906 = vmul.f32 %v2866, %v2891
        %v2907 = vmul.f32 %v2867, %v2893
        %v2908 = vmul.f32 %v2868, %v2895
        %v2909 = vmul.f32 %v2869, %v2897
        %v2910 = vmul.f32 %v2870, %v2899
        %v2911 = vmul.f32 %v2871, %v2901
        %v2912 = vmul.f32 %v2872, %v2903
        %v2913 = vmul.f32 %v2873, %v2905
        %v2914 = vsub.f32 1.0, %v2906
        %v2915 = vsub.f32 1.0, %v2907
        %v2916 = vsub.f32 1.0, %v2908
        %v2917 = vsub.f32 1.0, %v2909
        %v2918 = vsub.f32 1.0, %v2910
        %v2919 = vsub.f32 1.0, %v2911
        %v2920 = vsub.f32 1.0, %v2912
        %v2921 = vsub.f32 1.0, %v2913
        %v2922 = vmul.f32 %v2754, %v2914
        %v2923 = vmul.f32 %v2755, %v2915
        %v2924 = vmul.f32 %v2756, %v2916
        %v2925 = vmul.f32 %v2757, %v2917
        %v2926 = vmul.f32 %v2758, %v2918
        %v2927 = vmul.f32 %v2759, %v2919
        %v2928 = vmul.f32 %v2760, %v2920
        %v2929 = vmul.f32 %v2761, %v2921
        %v2930 = vadd.f32 %v2922, 1.0
        %v2931 = vadd.f32 %v2923, 1.0
        %v2932 = vadd.f32 %v2924, 1.0
        %v2933 = vadd.f32 %v2925, 1.0
        %v2934 = vadd.f32 %v2926, 1.0
        %v2935 = vadd.f32 %v2927, 1.0
        %v2936 = vadd.f32 %v2928, 1.0
        %v2937 = vadd.f32 %v2929, 1.0
        %v2938 = vmul.f32 %v2730, %v2930
        %v2939 = vmul.f32 %v2731, %v2931
        %v2940 = vmul.f32 %v2732, %v2932
        %v2941 = vmul.f32 %v2733, %v2933
        %v2942 = vmul.f32 %v2734, %v2934
        %v2943 = vmul.f32 %v2735, %v2935
        %v2944 = vmul.f32 %v2736, %v2936
        %v2945 = vmul.f32 %v2737, %v2937
        %v2947 = vlaneseq
        %v2948 = vshrl.u32 %v2947, 7
        %v2949 = vsub.s32 0, %v2948
        %v2950 = vrot.slane %v2462, %v2949
        %2952 = vmatprep.subr.mxu0 0.0
        %2953 = vmatpush1.msra.mxu0 %v2461
        %2954 = vmatprep.subr.mxu0 0.0
        %2955 = vmatpush1.msra.mxu0 %v2460
        %2956 = vmatprep.subr.mxu0 0.0
        %2957 = vmatpush1.msra.mxu0 %v2459
        %2958 = vmatprep.subr.mxu0 0.0
        %2959 = vmatpush1.msra.mxu0 %v2458
        %2960 = vmatprep.subr.mxu0 0.0
        %2961 = vmatpush1.msra.mxu0 %v2457
        %2962 = vmatprep.subr.mxu0 0.0
        %2963 = vmatpush1.msra.mxu0 %v2456
        %2964 = vmatprep.subr.mxu0 0.0
        %2965 = vmatpush1.msra.mxu0 %v2455
        %2966 = vmatprep.subr.mxu0 0.0
        %2967 = vmatpush1.msra.mxu0 %v2454
        %2968 = vmatprep.subr.mxu0 0.0
        %2969 = vmatpush1.msra.mxu0 %v2453
        %2970 = vmatprep.subr.mxu0 0.0
        %2971 = vmatpush1.msra.mxu0 %v2452
        %2972 = vmatprep.subr.mxu0 0.0
        %2973 = vmatpush1.msra.mxu0 %v2451
        %2974 = vmatprep.subr.mxu0 0.0
        %2975 = vmatpush1.msra.mxu0 %v2450
        %2976 = vmatprep.subr.mxu0 0.0
        %2977 = vmatpush1.msra.mxu0 %v2449
        %2978 = vmatprep.subr.mxu0 0.0
        %2979 = vmatpush1.msra.mxu0 %v2448
        %2980 = vmatprep.subr.mxu0 0.0
        %2981 = vmatpush1.msra.mxu0 %v2447
        %2982 = vmatprep.subr.mxu0 0.0
        %2983 = vmatpush1.msra.mxu0 %v2446
        %2984 = vmatprep.subr.mxu0 0.0
        %2985 = vmatpush2.msra.mxu0 0.0
        %2986 = vmatprep.subr.mxu0 0.0
        %2987 = vmatpush2.msra.mxu0 0.0
        %2988 = vmatprep.subr.mxu0 0.0
        %2989 = vmatpush2.msra.mxu0 0.0
        %2990 = vmatprep.subr.mxu0 0.0
        %2991 = vmatpush2.msra.mxu0 0.0
        %2992 = vmatprep.subr.mxu0 0.0
        %2993 = vmatpush2.msra.mxu0 0.0
        %2994 = vmatprep.subr.mxu0 0.0
        %2995 = vmatpush2.msra.mxu0 0.0
        %2996 = vmatprep.subr.mxu0 0.0
        %2997 = vmatpush2.msra.mxu0 0.0
        %2998 = vmatprep.subr.mxu0 0.0
        %2999 = vmatpush2.msra.mxu0 0.0
        %3000 = vmatprep.subr.mxu0 0.0
        %3001 = vmatpush2.msra.mxu0 0.0
        %3002 = vmatprep.subr.mxu0 0.0
        %3003 = vmatpush2.msra.mxu0 0.0
        %3004 = vmatprep.subr.mxu0 0.0
        %3005 = vmatpush2.msra.mxu0 0.0
        %3006 = vmatprep.subr.mxu0 0.0
        %3007 = vmatpush2.msra.mxu0 0.0
        %3008 = vmatprep.subr.mxu0 0.0
        %3009 = vmatpush2.msra.mxu0 0.0
        %3010 = vmatprep.subr.mxu0 0.0
        %3011 = vmatpush2.msra.mxu0 0.0
        %3012 = vmatprep.subr.mxu0 0.0
        %3013 = vmatpush2.msra.mxu0 0.0
        %3014 = vmatprep.subr.mxu0 0.0
        %3015 = vmatpush2.msra.mxu0 0.0
        %3016 = vmatprep.mubr.f32.mxu0 0.0
        %3017 = vmatmul.mubr.f32.gmra.mxu0 %v2938
        %v3018 = vpop.f32.mrf.mxu0
        %v3019 = vadd.f32 %v2950, %v3018
        %v3020 = vpop.f32.mrf.mxu0
        %3021 = vmatprep.mubr.f32.mxu0 0.0
        %3022 = vmatmul.mubr.f32.gmra.mxu0 %v2939
        %v3023 = vpop.f32.mrf.mxu0
        %v3024 = vadd.f32 %v2950, %v3023
        %v3025 = vpop.f32.mrf.mxu0
        %3026 = vmatprep.mubr.f32.mxu0 0.0
        %3027 = vmatmul.mubr.f32.gmra.mxu0 %v2940
        %v3028 = vpop.f32.mrf.mxu0
        %v3029 = vadd.f32 %v2950, %v3028
        %v3030 = vpop.f32.mrf.mxu0
        %3031 = vmatprep.mubr.f32.mxu0 0.0
        %3032 = vmatmul.mubr.f32.gmra.mxu0 %v2941
        %v3033 = vpop.f32.mrf.mxu0
        %v3034 = vadd.f32 %v2950, %v3033
        %v3035 = vpop.f32.mrf.mxu0
        %3036 = vmatprep.mubr.f32.mxu0 0.0
        %3037 = vmatmul.mubr.f32.gmra.mxu0 %v2942
        %v3038 = vpop.f32.mrf.mxu0
        %v3039 = vadd.f32 %v2950, %v3038
        %v3040 = vpop.f32.mrf.mxu0
        %3041 = vmatprep.mubr.f32.mxu0 0.0
        %3042 = vmatmul.mubr.f32.gmra.mxu0 %v2943
        %v3043 = vpop.f32.mrf.mxu0
        %v3044 = vadd.f32 %v2950, %v3043
        %v3045 = vpop.f32.mrf.mxu0
        %3046 = vmatprep.mubr.f32.mxu0 0.0
        %3047 = vmatmul.mubr.f32.gmra.mxu0 %v2944
        %v3048 = vpop.f32.mrf.mxu0
        %v3049 = vadd.f32 %v2950, %v3048
        %v3050 = vpop.f32.mrf.mxu0
        %3051 = vmatprep.mubr.f32.mxu0 0.0
        %3052 = vmatmul.mubr.f32.gmra.mxu0 %v2945
        %v3053 = vpop.f32.mrf.mxu0
        %v3054 = vadd.f32 %v2950, %v3053
        %v3055 = vpop.f32.mrf.mxu0
        %3056 = vdwg.mxu0
        %v3057 = vmul.f32 %v3019, 0.5
        %v3058 = vmul.f32 %v3024, 0.5
        %v3059 = vmul.f32 %v3029, 0.5
        %v3060 = vmul.f32 %v3034, 0.5
        %v3061 = vmul.f32 %v3039, 0.5
        %v3062 = vmul.f32 %v3044, 0.5
        %v3063 = vmul.f32 %v3049, 0.5
        %v3064 = vmul.f32 %v3054, 0.5
        %v3065 = vmul.f32 %v3019, 0.70710677
        %v3066 = vmul.f32 %v3024, 0.70710677
        %v3067 = vmul.f32 %v3029, 0.70710677
        %v3068 = vmul.f32 %v3034, 0.70710677
        %v3069 = vmul.f32 %v3039, 0.70710677
        %v3070 = vmul.f32 %v3044, 0.70710677
        %v3071 = vmul.f32 %v3049, 0.70710677
        %v3072 = vmul.f32 %v3054, 0.70710677
        %vm3073 = vcmp.ge.f32.partialorder %v3065, 0.0
        %vm3074 = vcmp.ge.f32.partialorder %v3066, 0.0
        %vm3075 = vcmp.ge.f32.partialorder %v3067, 0.0
        %vm3076 = vcmp.ge.f32.partialorder %v3068, 0.0
        %vm3077 = vcmp.ge.f32.partialorder %v3069, 0.0
        %vm3078 = vcmp.ge.f32.partialorder %v3070, 0.0
        %vm3079 = vcmp.ge.f32.partialorder %v3071, 0.0
        %vm3080 = vcmp.ge.f32.partialorder %v3072, 0.0
        %v3081 = vsel %vm3073, 1.0, -1.0
        %v3082 = vsel %vm3074, 1.0, -1.0
        %v3083 = vsel %vm3075, 1.0, -1.0
        %v3084 = vsel %vm3076, 1.0, -1.0
        %v3085 = vsel %vm3077, 1.0, -1.0
        %v3086 = vsel %vm3078, 1.0, -1.0
        %v3087 = vsel %vm3079, 1.0, -1.0
        %v3088 = vsel %vm3080, 1.0, -1.0
        %v3089 = vand.u32 2147483647, %v3065
        %v3090 = vand.u32 2147483647, %v3066
        %v3091 = vand.u32 2147483647, %v3067
        %v3092 = vand.u32 2147483647, %v3068
        %v3093 = vand.u32 2147483647, %v3069
        %v3094 = vand.u32 2147483647, %v3070
        %v3095 = vand.u32 2147483647, %v3071
        %v3096 = vand.u32 2147483647, %v3072
        %v3097 = vmul.f32 %v3089, 0.3275911
        %v3098 = vmul.f32 %v3090, 0.3275911
        %v3099 = vmul.f32 %v3091, 0.3275911
        %v3100 = vmul.f32 %v3092, 0.3275911
        %v3101 = vmul.f32 %v3093, 0.3275911
        %v3102 = vmul.f32 %v3094, 0.3275911
        %v3103 = vmul.f32 %v3095, 0.3275911
        %v3104 = vmul.f32 %v3096, 0.3275911
        %v3105 = vadd.f32 %v3097, 1.0
        %v3106 = vadd.f32 %v3098, 1.0
        %v3107 = vadd.f32 %v3099, 1.0
        %v3108 = vadd.f32 %v3100, 1.0
        %v3109 = vadd.f32 %v3101, 1.0
        %v3110 = vadd.f32 %v3102, 1.0
        %v3111 = vadd.f32 %v3103, 1.0
        %v3112 = vadd.f32 %v3104, 1.0
        %v3113 = vrcp.pop %v3105
        %v3114 = vmul.f32 1.0, %v3113
        %v3115 = vrcp.pop %v3106
        %v3116 = vmul.f32 1.0, %v3115
        %v3117 = vrcp.pop %v3107
        %v3118 = vmul.f32 1.0, %v3117
        %v3119 = vrcp.pop %v3108
        %v3120 = vmul.f32 1.0, %v3119
        %v3121 = vrcp.pop %v3109
        %v3122 = vmul.f32 1.0, %v3121
        %v3123 = vrcp.pop %v3110
        %v3124 = vmul.f32 1.0, %v3123
        %v3125 = vrcp.pop %v3111
        %v3126 = vmul.f32 1.0, %v3125
        %v3127 = vrcp.pop %v3112
        %v3128 = vmul.f32 1.0, %v3127
        %v3129 = vmul.f32 %v3114, 1.0614054
        %v3130 = vmul.f32 %v3116, 1.0614054
        %v3131 = vmul.f32 %v3118, 1.0614054
        %v3132 = vmul.f32 %v3120, 1.0614054
        %v3133 = vmul.f32 %v3122, 1.0614054
        %v3134 = vmul.f32 %v3124, 1.0614054
        %v3135 = vmul.f32 %v3126, 1.0614054
        %v3136 = vmul.f32 %v3128, 1.0614054
        %v3137 = vadd.f32 %v3129, -1.4531521
        %v3138 = vadd.f32 %v3130, -1.4531521
        %v3139 = vadd.f32 %v3131, -1.4531521
        %v3140 = vadd.f32 %v3132, -1.4531521
        %v3141 = vadd.f32 %v3133, -1.4531521
        %v3142 = vadd.f32 %v3134, -1.4531521
        %v3143 = vadd.f32 %v3135, -1.4531521
        %v3144 = vadd.f32 %v3136, -1.4531521
        %v3145 = vmul.f32 %v3137, %v3114
        %v3146 = vmul.f32 %v3138, %v3116
        %v3147 = vmul.f32 %v3139, %v3118
        %v3148 = vmul.f32 %v3140, %v3120
        %v3149 = vmul.f32 %v3141, %v3122
        %v3150 = vmul.f32 %v3142, %v3124
        %v3151 = vmul.f32 %v3143, %v3126
        %v3152 = vmul.f32 %v3144, %v3128
        %v3153 = vadd.f32 %v3145, 1.4214138
        %v3154 = vadd.f32 %v3146, 1.4214138
        %v3155 = vadd.f32 %v3147, 1.4214138
        %v3156 = vadd.f32 %v3148, 1.4214138
        %v3157 = vadd.f32 %v3149, 1.4214138
        %v3158 = vadd.f32 %v3150, 1.4214138
        %v3159 = vadd.f32 %v3151, 1.4214138
        %v3160 = vadd.f32 %v3152, 1.4214138
        %v3161 = vmul.f32 %v3153, %v3114
        %v3162 = vmul.f32 %v3154, %v3116
        %v3163 = vmul.f32 %v3155, %v3118
        %v3164 = vmul.f32 %v3156, %v3120
        %v3165 = vmul.f32 %v3157, %v3122
        %v3166 = vmul.f32 %v3158, %v3124
        %v3167 = vmul.f32 %v3159, %v3126
        %v3168 = vmul.f32 %v3160, %v3128
        %v3169 = vadd.f32 %v3161, -0.28449672
        %v3170 = vadd.f32 %v3162, -0.28449672
        %v3171 = vadd.f32 %v3163, -0.28449672
        %v3172 = vadd.f32 %v3164, -0.28449672
        %v3173 = vadd.f32 %v3165, -0.28449672
        %v3174 = vadd.f32 %v3166, -0.28449672
        %v3175 = vadd.f32 %v3167, -0.28449672
        %v3176 = vadd.f32 %v3168, -0.28449672
        %v3177 = vmul.f32 %v3169, %v3114
        %v3178 = vmul.f32 %v3170, %v3116
        %v3179 = vmul.f32 %v3171, %v3118
        %v3180 = vmul.f32 %v3172, %v3120
        %v3181 = vmul.f32 %v3173, %v3122
        %v3182 = vmul.f32 %v3174, %v3124
        %v3183 = vmul.f32 %v3175, %v3126
        %v3184 = vmul.f32 %v3176, %v3128
        %v3185 = vadd.f32 %v3177, 0.2548296
        %v3186 = vadd.f32 %v3178, 0.2548296
        %v3187 = vadd.f32 %v3179, 0.2548296
        %v3188 = vadd.f32 %v3180, 0.2548296
        %v3189 = vadd.f32 %v3181, 0.2548296
        %v3190 = vadd.f32 %v3182, 0.2548296
        %v3191 = vadd.f32 %v3183, 0.2548296
        %v3192 = vadd.f32 %v3184, 0.2548296
        %v3193 = vmul.f32 %v3185, %v3114
        %v3194 = vmul.f32 %v3186, %v3116
        %v3195 = vmul.f32 %v3187, %v3118
        %v3196 = vmul.f32 %v3188, %v3120
        %v3197 = vmul.f32 %v3189, %v3122
        %v3198 = vmul.f32 %v3190, %v3124
        %v3199 = vmul.f32 %v3191, %v3126
        %v3200 = vmul.f32 %v3192, %v3128
        %v3201 = vsub.f32 0.0, %v3089
        %v3202 = vsub.f32 0.0, %v3090
        %v3203 = vsub.f32 0.0, %v3091
        %v3204 = vsub.f32 0.0, %v3092
        %v3205 = vsub.f32 0.0, %v3093
        %v3206 = vsub.f32 0.0, %v3094
        %v3207 = vsub.f32 0.0, %v3095
        %v3208 = vsub.f32 0.0, %v3096
        %v3209 = vmul.f32 %v3201, %v3089
        %v3210 = vmul.f32 %v3202, %v3090
        %v3211 = vmul.f32 %v3203, %v3091
        %v3212 = vmul.f32 %v3204, %v3092
        %v3213 = vmul.f32 %v3205, %v3093
        %v3214 = vmul.f32 %v3206, %v3094
        %v3215 = vmul.f32 %v3207, %v3095
        %v3216 = vmul.f32 %v3208, %v3096
        %v3217 = vmul.f32 %v3209, 1.442695
        %v3218 = vpow.pop %v3217
        %v3219 = vmul.f32 %v3210, 1.442695
        %v3220 = vpow.pop %v3219
        %v3221 = vmul.f32 %v3211, 1.442695
        %v3222 = vpow.pop %v3221
        %v3223 = vmul.f32 %v3212, 1.442695
        %v3224 = vpow.pop %v3223
        %v3225 = vmul.f32 %v3213, 1.442695
        %v3226 = vpow.pop %v3225
        %v3227 = vmul.f32 %v3214, 1.442695
        %v3228 = vpow.pop %v3227
        %v3229 = vmul.f32 %v3215, 1.442695
        %v3230 = vpow.pop %v3229
        %v3231 = vmul.f32 %v3216, 1.442695
        %v3232 = vpow.pop %v3231
        %v3233 = vmul.f32 %v3193, %v3218
        %v3234 = vmul.f32 %v3194, %v3220
        %v3235 = vmul.f32 %v3195, %v3222
        %v3236 = vmul.f32 %v3196, %v3224
        %v3237 = vmul.f32 %v3197, %v3226
        %v3238 = vmul.f32 %v3198, %v3228
        %v3239 = vmul.f32 %v3199, %v3230
        %v3240 = vmul.f32 %v3200, %v3232
        %v3241 = vsub.f32 1.0, %v3233
        %v3242 = vsub.f32 1.0, %v3234
        %v3243 = vsub.f32 1.0, %v3235
        %v3244 = vsub.f32 1.0, %v3236
        %v3245 = vsub.f32 1.0, %v3237
        %v3246 = vsub.f32 1.0, %v3238
        %v3247 = vsub.f32 1.0, %v3239
        %v3248 = vsub.f32 1.0, %v3240
        %v3249 = vmul.f32 %v3081, %v3241
        %v3250 = vmul.f32 %v3082, %v3242
        %v3251 = vmul.f32 %v3083, %v3243
        %v3252 = vmul.f32 %v3084, %v3244
        %v3253 = vmul.f32 %v3085, %v3245
        %v3254 = vmul.f32 %v3086, %v3246
        %v3255 = vmul.f32 %v3087, %v3247
        %v3256 = vmul.f32 %v3088, %v3248
        %v3257 = vadd.f32 %v3249, 1.0
        %v3258 = vadd.f32 %v3250, 1.0
        %v3259 = vadd.f32 %v3251, 1.0
        %v3260 = vadd.f32 %v3252, 1.0
        %v3261 = vadd.f32 %v3253, 1.0
        %v3262 = vadd.f32 %v3254, 1.0
        %v3263 = vadd.f32 %v3255, 1.0
        %v3264 = vadd.f32 %v3256, 1.0
        %v3265 = vmul.f32 %v3057, %v3257
        %v3266 = vmul.f32 %v3058, %v3258
        %v3267 = vmul.f32 %v3059, %v3259
        %v3268 = vmul.f32 %v3060, %v3260
        %v3269 = vmul.f32 %v3061, %v3261
        %v3270 = vmul.f32 %v3062, %v3262
        %v3271 = vmul.f32 %v3063, %v3263
        %v3272 = vmul.f32 %v3064, %v3264
        %v3273 = vadd.f32 %v3265, %v2431
        %v3274 = vadd.f32 %v3266, %v2432
        %v3275 = vadd.f32 %v3267, %v2433
        %v3276 = vadd.f32 %v3268, %v2434
        %v3277 = vadd.f32 %v3269, %v2435
        %v3278 = vadd.f32 %v3270, %v2436
        %v3279 = vadd.f32 %v3271, %v2437
        %v3280 = vadd.f32 %v3272, %v2438
        %v3282 = vsel %vm871, %v845, 0
        %v3285 = vsel %vm871, %v846, 0
        %v3288 = vsel %vm871, %v847, 0
        %v3291 = vsel %vm871, %v848, 0
        %v3294 = vsel %vm871, %v849, 0
        %v3297 = vsel %vm871, %v850, 0
        %v3300 = vsel %vm871, %v851, 0
        %v3303 = vsel %vm871, %v852, 0
        %3305 = vmatprep.subr.mxu0 0.0
        %3306 = vmatpush1.msra.mxu0 0.0
        %3307 = vmatprep.subr.mxu0 0.0
        %3308 = vmatpush1.msra.mxu0 0.0
        %3309 = vmatprep.subr.mxu0 0.0
        %3310 = vmatpush1.msra.mxu0 0.0
        %3311 = vmatprep.subr.mxu0 0.0
        %3312 = vmatpush1.msra.mxu0 0.0
        %3313 = vmatprep.subr.mxu0 0.0
        %3314 = vmatpush1.msra.mxu0 0.0
        %3315 = vmatprep.subr.mxu0 0.0
        %3316 = vmatpush1.msra.mxu0 0.0
        %3317 = vmatprep.subr.mxu0 0.0
        %3318 = vmatpush1.msra.mxu0 0.0
        %3319 = vmatprep.subr.mxu0 0.0
        %3320 = vmatpush1.msra.mxu0 0.0
        %3321 = vmatprep.subr.mxu0 0.0
        %3322 = vmatpush1.msra.mxu0 %v3280
        %3323 = vmatprep.subr.mxu0 0.0
        %3324 = vmatpush1.msra.mxu0 %v3279
        %3325 = vmatprep.subr.mxu0 0.0
        %3326 = vmatpush1.msra.mxu0 %v3278
        %3327 = vmatprep.subr.mxu0 0.0
        %3328 = vmatpush1.msra.mxu0 %v3277
        %3329 = vmatprep.subr.mxu0 0.0
        %3330 = vmatpush1.msra.mxu0 %v3276
        %3331 = vmatprep.subr.mxu0 0.0
        %3332 = vmatpush1.msra.mxu0 %v3275
        %3333 = vmatprep.subr.mxu0 0.0
        %3334 = vmatpush1.msra.mxu0 %v3274
        %3335 = vmatprep.subr.mxu0 0.0
        %3336 = vmatpush1.msra.mxu0 %v3273
        %3337 = vmatprep.subr.mxu0 0.0
        %3338 = vmatpush2.msra.mxu0 0.0
        %3339 = vmatprep.subr.mxu0 0.0
        %3340 = vmatpush2.msra.mxu0 0.0
        %3341 = vmatprep.subr.mxu0 0.0
        %3342 = vmatpush2.msra.mxu0 0.0
        %3343 = vmatprep.subr.mxu0 0.0
        %3344 = vmatpush2.msra.mxu0 0.0
        %3345 = vmatprep.subr.mxu0 0.0
        %3346 = vmatpush2.msra.mxu0 0.0
        %3347 = vmatprep.subr.mxu0 0.0
        %3348 = vmatpush2.msra.mxu0 0.0
        %3349 = vmatprep.subr.mxu0 0.0
        %3350 = vmatpush2.msra.mxu0 0.0
        %3351 = vmatprep.subr.mxu0 0.0
        %3352 = vmatpush2.msra.mxu0 0.0
        %3353 = vmatprep.subr.mxu0 0.0
        %3354 = vmatpush2.msra.mxu0 0.0
        %3355 = vmatprep.subr.mxu0 0.0
        %3356 = vmatpush2.msra.mxu0 0.0
        %3357 = vmatprep.subr.mxu0 0.0
        %3358 = vmatpush2.msra.mxu0 0.0
        %3359 = vmatprep.subr.mxu0 0.0
        %3360 = vmatpush2.msra.mxu0 0.0
        %3361 = vmatprep.subr.mxu0 0.0
        %3362 = vmatpush2.msra.mxu0 0.0
        %3363 = vmatprep.subr.mxu0 0.0
        %3364 = vmatpush2.msra.mxu0 0.0
        %3365 = vmatprep.subr.mxu0 0.0
        %3366 = vmatpush2.msra.mxu0 0.0
        %3367 = vmatprep.subr.mxu0 0.0
        %3368 = vmatpush2.msra.mxu0 0.0
        %3369 = vmatprep.mubr.f32.mxu0 0.0
        %3370 = vmatmul.mubr.f32.gmra.mxu0 %v3282
        %v3371 = vpop.f32.mrf.mxu0
        %v3372 = vadd.f32 0.0, %v3371
        %v3373 = vpop.f32.mrf.mxu0
        %3374 = vmatprep.mubr.f32.mxu0 0.0
        %3375 = vmatmul.mubr.f32.gmra.mxu0 %v3285
        %v3376 = vpop.f32.mrf.mxu0
        %v3377 = vadd.f32 0.0, %v3376
        %v3378 = vpop.f32.mrf.mxu0
        %3379 = vmatprep.mubr.f32.mxu0 0.0
        %3380 = vmatmul.mubr.f32.gmra.mxu0 %v3288
        %v3381 = vpop.f32.mrf.mxu0
        %v3382 = vadd.f32 0.0, %v3381
        %v3383 = vpop.f32.mrf.mxu0
        %3384 = vmatprep.mubr.f32.mxu0 0.0
        %3385 = vmatmul.mubr.f32.gmra.mxu0 %v3291
        %v3386 = vpop.f32.mrf.mxu0
        %v3387 = vadd.f32 0.0, %v3386
        %v3388 = vpop.f32.mrf.mxu0
        %3389 = vmatprep.mubr.f32.mxu0 0.0
        %3390 = vmatmul.mubr.f32.gmra.mxu0 %v3294
        %v3391 = vpop.f32.mrf.mxu0
        %v3392 = vadd.f32 0.0, %v3391
        %v3393 = vpop.f32.mrf.mxu0
        %3394 = vmatprep.mubr.f32.mxu0 0.0
        %3395 = vmatmul.mubr.f32.gmra.mxu0 %v3297
        %v3396 = vpop.f32.mrf.mxu0
        %v3397 = vadd.f32 0.0, %v3396
        %v3398 = vpop.f32.mrf.mxu0
        %3399 = vmatprep.mubr.f32.mxu0 0.0
        %3400 = vmatmul.mubr.f32.gmra.mxu0 %v3300
        %v3401 = vpop.f32.mrf.mxu0
        %v3402 = vadd.f32 0.0, %v3401
        %v3403 = vpop.f32.mrf.mxu0
        %3404 = vmatprep.mubr.f32.mxu0 0.0
        %3405 = vmatmul.mubr.f32.gmra.mxu0 %v3303
        %v3406 = vpop.f32.mrf.mxu0
        %v3407 = vadd.f32 0.0, %v3406
        %v3408 = vpop.f32.mrf.mxu0
        %3409 = vdwg.mxu0
        %v3410 = vld [vmem:[%s14] sm:$0x1]
        %v3411 = vld [vmem:[#allocation5] sm:$0x1]
        %v3412 = vld [vmem:[%s16] sm:$0xff]
        %v3413 = vld [vmem:[%s16 + $0x8] sm:$0xff]
        %v3414 = vld [vmem:[%s16 + $0x10] sm:$0xff]
        %v3415 = vld [vmem:[%s16 + $0x18] sm:$0xff]
        %v3416 = vld [vmem:[%s17] sm:$0x1]
        %v3417 = vld [vmem:[%s18] sm:$0xff]
        %v3418 = vld [vmem:[%s18 + $0x8] sm:$0xff]
        %v3419 = vld [vmem:[%s18 + $0x10] sm:$0xff]
        %v3420 = vld [vmem:[%s18 + $0x18] sm:$0xff]
        %v3421 = vld [vmem:[%s19] sm:$0x1]
        %v3422 = vsel %vm1013, %v3372, 0.0
        %3423 = vadd.xlane.f32.xlu0 %v3422
        %v3424 = vpop.xlane.xlu0 %3423
        %v3425 = vsel %vm1013, %v3377, 0.0
        %3426 = vadd.xlane.f32.xlu0 %v3425
        %v3427 = vpop.xlane.xlu0 %3426
        %v3428 = vsel %vm1013, %v3382, 0.0
        %3429 = vadd.xlane.f32.xlu0 %v3428
        %v3430 = vpop.xlane.xlu0 %3429
        %v3431 = vsel %vm1013, %v3387, 0.0
        %3432 = vadd.xlane.f32.xlu0 %v3431
        %v3433 = vpop.xlane.xlu0 %3432
        %v3434 = vsel %vm1013, %v3392, 0.0
        %3435 = vadd.xlane.f32.xlu0 %v3434
        %v3436 = vpop.xlane.xlu0 %3435
        %v3437 = vsel %vm1013, %v3397, 0.0
        %3438 = vadd.xlane.f32.xlu0 %v3437
        %v3439 = vpop.xlane.xlu0 %3438
        %v3440 = vsel %vm1013, %v3402, 0.0
        %3441 = vadd.xlane.f32.xlu0 %v3440
        %v3442 = vpop.xlane.xlu0 %3441
        %v3443 = vsel %vm1013, %v3407, 0.0
        %3444 = vadd.xlane.f32.xlu0 %v3443
        %v3445 = vpop.xlane.xlu0 %3444
        %v3446 = vmul.f32 %v3424, %v1038
        %v3447 = vmul.f32 %v3427, %v1038
        %v3448 = vmul.f32 %v3430, %v1038
        %v3449 = vmul.f32 %v3433, %v1038
        %v3450 = vmul.f32 %v3436, %v1038
        %v3451 = vmul.f32 %v3439, %v1038
        %v3452 = vmul.f32 %v3442, %v1038
        %v3453 = vmul.f32 %v3445, %v1038
        %v3454 = vsub.f32 %v3372, %v3446
        %v3455 = vsub.f32 %v3377, %v3447
        %v3456 = vsub.f32 %v3382, %v3448
        %v3457 = vsub.f32 %v3387, %v3449
        %v3458 = vsub.f32 %v3392, %v3450
        %v3459 = vsub.f32 %v3397, %v3451
        %v3460 = vsub.f32 %v3402, %v3452
        %v3461 = vsub.f32 %v3407, %v3453
        %v3462 = vmul.f32 %v3454, %v3454
        %v3463 = vmul.f32 %v3455, %v3455
        %v3464 = vmul.f32 %v3456, %v3456
        %v3465 = vmul.f32 %v3457, %v3457
        %v3466 = vmul.f32 %v3458, %v3458
        %v3467 = vmul.f32 %v3459, %v3459
        %v3468 = vmul.f32 %v3460, %v3460
        %v3469 = vmul.f32 %v3461, %v3461
        %v3470 = vsel %vm1013, %v3462, 0.0
        %3471 = vadd.xlane.f32.xlu0 %v3470
        %v3472 = vpop.xlane.xlu0 %3471
        %v3473 = vsel %vm1013, %v3463, 0.0
        %3474 = vadd.xlane.f32.xlu0 %v3473
        %v3475 = vpop.xlane.xlu0 %3474
        %v3476 = vsel %vm1013, %v3464, 0.0
        %3477 = vadd.xlane.f32.xlu0 %v3476
        %v3478 = vpop.xlane.xlu0 %3477
        %v3479 = vsel %vm1013, %v3465, 0.0
        %3480 = vadd.xlane.f32.xlu0 %v3479
        %v3481 = vpop.xlane.xlu0 %3480
        %v3482 = vsel %vm1013, %v3466, 0.0
        %3483 = vadd.xlane.f32.xlu0 %v3482
        %v3484 = vpop.xlane.xlu0 %3483
        %v3485 = vsel %vm1013, %v3467, 0.0
        %3486 = vadd.xlane.f32.xlu0 %v3485
        %v3487 = vpop.xlane.xlu0 %3486
        %v3488 = vsel %vm1013, %v3468, 0.0
        %3489 = vadd.xlane.f32.xlu0 %v3488
        %v3490 = vpop.xlane.xlu0 %3489
        %v3491 = vsel %vm1013, %v3469, 0.0
        %3492 = vadd.xlane.f32.xlu0 %v3491
        %v3493 = vpop.xlane.xlu0 %3492
        %v3494 = vmul.f32 %v3472, %v1038
        %v3495 = vmul.f32 %v3475, %v1038
        %v3496 = vmul.f32 %v3478, %v1038
        %v3497 = vmul.f32 %v3481, %v1038
        %v3498 = vmul.f32 %v3484, %v1038
        %v3499 = vmul.f32 %v3487, %v1038
        %v3500 = vmul.f32 %v3490, %v1038
        %v3501 = vmul.f32 %v3493, %v1038
        %v3502 = vadd.f32 %v3494, 1e-05
        %v3503 = vadd.f32 %v3495, 1e-05
        %v3504 = vadd.f32 %v3496, 1e-05
        %v3505 = vadd.f32 %v3497, 1e-05
        %v3506 = vadd.f32 %v3498, 1e-05
        %v3507 = vadd.f32 %v3499, 1e-05
        %v3508 = vadd.f32 %v3500, 1e-05
        %v3509 = vadd.f32 %v3501, 1e-05
        %v3510 = vrsqrt.pop %v3502
        %v3511 = vrsqrt.pop %v3503
        %v3512 = vrsqrt.pop %v3504
        %v3513 = vrsqrt.pop %v3505
        %v3514 = vrsqrt.pop %v3506
        %v3515 = vrsqrt.pop %v3507
        %v3516 = vrsqrt.pop %v3508
        %v3517 = vrsqrt.pop %v3509
        %v3518 = vmul.f32 %v3454, %v3510
        %v3519 = vmul.f32 %v3455, %v3511
        %v3520 = vmul.f32 %v3456, %v3512
        %v3521 = vmul.f32 %v3457, %v3513
        %v3522 = vmul.f32 %v3458, %v3514
        %v3523 = vmul.f32 %v3459, %v3515
        %v3524 = vmul.f32 %v3460, %v3516
        %v3525 = vmul.f32 %v3461, %v3517
        %v3527 = vlaneseq
        %v3528 = vshrl.u32 %v3527, 7
        %v3529 = vsub.s32 0, %v3528
        %v3530 = vrot.slane %v3410, %v3529
        %v3532 = vmul.f32 %v3518, %v3530
        %v3533 = vmul.f32 %v3519, %v3530
        %v3534 = vmul.f32 %v3520, %v3530
        %v3535 = vmul.f32 %v3521, %v3530
        %v3536 = vmul.f32 %v3522, %v3530
        %v3537 = vmul.f32 %v3523, %v3530
        %v3538 = vmul.f32 %v3524, %v3530
        %v3539 = vmul.f32 %v3525, %v3530
        %v3541 = vlaneseq
        %v3542 = vshrl.u32 %v3541, 7
        %v3543 = vsub.s32 0, %v3542
        %v3544 = vrot.slane %v3411, %v3543
        %v3546 = vadd.f32 %v3532, %v3544
        %v3547 = vadd.f32 %v3533, %v3544
        %v3548 = vadd.f32 %v3534, %v3544
        %v3549 = vadd.f32 %v3535, %v3544
        %v3550 = vadd.f32 %v3536, %v3544
        %v3551 = vadd.f32 %v3537, %v3544
        %v3552 = vadd.f32 %v3538, %v3544
        %v3553 = vadd.f32 %v3539, %v3544
        %v3555 = vlaneseq
        %v3556 = vshrl.u32 %v3555, 7
        %v3557 = vsub.s32 0, %v3556
        %v3558 = vrot.slane %v3416, %v3557
        %v3561 = vsel %vm1013, %v3546, 0
        %v3564 = vsel %vm1013, %v3547, 0
        %v3567 = vsel %vm1013, %v3548, 0
        %v3570 = vsel %vm1013, %v3549, 0
        %v3573 = vsel %vm1013, %v3550, 0
        %v3576 = vsel %vm1013, %v3551, 0
        %v3579 = vsel %vm1013, %v3552, 0
        %v3582 = vsel %vm1013, %v3553, 0
        %3584 = vmatprep.subr.mxu0 0.0
        %3585 = vmatpush1.msra.mxu0 0.0
        %3586 = vmatprep.subr.mxu0 0.0
        %3587 = vmatpush1.msra.mxu0 0.0
        %3588 = vmatprep.subr.mxu0 0.0
        %3589 = vmatpush1.msra.mxu0 0.0
        %3590 = vmatprep.subr.mxu0 0.0
        %3591 = vmatpush1.msra.mxu0 0.0
        %3592 = vmatprep.subr.mxu0 0.0
        %3593 = vmatpush1.msra.mxu0 0.0
        %3594 = vmatprep.subr.mxu0 0.0
        %3595 = vmatpush1.msra.mxu0 0.0
        %3596 = vmatprep.subr.mxu0 0.0
        %3597 = vmatpush1.msra.mxu0 0.0
        %3598 = vmatprep.subr.mxu0 0.0
        %3599 = vmatpush1.msra.mxu0 0.0
        %3600 = vmatprep.subr.mxu0 0.0
        %3601 = vmatpush1.msra.mxu0 0.0
        %3602 = vmatprep.subr.mxu0 0.0
        %3603 = vmatpush1.msra.mxu0 0.0
        %3604 = vmatprep.subr.mxu0 0.0
        %3605 = vmatpush1.msra.mxu0 0.0
        %3606 = vmatprep.subr.mxu0 0.0
        %3607 = vmatpush1.msra.mxu0 0.0
        %3608 = vmatprep.subr.mxu0 0.0
        %3609 = vmatpush1.msra.mxu0 %v3415
        %3610 = vmatprep.subr.mxu0 0.0
        %3611 = vmatpush1.msra.mxu0 %v3414
        %3612 = vmatprep.subr.mxu0 0.0
        %3613 = vmatpush1.msra.mxu0 %v3413
        %3614 = vmatprep.subr.mxu0 0.0
        %3615 = vmatpush1.msra.mxu0 %v3412
        %3616 = vmatprep.subr.mxu0 0.0
        %3617 = vmatpush2.msra.mxu0 0.0
        %3618 = vmatprep.subr.mxu0 0.0
        %3619 = vmatpush2.msra.mxu0 0.0
        %3620 = vmatprep.subr.mxu0 0.0
        %3621 = vmatpush2.msra.mxu0 0.0
        %3622 = vmatprep.subr.mxu0 0.0
        %3623 = vmatpush2.msra.mxu0 0.0
        %3624 = vmatprep.subr.mxu0 0.0
        %3625 = vmatpush2.msra.mxu0 0.0
        %3626 = vmatprep.subr.mxu0 0.0
        %3627 = vmatpush2.msra.mxu0 0.0
        %3628 = vmatprep.subr.mxu0 0.0
        %3629 = vmatpush2.msra.mxu0 0.0
        %3630 = vmatprep.subr.mxu0 0.0
        %3631 = vmatpush2.msra.mxu0 0.0
        %3632 = vmatprep.subr.mxu0 0.0
        %3633 = vmatpush2.msra.mxu0 0.0
        %3634 = vmatprep.subr.mxu0 0.0
        %3635 = vmatpush2.msra.mxu0 0.0
        %3636 = vmatprep.subr.mxu0 0.0
        %3637 = vmatpush2.msra.mxu0 0.0
        %3638 = vmatprep.subr.mxu0 0.0
        %3639 = vmatpush2.msra.mxu0 0.0
        %3640 = vmatprep.subr.mxu0 0.0
        %3641 = vmatpush2.msra.mxu0 0.0
        %3642 = vmatprep.subr.mxu0 0.0
        %3643 = vmatpush2.msra.mxu0 0.0
        %3644 = vmatprep.subr.mxu0 0.0
        %3645 = vmatpush2.msra.mxu0 0.0
        %3646 = vmatprep.subr.mxu0 0.0
        %3647 = vmatpush2.msra.mxu0 0.0
        %3648 = vmatprep.mubr.f32.mxu0 0.0
        %3649 = vmatmul.mubr.f32.gmra.mxu0 %v3561
        %v3650 = vpop.f32.mrf.mxu0
        %v3651 = vadd.f32 %v3558, %v3650
        %v3652 = vpop.f32.mrf.mxu0
        %3653 = vmatprep.mubr.f32.mxu0 0.0
        %3654 = vmatmul.mubr.f32.gmra.mxu0 %v3564
        %v3655 = vpop.f32.mrf.mxu0
        %v3656 = vadd.f32 %v3558, %v3655
        %v3657 = vpop.f32.mrf.mxu0
        %3658 = vmatprep.mubr.f32.mxu0 0.0
        %3659 = vmatmul.mubr.f32.gmra.mxu0 %v3567
        %v3660 = vpop.f32.mrf.mxu0
        %v3661 = vadd.f32 %v3558, %v3660
        %v3662 = vpop.f32.mrf.mxu0
        %3663 = vmatprep.mubr.f32.mxu0 0.0
        %3664 = vmatmul.mubr.f32.gmra.mxu0 %v3570
        %v3665 = vpop.f32.mrf.mxu0
        %v3666 = vadd.f32 %v3558, %v3665
        %v3667 = vpop.f32.mrf.mxu0
        %3668 = vmatprep.mubr.f32.mxu0 0.0
        %3669 = vmatmul.mubr.f32.gmra.mxu0 %v3573
        %v3670 = vpop.f32.mrf.mxu0
        %v3671 = vadd.f32 %v3558, %v3670
        %v3672 = vpop.f32.mrf.mxu0
        %3673 = vmatprep.mubr.f32.mxu0 0.0
        %3674 = vmatmul.mubr.f32.gmra.mxu0 %v3576
        %v3675 = vpop.f32.mrf.mxu0
        %v3676 = vadd.f32 %v3558, %v3675
        %v3677 = vpop.f32.mrf.mxu0
        %3678 = vmatprep.mubr.f32.mxu0 0.0
        %3679 = vmatmul.mubr.f32.gmra.mxu0 %v3579
        %v3680 = vpop.f32.mrf.mxu0
        %v3681 = vadd.f32 %v3558, %v3680
        %v3682 = vpop.f32.mrf.mxu0
        %3683 = vmatprep.mubr.f32.mxu0 0.0
        %3684 = vmatmul.mubr.f32.gmra.mxu0 %v3582
        %v3685 = vpop.f32.mrf.mxu0
        %v3686 = vadd.f32 %v3558, %v3685
        %v3687 = vpop.f32.mrf.mxu0
        %3688 = vdwg.mxu0
        %3697 = vrot.lane.b32.xlu0 %v3651, 96
        %v3698 = vpop.permute.xlu0 %3697
        %3699 = vrot.lane.b32.xlu0 %v3656, 96
        %v3700 = vpop.permute.xlu0 %3699
        %3701 = vrot.lane.b32.xlu0 %v3661, 96
        %v3702 = vpop.permute.xlu0 %3701
        %3703 = vrot.lane.b32.xlu0 %v3666, 96
        %v3704 = vpop.permute.xlu0 %3703
        %3705 = vrot.lane.b32.xlu0 %v3671, 96
        %v3706 = vpop.permute.xlu0 %3705
        %3707 = vrot.lane.b32.xlu0 %v3676, 96
        %v3708 = vpop.permute.xlu0 %3707
        %3709 = vrot.lane.b32.xlu0 %v3681, 96
        %v3710 = vpop.permute.xlu0 %3709
        %3711 = vrot.lane.b32.xlu0 %v3686, 96
        %v3712 = vpop.permute.xlu0 %3711
        %v3713 = vsel %vm1306, %v3651, 0
        %v3715 = vsel %vm1306, %v3656, 0
        %v3717 = vsel %vm1306, %v3661, 0
        %v3719 = vsel %vm1306, %v3666, 0
        %v3721 = vsel %vm1306, %v3671, 0
        %v3723 = vsel %vm1306, %v3676, 0
        %v3725 = vsel %vm1306, %v3681, 0
        %v3727 = vsel %vm1306, %v3686, 0
        %v3729 = vsel %vm1306, %v3698, 0
        %v3731 = vsel %vm1306, %v3700, 0
        %v3733 = vsel %vm1306, %v3702, 0
        %v3735 = vsel %vm1306, %v3704, 0
        %v3737 = vsel %vm1306, %v3706, 0
        %v3739 = vsel %vm1306, %v3708, 0
        %v3741 = vsel %vm1306, %v3710, 0
        %v3743 = vsel %vm1306, %v3712, 0
        %3745 = vmatprep.subr.mxu0 0.0
        %3746 = vmatpush1.xpose.msra.mxu0 0.0
        %3747 = vmatprep.subr.mxu0 0.0
        %3748 = vmatpush1.xpose.msra.mxu0 0.0
        %3749 = vmatprep.subr.mxu0 0.0
        %3750 = vmatpush1.xpose.msra.mxu0 0.0
        %3751 = vmatprep.subr.mxu0 0.0
        %3752 = vmatpush1.xpose.msra.mxu0 0.0
        %3753 = vmatprep.subr.mxu0 0.0
        %3754 = vmatpush1.xpose.msra.mxu0 0.0
        %3755 = vmatprep.subr.mxu0 0.0
        %3756 = vmatpush1.xpose.msra.mxu0 0.0
        %3757 = vmatprep.subr.mxu0 0.0
        %3758 = vmatpush1.xpose.msra.mxu0 0.0
        %3759 = vmatprep.subr.mxu0 0.0
        %3760 = vmatpush1.xpose.msra.mxu0 0.0
        %3761 = vmatprep.subr.mxu0 0.0
        %3762 = vmatpush1.xpose.msra.mxu0 %v3743
        %3763 = vmatprep.subr.mxu0 0.0
        %3764 = vmatpush1.xpose.msra.mxu0 %v3741
        %3765 = vmatprep.subr.mxu0 0.0
        %3766 = vmatpush1.xpose.msra.mxu0 %v3739
        %3767 = vmatprep.subr.mxu0 0.0
        %3768 = vmatpush1.xpose.msra.mxu0 %v3737
        %3769 = vmatprep.subr.mxu0 0.0
        %3770 = vmatpush1.xpose.msra.mxu0 %v3735
        %3771 = vmatprep.subr.mxu0 0.0
        %3772 = vmatpush1.xpose.msra.mxu0 %v3733
        %3773 = vmatprep.subr.mxu0 0.0
        %3774 = vmatpush1.xpose.msra.mxu0 %v3731
        %3775 = vmatprep.subr.mxu0 0.0
        %3776 = vmatpush1.xpose.msra.mxu0 %v3729
        %3777 = vmatprep.subr.mxu0 0.0
        %3778 = vmatpush2.xpose.msra.mxu0 0.0
        %3779 = vmatprep.subr.mxu0 0.0
        %3780 = vmatpush2.xpose.msra.mxu0 0.0
        %3781 = vmatprep.subr.mxu0 0.0
        %3782 = vmatpush2.xpose.msra.mxu0 0.0
        %3783 = vmatprep.subr.mxu0 0.0
        %3784 = vmatpush2.xpose.msra.mxu0 0.0
        %3785 = vmatprep.subr.mxu0 0.0
        %3786 = vmatpush2.xpose.msra.mxu0 0.0
        %3787 = vmatprep.subr.mxu0 0.0
        %3788 = vmatpush2.xpose.msra.mxu0 0.0
        %3789 = vmatprep.subr.mxu0 0.0
        %3790 = vmatpush2.xpose.msra.mxu0 0.0
        %3791 = vmatprep.subr.mxu0 0.0
        %3792 = vmatpush2.xpose.msra.mxu0 0.0
        %3793 = vmatprep.subr.mxu0 0.0
        %3794 = vmatpush2.xpose.msra.mxu0 0.0
        %3795 = vmatprep.subr.mxu0 0.0
        %3796 = vmatpush2.xpose.msra.mxu0 0.0
        %3797 = vmatprep.subr.mxu0 0.0
        %3798 = vmatpush2.xpose.msra.mxu0 0.0
        %3799 = vmatprep.subr.mxu0 0.0
        %3800 = vmatpush2.xpose.msra.mxu0 0.0
        %3801 = vmatprep.subr.mxu0 0.0
        %3802 = vmatpush2.xpose.msra.mxu0 0.0
        %3803 = vmatprep.subr.mxu0 0.0
        %3804 = vmatpush2.xpose.msra.mxu0 0.0
        %3805 = vmatprep.subr.mxu0 0.0
        %3806 = vmatpush2.xpose.msra.mxu0 0.0
        %3807 = vmatprep.subr.mxu0 0.0
        %3808 = vmatpush2.xpose.msra.mxu0 0.0
        %3809 = vmatprep.mubr.f32.mxu0 0.0
        %3810 = vmatmul.mubr.f32.gmra.mxu0 %v3713
        %v3811 = vpop.f32.mrf.mxu0
        %v3812 = vadd.f32 0.0, %v3811
        %v3813 = vpop.f32.mrf.mxu0
        %3814 = vmatprep.mubr.f32.mxu0 0.0
        %3815 = vmatmul.mubr.f32.gmra.mxu0 %v3715
        %v3816 = vpop.f32.mrf.mxu0
        %v3817 = vadd.f32 0.0, %v3816
        %v3818 = vpop.f32.mrf.mxu0
        %3819 = vmatprep.mubr.f32.mxu0 0.0
        %3820 = vmatmul.mubr.f32.gmra.mxu0 %v3717
        %v3821 = vpop.f32.mrf.mxu0
        %v3822 = vadd.f32 0.0, %v3821
        %v3823 = vpop.f32.mrf.mxu0
        %3824 = vmatprep.mubr.f32.mxu0 0.0
        %3825 = vmatmul.mubr.f32.gmra.mxu0 %v3719
        %v3826 = vpop.f32.mrf.mxu0
        %v3827 = vadd.f32 0.0, %v3826
        %v3828 = vpop.f32.mrf.mxu0
        %3829 = vmatprep.mubr.f32.mxu0 0.0
        %3830 = vmatmul.mubr.f32.gmra.mxu0 %v3721
        %v3831 = vpop.f32.mrf.mxu0
        %v3832 = vadd.f32 0.0, %v3831
        %v3833 = vpop.f32.mrf.mxu0
        %3834 = vmatprep.mubr.f32.mxu0 0.0
        %3835 = vmatmul.mubr.f32.gmra.mxu0 %v3723
        %v3836 = vpop.f32.mrf.mxu0
        %v3837 = vadd.f32 0.0, %v3836
        %v3838 = vpop.f32.mrf.mxu0
        %3839 = vmatprep.mubr.f32.mxu0 0.0
        %3840 = vmatmul.mubr.f32.gmra.mxu0 %v3725
        %v3841 = vpop.f32.mrf.mxu0
        %v3842 = vadd.f32 0.0, %v3841
        %v3843 = vpop.f32.mrf.mxu0
        %3844 = vmatprep.mubr.f32.mxu0 0.0
        %3845 = vmatmul.mubr.f32.gmra.mxu0 %v3727
        %v3846 = vpop.f32.mrf.mxu0
        %v3847 = vadd.f32 0.0, %v3846
        %v3848 = vpop.f32.mrf.mxu0
        %3849 = vdwg.mxu0
        %v3850 = vmul.f32 %v3812, 0.25
        %v3851 = vmul.f32 %v3817, 0.25
        %v3852 = vmul.f32 %v3822, 0.25
        %v3853 = vmul.f32 %v3827, 0.25
        %v3854 = vmul.f32 %v3832, 0.25
        %v3855 = vmul.f32 %v3837, 0.25
        %v3856 = vmul.f32 %v3842, 0.25
        %v3857 = vmul.f32 %v3847, 0.25
        %v3858 = vadd.f32 %v3850, %v863
        %v3859 = vadd.f32 %v3851, %v864
        %v3860 = vadd.f32 %v3852, %v865
        %v3861 = vadd.f32 %v3853, %v866
        %v3862 = vadd.f32 %v3854, %v867
        %v3863 = vadd.f32 %v3855, %v868
        %v3864 = vadd.f32 %v3856, %v869
        %v3865 = vadd.f32 %v3857, %v870
        %v3866 = vsel %vm871, %v3858, -inf
        %3867 = vmax.xlane.f32.xlu0 %v3866
        %v3868 = vpop.xlane.xlu0 %3867
        %v3869 = vsel %vm871, %v3859, -inf
        %3870 = vmax.xlane.f32.xlu0 %v3869
        %v3871 = vpop.xlane.xlu0 %3870
        %v3872 = vsel %vm871, %v3860, -inf
        %3873 = vmax.xlane.f32.xlu0 %v3872
        %v3874 = vpop.xlane.xlu0 %3873
        %v3875 = vsel %vm871, %v3861, -inf
        %3876 = vmax.xlane.f32.xlu0 %v3875
        %v3877 = vpop.xlane.xlu0 %3876
        %v3878 = vsel %vm871, %v3862, -inf
        %3879 = vmax.xlane.f32.xlu0 %v3878
        %v3880 = vpop.xlane.xlu0 %3879
        %v3881 = vsel %vm871, %v3863, -inf
        %3882 = vmax.xlane.f32.xlu0 %v3881
        %v3883 = vpop.xlane.xlu0 %3882
        %v3884 = vsel %vm871, %v3864, -inf
        %3885 = vmax.xlane.f32.xlu0 %v3884
        %v3886 = vpop.xlane.xlu0 %3885
        %v3887 = vsel %vm871, %v3865, -inf
        %3888 = vmax.xlane.f32.xlu0 %v3887
        %v3889 = vpop.xlane.xlu0 %3888
        %v3890 = vsub.f32 %v3858, %v3868
        %v3891 = vsub.f32 %v3859, %v3871
        %v3892 = vsub.f32 %v3860, %v3874
        %v3893 = vsub.f32 %v3861, %v3877
        %v3894 = vsub.f32 %v3862, %v3880
        %v3895 = vsub.f32 %v3863, %v3883
        %v3896 = vsub.f32 %v3864, %v3886
        %v3897 = vsub.f32 %v3865, %v3889
        %v3898 = vmul.f32 %v3890, 1.442695
        %v3899 = vpow.pop %v3898
        %v3900 = vmul.f32 %v3891, 1.442695
        %v3901 = vpow.pop %v3900
        %v3902 = vmul.f32 %v3892, 1.442695
        %v3903 = vpow.pop %v3902
        %v3904 = vmul.f32 %v3893, 1.442695
        %v3905 = vpow.pop %v3904
        %v3906 = vmul.f32 %v3894, 1.442695
        %v3907 = vpow.pop %v3906
        %v3908 = vmul.f32 %v3895, 1.442695
        %v3909 = vpow.pop %v3908
        %v3910 = vmul.f32 %v3896, 1.442695
        %v3911 = vpow.pop %v3910
        %v3912 = vmul.f32 %v3897, 1.442695
        %v3913 = vpow.pop %v3912
        %v3914 = vsel %vm871, %v3899, 0.0
        %3915 = vadd.xlane.f32.xlu0 %v3914
        %v3916 = vpop.xlane.xlu0 %3915
        %v3917 = vsel %vm871, %v3901, 0.0
        %3918 = vadd.xlane.f32.xlu0 %v3917
        %v3919 = vpop.xlane.xlu0 %3918
        %v3920 = vsel %vm871, %v3903, 0.0
        %3921 = vadd.xlane.f32.xlu0 %v3920
        %v3922 = vpop.xlane.xlu0 %3921
        %v3923 = vsel %vm871, %v3905, 0.0
        %3924 = vadd.xlane.f32.xlu0 %v3923
        %v3925 = vpop.xlane.xlu0 %3924
        %v3926 = vsel %vm871, %v3907, 0.0
        %3927 = vadd.xlane.f32.xlu0 %v3926
        %v3928 = vpop.xlane.xlu0 %3927
        %v3929 = vsel %vm871, %v3909, 0.0
        %3930 = vadd.xlane.f32.xlu0 %v3929
        %v3931 = vpop.xlane.xlu0 %3930
        %v3932 = vsel %vm871, %v3911, 0.0
        %3933 = vadd.xlane.f32.xlu0 %v3932
        %v3934 = vpop.xlane.xlu0 %3933
        %v3935 = vsel %vm871, %v3913, 0.0
        %3936 = vadd.xlane.f32.xlu0 %v3935
        %v3937 = vpop.xlane.xlu0 %3936
        %v3938 = vrcp.pop %v3916
        %v3939 = vmul.f32 %v3899, %v3938
        %v3940 = vrcp.pop %v3919
        %v3941 = vmul.f32 %v3901, %v3940
        %v3942 = vrcp.pop %v3922
        %v3943 = vmul.f32 %v3903, %v3942
        %v3944 = vrcp.pop %v3925
        %v3945 = vmul.f32 %v3905, %v3944
        %v3946 = vrcp.pop %v3928
        %v3947 = vmul.f32 %v3907, %v3946
        %v3948 = vrcp.pop %v3931
        %v3949 = vmul.f32 %v3909, %v3948
        %v3950 = vrcp.pop %v3934
        %v3951 = vmul.f32 %v3911, %v3950
        %v3952 = vrcp.pop %v3937
        %v3953 = vmul.f32 %v3913, %v3952
        %3954 = vrot.lane.b32.xlu0 %v3651, 64
        %v3955 = vpop.permute.xlu0 %3954
        %3956 = vrot.lane.b32.xlu0 %v3656, 64
        %v3957 = vpop.permute.xlu0 %3956
        %3958 = vrot.lane.b32.xlu0 %v3661, 64
        %v3959 = vpop.permute.xlu0 %3958
        %3960 = vrot.lane.b32.xlu0 %v3666, 64
        %v3961 = vpop.permute.xlu0 %3960
        %3962 = vrot.lane.b32.xlu0 %v3671, 64
        %v3963 = vpop.permute.xlu0 %3962
        %3964 = vrot.lane.b32.xlu0 %v3676, 64
        %v3965 = vpop.permute.xlu0 %3964
        %3966 = vrot.lane.b32.xlu0 %v3681, 64
        %v3967 = vpop.permute.xlu0 %3966
        %3968 = vrot.lane.b32.xlu0 %v3686, 64
        %v3969 = vpop.permute.xlu0 %3968
        %v3979 = vsel %vm871, %v3939, 0
        %v3982 = vsel %vm871, %v3941, 0
        %v3985 = vsel %vm871, %v3943, 0
        %v3988 = vsel %vm871, %v3945, 0
        %v3991 = vsel %vm871, %v3947, 0
        %v3994 = vsel %vm871, %v3949, 0
        %v3997 = vsel %vm871, %v3951, 0
        %v4000 = vsel %vm871, %v3953, 0
        %4002 = vmatprep.subr.mxu0 0.0
        %4003 = vmatpush1.msra.mxu0 0.0
        %4004 = vmatprep.subr.mxu0 0.0
        %4005 = vmatpush1.msra.mxu0 0.0
        %4006 = vmatprep.subr.mxu0 0.0
        %4007 = vmatpush1.msra.mxu0 0.0
        %4008 = vmatprep.subr.mxu0 0.0
        %4009 = vmatpush1.msra.mxu0 0.0
        %4010 = vmatprep.subr.mxu0 0.0
        %4011 = vmatpush1.msra.mxu0 0.0
        %4012 = vmatprep.subr.mxu0 0.0
        %4013 = vmatpush1.msra.mxu0 0.0
        %4014 = vmatprep.subr.mxu0 0.0
        %4015 = vmatpush1.msra.mxu0 0.0
        %4016 = vmatprep.subr.mxu0 0.0
        %4017 = vmatpush1.msra.mxu0 0.0
        %4018 = vmatprep.subr.mxu0 0.0
        %4019 = vmatpush1.msra.mxu0 %v3969
        %4020 = vmatprep.subr.mxu0 0.0
        %4021 = vmatpush1.msra.mxu0 %v3967
        %4022 = vmatprep.subr.mxu0 0.0
        %4023 = vmatpush1.msra.mxu0 %v3965
        %4024 = vmatprep.subr.mxu0 0.0
        %4025 = vmatpush1.msra.mxu0 %v3963
        %4026 = vmatprep.subr.mxu0 0.0
        %4027 = vmatpush1.msra.mxu0 %v3961
        %4028 = vmatprep.subr.mxu0 0.0
        %4029 = vmatpush1.msra.mxu0 %v3959
        %4030 = vmatprep.subr.mxu0 0.0
        %4031 = vmatpush1.msra.mxu0 %v3957
        %4032 = vmatprep.subr.mxu0 0.0
        %4033 = vmatpush1.msra.mxu0 %v3955
        %4034 = vmatprep.subr.mxu0 0.0
        %4035 = vmatpush2.msra.mxu0 0.0
        %4036 = vmatprep.subr.mxu0 0.0
        %4037 = vmatpush2.msra.mxu0 0.0
        %4038 = vmatprep.subr.mxu0 0.0
        %4039 = vmatpush2.msra.mxu0 0.0
        %4040 = vmatprep.subr.mxu0 0.0
        %4041 = vmatpush2.msra.mxu0 0.0
        %4042 = vmatprep.subr.mxu0 0.0
        %4043 = vmatpush2.msra.mxu0 0.0
        %4044 = vmatprep.subr.mxu0 0.0
        %4045 = vmatpush2.msra.mxu0 0.0
        %4046 = vmatprep.subr.mxu0 0.0
        %4047 = vmatpush2.msra.mxu0 0.0
        %4048 = vmatprep.subr.mxu0 0.0
        %4049 = vmatpush2.msra.mxu0 0.0
        %4050 = vmatprep.subr.mxu0 0.0
        %4051 = vmatpush2.msra.mxu0 0.0
        %4052 = vmatprep.subr.mxu0 0.0
        %4053 = vmatpush2.msra.mxu0 0.0
        %4054 = vmatprep.subr.mxu0 0.0
        %4055 = vmatpush2.msra.mxu0 0.0
        %4056 = vmatprep.subr.mxu0 0.0
        %4057 = vmatpush2.msra.mxu0 0.0
        %4058 = vmatprep.subr.mxu0 0.0
        %4059 = vmatpush2.msra.mxu0 0.0
        %4060 = vmatprep.subr.mxu0 0.0
        %4061 = vmatpush2.msra.mxu0 0.0
        %4062 = vmatprep.subr.mxu0 0.0
        %4063 = vmatpush2.msra.mxu0 0.0
        %4064 = vmatprep.subr.mxu0 0.0
        %4065 = vmatpush2.msra.mxu0 0.0
        %4066 = vmatprep.mubr.f32.mxu0 0.0
        %4067 = vmatmul.mubr.f32.gmra.mxu0 %v3979
        %v4068 = vpop.f32.mrf.mxu0
        %v4069 = vadd.f32 0.0, %v4068
        %v4070 = vpop.f32.mrf.mxu0
        %4071 = vmatprep.mubr.f32.mxu0 0.0
        %4072 = vmatmul.mubr.f32.gmra.mxu0 %v3982
        %v4073 = vpop.f32.mrf.mxu0
        %v4074 = vadd.f32 0.0, %v4073
        %v4075 = vpop.f32.mrf.mxu0
        %4076 = vmatprep.mubr.f32.mxu0 0.0
        %4077 = vmatmul.mubr.f32.gmra.mxu0 %v3985
        %v4078 = vpop.f32.mrf.mxu0
        %v4079 = vadd.f32 0.0, %v4078
        %v4080 = vpop.f32.mrf.mxu0
        %4081 = vmatprep.mubr.f32.mxu0 0.0
        %4082 = vmatmul.mubr.f32.gmra.mxu0 %v3988
        %v4083 = vpop.f32.mrf.mxu0
        %v4084 = vadd.f32 0.0, %v4083
        %v4085 = vpop.f32.mrf.mxu0
        %4086 = vmatprep.mubr.f32.mxu0 0.0
        %4087 = vmatmul.mubr.f32.gmra.mxu0 %v3991
        %v4088 = vpop.f32.mrf.mxu0
        %v4089 = vadd.f32 0.0, %v4088
        %v4090 = vpop.f32.mrf.mxu0
        %4091 = vmatprep.mubr.f32.mxu0 0.0
        %4092 = vmatmul.mubr.f32.gmra.mxu0 %v3994
        %v4093 = vpop.f32.mrf.mxu0
        %v4094 = vadd.f32 0.0, %v4093
        %v4095 = vpop.f32.mrf.mxu0
        %4096 = vmatprep.mubr.f32.mxu0 0.0
        %4097 = vmatmul.mubr.f32.gmra.mxu0 %v3997
        %v4098 = vpop.f32.mrf.mxu0
        %v4099 = vadd.f32 0.0, %v4098
        %v4100 = vpop.f32.mrf.mxu0
        %4101 = vmatprep.mubr.f32.mxu0 0.0
        %4102 = vmatmul.mubr.f32.gmra.mxu0 %v4000
        %v4103 = vpop.f32.mrf.mxu0
        %v4104 = vadd.f32 0.0, %v4103
        %v4105 = vpop.f32.mrf.mxu0
        %4106 = vdwg.mxu0
        %4107 = vrot.lane.b32.xlu0 %v3651, 112
        %v4108 = vpop.permute.xlu0 %4107
        %4109 = vrot.lane.b32.xlu0 %v3656, 112
        %v4110 = vpop.permute.xlu0 %4109
        %4111 = vrot.lane.b32.xlu0 %v3661, 112
        %v4112 = vpop.permute.xlu0 %4111
        %4113 = vrot.lane.b32.xlu0 %v3666, 112
        %v4114 = vpop.permute.xlu0 %4113
        %4115 = vrot.lane.b32.xlu0 %v3671, 112
        %v4116 = vpop.permute.xlu0 %4115
        %4117 = vrot.lane.b32.xlu0 %v3676, 112
        %v4118 = vpop.permute.xlu0 %4117
        %4119 = vrot.lane.b32.xlu0 %v3681, 112
        %v4120 = vpop.permute.xlu0 %4119
        %4121 = vrot.lane.b32.xlu0 %v3686, 112
        %v4122 = vpop.permute.xlu0 %4121
        %4123 = vrot.lane.b32.xlu0 %v3651, 80
        %v4124 = vpop.permute.xlu0 %4123
        %4125 = vrot.lane.b32.xlu0 %v3656, 80
        %v4126 = vpop.permute.xlu0 %4125
        %4127 = vrot.lane.b32.xlu0 %v3661, 80
        %v4128 = vpop.permute.xlu0 %4127
        %4129 = vrot.lane.b32.xlu0 %v3666, 80
        %v4130 = vpop.permute.xlu0 %4129
        %4131 = vrot.lane.b32.xlu0 %v3671, 80
        %v4132 = vpop.permute.xlu0 %4131
        %4133 = vrot.lane.b32.xlu0 %v3676, 80
        %v4134 = vpop.permute.xlu0 %4133
        %4135 = vrot.lane.b32.xlu0 %v3681, 80
        %v4136 = vpop.permute.xlu0 %4135
        %4137 = vrot.lane.b32.xlu0 %v3686, 80
        %v4138 = vpop.permute.xlu0 %4137
        %v4139 = vsel %vm1306, %v4108, 0
        %v4141 = vsel %vm1306, %v4110, 0
        %v4143 = vsel %vm1306, %v4112, 0
        %v4145 = vsel %vm1306, %v4114, 0
        %v4147 = vsel %vm1306, %v4116, 0
        %v4149 = vsel %vm1306, %v4118, 0
        %v4151 = vsel %vm1306, %v4120, 0
        %v4153 = vsel %vm1306, %v4122, 0
        %v4155 = vsel %vm1306, %v4124, 0
        %v4157 = vsel %vm1306, %v4126, 0
        %v4159 = vsel %vm1306, %v4128, 0
        %v4161 = vsel %vm1306, %v4130, 0
        %v4163 = vsel %vm1306, %v4132, 0
        %v4165 = vsel %vm1306, %v4134, 0
        %v4167 = vsel %vm1306, %v4136, 0
        %v4169 = vsel %vm1306, %v4138, 0
        %4171 = vmatprep.subr.mxu0 0.0
        %4172 = vmatpush1.xpose.msra.mxu0 0.0
        %4173 = vmatprep.subr.mxu0 0.0
        %4174 = vmatpush1.xpose.msra.mxu0 0.0
        %4175 = vmatprep.subr.mxu0 0.0
        %4176 = vmatpush1.xpose.msra.mxu0 0.0
        %4177 = vmatprep.subr.mxu0 0.0
        %4178 = vmatpush1.xpose.msra.mxu0 0.0
        %4179 = vmatprep.subr.mxu0 0.0
        %4180 = vmatpush1.xpose.msra.mxu0 0.0
        %4181 = vmatprep.subr.mxu0 0.0
        %4182 = vmatpush1.xpose.msra.mxu0 0.0
        %4183 = vmatprep.subr.mxu0 0.0
        %4184 = vmatpush1.xpose.msra.mxu0 0.0
        %4185 = vmatprep.subr.mxu0 0.0
        %4186 = vmatpush1.xpose.msra.mxu0 0.0
        %4187 = vmatprep.subr.mxu0 0.0
        %4188 = vmatpush1.xpose.msra.mxu0 %v4169
        %4189 = vmatprep.subr.mxu0 0.0
        %4190 = vmatpush1.xpose.msra.mxu0 %v4167
        %4191 = vmatprep.subr.mxu0 0.0
        %4192 = vmatpush1.xpose.msra.mxu0 %v4165
        %4193 = vmatprep.subr.mxu0 0.0
        %4194 = vmatpush1.xpose.msra.mxu0 %v4163
        %4195 = vmatprep.subr.mxu0 0.0
        %4196 = vmatpush1.xpose.msra.mxu0 %v4161
        %4197 = vmatprep.subr.mxu0 0.0
        %4198 = vmatpush1.xpose.msra.mxu0 %v4159
        %4199 = vmatprep.subr.mxu0 0.0
        %4200 = vmatpush1.xpose.msra.mxu0 %v4157
        %4201 = vmatprep.subr.mxu0 0.0
        %4202 = vmatpush1.xpose.msra.mxu0 %v4155
        %4203 = vmatprep.subr.mxu0 0.0
        %4204 = vmatpush2.xpose.msra.mxu0 0.0
        %4205 = vmatprep.subr.mxu0 0.0
        %4206 = vmatpush2.xpose.msra.mxu0 0.0
        %4207 = vmatprep.subr.mxu0 0.0
        %4208 = vmatpush2.xpose.msra.mxu0 0.0
        %4209 = vmatprep.subr.mxu0 0.0
        %4210 = vmatpush2.xpose.msra.mxu0 0.0
        %4211 = vmatprep.subr.mxu0 0.0
        %4212 = vmatpush2.xpose.msra.mxu0 0.0
        %4213 = vmatprep.subr.mxu0 0.0
        %4214 = vmatpush2.xpose.msra.mxu0 0.0
        %4215 = vmatprep.subr.mxu0 0.0
        %4216 = vmatpush2.xpose.msra.mxu0 0.0
        %4217 = vmatprep.subr.mxu0 0.0
        %4218 = vmatpush2.xpose.msra.mxu0 0.0
        %4219 = vmatprep.subr.mxu0 0.0
        %4220 = vmatpush2.xpose.msra.mxu0 0.0
        %4221 = vmatprep.subr.mxu0 0.0
        %4222 = vmatpush2.xpose.msra.mxu0 0.0
        %4223 = vmatprep.subr.mxu0 0.0
        %4224 = vmatpush2.xpose.msra.mxu0 0.0
        %4225 = vmatprep.subr.mxu0 0.0
        %4226 = vmatpush2.xpose.msra.mxu0 0.0
        %4227 = vmatprep.subr.mxu0 0.0
        %4228 = vmatpush2.xpose.msra.mxu0 0.0
        %4229 = vmatprep.subr.mxu0 0.0
        %4230 = vmatpush2.xpose.msra.mxu0 0.0
        %4231 = vmatprep.subr.mxu0 0.0
        %4232 = vmatpush2.xpose.msra.mxu0 0.0
        %4233 = vmatprep.subr.mxu0 0.0
        %4234 = vmatpush2.xpose.msra.mxu0 0.0
        %4235 = vmatprep.mubr.f32.mxu0 0.0
        %4236 = vmatmul.mubr.f32.gmra.mxu0 %v4139
        %v4237 = vpop.f32.mrf.mxu0
        %v4238 = vadd.f32 0.0, %v4237
        %v4239 = vpop.f32.mrf.mxu0
        %4240 = vmatprep.mubr.f32.mxu0 0.0
        %4241 = vmatmul.mubr.f32.gmra.mxu0 %v4141
        %v4242 = vpop.f32.mrf.mxu0
        %v4243 = vadd.f32 0.0, %v4242
        %v4244 = vpop.f32.mrf.mxu0
        %4245 = vmatprep.mubr.f32.mxu0 0.0
        %4246 = vmatmul.mubr.f32.gmra.mxu0 %v4143
        %v4247 = vpop.f32.mrf.mxu0
        %v4248 = vadd.f32 0.0, %v4247
        %v4249 = vpop.f32.mrf.mxu0
        %4250 = vmatprep.mubr.f32.mxu0 0.0
        %4251 = vmatmul.mubr.f32.gmra.mxu0 %v4145
        %v4252 = vpop.f32.mrf.mxu0
        %v4253 = vadd.f32 0.0, %v4252
        %v4254 = vpop.f32.mrf.mxu0
        %4255 = vmatprep.mubr.f32.mxu0 0.0
        %4256 = vmatmul.mubr.f32.gmra.mxu0 %v4147
        %v4257 = vpop.f32.mrf.mxu0
        %v4258 = vadd.f32 0.0, %v4257
        %v4259 = vpop.f32.mrf.mxu0
        %4260 = vmatprep.mubr.f32.mxu0 0.0
        %4261 = vmatmul.mubr.f32.gmra.mxu0 %v4149
        %v4262 = vpop.f32.mrf.mxu0
        %v4263 = vadd.f32 0.0, %v4262
        %v4264 = vpop.f32.mrf.mxu0
        %4265 = vmatprep.mubr.f32.mxu0 0.0
        %4266 = vmatmul.mubr.f32.gmra.mxu0 %v4151
        %v4267 = vpop.f32.mrf.mxu0
        %v4268 = vadd.f32 0.0, %v4267
        %v4269 = vpop.f32.mrf.mxu0
        %4270 = vmatprep.mubr.f32.mxu0 0.0
        %4271 = vmatmul.mubr.f32.gmra.mxu0 %v4153
        %v4272 = vpop.f32.mrf.mxu0
        %v4273 = vadd.f32 0.0, %v4272
        %v4274 = vpop.f32.mrf.mxu0
        %4275 = vdwg.mxu0
        %v4276 = vmul.f32 %v4238, 0.25
        %v4277 = vmul.f32 %v4243, 0.25
        %v4278 = vmul.f32 %v4248, 0.25
        %v4279 = vmul.f32 %v4253, 0.25
        %v4280 = vmul.f32 %v4258, 0.25
        %v4281 = vmul.f32 %v4263, 0.25
        %v4282 = vmul.f32 %v4268, 0.25
        %v4283 = vmul.f32 %v4273, 0.25
        %v4284 = vadd.f32 %v4276, %v863
        %v4285 = vadd.f32 %v4277, %v864
        %v4286 = vadd.f32 %v4278, %v865
        %v4287 = vadd.f32 %v4279, %v866
        %v4288 = vadd.f32 %v4280, %v867
        %v4289 = vadd.f32 %v4281, %v868
        %v4290 = vadd.f32 %v4282, %v869
        %v4291 = vadd.f32 %v4283, %v870
        %v4292 = vsel %vm871, %v4284, -inf
        %4293 = vmax.xlane.f32.xlu0 %v4292
        %v4294 = vpop.xlane.xlu0 %4293
        %v4295 = vsel %vm871, %v4285, -inf
        %4296 = vmax.xlane.f32.xlu0 %v4295
        %v4297 = vpop.xlane.xlu0 %4296
        %v4298 = vsel %vm871, %v4286, -inf
        %4299 = vmax.xlane.f32.xlu0 %v4298
        %v4300 = vpop.xlane.xlu0 %4299
        %v4301 = vsel %vm871, %v4287, -inf
        %4302 = vmax.xlane.f32.xlu0 %v4301
        %v4303 = vpop.xlane.xlu0 %4302
        %v4304 = vsel %vm871, %v4288, -inf
        %4305 = vmax.xlane.f32.xlu0 %v4304
        %v4306 = vpop.xlane.xlu0 %4305
        %v4307 = vsel %vm871, %v4289, -inf
        %4308 = vmax.xlane.f32.xlu0 %v4307
        %v4309 = vpop.xlane.xlu0 %4308
        %v4310 = vsel %vm871, %v4290, -inf
        %4311 = vmax.xlane.f32.xlu0 %v4310
        %v4312 = vpop.xlane.xlu0 %4311
        %v4313 = vsel %vm871, %v4291, -inf
        %4314 = vmax.xlane.f32.xlu0 %v4313
        %v4315 = vpop.xlane.xlu0 %4314
        %v4316 = vsub.f32 %v4284, %v4294
        %v4317 = vsub.f32 %v4285, %v4297
        %v4318 = vsub.f32 %v4286, %v4300
        %v4319 = vsub.f32 %v4287, %v4303
        %v4320 = vsub.f32 %v4288, %v4306
        %v4321 = vsub.f32 %v4289, %v4309
        %v4322 = vsub.f32 %v4290, %v4312
        %v4323 = vsub.f32 %v4291, %v4315
        %v4324 = vmul.f32 %v4316, 1.442695
        %v4325 = vpow.pop %v4324
        %v4326 = vmul.f32 %v4317, 1.442695
        %v4327 = vpow.pop %v4326
        %v4328 = vmul.f32 %v4318, 1.442695
        %v4329 = vpow.pop %v4328
        %v4330 = vmul.f32 %v4319, 1.442695
        %v4331 = vpow.pop %v4330
        %v4332 = vmul.f32 %v4320, 1.442695
        %v4333 = vpow.pop %v4332
        %v4334 = vmul.f32 %v4321, 1.442695
        %v4335 = vpow.pop %v4334
        %v4336 = vmul.f32 %v4322, 1.442695
        %v4337 = vpow.pop %v4336
        %v4338 = vmul.f32 %v4323, 1.442695
        %v4339 = vpow.pop %v4338
        %v4340 = vsel %vm871, %v4325, 0.0
        %4341 = vadd.xlane.f32.xlu0 %v4340
        %v4342 = vpop.xlane.xlu0 %4341
        %v4343 = vsel %vm871, %v4327, 0.0
        %4344 = vadd.xlane.f32.xlu0 %v4343
        %v4345 = vpop.xlane.xlu0 %4344
        %v4346 = vsel %vm871, %v4329, 0.0
        %4347 = vadd.xlane.f32.xlu0 %v4346
        %v4348 = vpop.xlane.xlu0 %4347
        %v4349 = vsel %vm871, %v4331, 0.0
        %4350 = vadd.xlane.f32.xlu0 %v4349
        %v4351 = vpop.xlane.xlu0 %4350
        %v4352 = vsel %vm871, %v4333, 0.0
        %4353 = vadd.xlane.f32.xlu0 %v4352
        %v4354 = vpop.xlane.xlu0 %4353
        %v4355 = vsel %vm871, %v4335, 0.0
        %4356 = vadd.xlane.f32.xlu0 %v4355
        %v4357 = vpop.xlane.xlu0 %4356
        %v4358 = vsel %vm871, %v4337, 0.0
        %4359 = vadd.xlane.f32.xlu0 %v4358
        %v4360 = vpop.xlane.xlu0 %4359
        %v4361 = vsel %vm871, %v4339, 0.0
        %4362 = vadd.xlane.f32.xlu0 %v4361
        %v4363 = vpop.xlane.xlu0 %4362
        %v4364 = vrcp.pop %v4342
        %v4365 = vmul.f32 %v4325, %v4364
        %v4366 = vrcp.pop %v4345
        %v4367 = vmul.f32 %v4327, %v4366
        %v4368 = vrcp.pop %v4348
        %v4369 = vmul.f32 %v4329, %v4368
        %v4370 = vrcp.pop %v4351
        %v4371 = vmul.f32 %v4331, %v4370
        %v4372 = vrcp.pop %v4354
        %v4373 = vmul.f32 %v4333, %v4372
        %v4374 = vrcp.pop %v4357
        %v4375 = vmul.f32 %v4335, %v4374
        %v4376 = vrcp.pop %v4360
        %v4377 = vmul.f32 %v4337, %v4376
        %v4378 = vrcp.pop %v4363
        %v4379 = vmul.f32 %v4339, %v4378
        %4380 = vrot.lane.b32.xlu0 %v3651, 48
        %v4381 = vpop.permute.xlu0 %4380
        %4382 = vrot.lane.b32.xlu0 %v3656, 48
        %v4383 = vpop.permute.xlu0 %4382
        %4384 = vrot.lane.b32.xlu0 %v3661, 48
        %v4385 = vpop.permute.xlu0 %4384
        %4386 = vrot.lane.b32.xlu0 %v3666, 48
        %v4387 = vpop.permute.xlu0 %4386
        %4388 = vrot.lane.b32.xlu0 %v3671, 48
        %v4389 = vpop.permute.xlu0 %4388
        %4390 = vrot.lane.b32.xlu0 %v3676, 48
        %v4391 = vpop.permute.xlu0 %4390
        %4392 = vrot.lane.b32.xlu0 %v3681, 48
        %v4393 = vpop.permute.xlu0 %4392
        %4394 = vrot.lane.b32.xlu0 %v3686, 48
        %v4395 = vpop.permute.xlu0 %4394
        %v4405 = vsel %vm871, %v4365, 0
        %v4408 = vsel %vm871, %v4367, 0
        %v4411 = vsel %vm871, %v4369, 0
        %v4414 = vsel %vm871, %v4371, 0
        %v4417 = vsel %vm871, %v4373, 0
        %v4420 = vsel %vm871, %v4375, 0
        %v4423 = vsel %vm871, %v4377, 0
        %v4426 = vsel %vm871, %v4379, 0
        %4428 = vmatprep.subr.mxu0 0.0
        %4429 = vmatpush1.msra.mxu0 0.0
        %4430 = vmatprep.subr.mxu0 0.0
        %4431 = vmatpush1.msra.mxu0 0.0
        %4432 = vmatprep.subr.mxu0 0.0
        %4433 = vmatpush1.msra.mxu0 0.0
        %4434 = vmatprep.subr.mxu0 0.0
        %4435 = vmatpush1.msra.mxu0 0.0
        %4436 = vmatprep.subr.mxu0 0.0
        %4437 = vmatpush1.msra.mxu0 0.0
        %4438 = vmatprep.subr.mxu0 0.0
        %4439 = vmatpush1.msra.mxu0 0.0
        %4440 = vmatprep.subr.mxu0 0.0
        %4441 = vmatpush1.msra.mxu0 0.0
        %4442 = vmatprep.subr.mxu0 0.0
        %4443 = vmatpush1.msra.mxu0 0.0
        %4444 = vmatprep.subr.mxu0 0.0
        %4445 = vmatpush1.msra.mxu0 %v4395
        %4446 = vmatprep.subr.mxu0 0.0
        %4447 = vmatpush1.msra.mxu0 %v4393
        %4448 = vmatprep.subr.mxu0 0.0
        %4449 = vmatpush1.msra.mxu0 %v4391
        %4450 = vmatprep.subr.mxu0 0.0
        %4451 = vmatpush1.msra.mxu0 %v4389
        %4452 = vmatprep.subr.mxu0 0.0
        %4453 = vmatpush1.msra.mxu0 %v4387
        %4454 = vmatprep.subr.mxu0 0.0
        %4455 = vmatpush1.msra.mxu0 %v4385
        %4456 = vmatprep.subr.mxu0 0.0
        %4457 = vmatpush1.msra.mxu0 %v4383
        %4458 = vmatprep.subr.mxu0 0.0
        %4459 = vmatpush1.msra.mxu0 %v4381
        %4460 = vmatprep.subr.mxu0 0.0
        %4461 = vmatpush2.msra.mxu0 0.0
        %4462 = vmatprep.subr.mxu0 0.0
        %4463 = vmatpush2.msra.mxu0 0.0
        %4464 = vmatprep.subr.mxu0 0.0
        %4465 = vmatpush2.msra.mxu0 0.0
        %4466 = vmatprep.subr.mxu0 0.0
        %4467 = vmatpush2.msra.mxu0 0.0
        %4468 = vmatprep.subr.mxu0 0.0
        %4469 = vmatpush2.msra.mxu0 0.0
        %4470 = vmatprep.subr.mxu0 0.0
        %4471 = vmatpush2.msra.mxu0 0.0
        %4472 = vmatprep.subr.mxu0 0.0
        %4473 = vmatpush2.msra.mxu0 0.0
        %4474 = vmatprep.subr.mxu0 0.0
        %4475 = vmatpush2.msra.mxu0 0.0
        %4476 = vmatprep.subr.mxu0 0.0
        %4477 = vmatpush2.msra.mxu0 0.0
        %4478 = vmatprep.subr.mxu0 0.0
        %4479 = vmatpush2.msra.mxu0 0.0
        %4480 = vmatprep.subr.mxu0 0.0
        %4481 = vmatpush2.msra.mxu0 0.0
        %4482 = vmatprep.subr.mxu0 0.0
        %4483 = vmatpush2.msra.mxu0 0.0
        %4484 = vmatprep.subr.mxu0 0.0
        %4485 = vmatpush2.msra.mxu0 0.0
        %4486 = vmatprep.subr.mxu0 0.0
        %4487 = vmatpush2.msra.mxu0 0.0
        %4488 = vmatprep.subr.mxu0 0.0
        %4489 = vmatpush2.msra.mxu0 0.0
        %4490 = vmatprep.subr.mxu0 0.0
        %4491 = vmatpush2.msra.mxu0 0.0
        %4492 = vmatprep.mubr.f32.mxu0 0.0
        %4493 = vmatmul.mubr.f32.gmra.mxu0 %v4405
        %v4494 = vpop.f32.mrf.mxu0
        %v4495 = vadd.f32 0.0, %v4494
        %v4496 = vpop.f32.mrf.mxu0
        %4497 = vmatprep.mubr.f32.mxu0 0.0
        %4498 = vmatmul.mubr.f32.gmra.mxu0 %v4408
        %v4499 = vpop.f32.mrf.mxu0
        %v4500 = vadd.f32 0.0, %v4499
        %v4501 = vpop.f32.mrf.mxu0
        %4502 = vmatprep.mubr.f32.mxu0 0.0
        %4503 = vmatmul.mubr.f32.gmra.mxu0 %v4411
        %v4504 = vpop.f32.mrf.mxu0
        %v4505 = vadd.f32 0.0, %v4504
        %v4506 = vpop.f32.mrf.mxu0
        %4507 = vmatprep.mubr.f32.mxu0 0.0
        %4508 = vmatmul.mubr.f32.gmra.mxu0 %v4414
        %v4509 = vpop.f32.mrf.mxu0
        %v4510 = vadd.f32 0.0, %v4509
        %v4511 = vpop.f32.mrf.mxu0
        %4512 = vmatprep.mubr.f32.mxu0 0.0
        %4513 = vmatmul.mubr.f32.gmra.mxu0 %v4417
        %v4514 = vpop.f32.mrf.mxu0
        %v4515 = vadd.f32 0.0, %v4514
        %v4516 = vpop.f32.mrf.mxu0
        %4517 = vmatprep.mubr.f32.mxu0 0.0
        %4518 = vmatmul.mubr.f32.gmra.mxu0 %v4420
        %v4519 = vpop.f32.mrf.mxu0
        %v4520 = vadd.f32 0.0, %v4519
        %v4521 = vpop.f32.mrf.mxu0
        %4522 = vmatprep.mubr.f32.mxu0 0.0
        %4523 = vmatmul.mubr.f32.gmra.mxu0 %v4423
        %v4524 = vpop.f32.mrf.mxu0
        %v4525 = vadd.f32 0.0, %v4524
        %v4526 = vpop.f32.mrf.mxu0
        %4527 = vmatprep.mubr.f32.mxu0 0.0
        %4528 = vmatmul.mubr.f32.gmra.mxu0 %v4426
        %v4529 = vpop.f32.mrf.mxu0
        %v4530 = vadd.f32 0.0, %v4529
        %v4531 = vpop.f32.mrf.mxu0
        %4532 = vdwg.mxu0
        %v4534 = vsel %vm1306, %v4495, 0
        %v4537 = vsel %vm1306, %v4500, 0
        %v4540 = vsel %vm1306, %v4505, 0
        %v4543 = vsel %vm1306, %v4510, 0
        %v4546 = vsel %vm1306, %v4515, 0
        %v4549 = vsel %vm1306, %v4520, 0
        %v4552 = vsel %vm1306, %v4525, 0
        %v4555 = vsel %vm1306, %v4530, 0
        %4557 = vmatprep.subr.mxu0 0.0
        %4558 = vmatpush1.msra.mxu0 0.0
        %4559 = vmatprep.subr.mxu0 0.0
        %4560 = vmatpush1.msra.mxu0 0.0
        %4561 = vmatprep.subr.mxu0 0.0
        %4562 = vmatpush1.msra.mxu0 0.0
        %4563 = vmatprep.subr.mxu0 0.0
        %4564 = vmatpush1.msra.mxu0 0.0
        %4565 = vmatprep.subr.mxu0 0.0
        %4566 = vmatpush1.msra.mxu0 0.0
        %4567 = vmatprep.subr.mxu0 0.0
        %4568 = vmatpush1.msra.mxu0 0.0
        %4569 = vmatprep.subr.mxu0 0.0
        %4570 = vmatpush1.msra.mxu0 0.0
        %4571 = vmatprep.subr.mxu0 0.0
        %4572 = vmatpush1.msra.mxu0 0.0
        %4573 = vmatprep.subr.mxu0 0.0
        %4574 = vmatpush1.msra.mxu0 0.0
        %4575 = vmatprep.subr.mxu0 0.0
        %4576 = vmatpush1.msra.mxu0 0.0
        %4577 = vmatprep.subr.mxu0 0.0
        %4578 = vmatpush1.msra.mxu0 0.0
        %4579 = vmatprep.subr.mxu0 0.0
        %4580 = vmatpush1.msra.mxu0 0.0
        %4581 = vmatprep.subr.mxu0 0.0
        %4582 = vmatpush1.msra.mxu0 0.0
        %4583 = vmatprep.subr.mxu0 0.0
        %4584 = vmatpush1.msra.mxu0 0.0
        %4585 = vmatprep.subr.mxu0 0.0
        %4586 = vmatpush1.msra.mxu0 %v3420
        %4587 = vmatprep.subr.mxu0 0.0
        %4588 = vmatpush1.msra.mxu0 %v3419
        %4589 = vmatprep.subr.mxu0 0.0
        %4590 = vmatpush2.msra.mxu0 0.0
        %4591 = vmatprep.subr.mxu0 0.0
        %4592 = vmatpush2.msra.mxu0 0.0
        %4593 = vmatprep.subr.mxu0 0.0
        %4594 = vmatpush2.msra.mxu0 0.0
        %4595 = vmatprep.subr.mxu0 0.0
        %4596 = vmatpush2.msra.mxu0 0.0
        %4597 = vmatprep.subr.mxu0 0.0
        %4598 = vmatpush2.msra.mxu0 0.0
        %4599 = vmatprep.subr.mxu0 0.0
        %4600 = vmatpush2.msra.mxu0 0.0
        %4601 = vmatprep.subr.mxu0 0.0
        %4602 = vmatpush2.msra.mxu0 0.0
        %4603 = vmatprep.subr.mxu0 0.0
        %4604 = vmatpush2.msra.mxu0 0.0
        %4605 = vmatprep.subr.mxu0 0.0
        %4606 = vmatpush2.msra.mxu0 0.0
        %4607 = vmatprep.subr.mxu0 0.0
        %4608 = vmatpush2.msra.mxu0 0.0
        %4609 = vmatprep.subr.mxu0 0.0
        %4610 = vmatpush2.msra.mxu0 0.0
        %4611 = vmatprep.subr.mxu0 0.0
        %4612 = vmatpush2.msra.mxu0 0.0
        %4613 = vmatprep.subr.mxu0 0.0
        %4614 = vmatpush2.msra.mxu0 0.0
        %4615 = vmatprep.subr.mxu0 0.0
        %4616 = vmatpush2.msra.mxu0 0.0
        %4617 = vmatprep.subr.mxu0 0.0
        %4618 = vmatpush2.msra.mxu0 0.0
        %4619 = vmatprep.subr.mxu0 0.0
        %4620 = vmatpush2.msra.mxu0 0.0
        %4621 = vmatprep.mubr.f32.mxu0 0.0
        %4622 = vmatmul.mubr.f32.gmra.mxu0 %v4534
        %v4623 = vpop.f32.mrf.mxu0
        %v4624 = vadd.f32 0.0, %v4623
        %v4625 = vpop.f32.mrf.mxu0
        %4626 = vmatprep.mubr.f32.mxu0 0.0
        %4627 = vmatmul.mubr.f32.gmra.mxu0 %v4537
        %v4628 = vpop.f32.mrf.mxu0
        %v4629 = vadd.f32 0.0, %v4628
        %v4630 = vpop.f32.mrf.mxu0
        %4631 = vmatprep.mubr.f32.mxu0 0.0
        %4632 = vmatmul.mubr.f32.gmra.mxu0 %v4540
        %v4633 = vpop.f32.mrf.mxu0
        %v4634 = vadd.f32 0.0, %v4633
        %v4635 = vpop.f32.mrf.mxu0
        %4636 = vmatprep.mubr.f32.mxu0 0.0
        %4637 = vmatmul.mubr.f32.gmra.mxu0 %v4543
        %v4638 = vpop.f32.mrf.mxu0
        %v4639 = vadd.f32 0.0, %v4638
        %v4640 = vpop.f32.mrf.mxu0
        %4641 = vmatprep.mubr.f32.mxu0 0.0
        %4642 = vmatmul.mubr.f32.gmra.mxu0 %v4546
        %v4643 = vpop.f32.mrf.mxu0
        %v4644 = vadd.f32 0.0, %v4643
        %v4645 = vpop.f32.mrf.mxu0
        %4646 = vmatprep.mubr.f32.mxu0 0.0
        %4647 = vmatmul.mubr.f32.gmra.mxu0 %v4549
        %v4648 = vpop.f32.mrf.mxu0
        %v4649 = vadd.f32 0.0, %v4648
        %v4650 = vpop.f32.mrf.mxu0
        %4651 = vmatprep.mubr.f32.mxu0 0.0
        %4652 = vmatmul.mubr.f32.gmra.mxu0 %v4552
        %v4653 = vpop.f32.mrf.mxu0
        %v4654 = vadd.f32 0.0, %v4653
        %v4655 = vpop.f32.mrf.mxu0
        %4656 = vmatprep.mubr.f32.mxu0 0.0
        %4657 = vmatmul.mubr.f32.gmra.mxu0 %v4555
        %v4658 = vpop.f32.mrf.mxu0
        %v4659 = vadd.f32 0.0, %v4658
        %v4660 = vpop.f32.mrf.mxu0
        %4661 = vdwg.mxu0
        %v4663 = vsel %vm1306, %v4069, 0
        %v4666 = vsel %vm1306, %v4074, 0
        %v4669 = vsel %vm1306, %v4079, 0
        %v4672 = vsel %vm1306, %v4084, 0
        %v4675 = vsel %vm1306, %v4089, 0
        %v4678 = vsel %vm1306, %v4094, 0
        %v4681 = vsel %vm1306, %v4099, 0
        %v4684 = vsel %vm1306, %v4104, 0
        %4686 = vmatprep.subr.mxu0 0.0
        %4687 = vmatpush1.msra.mxu0 0.0
        %4688 = vmatprep.subr.mxu0 0.0
        %4689 = vmatpush1.msra.mxu0 0.0
        %4690 = vmatprep.subr.mxu0 0.0
        %4691 = vmatpush1.msra.mxu0 0.0
        %4692 = vmatprep.subr.mxu0 0.0
        %4693 = vmatpush1.msra.mxu0 0.0
        %4694 = vmatprep.subr.mxu0 0.0
        %4695 = vmatpush1.msra.mxu0 0.0
        %4696 = vmatprep.subr.mxu0 0.0
        %4697 = vmatpush1.msra.mxu0 0.0
        %4698 = vmatprep.subr.mxu0 0.0
        %4699 = vmatpush1.msra.mxu0 0.0
        %4700 = vmatprep.subr.mxu0 0.0
        %4701 = vmatpush1.msra.mxu0 0.0
        %4702 = vmatprep.subr.mxu0 0.0
        %4703 = vmatpush1.msra.mxu0 0.0
        %4704 = vmatprep.subr.mxu0 0.0
        %4705 = vmatpush1.msra.mxu0 0.0
        %4706 = vmatprep.subr.mxu0 0.0
        %4707 = vmatpush1.msra.mxu0 0.0
        %4708 = vmatprep.subr.mxu0 0.0
        %4709 = vmatpush1.msra.mxu0 0.0
        %4710 = vmatprep.subr.mxu0 0.0
        %4711 = vmatpush1.msra.mxu0 0.0
        %4712 = vmatprep.subr.mxu0 0.0
        %4713 = vmatpush1.msra.mxu0 0.0
        %4714 = vmatprep.subr.mxu0 0.0
        %4715 = vmatpush1.msra.mxu0 %v3418
        %4716 = vmatprep.subr.mxu0 0.0
        %4717 = vmatpush1.msra.mxu0 %v3417
        %4718 = vmatprep.subr.mxu0 0.0
        %4719 = vmatpush2.msra.mxu0 0.0
        %4720 = vmatprep.subr.mxu0 0.0
        %4721 = vmatpush2.msra.mxu0 0.0
        %4722 = vmatprep.subr.mxu0 0.0
        %4723 = vmatpush2.msra.mxu0 0.0
        %4724 = vmatprep.subr.mxu0 0.0
        %4725 = vmatpush2.msra.mxu0 0.0
        %4726 = vmatprep.subr.mxu0 0.0
        %4727 = vmatpush2.msra.mxu0 0.0
        %4728 = vmatprep.subr.mxu0 0.0
        %4729 = vmatpush2.msra.mxu0 0.0
        %4730 = vmatprep.subr.mxu0 0.0
        %4731 = vmatpush2.msra.mxu0 0.0
        %4732 = vmatprep.subr.mxu0 0.0
        %4733 = vmatpush2.msra.mxu0 0.0
        %4734 = vmatprep.subr.mxu0 0.0
        %4735 = vmatpush2.msra.mxu0 0.0
        %4736 = vmatprep.subr.mxu0 0.0
        %4737 = vmatpush2.msra.mxu0 0.0
        %4738 = vmatprep.subr.mxu0 0.0
        %4739 = vmatpush2.msra.mxu0 0.0
        %4740 = vmatprep.subr.mxu0 0.0
        %4741 = vmatpush2.msra.mxu0 0.0
        %4742 = vmatprep.subr.mxu0 0.0
        %4743 = vmatpush2.msra.mxu0 0.0
        %4744 = vmatprep.subr.mxu0 0.0
        %4745 = vmatpush2.msra.mxu0 0.0
        %4746 = vmatprep.subr.mxu0 0.0
        %4747 = vmatpush2.msra.mxu0 0.0
        %4748 = vmatprep.subr.mxu0 0.0
        %4749 = vmatpush2.msra.mxu0 0.0
        %4750 = vmatprep.mubr.f32.mxu0 0.0
        %4751 = vmatmul.mubr.f32.gmra.mxu0 %v4663
        %v4752 = vpop.f32.mrf.mxu0
        %v4753 = vadd.f32 %v4624, %v4752
        %v4754 = vpop.f32.mrf.mxu0
        %4755 = vmatprep.mubr.f32.mxu0 0.0
        %4756 = vmatmul.mubr.f32.gmra.mxu0 %v4666
        %v4757 = vpop.f32.mrf.mxu0
        %v4758 = vadd.f32 %v4629, %v4757
        %v4759 = vpop.f32.mrf.mxu0
        %4760 = vmatprep.mubr.f32.mxu0 0.0
        %4761 = vmatmul.mubr.f32.gmra.mxu0 %v4669
        %v4762 = vpop.f32.mrf.mxu0
        %v4763 = vadd.f32 %v4634, %v4762
        %v4764 = vpop.f32.mrf.mxu0
        %4765 = vmatprep.mubr.f32.mxu0 0.0
        %4766 = vmatmul.mubr.f32.gmra.mxu0 %v4672
        %v4767 = vpop.f32.mrf.mxu0
        %v4768 = vadd.f32 %v4639, %v4767
        %v4769 = vpop.f32.mrf.mxu0
        %4770 = vmatprep.mubr.f32.mxu0 0.0
        %4771 = vmatmul.mubr.f32.gmra.mxu0 %v4675
        %v4772 = vpop.f32.mrf.mxu0
        %v4773 = vadd.f32 %v4644, %v4772
        %v4774 = vpop.f32.mrf.mxu0
        %4775 = vmatprep.mubr.f32.mxu0 0.0
        %4776 = vmatmul.mubr.f32.gmra.mxu0 %v4678
        %v4777 = vpop.f32.mrf.mxu0
        %v4778 = vadd.f32 %v4649, %v4777
        %v4779 = vpop.f32.mrf.mxu0
        %4780 = vmatprep.mubr.f32.mxu0 0.0
        %4781 = vmatmul.mubr.f32.gmra.mxu0 %v4681
        %v4782 = vpop.f32.mrf.mxu0
        %v4783 = vadd.f32 %v4654, %v4782
        %v4784 = vpop.f32.mrf.mxu0
        %4785 = vmatprep.mubr.f32.mxu0 0.0
        %4786 = vmatmul.mubr.f32.gmra.mxu0 %v4684
        %v4787 = vpop.f32.mrf.mxu0
        %v4788 = vadd.f32 %v4659, %v4787
        %v4789 = vpop.f32.mrf.mxu0
        %4790 = vdwg.mxu0
        %v4792 = vlaneseq
        %v4793 = vshrl.u32 %v4792, 7
        %v4794 = vsub.s32 0, %v4793
        %v4795 = vrot.slane %v3421, %v4794
        %v4797 = vadd.f32 %v4753, %v4795
        %v4798 = vadd.f32 %v4758, %v4795
        %v4799 = vadd.f32 %v4763, %v4795
        %v4800 = vadd.f32 %v4768, %v4795
        %v4801 = vadd.f32 %v4773, %v4795
        %v4802 = vadd.f32 %v4778, %v4795
        %v4803 = vadd.f32 %v4783, %v4795
        %v4804 = vadd.f32 %v4788, %v4795
        %v4806 = vsel %vm871, %v854, 0
        %v4809 = vsel %vm871, %v855, 0
        %v4812 = vsel %vm871, %v856, 0
        %v4815 = vsel %vm871, %v857, 0
        %v4818 = vsel %vm871, %v858, 0
        %v4821 = vsel %vm871, %v859, 0
        %v4824 = vsel %vm871, %v860, 0
        %v4827 = vsel %vm871, %v861, 0
        %4829 = vmatprep.subr.mxu0 0.0
        %4830 = vmatpush1.msra.mxu0 0.0
        %4831 = vmatprep.subr.mxu0 0.0
        %4832 = vmatpush1.msra.mxu0 0.0
        %4833 = vmatprep.subr.mxu0 0.0
        %4834 = vmatpush1.msra.mxu0 0.0
        %4835 = vmatprep.subr.mxu0 0.0
        %4836 = vmatpush1.msra.mxu0 0.0
        %4837 = vmatprep.subr.mxu0 0.0
        %4838 = vmatpush1.msra.mxu0 0.0
        %4839 = vmatprep.subr.mxu0 0.0
        %4840 = vmatpush1.msra.mxu0 0.0
        %4841 = vmatprep.subr.mxu0 0.0
        %4842 = vmatpush1.msra.mxu0 0.0
        %4843 = vmatprep.subr.mxu0 0.0
        %4844 = vmatpush1.msra.mxu0 0.0
        %4845 = vmatprep.subr.mxu0 0.0
        %4846 = vmatpush1.msra.mxu0 %v4804
        %4847 = vmatprep.subr.mxu0 0.0
        %4848 = vmatpush1.msra.mxu0 %v4803
        %4849 = vmatprep.subr.mxu0 0.0
        %4850 = vmatpush1.msra.mxu0 %v4802
        %4851 = vmatprep.subr.mxu0 0.0
        %4852 = vmatpush1.msra.mxu0 %v4801
        %4853 = vmatprep.subr.mxu0 0.0
        %4854 = vmatpush1.msra.mxu0 %v4800
        %4855 = vmatprep.subr.mxu0 0.0
        %4856 = vmatpush1.msra.mxu0 %v4799
        %4857 = vmatprep.subr.mxu0 0.0
        %4858 = vmatpush1.msra.mxu0 %v4798
        %4859 = vmatprep.subr.mxu0 0.0
        %4860 = vmatpush1.msra.mxu0 %v4797
        %4861 = vmatprep.subr.mxu0 0.0
        %4862 = vmatpush2.msra.mxu0 0.0
        %4863 = vmatprep.subr.mxu0 0.0
        %4864 = vmatpush2.msra.mxu0 0.0
        %4865 = vmatprep.subr.mxu0 0.0
        %4866 = vmatpush2.msra.mxu0 0.0
        %4867 = vmatprep.subr.mxu0 0.0
        %4868 = vmatpush2.msra.mxu0 0.0
        %4869 = vmatprep.subr.mxu0 0.0
        %4870 = vmatpush2.msra.mxu0 0.0
        %4871 = vmatprep.subr.mxu0 0.0
        %4872 = vmatpush2.msra.mxu0 0.0
        %4873 = vmatprep.subr.mxu0 0.0
        %4874 = vmatpush2.msra.mxu0 0.0
        %4875 = vmatprep.subr.mxu0 0.0
        %4876 = vmatpush2.msra.mxu0 0.0
        %4877 = vmatprep.subr.mxu0 0.0
        %4878 = vmatpush2.msra.mxu0 0.0
        %4879 = vmatprep.subr.mxu0 0.0
        %4880 = vmatpush2.msra.mxu0 0.0
        %4881 = vmatprep.subr.mxu0 0.0
        %4882 = vmatpush2.msra.mxu0 0.0
        %4883 = vmatprep.subr.mxu0 0.0
        %4884 = vmatpush2.msra.mxu0 0.0
        %4885 = vmatprep.subr.mxu0 0.0
        %4886 = vmatpush2.msra.mxu0 0.0
        %4887 = vmatprep.subr.mxu0 0.0
        %4888 = vmatpush2.msra.mxu0 0.0
        %4889 = vmatprep.subr.mxu0 0.0
        %4890 = vmatpush2.msra.mxu0 0.0
        %4891 = vmatprep.subr.mxu0 0.0
        %4892 = vmatpush2.msra.mxu0 0.0
        %4893 = vmatprep.mubr.f32.mxu0 0.0
        %4894 = vmatmul.mubr.f32.gmra.mxu0 %v4806
        %v4895 = vpop.f32.mrf.mxu0
        %v4896 = vadd.f32 0.0, %v4895
        %v4897 = vpop.f32.mrf.mxu0
        %4898 = vmatprep.mubr.f32.mxu0 0.0
        %4899 = vmatmul.mubr.f32.gmra.mxu0 %v4809
        %v4900 = vpop.f32.mrf.mxu0
        %v4901 = vadd.f32 0.0, %v4900
        %v4902 = vpop.f32.mrf.mxu0
        %4903 = vmatprep.mubr.f32.mxu0 0.0
        %4904 = vmatmul.mubr.f32.gmra.mxu0 %v4812
        %v4905 = vpop.f32.mrf.mxu0
        %v4906 = vadd.f32 0.0, %v4905
        %v4907 = vpop.f32.mrf.mxu0
        %4908 = vmatprep.mubr.f32.mxu0 0.0
        %4909 = vmatmul.mubr.f32.gmra.mxu0 %v4815
        %v4910 = vpop.f32.mrf.mxu0
        %v4911 = vadd.f32 0.0, %v4910
        %v4912 = vpop.f32.mrf.mxu0
        %4913 = vmatprep.mubr.f32.mxu0 0.0
        %4914 = vmatmul.mubr.f32.gmra.mxu0 %v4818
        %v4915 = vpop.f32.mrf.mxu0
        %v4916 = vadd.f32 0.0, %v4915
        %v4917 = vpop.f32.mrf.mxu0
        %4918 = vmatprep.mubr.f32.mxu0 0.0
        %4919 = vmatmul.mubr.f32.gmra.mxu0 %v4821
        %v4920 = vpop.f32.mrf.mxu0
        %v4921 = vadd.f32 0.0, %v4920
        %v4922 = vpop.f32.mrf.mxu0
        %4923 = vmatprep.mubr.f32.mxu0 0.0
        %4924 = vmatmul.mubr.f32.gmra.mxu0 %v4824
        %v4925 = vpop.f32.mrf.mxu0
        %v4926 = vadd.f32 0.0, %v4925
        %v4927 = vpop.f32.mrf.mxu0
        %4928 = vmatprep.mubr.f32.mxu0 0.0
        %4929 = vmatmul.mubr.f32.gmra.mxu0 %v4827
        %v4930 = vpop.f32.mrf.mxu0
        %v4931 = vadd.f32 0.0, %v4930
        %v4932 = vpop.f32.mrf.mxu0
        %4933 = vdwg.mxu0
        %v4934 = vadd.f32 %v3273, %v4896
        %v4935 = vadd.f32 %v3274, %v4901
        %v4936 = vadd.f32 %v3275, %v4906
        %v4937 = vadd.f32 %v3276, %v4911
        %v4938 = vadd.f32 %v3277, %v4916
        %v4939 = vadd.f32 %v3278, %v4921
        %v4940 = vadd.f32 %v3279, %v4926
        %v4941 = vadd.f32 %v3280, %v4931
        %v4942 = vld [vmem:[%s20] sm:$0x1]
        %v4943 = vld [vmem:[#allocation7] sm:$0x1]
        %v4944 = vld [vmem:[%s22] sm:$0xff]
        %v4945 = vld [vmem:[%s22 + $0x8] sm:$0xff]
        %v4946 = vld [vmem:[%s22 + $0x10] sm:$0xff]
        %v4947 = vld [vmem:[%s22 + $0x18] sm:$0xff]
        %v4948 = vld [vmem:[%s23] sm:$0x1]
        %v4949 = vld [vmem:[%s24] sm:$0xff]
        %v4950 = vld [vmem:[%s24 + $0x8] sm:$0xff]
        %v4951 = vld [vmem:[%s24 + $0x10] sm:$0xff]
        %v4952 = vld [vmem:[%s24 + $0x18] sm:$0xff]
        %v4953 = vld [vmem:[%s24 + $0x20] sm:$0xff]
        %v4954 = vld [vmem:[%s24 + $0x28] sm:$0xff]
        %v4955 = vld [vmem:[%s24 + $0x30] sm:$0xff]
        %v4956 = vld [vmem:[%s24 + $0x38] sm:$0xff]
        %v4957 = vld [vmem:[%s24 + $0x40] sm:$0xff]
        %v4958 = vld [vmem:[%s24 + $0x48] sm:$0xff]
        %v4959 = vld [vmem:[%s24 + $0x50] sm:$0xff]
        %v4960 = vld [vmem:[%s24 + $0x58] sm:$0xff]
        %v4961 = vld [vmem:[%s24 + $0x60] sm:$0xff]
        %v4962 = vld [vmem:[%s24 + $0x68] sm:$0xff]
        %v4963 = vld [vmem:[%s24 + $0x70] sm:$0xff]
        %v4964 = vld [vmem:[%s24 + $0x78] sm:$0xff]
        %v4965 = vld [vmem:[%s25] sm:$0x1]
        %v4966 = vsel %vm1013, %v4934, 0.0
        %4967 = vadd.xlane.f32.xlu0 %v4966
        %v4968 = vpop.xlane.xlu0 %4967
        %v4969 = vsel %vm1013, %v4935, 0.0
        %4970 = vadd.xlane.f32.xlu0 %v4969
        %v4971 = vpop.xlane.xlu0 %4970
        %v4972 = vsel %vm1013, %v4936, 0.0
        %4973 = vadd.xlane.f32.xlu0 %v4972
        %v4974 = vpop.xlane.xlu0 %4973
        %v4975 = vsel %vm1013, %v4937, 0.0
        %4976 = vadd.xlane.f32.xlu0 %v4975
        %v4977 = vpop.xlane.xlu0 %4976
        %v4978 = vsel %vm1013, %v4938, 0.0
        %4979 = vadd.xlane.f32.xlu0 %v4978
        %v4980 = vpop.xlane.xlu0 %4979
        %v4981 = vsel %vm1013, %v4939, 0.0
        %4982 = vadd.xlane.f32.xlu0 %v4981
        %v4983 = vpop.xlane.xlu0 %4982
        %v4984 = vsel %vm1013, %v4940, 0.0
        %4985 = vadd.xlane.f32.xlu0 %v4984
        %v4986 = vpop.xlane.xlu0 %4985
        %v4987 = vsel %vm1013, %v4941, 0.0
        %4988 = vadd.xlane.f32.xlu0 %v4987
        %v4989 = vpop.xlane.xlu0 %4988
        %v4990 = vmul.f32 %v4968, %v1038
        %v4991 = vmul.f32 %v4971, %v1038
        %v4992 = vmul.f32 %v4974, %v1038
        %v4993 = vmul.f32 %v4977, %v1038
        %v4994 = vmul.f32 %v4980, %v1038
        %v4995 = vmul.f32 %v4983, %v1038
        %v4996 = vmul.f32 %v4986, %v1038
        %v4997 = vmul.f32 %v4989, %v1038
        %v4998 = vsub.f32 %v4934, %v4990
        %v4999 = vsub.f32 %v4935, %v4991
        %v5000 = vsub.f32 %v4936, %v4992
        %v5001 = vsub.f32 %v4937, %v4993
        %v5002 = vsub.f32 %v4938, %v4994
        %v5003 = vsub.f32 %v4939, %v4995
        %v5004 = vsub.f32 %v4940, %v4996
        %v5005 = vsub.f32 %v4941, %v4997
        %v5006 = vmul.f32 %v4998, %v4998
        %v5007 = vmul.f32 %v4999, %v4999
        %v5008 = vmul.f32 %v5000, %v5000
        %v5009 = vmul.f32 %v5001, %v5001
        %v5010 = vmul.f32 %v5002, %v5002
        %v5011 = vmul.f32 %v5003, %v5003
        %v5012 = vmul.f32 %v5004, %v5004
        %v5013 = vmul.f32 %v5005, %v5005
        %v5014 = vsel %vm1013, %v5006, 0.0
        %5015 = vadd.xlane.f32.xlu0 %v5014
        %v5016 = vpop.xlane.xlu0 %5015
        %v5017 = vsel %vm1013, %v5007, 0.0
        %5018 = vadd.xlane.f32.xlu0 %v5017
        %v5019 = vpop.xlane.xlu0 %5018
        %v5020 = vsel %vm1013, %v5008, 0.0
        %5021 = vadd.xlane.f32.xlu0 %v5020
        %v5022 = vpop.xlane.xlu0 %5021
        %v5023 = vsel %vm1013, %v5009, 0.0
        %5024 = vadd.xlane.f32.xlu0 %v5023
        %v5025 = vpop.xlane.xlu0 %5024
        %v5026 = vsel %vm1013, %v5010, 0.0
        %5027 = vadd.xlane.f32.xlu0 %v5026
        %v5028 = vpop.xlane.xlu0 %5027
        %v5029 = vsel %vm1013, %v5011, 0.0
        %5030 = vadd.xlane.f32.xlu0 %v5029
        %v5031 = vpop.xlane.xlu0 %5030
        %v5032 = vsel %vm1013, %v5012, 0.0
        %5033 = vadd.xlane.f32.xlu0 %v5032
        %v5034 = vpop.xlane.xlu0 %5033
        %v5035 = vsel %vm1013, %v5013, 0.0
        %5036 = vadd.xlane.f32.xlu0 %v5035
        %v5037 = vpop.xlane.xlu0 %5036
        %v5038 = vmul.f32 %v5016, %v1038
        %v5039 = vmul.f32 %v5019, %v1038
        %v5040 = vmul.f32 %v5022, %v1038
        %v5041 = vmul.f32 %v5025, %v1038
        %v5042 = vmul.f32 %v5028, %v1038
        %v5043 = vmul.f32 %v5031, %v1038
        %v5044 = vmul.f32 %v5034, %v1038
        %v5045 = vmul.f32 %v5037, %v1038
        %v5046 = vadd.f32 %v5038, 1e-05
        %v5047 = vadd.f32 %v5039, 1e-05
        %v5048 = vadd.f32 %v5040, 1e-05
        %v5049 = vadd.f32 %v5041, 1e-05
        %v5050 = vadd.f32 %v5042, 1e-05
        %v5051 = vadd.f32 %v5043, 1e-05
        %v5052 = vadd.f32 %v5044, 1e-05
        %v5053 = vadd.f32 %v5045, 1e-05
        %v5054 = vrsqrt.pop %v5046
        %v5055 = vrsqrt.pop %v5047
        %v5056 = vrsqrt.pop %v5048
        %v5057 = vrsqrt.pop %v5049
        %v5058 = vrsqrt.pop %v5050
        %v5059 = vrsqrt.pop %v5051
        %v5060 = vrsqrt.pop %v5052
        %v5061 = vrsqrt.pop %v5053
        %v5062 = vmul.f32 %v4998, %v5054
        %v5063 = vmul.f32 %v4999, %v5055
        %v5064 = vmul.f32 %v5000, %v5056
        %v5065 = vmul.f32 %v5001, %v5057
        %v5066 = vmul.f32 %v5002, %v5058
        %v5067 = vmul.f32 %v5003, %v5059
        %v5068 = vmul.f32 %v5004, %v5060
        %v5069 = vmul.f32 %v5005, %v5061
        %v5071 = vlaneseq
        %v5072 = vshrl.u32 %v5071, 7
        %v5073 = vsub.s32 0, %v5072
        %v5074 = vrot.slane %v4942, %v5073
        %v5076 = vmul.f32 %v5062, %v5074
        %v5077 = vmul.f32 %v5063, %v5074
        %v5078 = vmul.f32 %v5064, %v5074
        %v5079 = vmul.f32 %v5065, %v5074
        %v5080 = vmul.f32 %v5066, %v5074
        %v5081 = vmul.f32 %v5067, %v5074
        %v5082 = vmul.f32 %v5068, %v5074
        %v5083 = vmul.f32 %v5069, %v5074
        %v5085 = vlaneseq
        %v5086 = vshrl.u32 %v5085, 7
        %v5087 = vsub.s32 0, %v5086
        %v5088 = vrot.slane %v4943, %v5087
        %v5090 = vadd.f32 %v5076, %v5088
        %v5091 = vadd.f32 %v5077, %v5088
        %v5092 = vadd.f32 %v5078, %v5088
        %v5093 = vadd.f32 %v5079, %v5088
        %v5094 = vadd.f32 %v5080, %v5088
        %v5095 = vadd.f32 %v5081, %v5088
        %v5096 = vadd.f32 %v5082, %v5088
        %v5097 = vadd.f32 %v5083, %v5088
        %v5099 = vlaneseq
        %v5100 = vshrl.u32 %v5099, 7
        %v5101 = vsub.s32 0, %v5100
        %v5102 = vrot.slane %v4948, %v5101
        %v5105 = vsel %vm1013, %v5090, 0
        %v5108 = vsel %vm1013, %v5091, 0
        %v5111 = vsel %vm1013, %v5092, 0
        %v5114 = vsel %vm1013, %v5093, 0
        %v5117 = vsel %vm1013, %v5094, 0
        %v5120 = vsel %vm1013, %v5095, 0
        %v5123 = vsel %vm1013, %v5096, 0
        %v5126 = vsel %vm1013, %v5097, 0
        %5128 = vmatprep.subr.mxu0 0.0
        %5129 = vmatpush1.msra.mxu0 0.0
        %5130 = vmatprep.subr.mxu0 0.0
        %5131 = vmatpush1.msra.mxu0 0.0
        %5132 = vmatprep.subr.mxu0 0.0
        %5133 = vmatpush1.msra.mxu0 0.0
        %5134 = vmatprep.subr.mxu0 0.0
        %5135 = vmatpush1.msra.mxu0 0.0
        %5136 = vmatprep.subr.mxu0 0.0
        %5137 = vmatpush1.msra.mxu0 0.0
        %5138 = vmatprep.subr.mxu0 0.0
        %5139 = vmatpush1.msra.mxu0 0.0
        %5140 = vmatprep.subr.mxu0 0.0
        %5141 = vmatpush1.msra.mxu0 0.0
        %5142 = vmatprep.subr.mxu0 0.0
        %5143 = vmatpush1.msra.mxu0 0.0
        %5144 = vmatprep.subr.mxu0 0.0
        %5145 = vmatpush1.msra.mxu0 0.0
        %5146 = vmatprep.subr.mxu0 0.0
        %5147 = vmatpush1.msra.mxu0 0.0
        %5148 = vmatprep.subr.mxu0 0.0
        %5149 = vmatpush1.msra.mxu0 0.0
        %5150 = vmatprep.subr.mxu0 0.0
        %5151 = vmatpush1.msra.mxu0 0.0
        %5152 = vmatprep.subr.mxu0 0.0
        %5153 = vmatpush1.msra.mxu0 %v4947
        %5154 = vmatprep.subr.mxu0 0.0
        %5155 = vmatpush1.msra.mxu0 %v4946
        %5156 = vmatprep.subr.mxu0 0.0
        %5157 = vmatpush1.msra.mxu0 %v4945
        %5158 = vmatprep.subr.mxu0 0.0
        %5159 = vmatpush1.msra.mxu0 %v4944
        %5160 = vmatprep.subr.mxu0 0.0
        %5161 = vmatpush2.msra.mxu0 0.0
        %5162 = vmatprep.subr.mxu0 0.0
        %5163 = vmatpush2.msra.mxu0 0.0
        %5164 = vmatprep.subr.mxu0 0.0
        %5165 = vmatpush2.msra.mxu0 0.0
        %5166 = vmatprep.subr.mxu0 0.0
        %5167 = vmatpush2.msra.mxu0 0.0
        %5168 = vmatprep.subr.mxu0 0.0
        %5169 = vmatpush2.msra.mxu0 0.0
        %5170 = vmatprep.subr.mxu0 0.0
        %5171 = vmatpush2.msra.mxu0 0.0
        %5172 = vmatprep.subr.mxu0 0.0
        %5173 = vmatpush2.msra.mxu0 0.0
        %5174 = vmatprep.subr.mxu0 0.0
        %5175 = vmatpush2.msra.mxu0 0.0
        %5176 = vmatprep.subr.mxu0 0.0
        %5177 = vmatpush2.msra.mxu0 0.0
        %5178 = vmatprep.subr.mxu0 0.0
        %5179 = vmatpush2.msra.mxu0 0.0
        %5180 = vmatprep.subr.mxu0 0.0
        %5181 = vmatpush2.msra.mxu0 0.0
        %5182 = vmatprep.subr.mxu0 0.0
        %5183 = vmatpush2.msra.mxu0 0.0
        %5184 = vmatprep.subr.mxu0 0.0
        %5185 = vmatpush2.msra.mxu0 0.0
        %5186 = vmatprep.subr.mxu0 0.0
        %5187 = vmatpush2.msra.mxu0 0.0
        %5188 = vmatprep.subr.mxu0 0.0
        %5189 = vmatpush2.msra.mxu0 0.0
        %5190 = vmatprep.subr.mxu0 0.0
        %5191 = vmatpush2.msra.mxu0 0.0
        %5192 = vmatprep.mubr.f32.mxu0 0.0
        %5193 = vmatmul.mubr.f32.gmra.mxu0 %v5105
        %v5194 = vpop.f32.mrf.mxu0
        %v5195 = vadd.f32 %v5102, %v5194
        %v5196 = vpop.f32.mrf.mxu0
        %5197 = vmatprep.mubr.f32.mxu0 0.0
        %5198 = vmatmul.mubr.f32.gmra.mxu0 %v5108
        %v5199 = vpop.f32.mrf.mxu0
        %v5200 = vadd.f32 %v5102, %v5199
        %v5201 = vpop.f32.mrf.mxu0
        %5202 = vmatprep.mubr.f32.mxu0 0.0
        %5203 = vmatmul.mubr.f32.gmra.mxu0 %v5111
        %v5204 = vpop.f32.mrf.mxu0
        %v5205 = vadd.f32 %v5102, %v5204
        %v5206 = vpop.f32.mrf.mxu0
        %5207 = vmatprep.mubr.f32.mxu0 0.0
        %5208 = vmatmul.mubr.f32.gmra.mxu0 %v5114
        %v5209 = vpop.f32.mrf.mxu0
        %v5210 = vadd.f32 %v5102, %v5209
        %v5211 = vpop.f32.mrf.mxu0
        %5212 = vmatprep.mubr.f32.mxu0 0.0
        %5213 = vmatmul.mubr.f32.gmra.mxu0 %v5117
        %v5214 = vpop.f32.mrf.mxu0
        %v5215 = vadd.f32 %v5102, %v5214
        %v5216 = vpop.f32.mrf.mxu0
        %5217 = vmatprep.mubr.f32.mxu0 0.0
        %5218 = vmatmul.mubr.f32.gmra.mxu0 %v5120
        %v5219 = vpop.f32.mrf.mxu0
        %v5220 = vadd.f32 %v5102, %v5219
        %v5221 = vpop.f32.mrf.mxu0
        %5222 = vmatprep.mubr.f32.mxu0 0.0
        %5223 = vmatmul.mubr.f32.gmra.mxu0 %v5123
        %v5224 = vpop.f32.mrf.mxu0
        %v5225 = vadd.f32 %v5102, %v5224
        %v5226 = vpop.f32.mrf.mxu0
        %5227 = vmatprep.mubr.f32.mxu0 0.0
        %5228 = vmatmul.mubr.f32.gmra.mxu0 %v5126
        %v5229 = vpop.f32.mrf.mxu0
        %v5230 = vadd.f32 %v5102, %v5229
        %v5231 = vpop.f32.mrf.mxu0
        %5232 = vdwg.mxu0
        %v5233 = vmul.f32 %v5195, 0.5
        %v5234 = vmul.f32 %v5200, 0.5
        %v5235 = vmul.f32 %v5205, 0.5
        %v5236 = vmul.f32 %v5210, 0.5
        %v5237 = vmul.f32 %v5215, 0.5
        %v5238 = vmul.f32 %v5220, 0.5
        %v5239 = vmul.f32 %v5225, 0.5
        %v5240 = vmul.f32 %v5230, 0.5
        %v5241 = vmul.f32 %v5195, 0.70710677
        %v5242 = vmul.f32 %v5200, 0.70710677
        %v5243 = vmul.f32 %v5205, 0.70710677
        %v5244 = vmul.f32 %v5210, 0.70710677
        %v5245 = vmul.f32 %v5215, 0.70710677
        %v5246 = vmul.f32 %v5220, 0.70710677
        %v5247 = vmul.f32 %v5225, 0.70710677
        %v5248 = vmul.f32 %v5230, 0.70710677
        %vm5249 = vcmp.ge.f32.partialorder %v5241, 0.0
        %vm5250 = vcmp.ge.f32.partialorder %v5242, 0.0
        %vm5251 = vcmp.ge.f32.partialorder %v5243, 0.0
        %vm5252 = vcmp.ge.f32.partialorder %v5244, 0.0
        %vm5253 = vcmp.ge.f32.partialorder %v5245, 0.0
        %vm5254 = vcmp.ge.f32.partialorder %v5246, 0.0
        %vm5255 = vcmp.ge.f32.partialorder %v5247, 0.0
        %vm5256 = vcmp.ge.f32.partialorder %v5248, 0.0
        %v5257 = vsel %vm5249, 1.0, -1.0
        %v5258 = vsel %vm5250, 1.0, -1.0
        %v5259 = vsel %vm5251, 1.0, -1.0
        %v5260 = vsel %vm5252, 1.0, -1.0
        %v5261 = vsel %vm5253, 1.0, -1.0
        %v5262 = vsel %vm5254, 1.0, -1.0
        %v5263 = vsel %vm5255, 1.0, -1.0
        %v5264 = vsel %vm5256, 1.0, -1.0
        %v5265 = vand.u32 2147483647, %v5241
        %v5266 = vand.u32 2147483647, %v5242
        %v5267 = vand.u32 2147483647, %v5243
        %v5268 = vand.u32 2147483647, %v5244
        %v5269 = vand.u32 2147483647, %v5245
        %v5270 = vand.u32 2147483647, %v5246
        %v5271 = vand.u32 2147483647, %v5247
        %v5272 = vand.u32 2147483647, %v5248
        %v5273 = vmul.f32 %v5265, 0.3275911
        %v5274 = vmul.f32 %v5266, 0.3275911
        %v5275 = vmul.f32 %v5267, 0.3275911
        %v5276 = vmul.f32 %v5268, 0.3275911
        %v5277 = vmul.f32 %v5269, 0.3275911
        %v5278 = vmul.f32 %v5270, 0.3275911
        %v5279 = vmul.f32 %v5271, 0.3275911
        %v5280 = vmul.f32 %v5272, 0.3275911
        %v5281 = vadd.f32 %v5273, 1.0
        %v5282 = vadd.f32 %v5274, 1.0
        %v5283 = vadd.f32 %v5275, 1.0
        %v5284 = vadd.f32 %v5276, 1.0
        %v5285 = vadd.f32 %v5277, 1.0
        %v5286 = vadd.f32 %v5278, 1.0
        %v5287 = vadd.f32 %v5279, 1.0
        %v5288 = vadd.f32 %v5280, 1.0
        %v5289 = vrcp.pop %v5281
        %v5290 = vmul.f32 1.0, %v5289
        %v5291 = vrcp.pop %v5282
        %v5292 = vmul.f32 1.0, %v5291
        %v5293 = vrcp.pop %v5283
        %v5294 = vmul.f32 1.0, %v5293
        %v5295 = vrcp.pop %v5284
        %v5296 = vmul.f32 1.0, %v5295
        %v5297 = vrcp.pop %v5285
        %v5298 = vmul.f32 1.0, %v5297
        %v5299 = vrcp.pop %v5286
        %v5300 = vmul.f32 1.0, %v5299
        %v5301 = vrcp.pop %v5287
        %v5302 = vmul.f32 1.0, %v5301
        %v5303 = vrcp.pop %v5288
        %v5304 = vmul.f32 1.0, %v5303
        %v5305 = vmul.f32 %v5290, 1.0614054
        %v5306 = vmul.f32 %v5292, 1.0614054
        %v5307 = vmul.f32 %v5294, 1.0614054
        %v5308 = vmul.f32 %v5296, 1.0614054
        %v5309 = vmul.f32 %v5298, 1.0614054
        %v5310 = vmul.f32 %v5300, 1.0614054
        %v5311 = vmul.f32 %v5302, 1.0614054
        %v5312 = vmul.f32 %v5304, 1.0614054
        %v5313 = vadd.f32 %v5305, -1.4531521
        %v5314 = vadd.f32 %v5306, -1.4531521
        %v5315 = vadd.f32 %v5307, -1.4531521
        %v5316 = vadd.f32 %v5308, -1.4531521
        %v5317 = vadd.f32 %v5309, -1.4531521
        %v5318 = vadd.f32 %v5310, -1.4531521
        %v5319 = vadd.f32 %v5311, -1.4531521
        %v5320 = vadd.f32 %v5312, -1.4531521
        %v5321 = vmul.f32 %v5313, %v5290
        %v5322 = vmul.f32 %v5314, %v5292
        %v5323 = vmul.f32 %v5315, %v5294
        %v5324 = vmul.f32 %v5316, %v5296
        %v5325 = vmul.f32 %v5317, %v5298
        %v5326 = vmul.f32 %v5318, %v5300
        %v5327 = vmul.f32 %v5319, %v5302
        %v5328 = vmul.f32 %v5320, %v5304
        %v5329 = vadd.f32 %v5321, 1.4214138
        %v5330 = vadd.f32 %v5322, 1.4214138
        %v5331 = vadd.f32 %v5323, 1.4214138
        %v5332 = vadd.f32 %v5324, 1.4214138
        %v5333 = vadd.f32 %v5325, 1.4214138
        %v5334 = vadd.f32 %v5326, 1.4214138
        %v5335 = vadd.f32 %v5327, 1.4214138
        %v5336 = vadd.f32 %v5328, 1.4214138
        %v5337 = vmul.f32 %v5329, %v5290
        %v5338 = vmul.f32 %v5330, %v5292
        %v5339 = vmul.f32 %v5331, %v5294
        %v5340 = vmul.f32 %v5332, %v5296
        %v5341 = vmul.f32 %v5333, %v5298
        %v5342 = vmul.f32 %v5334, %v5300
        %v5343 = vmul.f32 %v5335, %v5302
        %v5344 = vmul.f32 %v5336, %v5304
        %v5345 = vadd.f32 %v5337, -0.28449672
        %v5346 = vadd.f32 %v5338, -0.28449672
        %v5347 = vadd.f32 %v5339, -0.28449672
        %v5348 = vadd.f32 %v5340, -0.28449672
        %v5349 = vadd.f32 %v5341, -0.28449672
        %v5350 = vadd.f32 %v5342, -0.28449672
        %v5351 = vadd.f32 %v5343, -0.28449672
        %v5352 = vadd.f32 %v5344, -0.28449672
        %v5353 = vmul.f32 %v5345, %v5290
        %v5354 = vmul.f32 %v5346, %v5292
        %v5355 = vmul.f32 %v5347, %v5294
        %v5356 = vmul.f32 %v5348, %v5296
        %v5357 = vmul.f32 %v5349, %v5298
        %v5358 = vmul.f32 %v5350, %v5300
        %v5359 = vmul.f32 %v5351, %v5302
        %v5360 = vmul.f32 %v5352, %v5304
        %v5361 = vadd.f32 %v5353, 0.2548296
        %v5362 = vadd.f32 %v5354, 0.2548296
        %v5363 = vadd.f32 %v5355, 0.2548296
        %v5364 = vadd.f32 %v5356, 0.2548296
        %v5365 = vadd.f32 %v5357, 0.2548296
        %v5366 = vadd.f32 %v5358, 0.2548296
        %v5367 = vadd.f32 %v5359, 0.2548296
        %v5368 = vadd.f32 %v5360, 0.2548296
        %v5369 = vmul.f32 %v5361, %v5290
        %v5370 = vmul.f32 %v5362, %v5292
        %v5371 = vmul.f32 %v5363, %v5294
        %v5372 = vmul.f32 %v5364, %v5296
        %v5373 = vmul.f32 %v5365, %v5298
        %v5374 = vmul.f32 %v5366, %v5300
        %v5375 = vmul.f32 %v5367, %v5302
        %v5376 = vmul.f32 %v5368, %v5304
        %v5377 = vsub.f32 0.0, %v5265
        %v5378 = vsub.f32 0.0, %v5266
        %v5379 = vsub.f32 0.0, %v5267
        %v5380 = vsub.f32 0.0, %v5268
        %v5381 = vsub.f32 0.0, %v5269
        %v5382 = vsub.f32 0.0, %v5270
        %v5383 = vsub.f32 0.0, %v5271
        %v5384 = vsub.f32 0.0, %v5272
        %v5385 = vmul.f32 %v5377, %v5265
        %v5386 = vmul.f32 %v5378, %v5266
        %v5387 = vmul.f32 %v5379, %v5267
        %v5388 = vmul.f32 %v5380, %v5268
        %v5389 = vmul.f32 %v5381, %v5269
        %v5390 = vmul.f32 %v5382, %v5270
        %v5391 = vmul.f32 %v5383, %v5271
        %v5392 = vmul.f32 %v5384, %v5272
        %v5393 = vmul.f32 %v5385, 1.442695
        %v5394 = vpow.pop %v5393
        %v5395 = vmul.f32 %v5386, 1.442695
        %v5396 = vpow.pop %v5395
        %v5397 = vmul.f32 %v5387, 1.442695
        %v5398 = vpow.pop %v5397
        %v5399 = vmul.f32 %v5388, 1.442695
        %v5400 = vpow.pop %v5399
        %v5401 = vmul.f32 %v5389, 1.442695
        %v5402 = vpow.pop %v5401
        %v5403 = vmul.f32 %v5390, 1.442695
        %v5404 = vpow.pop %v5403
        %v5405 = vmul.f32 %v5391, 1.442695
        %v5406 = vpow.pop %v5405
        %v5407 = vmul.f32 %v5392, 1.442695
        %v5408 = vpow.pop %v5407
        %v5409 = vmul.f32 %v5369, %v5394
        %v5410 = vmul.f32 %v5370, %v5396
        %v5411 = vmul.f32 %v5371, %v5398
        %v5412 = vmul.f32 %v5372, %v5400
        %v5413 = vmul.f32 %v5373, %v5402
        %v5414 = vmul.f32 %v5374, %v5404
        %v5415 = vmul.f32 %v5375, %v5406
        %v5416 = vmul.f32 %v5376, %v5408
        %v5417 = vsub.f32 1.0, %v5409
        %v5418 = vsub.f32 1.0, %v5410
        %v5419 = vsub.f32 1.0, %v5411
        %v5420 = vsub.f32 1.0, %v5412
        %v5421 = vsub.f32 1.0, %v5413
        %v5422 = vsub.f32 1.0, %v5414
        %v5423 = vsub.f32 1.0, %v5415
        %v5424 = vsub.f32 1.0, %v5416
        %v5425 = vmul.f32 %v5257, %v5417
        %v5426 = vmul.f32 %v5258, %v5418
        %v5427 = vmul.f32 %v5259, %v5419
        %v5428 = vmul.f32 %v5260, %v5420
        %v5429 = vmul.f32 %v5261, %v5421
        %v5430 = vmul.f32 %v5262, %v5422
        %v5431 = vmul.f32 %v5263, %v5423
        %v5432 = vmul.f32 %v5264, %v5424
        %v5433 = vadd.f32 %v5425, 1.0
        %v5434 = vadd.f32 %v5426, 1.0
        %v5435 = vadd.f32 %v5427, 1.0
        %v5436 = vadd.f32 %v5428, 1.0
        %v5437 = vadd.f32 %v5429, 1.0
        %v5438 = vadd.f32 %v5430, 1.0
        %v5439 = vadd.f32 %v5431, 1.0
        %v5440 = vadd.f32 %v5432, 1.0
        %v5441 = vmul.f32 %v5233, %v5433
        %v5442 = vmul.f32 %v5234, %v5434
        %v5443 = vmul.f32 %v5235, %v5435
        %v5444 = vmul.f32 %v5236, %v5436
        %v5445 = vmul.f32 %v5237, %v5437
        %v5446 = vmul.f32 %v5238, %v5438
        %v5447 = vmul.f32 %v5239, %v5439
        %v5448 = vmul.f32 %v5240, %v5440
        %v5450 = vlaneseq
        %v5451 = vshrl.u32 %v5450, 7
        %v5452 = vsub.s32 0, %v5451
        %v5453 = vrot.slane %v4965, %v5452
        %5455 = vmatprep.subr.mxu0 0.0
        %5456 = vmatpush1.msra.mxu0 %v4964
        %5457 = vmatprep.subr.mxu0 0.0
        %5458 = vmatpush1.msra.mxu0 %v4963
        %5459 = vmatprep.subr.mxu0 0.0
        %5460 = vmatpush1.msra.mxu0 %v4962
        %5461 = vmatprep.subr.mxu0 0.0
        %5462 = vmatpush1.msra.mxu0 %v4961
        %5463 = vmatprep.subr.mxu0 0.0
        %5464 = vmatpush1.msra.mxu0 %v4960
        %5465 = vmatprep.subr.mxu0 0.0
        %5466 = vmatpush1.msra.mxu0 %v4959
        %5467 = vmatprep.subr.mxu0 0.0
        %5468 = vmatpush1.msra.mxu0 %v4958
        %5469 = vmatprep.subr.mxu0 0.0
        %5470 = vmatpush1.msra.mxu0 %v4957
        %5471 = vmatprep.subr.mxu0 0.0
        %5472 = vmatpush1.msra.mxu0 %v4956
        %5473 = vmatprep.subr.mxu0 0.0
        %5474 = vmatpush1.msra.mxu0 %v4955
        %5475 = vmatprep.subr.mxu0 0.0
        %5476 = vmatpush1.msra.mxu0 %v4954
        %5477 = vmatprep.subr.mxu0 0.0
        %5478 = vmatpush1.msra.mxu0 %v4953
        %5479 = vmatprep.subr.mxu0 0.0
        %5480 = vmatpush1.msra.mxu0 %v4952
        %5481 = vmatprep.subr.mxu0 0.0
        %5482 = vmatpush1.msra.mxu0 %v4951
        %5483 = vmatprep.subr.mxu0 0.0
        %5484 = vmatpush1.msra.mxu0 %v4950
        %5485 = vmatprep.subr.mxu0 0.0
        %5486 = vmatpush1.msra.mxu0 %v4949
        %5487 = vmatprep.subr.mxu0 0.0
        %5488 = vmatpush2.msra.mxu0 0.0
        %5489 = vmatprep.subr.mxu0 0.0
        %5490 = vmatpush2.msra.mxu0 0.0
        %5491 = vmatprep.subr.mxu0 0.0
        %5492 = vmatpush2.msra.mxu0 0.0
        %5493 = vmatprep.subr.mxu0 0.0
        %5494 = vmatpush2.msra.mxu0 0.0
        %5495 = vmatprep.subr.mxu0 0.0
        %5496 = vmatpush2.msra.mxu0 0.0
        %5497 = vmatprep.subr.mxu0 0.0
        %5498 = vmatpush2.msra.mxu0 0.0
        %5499 = vmatprep.subr.mxu0 0.0
        %5500 = vmatpush2.msra.mxu0 0.0
        %5501 = vmatprep.subr.mxu0 0.0
        %5502 = vmatpush2.msra.mxu0 0.0
        %5503 = vmatprep.subr.mxu0 0.0
        %5504 = vmatpush2.msra.mxu0 0.0
        %5505 = vmatprep.subr.mxu0 0.0
        %5506 = vmatpush2.msra.mxu0 0.0
        %5507 = vmatprep.subr.mxu0 0.0
        %5508 = vmatpush2.msra.mxu0 0.0
        %5509 = vmatprep.subr.mxu0 0.0
        %5510 = vmatpush2.msra.mxu0 0.0
        %5511 = vmatprep.subr.mxu0 0.0
        %5512 = vmatpush2.msra.mxu0 0.0
        %5513 = vmatprep.subr.mxu0 0.0
        %5514 = vmatpush2.msra.mxu0 0.0
        %5515 = vmatprep.subr.mxu0 0.0
        %5516 = vmatpush2.msra.mxu0 0.0
        %5517 = vmatprep.subr.mxu0 0.0
        %5518 = vmatpush2.msra.mxu0 0.0
        %5519 = vmatprep.mubr.f32.mxu0 0.0
        %5520 = vmatmul.mubr.f32.gmra.mxu0 %v5441
        %v5521 = vpop.f32.mrf.mxu0
        %v5522 = vadd.f32 %v5453, %v5521
        %v5523 = vpop.f32.mrf.mxu0
        %5524 = vmatprep.mubr.f32.mxu0 0.0
        %5525 = vmatmul.mubr.f32.gmra.mxu0 %v5442
        %v5526 = vpop.f32.mrf.mxu0
        %v5527 = vadd.f32 %v5453, %v5526
        %v5528 = vpop.f32.mrf.mxu0
        %5529 = vmatprep.mubr.f32.mxu0 0.0
        %5530 = vmatmul.mubr.f32.gmra.mxu0 %v5443
        %v5531 = vpop.f32.mrf.mxu0
        %v5532 = vadd.f32 %v5453, %v5531
        %v5533 = vpop.f32.mrf.mxu0
        %5534 = vmatprep.mubr.f32.mxu0 0.0
        %5535 = vmatmul.mubr.f32.gmra.mxu0 %v5444
        %v5536 = vpop.f32.mrf.mxu0
        %v5537 = vadd.f32 %v5453, %v5536
        %v5538 = vpop.f32.mrf.mxu0
        %5539 = vmatprep.mubr.f32.mxu0 0.0
        %5540 = vmatmul.mubr.f32.gmra.mxu0 %v5445
        %v5541 = vpop.f32.mrf.mxu0
        %v5542 = vadd.f32 %v5453, %v5541
        %v5543 = vpop.f32.mrf.mxu0
        %5544 = vmatprep.mubr.f32.mxu0 0.0
        %5545 = vmatmul.mubr.f32.gmra.mxu0 %v5446
        %v5546 = vpop.f32.mrf.mxu0
        %v5547 = vadd.f32 %v5453, %v5546
        %v5548 = vpop.f32.mrf.mxu0
        %5549 = vmatprep.mubr.f32.mxu0 0.0
        %5550 = vmatmul.mubr.f32.gmra.mxu0 %v5447
        %v5551 = vpop.f32.mrf.mxu0
        %v5552 = vadd.f32 %v5453, %v5551
        %v5553 = vpop.f32.mrf.mxu0
        %5554 = vmatprep.mubr.f32.mxu0 0.0
        %5555 = vmatmul.mubr.f32.gmra.mxu0 %v5448
        %v5556 = vpop.f32.mrf.mxu0
        %v5557 = vadd.f32 %v5453, %v5556
        %v5558 = vpop.f32.mrf.mxu0
        %5559 = vdwg.mxu0
        %v5560 = vmul.f32 %v5522, 0.5
        %v5561 = vmul.f32 %v5527, 0.5
        %v5562 = vmul.f32 %v5532, 0.5
        %v5563 = vmul.f32 %v5537, 0.5
        %v5564 = vmul.f32 %v5542, 0.5
        %v5565 = vmul.f32 %v5547, 0.5
        %v5566 = vmul.f32 %v5552, 0.5
        %v5567 = vmul.f32 %v5557, 0.5
        %v5568 = vmul.f32 %v5522, 0.70710677
        %v5569 = vmul.f32 %v5527, 0.70710677
        %v5570 = vmul.f32 %v5532, 0.70710677
        %v5571 = vmul.f32 %v5537, 0.70710677
        %v5572 = vmul.f32 %v5542, 0.70710677
        %v5573 = vmul.f32 %v5547, 0.70710677
        %v5574 = vmul.f32 %v5552, 0.70710677
        %v5575 = vmul.f32 %v5557, 0.70710677
        %vm5576 = vcmp.ge.f32.partialorder %v5568, 0.0
        %vm5577 = vcmp.ge.f32.partialorder %v5569, 0.0
        %vm5578 = vcmp.ge.f32.partialorder %v5570, 0.0
        %vm5579 = vcmp.ge.f32.partialorder %v5571, 0.0
        %vm5580 = vcmp.ge.f32.partialorder %v5572, 0.0
        %vm5581 = vcmp.ge.f32.partialorder %v5573, 0.0
        %vm5582 = vcmp.ge.f32.partialorder %v5574, 0.0
        %vm5583 = vcmp.ge.f32.partialorder %v5575, 0.0
        %v5584 = vsel %vm5576, 1.0, -1.0
        %v5585 = vsel %vm5577, 1.0, -1.0
        %v5586 = vsel %vm5578, 1.0, -1.0
        %v5587 = vsel %vm5579, 1.0, -1.0
        %v5588 = vsel %vm5580, 1.0, -1.0
        %v5589 = vsel %vm5581, 1.0, -1.0
        %v5590 = vsel %vm5582, 1.0, -1.0
        %v5591 = vsel %vm5583, 1.0, -1.0
        %v5592 = vand.u32 2147483647, %v5568
        %v5593 = vand.u32 2147483647, %v5569
        %v5594 = vand.u32 2147483647, %v5570
        %v5595 = vand.u32 2147483647, %v5571
        %v5596 = vand.u32 2147483647, %v5572
        %v5597 = vand.u32 2147483647, %v5573
        %v5598 = vand.u32 2147483647, %v5574
        %v5599 = vand.u32 2147483647, %v5575
        %v5600 = vmul.f32 %v5592, 0.3275911
        %v5601 = vmul.f32 %v5593, 0.3275911
        %v5602 = vmul.f32 %v5594, 0.3275911
        %v5603 = vmul.f32 %v5595, 0.3275911
        %v5604 = vmul.f32 %v5596, 0.3275911
        %v5605 = vmul.f32 %v5597, 0.3275911
        %v5606 = vmul.f32 %v5598, 0.3275911
        %v5607 = vmul.f32 %v5599, 0.3275911
        %v5608 = vadd.f32 %v5600, 1.0
        %v5609 = vadd.f32 %v5601, 1.0
        %v5610 = vadd.f32 %v5602, 1.0
        %v5611 = vadd.f32 %v5603, 1.0
        %v5612 = vadd.f32 %v5604, 1.0
        %v5613 = vadd.f32 %v5605, 1.0
        %v5614 = vadd.f32 %v5606, 1.0
        %v5615 = vadd.f32 %v5607, 1.0
        %v5616 = vrcp.pop %v5608
        %v5617 = vmul.f32 1.0, %v5616
        %v5618 = vrcp.pop %v5609
        %v5619 = vmul.f32 1.0, %v5618
        %v5620 = vrcp.pop %v5610
        %v5621 = vmul.f32 1.0, %v5620
        %v5622 = vrcp.pop %v5611
        %v5623 = vmul.f32 1.0, %v5622
        %v5624 = vrcp.pop %v5612
        %v5625 = vmul.f32 1.0, %v5624
        %v5626 = vrcp.pop %v5613
        %v5627 = vmul.f32 1.0, %v5626
        %v5628 = vrcp.pop %v5614
        %v5629 = vmul.f32 1.0, %v5628
        %v5630 = vrcp.pop %v5615
        %v5631 = vmul.f32 1.0, %v5630
        %v5632 = vmul.f32 %v5617, 1.0614054
        %v5633 = vmul.f32 %v5619, 1.0614054
        %v5634 = vmul.f32 %v5621, 1.0614054
        %v5635 = vmul.f32 %v5623, 1.0614054
        %v5636 = vmul.f32 %v5625, 1.0614054
        %v5637 = vmul.f32 %v5627, 1.0614054
        %v5638 = vmul.f32 %v5629, 1.0614054
        %v5639 = vmul.f32 %v5631, 1.0614054
        %v5640 = vadd.f32 %v5632, -1.4531521
        %v5641 = vadd.f32 %v5633, -1.4531521
        %v5642 = vadd.f32 %v5634, -1.4531521
        %v5643 = vadd.f32 %v5635, -1.4531521
        %v5644 = vadd.f32 %v5636, -1.4531521
        %v5645 = vadd.f32 %v5637, -1.4531521
        %v5646 = vadd.f32 %v5638, -1.4531521
        %v5647 = vadd.f32 %v5639, -1.4531521
        %v5648 = vmul.f32 %v5640, %v5617
        %v5649 = vmul.f32 %v5641, %v5619
        %v5650 = vmul.f32 %v5642, %v5621
        %v5651 = vmul.f32 %v5643, %v5623
        %v5652 = vmul.f32 %v5644, %v5625
        %v5653 = vmul.f32 %v5645, %v5627
        %v5654 = vmul.f32 %v5646, %v5629
        %v5655 = vmul.f32 %v5647, %v5631
        %v5656 = vadd.f32 %v5648, 1.4214138
        %v5657 = vadd.f32 %v5649, 1.4214138
        %v5658 = vadd.f32 %v5650, 1.4214138
        %v5659 = vadd.f32 %v5651, 1.4214138
        %v5660 = vadd.f32 %v5652, 1.4214138
        %v5661 = vadd.f32 %v5653, 1.4214138
        %v5662 = vadd.f32 %v5654, 1.4214138
        %v5663 = vadd.f32 %v5655, 1.4214138
        %v5664 = vmul.f32 %v5656, %v5617
        %v5665 = vmul.f32 %v5657, %v5619
        %v5666 = vmul.f32 %v5658, %v5621
        %v5667 = vmul.f32 %v5659, %v5623
        %v5668 = vmul.f32 %v5660, %v5625
        %v5669 = vmul.f32 %v5661, %v5627
        %v5670 = vmul.f32 %v5662, %v5629
        %v5671 = vmul.f32 %v5663, %v5631
        %v5672 = vadd.f32 %v5664, -0.28449672
        %v5673 = vadd.f32 %v5665, -0.28449672
        %v5674 = vadd.f32 %v5666, -0.28449672
        %v5675 = vadd.f32 %v5667, -0.28449672
        %v5676 = vadd.f32 %v5668, -0.28449672
        %v5677 = vadd.f32 %v5669, -0.28449672
        %v5678 = vadd.f32 %v5670, -0.28449672
        %v5679 = vadd.f32 %v5671, -0.28449672
        %v5680 = vmul.f32 %v5672, %v5617
        %v5681 = vmul.f32 %v5673, %v5619
        %v5682 = vmul.f32 %v5674, %v5621
        %v5683 = vmul.f32 %v5675, %v5623
        %v5684 = vmul.f32 %v5676, %v5625
        %v5685 = vmul.f32 %v5677, %v5627
        %v5686 = vmul.f32 %v5678, %v5629
        %v5687 = vmul.f32 %v5679, %v5631
        %v5688 = vadd.f32 %v5680, 0.2548296
        %v5689 = vadd.f32 %v5681, 0.2548296
        %v5690 = vadd.f32 %v5682, 0.2548296
        %v5691 = vadd.f32 %v5683, 0.2548296
        %v5692 = vadd.f32 %v5684, 0.2548296
        %v5693 = vadd.f32 %v5685, 0.2548296
        %v5694 = vadd.f32 %v5686, 0.2548296
        %v5695 = vadd.f32 %v5687, 0.2548296
        %v5696 = vmul.f32 %v5688, %v5617
        %v5697 = vmul.f32 %v5689, %v5619
        %v5698 = vmul.f32 %v5690, %v5621
        %v5699 = vmul.f32 %v5691, %v5623
        %v5700 = vmul.f32 %v5692, %v5625
        %v5701 = vmul.f32 %v5693, %v5627
        %v5702 = vmul.f32 %v5694, %v5629
        %v5703 = vmul.f32 %v5695, %v5631
        %v5704 = vsub.f32 0.0, %v5592
        %v5705 = vsub.f32 0.0, %v5593
        %v5706 = vsub.f32 0.0, %v5594
        %v5707 = vsub.f32 0.0, %v5595
        %v5708 = vsub.f32 0.0, %v5596
        %v5709 = vsub.f32 0.0, %v5597
        %v5710 = vsub.f32 0.0, %v5598
        %v5711 = vsub.f32 0.0, %v5599
        %v5712 = vmul.f32 %v5704, %v5592
        %v5713 = vmul.f32 %v5705, %v5593
        %v5714 = vmul.f32 %v5706, %v5594
        %v5715 = vmul.f32 %v5707, %v5595
        %v5716 = vmul.f32 %v5708, %v5596
        %v5717 = vmul.f32 %v5709, %v5597
        %v5718 = vmul.f32 %v5710, %v5598
        %v5719 = vmul.f32 %v5711, %v5599
        %v5720 = vmul.f32 %v5712, 1.442695
        %v5721 = vpow.pop %v5720
        %v5722 = vmul.f32 %v5713, 1.442695
        %v5723 = vpow.pop %v5722
        %v5724 = vmul.f32 %v5714, 1.442695
        %v5725 = vpow.pop %v5724
        %v5726 = vmul.f32 %v5715, 1.442695
        %v5727 = vpow.pop %v5726
        %v5728 = vmul.f32 %v5716, 1.442695
        %v5729 = vpow.pop %v5728
        %v5730 = vmul.f32 %v5717, 1.442695
        %v5731 = vpow.pop %v5730
        %v5732 = vmul.f32 %v5718, 1.442695
        %v5733 = vpow.pop %v5732
        %v5734 = vmul.f32 %v5719, 1.442695
        %v5735 = vpow.pop %v5734
        %v5736 = vmul.f32 %v5696, %v5721
        %v5737 = vmul.f32 %v5697, %v5723
        %v5738 = vmul.f32 %v5698, %v5725
        %v5739 = vmul.f32 %v5699, %v5727
        %v5740 = vmul.f32 %v5700, %v5729
        %v5741 = vmul.f32 %v5701, %v5731
        %v5742 = vmul.f32 %v5702, %v5733
        %v5743 = vmul.f32 %v5703, %v5735
        %v5744 = vsub.f32 1.0, %v5736
        %v5745 = vsub.f32 1.0, %v5737
        %v5746 = vsub.f32 1.0, %v5738
        %v5747 = vsub.f32 1.0, %v5739
        %v5748 = vsub.f32 1.0, %v5740
        %v5749 = vsub.f32 1.0, %v5741
        %v5750 = vsub.f32 1.0, %v5742
        %v5751 = vsub.f32 1.0, %v5743
        %v5752 = vmul.f32 %v5584, %v5744
        %v5753 = vmul.f32 %v5585, %v5745
        %v5754 = vmul.f32 %v5586, %v5746
        %v5755 = vmul.f32 %v5587, %v5747
        %v5756 = vmul.f32 %v5588, %v5748
        %v5757 = vmul.f32 %v5589, %v5749
        %v5758 = vmul.f32 %v5590, %v5750
        %v5759 = vmul.f32 %v5591, %v5751
        %v5760 = vadd.f32 %v5752, 1.0
        %v5761 = vadd.f32 %v5753, 1.0
        %v5762 = vadd.f32 %v5754, 1.0
        %v5763 = vadd.f32 %v5755, 1.0
        %v5764 = vadd.f32 %v5756, 1.0
        %v5765 = vadd.f32 %v5757, 1.0
        %v5766 = vadd.f32 %v5758, 1.0
        %v5767 = vadd.f32 %v5759, 1.0
        %v5768 = vmul.f32 %v5560, %v5760
        %v5769 = vmul.f32 %v5561, %v5761
        %v5770 = vmul.f32 %v5562, %v5762
        %v5771 = vmul.f32 %v5563, %v5763
        %v5772 = vmul.f32 %v5564, %v5764
        %v5773 = vmul.f32 %v5565, %v5765
        %v5774 = vmul.f32 %v5566, %v5766
        %v5775 = vmul.f32 %v5567, %v5767
        %v5776 = vadd.f32 %v5768, %v4934
        %v5777 = vadd.f32 %v5769, %v4935
        %v5778 = vadd.f32 %v5770, %v4936
        %v5779 = vadd.f32 %v5771, %v4937
        %v5780 = vadd.f32 %v5772, %v4938
        %v5781 = vadd.f32 %v5773, %v4939
        %v5782 = vadd.f32 %v5774, %v4940
        %v5783 = vadd.f32 %v5775, %v4941
        %5784 = vst.msk [vmem:[%s822] sm:$0xff] %vm1013, %v5776
        %5785 = vst.msk [vmem:[%s822 + $0x8] sm:$0xff] %vm1013, %v5777
        %5786 = vst.msk [vmem:[%s822 + $0x10] sm:$0xff] %vm1013, %v5778
        %5787 = vst.msk [vmem:[%s822 + $0x18] sm:$0xff] %vm1013, %v5779
        %5788 = vst.msk [vmem:[%s822 + $0x20] sm:$0xff] %vm1013, %v5780
        %5789 = vst.msk [vmem:[%s822 + $0x28] sm:$0xff] %vm1013, %v5781
        %5790 = vst.msk [vmem:[%s822 + $0x30] sm:$0xff] %vm1013, %v5782
        %5791 = vst.msk [vmem:[%s822 + $0x38] sm:$0xff] %vm1013, %v5783
        %s5792 = sand.u32 %s601, 1
        %s5793 = scalar_lea.sflag [#allocation4], %s5792
        %s5794 = sand.u32 %s601, 1
        %s5795 = smul.addr %s5794, 64
        %s5796 = scalar_lea.vmem [#allocation8], %s5795
        // Predicated region
        $region137: #{swin_transformer_block.1} parent=123 // pred_check
          %p5797 = pneg %p611
        $region138: #{swin_transformer_block.1} parent=123 // pred_check_branch
          %5799 = sbr.rel (%p5797) target = $region140
        $region139: #{swin_transformer_block.1} parent=123 // pred_region
          %s5801 = ssub.s32 1024, 1024
          %5802 = vsyncadd %s5793, %s5801
          %s5803 = smul.addr %s42, 8
          %s5804 = smul.addr %s5803, 128
          %s5805 = scalar_lea.hbm %s26, %s5804
          %s5806 = sshll.u32 %s5796, 4
          %s5807 = int_to_ptr.vmem [resolvable:$true] %s5806
          %5812 = dma.vmem_to_hbm [thread:$0]  %s5807, 1024, %s5805, %s5793, 128, 128, 8
        $region140: #{swin_transformer_block.1} parent=123 // pred_fallthru
          _
      $region124: #{swin_transformer_block.1} parent=5 // pred_fallthru
        _
      %p5813 = scmp.le.s32.totalorder 2, %s37
      // Predicated region
      $region141: #{swin_transformer_block.1} parent=5 // pred_check
        %p5814 = pneg %p5813
      $region142: #{swin_transformer_block.1} parent=5 // pred_check_branch
        %5816 = sbr.rel (%p5814) target = $region144
      $region143: #{swin_transformer_block.1} parent=5 // pred_region
        %s5817 = ssub.s32 %s37, 2
        // Predicated region
        $region145: #{swin_transformer_block.1} parent=143 // pred_check
          %p5818 = pneg %p617
        $region146: #{swin_transformer_block.1} parent=143 // pred_check_branch
          %5820 = sbr.rel (%p5818) target = $region148
        $region147: #{swin_transformer_block.1} parent=143 // pred_region
          %s5821 = sand.u32 %s602, 1
          %s5822 = scalar_lea.sflag [#allocation4], %s5821
          %s5823 = sand.u32 %s602, 1
          %s5824 = smul.addr %s5823, 64
          %s5825 = scalar_lea.vmem [#allocation8], %s5824
          %5826 = dma.done %s5822, 1024
        $region148: #{swin_transformer_block.1} parent=143 // pred_fallthru
          _
      $region144: #{swin_transformer_block.1} parent=5 // pred_fallthru
        _
    $region6: #{swin_transformer_block.1} parent=1 // loop_footer
      %s41 = sadd.s32 1, %s37
    $region7: #{swin_transformer_block.1} parent=1 // loop_footer_branch
      %36 = sbr.rel target = $region3
    $region8: #{swin_transformer_block.1} parent=1 // loop_exit
      _
    %5827 = vsyncpa [#allocation3], 1
    %s5828 = scalar_lea.sflag [#allocation3], 1
    %5829 = vsyncpa %s5828, 1
    %5830 = vsyncpa [#allocation6], 1
    %5831 = vsyncpa [#allocation4], 1
    %s5832 = scalar_lea.sflag [#allocation4], 1
    %5833 = vsyncpa %s5832, 1

</llo_original>
